<compile_context>
chip_gen: v6e
topology: v6e:2x2x1
jax: 0.10.0
libtpu: 0.0.40
codegen_flags: <defaults>
</compile_context>

<pallas_src>
import functools

import jax
import jax.numpy as jnp
from jax import lax
from jax.experimental import pallas as pl
from jax.experimental.pallas import tpu as pltpu


_VMEM = pl.BlockSpec(memory_space=pltpu.MemorySpace.VMEM)


# ----------------------------------------------------------------------------
# Encoder kernel: bidirectional GRU (input matmuls hoisted, directions
# interleaved, fully unrolled) + fc/tanh of final hiddens + hoisted attention
# projection e_e = enc @ W_att_e + b_att.
# ----------------------------------------------------------------------------
def encoder_kernel(src_ref,
                   wif_ref, whf_ref, bif_ref, bhf_ref,      # forward GRU
                   wib_ref, whb_ref, bib_ref, bhb_ref,      # backward GRU
                   wfc_ref, bfc_ref,                        # fc (2H -> D)
                   wae_ref, bae_ref,                        # attn enc projection (hoisted)
                   enc_ref, ee_ref, hid_ref,                # outputs
                   outf_ref, outb_ref):                     # VMEM scratch (T, B, H) each
    T, B, C = src_ref.shape
    H = whf_ref.shape[0]

    # Hoisted input->hidden matmuls: one MXU-friendly (T*B, C) @ (C, 3H) per direction.
    src2 = src_ref[...].reshape(T * B, C)
    gxf = (jnp.dot(src2, wif_ref[...], preferred_element_type=jnp.float32)
           + bif_ref[...]).reshape(T, B, 3 * H)
    gxb = (jnp.dot(src2, wib_ref[...], preferred_element_type=jnp.float32)
           + bib_ref[...]).reshape(T, B, 3 * H)

    w_hf = whf_ref[...]; b_hf = bhf_ref[...]
    w_hb = whb_ref[...]; b_hb = bhb_ref[...]

    def cell(gx, h, w_hh, b_hh):
        gh = jnp.dot(h, w_hh, preferred_element_type=jnp.float32) + b_hh
        r = jax.nn.sigmoid(gx[:, :H] + gh[:, :H])
        z = jax.nn.sigmoid(gx[:, H:2 * H] + gh[:, H:2 * H])
        n = jnp.tanh(gx[:, 2 * H:] + r * gh[:, 2 * H:])
        return (1.0 - z) * n + z * h

    h_f = jnp.zeros((B, H), jnp.float32)
    h_b = jnp.zeros((B, H), jnp.float32)
    # Fully-unrolled, interleaved fwd/bwd recurrence (the two chains are independent
    # and co-issue; only the h @ W_hh matmul remains on the serial path).
    for i in range(T):
        tb = T - 1 - i
        h_f = cell(gxf[i], h_f, w_hf, b_hf)
        h_b = cell(gxb[tb], h_b, w_hb, b_hb)
        outf_ref[i] = h_f
        outb_ref[tb] = h_b

    enc = jnp.concatenate([outf_ref[...], outb_ref[...]], axis=-1)          # (T, B, 2H)
    enc_ref[...] = enc
    # Hoisted (decode-loop-invariant) attention projection, attn bias folded in.
    ee_ref[...] = (jnp.dot(enc.reshape(T * B, 2 * H), wae_ref[...],
                           preferred_element_type=jnp.float32)
                   + bae_ref[...]).reshape(T, B, wae_ref.shape[1])
    cat = jnp.concatenate([h_f, h_b], axis=1)                                # (B, 2H)
    hid_ref[...] = jnp.tanh(
        jnp.dot(cat, wfc_ref[...], preferred_element_type=jnp.float32) + bfc_ref[...])


# ----------------------------------------------------------------------------
# Fused decoder kernel: all MAX_LEN greedy decode steps in one pallas_call.
# ----------------------------------------------------------------------------
def decoder_kernel(emb_tab_ref, hid0_ref, enc_ref, ee_ref,
                   wah_ref, v_ref,                                  # attention
                   wie_ref, wiw_ref, whh_ref, bih_ref, bhh_ref,     # decoder GRU
                   wo_ref, ww_ref, we_ref, bo_ref,                  # fc_out (vocab-padded)
                   logits_ref, *, sos_token_id):
    T, B, HH = enc_ref.shape
    D = hid0_ref.shape[1]
    V, E = emb_tab_ref.shape
    Vp = wo_ref.shape[1]
    max_len = logits_ref.shape[0]

    # Load every loop invariant (weights, enc, e_e) exactly once.
    emb_tab = emb_tab_ref[...]
    enc = enc_ref[...]
    ee = ee_ref[...]
    wah = wah_ref[...]; v = v_ref[...]
    wie = wie_ref[...]; wiw = wiw_ref[...]; whh = whh_ref[...]
    bih = bih_ref[...]; bhh = bhh_ref[...]
    wo = wo_ref[...]; ww = ww_ref[...]; we = we_ref[...]; bo = bo_ref[...]

    vocab_iota = lax.broadcasted_iota(jnp.int32, (B, V), 1)
    vpad_iota = lax.broadcasted_iota(jnp.int32, (B, Vp), 1)

    hid = hid0_ref[...]
    tok = jnp.full((B, 1), sos_token_id, jnp.int32)

    for step in range(max_len):                       # fused greedy decode, fully unrolled
        # Embedding lookup as a one-hot matmul (MXU; avoids a dynamic gather).
        onehot = (vocab_iota == tok).astype(jnp.float32)                          # (B, V)
        emb = jnp.dot(onehot, emb_tab, preferred_element_type=jnp.float32)        # (B, E)

        # Attention: e_e precomputed in the encoder kernel; only hid @ W_h per step.
        e_h = jnp.dot(hid, wah, preferred_element_type=jnp.float32)               # (B, D)
        energy = jnp.tanh(ee + e_h[None, :, :])                                   # (T, B, D)
        scores = jnp.sum(energy * v[None, :, :], axis=-1)                         # (T, B)
        scores = scores - jnp.max(scores, axis=0, keepdims=True)
        expw = jnp.exp(scores)
        denom = jnp.sum(expw, axis=0, keepdims=True)                              # (1, B)
        a = expw * pl.reciprocal(denom, approx=True)                              # (T, B)
        weighted = jnp.sum(a[:, :, None] * enc, axis=0)                           # (B, 2H)

        # GRU cell on [embedded ; weighted].
        gx = (jnp.dot(emb, wie, preferred_element_type=jnp.float32)
              + jnp.dot(weighted, wiw, preferred_element_type=jnp.float32) + bih)
        gh = jnp.dot(hid, whh, preferred_element_type=jnp.float32) + bhh
        r = jax.nn.sigmoid(gx[:, :D] + gh[:, :D])
        z = jax.nn.sigmoid(gx[:, D:2 * D] + gh[:, D:2 * D])
        n = jnp.tanh(gx[:, 2 * D:] + r * gh[:, 2 * D:])
        hid = (1.0 - z) * n + z * hid

        # Output projection (vocab padded to a lane-dense multiple of 128; padded
        # columns carry a -1e9 bias so argmax can never select them).
        lg = (jnp.dot(hid, wo, preferred_element_type=jnp.float32)
              + jnp.dot(weighted, ww, preferred_element_type=jnp.float32)
              + jnp.dot(emb, we, preferred_element_type=jnp.float32) + bo)        # (B, Vp)
        logits_ref[step] = lg

        # Greedy argmax feedback (first-max index, like torch.argmax).
        mx = jnp.max(lg, axis=-1, keepdims=True)
        tok = jnp.min(jnp.where(lg >= mx, vpad_iota, Vp),
                      axis=-1, keepdims=True).astype(jnp.int32)


# ----------------------------------------------------------------------------
# Wrappers
# ----------------------------------------------------------------------------
def run_encoder(src, p):
    T, B, _ = src.shape
    H = p["enc_whf"].shape[0]
    D = p["enc_wfc"].shape[1]
    enc, ee, hidden = pl.pallas_call(
        encoder_kernel,
        out_shape=(jax.ShapeDtypeStruct((T, B, 2 * H), jnp.float32),
                   jax.ShapeDtypeStruct((T, B, D), jnp.float32),
                   jax.ShapeDtypeStruct((B, D), jnp.float32)),
        in_specs=[_VMEM] * 13,
        out_specs=(_VMEM, _VMEM, _VMEM),
        scratch_shapes=[pltpu.VMEM((T, B, H), jnp.float32),
                        pltpu.VMEM((T, B, H), jnp.float32)],
    )(src,
      p["enc_wif"], p["enc_whf"], p["enc_bif"], p["enc_bhf"],
      p["enc_wib"], p["enc_whb"], p["enc_bib"], p["enc_bhb"],
      p["enc_wfc"], p["enc_bfc"],
      p["att_we"], p["att_b"])
    return enc, ee, hidden


def run_decoder(p, hidden, enc, ee, sos_token_id, max_len):
    T, B, HH = enc.shape
    D = hidden.shape[1]
    V, E = p["embedding"].shape
    Vp = ((V + 127) // 128) * 128                     # lane-dense padded vocab
    pad = Vp - V

    wo = jnp.pad(p["fo_wo"], ((0, 0), (0, pad)))
    ww = jnp.pad(p["fo_ww"], ((0, 0), (0, pad)))
    we = jnp.pad(p["fo_we"], ((0, 0), (0, pad)))
    bo = jnp.pad(p["fo_b"], ((0, 0), (0, pad)), constant_values=-1e9)

    # Each batch row decodes independently -> 'parallel' grid over batch.
    # At toy sizes bt == B (grid of 1); shrink bt (multiple of 8) for v7x 2-TC sharding.
    bt = B
    grid = (B // bt,)

    def bcast(shape):
        return pl.BlockSpec(shape, lambda i, n=len(shape): (0,) * n)

    in_specs = [
        bcast((V, E)),                                           # embedding table
        pl.BlockSpec((bt, D), lambda i: (i, 0)),                 # hidden0
        pl.BlockSpec((T, bt, HH), lambda i: (0, i, 0)),          # enc
        pl.BlockSpec((T, bt, D), lambda i: (0, i, 0)),           # e_e
        bcast((D, D)), bcast((1, D)),                            # attention
        bcast((E, 3 * D)), bcast((HH, 3 * D)), bcast((D, 3 * D)),
        bcast((1, 3 * D)), bcast((1, 3 * D)),                    # decoder GRU
        bcast((D, Vp)), bcast((HH, Vp)), bcast((E, Vp)), bcast((1, Vp)),   # fc_out
    ]
    out_spec = pl.BlockSpec((max_len, bt, Vp), lambda i: (0, i, 0))

    logits_pad = pl.pallas_call(
        functools.partial(decoder_kernel, sos_token_id=sos_token_id),
        out_shape=jax.ShapeDtypeStruct((max_len, B, Vp), jnp.float32),
        grid=grid,
        in_specs=in_specs,
        out_specs=out_spec,
        compiler_params=pltpu.CompilerParams(dimension_semantics=("parallel",)),
    )(p["embedding"], hidden, enc, ee,
      p["att_wh"], p["att_v"],
      p["dec_wie"], p["dec_wiw"], p["dec_whh"], p["dec_bih"], p["dec_bhh"],
      wo, ww, we, bo)
    return logits_pad


def seq2seq_forward(src, p, sos_token_id, max_len):
    """Greedy (teacher_forcing=False) forward. Returns (logits (B,L,V), tokens_fed (B,L))."""
    T, B, _ = src.shape
    V = p["embedding"].shape[0]

    enc, ee, hidden = run_encoder(src, p)
    logits_pad = run_decoder(p, hidden, enc, ee, sos_token_id, max_len)    # (L, B, Vp)

    logits = jnp.transpose(logits_pad[:, :, :V], (1, 0, 2))                # (B, L, V) glue
    # Tokens fed at each step (SOS, then argmax of previous logits) for the reference replay.
    prev = jnp.argmax(logits[:, :-1, :], axis=-1).astype(jnp.int32)
    tokens_fed = jnp.concatenate(
        [jnp.full((B, 1), sos_token_id, jnp.int32), prev], axis=1)
    return logits, tokens_fed


# ----------------------------------------------------------------------------
# Pure-JAX reference (same math, no Pallas) for a numerical cross-check.
# ----------------------------------------------------------------------------
def _ref_gru_cell(x, h, w_ih, w_hh, b_ih, b_hh, H):
    gx = x @ w_ih + b_ih
    gh = h @ w_hh + b_hh
    r = jax.nn.sigmoid(gx[:, :H] + gh[:, :H])
    z = jax.nn.sigmoid(gx[:, H:2 * H] + gh[:, H:2 * H])
    n = jnp.tanh(gx[:, 2 * H:] + r * gh[:, 2 * H:])
    return (1.0 - z) * n + z * h


def reference_forward(src, p, tokens_fed):
    T, B, _ = src.shape
    H = p["enc_whf"].shape[0]
    D = p["enc_wfc"].shape[1]

    h_f = jnp.zeros((B, H), jnp.float32)
    h_b = jnp.zeros((B, H), jnp.float32)
    outs_f = [None] * T
    outs_b = [None] * T
    for t in range(T):
        h_f = _ref_gru_cell(src[t], h_f, p["enc_wif"], p["enc_whf"], p["enc_bif"], p["enc_bhf"], H)
        outs_f[t] = h_f
    for t in range(T - 1, -1, -1):
        h_b = _ref_gru_cell(src[t], h_b, p["enc_wib"], p["enc_whb"], p["enc_bib"], p["enc_bhb"], H)
        outs_b[t] = h_b
    enc = jnp.stack([jnp.concatenate([outs_f[t], outs_b[t]], axis=-1) for t in range(T)], axis=0)
    hidden = jnp.tanh(jnp.concatenate([h_f, h_b], axis=1) @ p["enc_wfc"] + p["enc_bfc"])

    enc_bt = jnp.transpose(enc, (1, 0, 2))               # (B, T, 2H)
    logits_steps = []
    for i in range(tokens_fed.shape[1]):
        tok = tokens_fed[:, i]
        emb = p["embedding"][tok]
        energy = jnp.tanh(jnp.einsum("btk,kd->btd", enc_bt, p["att_we"])
                          + (hidden @ p["att_wh"])[:, None, :] + p["att_b"][None, :, :])
        scores = jnp.sum(energy * p["att_v"][:, None, :], axis=-1)
        a = jax.nn.softmax(scores, axis=1)
        weighted = jnp.sum(a[:, :, None] * enc_bt, axis=1)
        gx = emb @ p["dec_wie"] + weighted @ p["dec_wiw"] + p["dec_bih"]
        gh = hidden @ p["dec_whh"] + p["dec_bhh"]
        r = jax.nn.sigmoid(gx[:, :D] + gh[:, :D])
        z = jax.nn.sigmoid(gx[:, D:2 * D] + gh[:, D:2 * D])
        n = jnp.tanh(gx[:, 2 * D:] + r * gh[:, 2 * D:])
        hidden = (1.0 - z) * n + z * hidden
        logits = (hidden @ p["fo_wo"] + weighted @ p["fo_ww"] + emb @ p["fo_we"] + p["fo_b"])
        logits_steps.append(logits)
    return jnp.stack(logits_steps, axis=1)


# ----------------------------------------------------------------------------
# Deterministic parameter init (synthetic; shapes follow the torch module).
# ----------------------------------------------------------------------------
def init_params(key, img_channel, enc_hid, dec_hid, emb_dim, vocab):
    H, D, E, V, C = enc_hid, dec_hid, emb_dim, vocab, img_channel
    names_shapes = [
        ("enc_wif", (C, 3 * H)), ("enc_whf", (H, 3 * H)), ("enc_bif", (1, 3 * H)), ("enc_bhf", (1, 3 * H)),
        ("enc_wib", (C, 3 * H)), ("enc_whb", (H, 3 * H)), ("enc_bib", (1, 3 * H)), ("enc_bhb", (1, 3 * H)),
        ("enc_wfc", (2 * H, D)), ("enc_bfc", (1, D)),
        ("att_wh", (D, D)), ("att_we", (2 * H, D)), ("att_b", (1, D)), ("att_v", (1, D)),
        ("embedding", (V, E)),
        ("dec_wie", (E, 3 * D)), ("dec_wiw", (2 * H, 3 * D)), ("dec_whh", (D, 3 * D)),
        ("dec_bih", (1, 3 * D)), ("dec_bhh", (1, 3 * D)),
        ("fo_wo", (D, V)), ("fo_ww", (2 * H, V)), ("fo_we", (E, V)), ("fo_b", (1, V)),
    ]
    keys = jax.random.split(key, len(names_shapes))
    return {name: (0.1 * jax.random.normal(k, shape, jnp.float32))
            for (name, shape), k in zip(names_shapes, keys)}


if __name__ == "__main__":
    # Small, module-consistent shapes.
    B, T, C = 2, 16, 8            # batch, src_len (timesteps), img_channel
    ENC_H, DEC_H = 32, 32
    EMB, VOCAB = 16, 32
    MAX_LEN = 8                   # plays the role of tgt.shape[1]
    SOS = 1

    key = jax.random.PRNGKey(0)
    k_src, k_par = jax.random.split(key)
    src = jax.random.normal(k_src, (T, B, C), jnp.float32)
    params = init_params(k_par, C, ENC_H, DEC_H, EMB, VOCAB)

    logits, tokens_fed = seq2seq_forward(src, params, SOS, MAX_LEN)
    logits = jax.block_until_ready(logits)

    assert logits.shape == (B, MAX_LEN, VOCAB), logits.shape

    # Cross-check against a pure-JAX reference replaying the exact token inputs.
    ref = reference_forward(src, params, tokens_fed)
    assert bool(jnp.all(jnp.isfinite(logits)))
    err = float(jnp.max(jnp.abs(logits - ref)))
    assert bool(jnp.allclose(logits, ref, atol=1e-2, rtol=1e-2)), err

    print("KERNEL_OK")
</pallas_src>

<mosaic_0001>
module attributes {stable_mosaic.version = 11 : i64} {
  func.func @encoder_kernel(%arg0: memref<16x2x8xf32, #tpu.memory_space<vmem>>, %arg1: memref<8x96xf32, #tpu.memory_space<vmem>>, %arg2: memref<32x96xf32, #tpu.memory_space<vmem>>, %arg3: memref<1x96xf32, #tpu.memory_space<vmem>>, %arg4: memref<1x96xf32, #tpu.memory_space<vmem>>, %arg5: memref<8x96xf32, #tpu.memory_space<vmem>>, %arg6: memref<32x96xf32, #tpu.memory_space<vmem>>, %arg7: memref<1x96xf32, #tpu.memory_space<vmem>>, %arg8: memref<1x96xf32, #tpu.memory_space<vmem>>, %arg9: memref<64x32xf32, #tpu.memory_space<vmem>>, %arg10: memref<1x32xf32, #tpu.memory_space<vmem>>, %arg11: memref<64x32xf32, #tpu.memory_space<vmem>>, %arg12: memref<1x32xf32, #tpu.memory_space<vmem>>, %arg13: memref<16x2x64xf32, #tpu.memory_space<vmem>>, %arg14: memref<16x2x32xf32, #tpu.memory_space<vmem>>, %arg15: memref<2x32xf32, #tpu.memory_space<vmem>>, %arg16: memref<16x2x32xf32, #tpu.memory_space<vmem>>, %arg17: memref<16x2x32xf32, #tpu.memory_space<vmem>>) attributes {dimension_semantics = [], scalar_prefetch = 0 : i64, scratch_operands = 2 : i64, tpu.core_type = #tpu.core_type<tc>} {
    %c0 = arith.constant 0 : index
    %c0_0 = arith.constant 0 : index
    %c0_1 = arith.constant 0 : index
    %0 = vector.load %arg0[%c0, %c0_0, %c0_1] : memref<16x2x8xf32, #tpu.memory_space<vmem>>, vector<16x2x8xf32>
    %1 = vector.shape_cast %0 : vector<16x2x8xf32> to vector<32x8xf32>
    %c0_2 = arith.constant 0 : index
    %c0_3 = arith.constant 0 : index
    %2 = vector.load %arg1[%c0_2, %c0_3] : memref<8x96xf32, #tpu.memory_space<vmem>>, vector<8x96xf32>
    %cst = arith.constant dense<0.000000e+00> : vector<32x96xf32>
    %3 = tpu.matmul %1, %2, %cst {dimension_numbers = #tpu.dot_dimension_numbers<[1], [0], [0], [1], [0, 0, 1, 1], [], []>} : vector<32x8xf32>, vector<8x96xf32>, vector<32x96xf32> -> vector<32x96xf32>
    %c0_4 = arith.constant 0 : index
    %c0_5 = arith.constant 0 : index
    %4 = vector.load %arg3[%c0_4, %c0_5] : memref<1x96xf32, #tpu.memory_space<vmem>>, vector<1x96xf32>
    %5 = vector.broadcast %4 : vector<1x96xf32> to vector<32x96xf32>
    %6 = arith.addf %3, %5 : vector<32x96xf32>
    %7 = vector.shape_cast %6 : vector<32x96xf32> to vector<16x2x96xf32>
    %c0_6 = arith.constant 0 : index
    %c0_7 = arith.constant 0 : index
    %8 = vector.load %arg5[%c0_6, %c0_7] : memref<8x96xf32, #tpu.memory_space<vmem>>, vector<8x96xf32>
    %cst_8 = arith.constant dense<0.000000e+00> : vector<32x96xf32>
    %9 = tpu.matmul %1, %8, %cst_8 {dimension_numbers = #tpu.dot_dimension_numbers<[1], [0], [0], [1], [0, 0, 1, 1], [], []>} : vector<32x8xf32>, vector<8x96xf32>, vector<32x96xf32> -> vector<32x96xf32>
    %c0_9 = arith.constant 0 : index
    %c0_10 = arith.constant 0 : index
    %10 = vector.load %arg7[%c0_9, %c0_10] : memref<1x96xf32, #tpu.memory_space<vmem>>, vector<1x96xf32>
    %11 = vector.broadcast %10 : vector<1x96xf32> to vector<32x96xf32>
    %12 = arith.addf %9, %11 : vector<32x96xf32>
    %13 = vector.shape_cast %12 : vector<32x96xf32> to vector<16x2x96xf32>
    %c0_11 = arith.constant 0 : index
    %c0_12 = arith.constant 0 : index
    %14 = vector.load %arg2[%c0_11, %c0_12] : memref<32x96xf32, #tpu.memory_space<vmem>>, vector<32x96xf32>
    %c0_13 = arith.constant 0 : index
    %c0_14 = arith.constant 0 : index
    %15 = vector.load %arg4[%c0_13, %c0_14] : memref<1x96xf32, #tpu.memory_space<vmem>>, vector<1x96xf32>
    %c0_15 = arith.constant 0 : index
    %c0_16 = arith.constant 0 : index
    %16 = vector.load %arg6[%c0_15, %c0_16] : memref<32x96xf32, #tpu.memory_space<vmem>>, vector<32x96xf32>
    %c0_17 = arith.constant 0 : index
    %c0_18 = arith.constant 0 : index
    %17 = vector.load %arg8[%c0_17, %c0_18] : memref<1x96xf32, #tpu.memory_space<vmem>>, vector<1x96xf32>
    %cst_19 = arith.constant 0.000000e+00 : f32
    %18 = vector.broadcast %cst_19 : f32 to vector<2x32xf32>
    %cst_20 = arith.constant 0.000000e+00 : f32
    %19 = vector.broadcast %cst_20 : f32 to vector<2x32xf32>
    %20 = vector.extract_strided_slice %7 {offsets = [0, 0, 0], sizes = [1, 2, 96], strides = [1, 1, 1]} : vector<16x2x96xf32> to vector<1x2x96xf32>
    %21 = vector.shape_cast %20 : vector<1x2x96xf32> to vector<2x96xf32>
    %cst_21 = arith.constant dense<0.000000e+00> : vector<2x96xf32>
    %22 = tpu.matmul %18, %14, %cst_21 {dimension_numbers = #tpu.dot_dimension_numbers<[1], [0], [0], [1], [0, 0, 1, 1], [], []>} : vector<2x32xf32>, vector<32x96xf32>, vector<2x96xf32> -> vector<2x96xf32>
    %23 = vector.broadcast %15 : vector<1x96xf32> to vector<2x96xf32>
    %24 = arith.addf %22, %23 : vector<2x96xf32>
    %25 = vector.extract_strided_slice %21 {offsets = [0, 0], sizes = [2, 32], strides = [1, 1]} : vector<2x96xf32> to vector<2x32xf32>
    %26 = vector.extract_strided_slice %24 {offsets = [0, 0], sizes = [2, 32], strides = [1, 1]} : vector<2x96xf32> to vector<2x32xf32>
    %27 = arith.addf %25, %26 : vector<2x32xf32>
    %28 = arith.negf %27 : vector<2x32xf32>
    %29 = math.exp %28 : vector<2x32xf32>
    %cst_22 = arith.constant 1.000000e+00 : f32
    %30 = vector.broadcast %cst_22 : f32 to vector<2x32xf32>
    %31 = arith.addf %30, %29 : vector<2x32xf32>
    %32 = arith.divf %30, %31 : vector<2x32xf32>
    %33 = vector.extract_strided_slice %21 {offsets = [0, 32], sizes = [2, 32], strides = [1, 1]} : vector<2x96xf32> to vector<2x32xf32>
    %34 = vector.extract_strided_slice %24 {offsets = [0, 32], sizes = [2, 32], strides = [1, 1]} : vector<2x96xf32> to vector<2x32xf32>
    %35 = arith.addf %33, %34 : vector<2x32xf32>
    %36 = arith.negf %35 : vector<2x32xf32>
    %37 = math.exp %36 : vector<2x32xf32>
    %cst_23 = arith.constant 1.000000e+00 : f32
    %38 = vector.broadcast %cst_23 : f32 to vector<2x32xf32>
    %39 = arith.addf %38, %37 : vector<2x32xf32>
    %40 = arith.divf %38, %39 : vector<2x32xf32>
    %41 = vector.extract_strided_slice %21 {offsets = [0, 64], sizes = [2, 32], strides = [1, 1]} : vector<2x96xf32> to vector<2x32xf32>
    %42 = vector.extract_strided_slice %24 {offsets = [0, 64], sizes = [2, 32], strides = [1, 1]} : vector<2x96xf32> to vector<2x32xf32>
    %43 = arith.mulf %32, %42 : vector<2x32xf32>
    %44 = arith.addf %41, %43 : vector<2x32xf32>
    %45 = math.tanh %44 : vector<2x32xf32>
    %cst_24 = arith.constant 1.000000e+00 : f32
    %46 = vector.broadcast %cst_24 : f32 to vector<2x32xf32>
    %47 = arith.subf %46, %40 : vector<2x32xf32>
    %48 = arith.mulf %47, %45 : vector<2x32xf32>
    %49 = arith.mulf %40, %18 : vector<2x32xf32>
    %50 = arith.addf %48, %49 : vector<2x32xf32>
    %51 = vector.extract_strided_slice %13 {offsets = [15, 0, 0], sizes = [1, 2, 96], strides = [1, 1, 1]} : vector<16x2x96xf32> to vector<1x2x96xf32>
    %52 = vector.shape_cast %51 : vector<1x2x96xf32> to vector<2x96xf32>
    %cst_25 = arith.constant dense<0.000000e+00> : vector<2x96xf32>
    %53 = tpu.matmul %19, %16, %cst_25 {dimension_numbers = #tpu.dot_dimension_numbers<[1], [0], [0], [1], [0, 0, 1, 1], [], []>} : vector<2x32xf32>, vector<32x96xf32>, vector<2x96xf32> -> vector<2x96xf32>
    %54 = vector.broadcast %17 : vector<1x96xf32> to vector<2x96xf32>
    %55 = arith.addf %53, %54 : vector<2x96xf32>
    %56 = vector.extract_strided_slice %52 {offsets = [0, 0], sizes = [2, 32], strides = [1, 1]} : vector<2x96xf32> to vector<2x32xf32>
    %57 = vector.extract_strided_slice %55 {offsets = [0, 0], sizes = [2, 32], strides = [1, 1]} : vector<2x96xf32> to vector<2x32xf32>
    %58 = arith.addf %56, %57 : vector<2x32xf32>
    %59 = arith.negf %58 : vector<2x32xf32>
    %60 = math.exp %59 : vector<2x32xf32>
    %cst_26 = arith.constant 1.000000e+00 : f32
    %61 = vector.broadcast %cst_26 : f32 to vector<2x32xf32>
    %62 = arith.addf %61, %60 : vector<2x32xf32>
    %63 = arith.divf %61, %62 : vector<2x32xf32>
    %64 = vector.extract_strided_slice %52 {offsets = [0, 32], sizes = [2, 32], strides = [1, 1]} : vector<2x96xf32> to vector<2x32xf32>
    %65 = vector.extract_strided_slice %55 {offsets = [0, 32], sizes = [2, 32], strides = [1, 1]} : vector<2x96xf32> to vector<2x32xf32>
    %66 = arith.addf %64, %65 : vector<2x32xf32>
    %67 = arith.negf %66 : vector<2x32xf32>
    %68 = math.exp %67 : vector<2x32xf32>
    %cst_27 = arith.constant 1.000000e+00 : f32
    %69 = vector.broadcast %cst_27 : f32 to vector<2x32xf32>
    %70 = arith.addf %69, %68 : vector<2x32xf32>
    %71 = arith.divf %69, %70 : vector<2x32xf32>
    %72 = vector.extract_strided_slice %52 {offsets = [0, 64], sizes = [2, 32], strides = [1, 1]} : vector<2x96xf32> to vector<2x32xf32>
    %73 = vector.extract_strided_slice %55 {offsets = [0, 64], sizes = [2, 32], strides = [1, 1]} : vector<2x96xf32> to vector<2x32xf32>
    %74 = arith.mulf %63, %73 : vector<2x32xf32>
    %75 = arith.addf %72, %74 : vector<2x32xf32>
    %76 = math.tanh %75 : vector<2x32xf32>
    %cst_28 = arith.constant 1.000000e+00 : f32
    %77 = vector.broadcast %cst_28 : f32 to vector<2x32xf32>
    %78 = arith.subf %77, %71 : vector<2x32xf32>
    %79 = arith.mulf %78, %76 : vector<2x32xf32>
    %80 = arith.mulf %71, %19 : vector<2x32xf32>
    %81 = arith.addf %79, %80 : vector<2x32xf32>
    %c0_29 = arith.constant 0 : index
    %c0_30 = arith.constant 0 : index
    %c0_31 = arith.constant 0 : index
    %82 = vector.load %arg16[%c0_29, %c0_30, %c0_31] : memref<16x2x32xf32, #tpu.memory_space<vmem>>, vector<1x2x32xf32>
    %83 = vector.shape_cast %82 : vector<1x2x32xf32> to vector<2x32xf32>
    %84 = vector.shape_cast %50 : vector<2x32xf32> to vector<1x2x32xf32>
    tpu.vector_store %arg16[%c0_29, %c0_30, %c0_31], %84 {strides = array<i32>} : memref<16x2x32xf32, #tpu.memory_space<vmem>>, vector<1x2x32xf32>,
    %c15 = arith.constant 15 : index
    %c0_32 = arith.constant 0 : index
    %c0_33 = arith.constant 0 : index
    %85 = vector.load %arg17[%c15, %c0_32, %c0_33] : memref<16x2x32xf32, #tpu.memory_space<vmem>>, vector<1x2x32xf32>
    %86 = vector.shape_cast %85 : vector<1x2x32xf32> to vector<2x32xf32>
    %87 = vector.shape_cast %81 : vector<2x32xf32> to vector<1x2x32xf32>
    tpu.vector_store %arg17[%c15, %c0_32, %c0_33], %87 {strides = array<i32>} : memref<16x2x32xf32, #tpu.memory_space<vmem>>, vector<1x2x32xf32>,
    %88 = vector.extract_strided_slice %7 {offsets = [1, 0, 0], sizes = [1, 2, 96], strides = [1, 1, 1]} : vector<16x2x96xf32> to vector<1x2x96xf32>
    %89 = vector.shape_cast %88 : vector<1x2x96xf32> to vector<2x96xf32>
    %cst_34 = arith.constant dense<0.000000e+00> : vector<2x96xf32>
    %90 = tpu.matmul %50, %14, %cst_34 {dimension_numbers = #tpu.dot_dimension_numbers<[1], [0], [0], [1], [0, 0, 1, 1], [], []>} : vector<2x32xf32>, vector<32x96xf32>, vector<2x96xf32> -> vector<2x96xf32>
    %91 = vector.broadcast %15 : vector<1x96xf32> to vector<2x96xf32>
    %92 = arith.addf %90, %91 : vector<2x96xf32>
    %93 = vector.extract_strided_slice %89 {offsets = [0, 0], sizes = [2, 32], strides = [1, 1]} : vector<2x96xf32> to vector<2x32xf32>
    %94 = vector.extract_strided_slice %92 {offsets = [0, 0], sizes = [2, 32], strides = [1, 1]} : vector<2x96xf32> to vector<2x32xf32>
    %95 = arith.addf %93, %94 : vector<2x32xf32>
    %96 = arith.negf %95 : vector<2x32xf32>
    %97 = math.exp %96 : vector<2x32xf32>
    %cst_35 = arith.constant 1.000000e+00 : f32
    %98 = vector.broadcast %cst_35 : f32 to vector<2x32xf32>
    %99 = arith.addf %98, %97 : vector<2x32xf32>
    %100 = arith.divf %98, %99 : vector<2x32xf32>
    %101 = vector.extract_strided_slice %89 {offsets = [0, 32], sizes = [2, 32], strides = [1, 1]} : vector<2x96xf32> to vector<2x32xf32>
    %102 = vector.extract_strided_slice %92 {offsets = [0, 32], sizes = [2, 32], strides = [1, 1]} : vector<2x96xf32> to vector<2x32xf32>
    %103 = arith.addf %101, %102 : vector<2x32xf32>
    %104 = arith.negf %103 : vector<2x32xf32>
    %105 = math.exp %104 : vector<2x32xf32>
    %cst_36 = arith.constant 1.000000e+00 : f32
    %106 = vector.broadcast %cst_36 : f32 to vector<2x32xf32>
    %107 = arith.addf %106, %105 : vector<2x32xf32>
    %108 = arith.divf %106, %107 : vector<2x32xf32>
    %109 = vector.extract_strided_slice %89 {offsets = [0, 64], sizes = [2, 32], strides = [1, 1]} : vector<2x96xf32> to vector<2x32xf32>
    %110 = vector.extract_strided_slice %92 {offsets = [0, 64], sizes = [2, 32], strides = [1, 1]} : vector<2x96xf32> to vector<2x32xf32>
    %111 = arith.mulf %100, %110 : vector<2x32xf32>
    %112 = arith.addf %109, %111 : vector<2x32xf32>
    %113 = math.tanh %112 : vector<2x32xf32>
    %cst_37 = arith.constant 1.000000e+00 : f32
    %114 = vector.broadcast %cst_37 : f32 to vector<2x32xf32>
    %115 = arith.subf %114, %108 : vector<2x32xf32>
    %116 = arith.mulf %115, %113 : vector<2x32xf32>
    %117 = arith.mulf %108, %50 : vector<2x32xf32>
    %118 = arith.addf %116, %117 : vector<2x32xf32>
    %119 = vector.extract_strided_slice %13 {offsets = [14, 0, 0], sizes = [1, 2, 96], strides = [1, 1, 1]} : vector<16x2x96xf32> to vector<1x2x96xf32>
    %120 = vector.shape_cast %119 : vector<1x2x96xf32> to vector<2x96xf32>
    %cst_38 = arith.constant dense<0.000000e+00> : vector<2x96xf32>
    %121 = tpu.matmul %81, %16, %cst_38 {dimension_numbers = #tpu.dot_dimension_numbers<[1], [0], [0], [1], [0, 0, 1, 1], [], []>} : vector<2x32xf32>, vector<32x96xf32>, vector<2x96xf32> -> vector<2x96xf32>
    %122 = vector.broadcast %17 : vector<1x96xf32> to vector<2x96xf32>
    %123 = arith.addf %121, %122 : vector<2x96xf32>
    %124 = vector.extract_strided_slice %120 {offsets = [0, 0], sizes = [2, 32], strides = [1, 1]} : vector<2x96xf32> to vector<2x32xf32>
    %125 = vector.extract_strided_slice %123 {offsets = [0, 0], sizes = [2, 32], strides = [1, 1]} : vector<2x96xf32> to vector<2x32xf32>
    %126 = arith.addf %124, %125 : vector<2x32xf32>
    %127 = arith.negf %126 : vector<2x32xf32>
    %128 = math.exp %127 : vector<2x32xf32>
    %cst_39 = arith.constant 1.000000e+00 : f32
    %129 = vector.broadcast %cst_39 : f32 to vector<2x32xf32>
    %130 = arith.addf %129, %128 : vector<2x32xf32>
    %131 = arith.divf %129, %130 : vector<2x32xf32>
    %132 = vector.extract_strided_slice %120 {offsets = [0, 32], sizes = [2, 32], strides = [1, 1]} : vector<2x96xf32> to vector<2x32xf32>
    %133 = vector.extract_strided_slice %123 {offsets = [0, 32], sizes = [2, 32], strides = [1, 1]} : vector<2x96xf32> to vector<2x32xf32>
    %134 = arith.addf %132, %133 : vector<2x32xf32>
    %135 = arith.negf %134 : vector<2x32xf32>
    %136 = math.exp %135 : vector<2x32xf32>
    %cst_40 = arith.constant 1.000000e+00 : f32
    %137 = vector.broadcast %cst_40 : f32 to vector<2x32xf32>
    %138 = arith.addf %137, %136 : vector<2x32xf32>
    %139 = arith.divf %137, %138 : vector<2x32xf32>
    %140 = vector.extract_strided_slice %120 {offsets = [0, 64], sizes = [2, 32], strides = [1, 1]} : vector<2x96xf32> to vector<2x32xf32>
    %141 = vector.extract_strided_slice %123 {offsets = [0, 64], sizes = [2, 32], strides = [1, 1]} : vector<2x96xf32> to vector<2x32xf32>
    %142 = arith.mulf %131, %141 : vector<2x32xf32>
    %143 = arith.addf %140, %142 : vector<2x32xf32>
    %144 = math.tanh %143 : vector<2x32xf32>
    %cst_41 = arith.constant 1.000000e+00 : f32
    %145 = vector.broadcast %cst_41 : f32 to vector<2x32xf32>
    %146 = arith.subf %145, %139 : vector<2x32xf32>
    %147 = arith.mulf %146, %144 : vector<2x32xf32>
    %148 = arith.mulf %139, %81 : vector<2x32xf32>
    %149 = arith.addf %147, %148 : vector<2x32xf32>
    %c1 = arith.constant 1 : index
    %c0_42 = arith.constant 0 : index
    %c0_43 = arith.constant 0 : index
    %150 = vector.load %arg16[%c1, %c0_42, %c0_43] : memref<16x2x32xf32, #tpu.memory_space<vmem>>, vector<1x2x32xf32>
    %151 = vector.shape_cast %150 : vector<1x2x32xf32> to vector<2x32xf32>
    %152 = vector.shape_cast %118 : vector<2x32xf32> to vector<1x2x32xf32>
    tpu.vector_store %arg16[%c1, %c0_42, %c0_43], %152 {strides = array<i32>} : memref<16x2x32xf32, #tpu.memory_space<vmem>>, vector<1x2x32xf32>,
    %c14 = arith.constant 14 : index
    %c0_44 = arith.constant 0 : index
    %c0_45 = arith.constant 0 : index
    %153 = vector.load %arg17[%c14, %c0_44, %c0_45] : memref<16x2x32xf32, #tpu.memory_space<vmem>>, vector<1x2x32xf32>
    %154 = vector.shape_cast %153 : vector<1x2x32xf32> to vector<2x32xf32>
    %155 = vector.shape_cast %149 : vector<2x32xf32> to vector<1x2x32xf32>
    tpu.vector_store %arg17[%c14, %c0_44, %c0_45], %155 {strides = array<i32>} : memref<16x2x32xf32, #tpu.memory_space<vmem>>, vector<1x2x32xf32>,
    %156 = vector.extract_strided_slice %7 {offsets = [2, 0, 0], sizes = [1, 2, 96], strides = [1, 1, 1]} : vector<16x2x96xf32> to vector<1x2x96xf32>
    %157 = vector.shape_cast %156 : vector<1x2x96xf32> to vector<2x96xf32>
    %cst_46 = arith.constant dense<0.000000e+00> : vector<2x96xf32>
    %158 = tpu.matmul %118, %14, %cst_46 {dimension_numbers = #tpu.dot_dimension_numbers<[1], [0], [0], [1], [0, 0, 1, 1], [], []>} : vector<2x32xf32>, vector<32x96xf32>, vector<2x96xf32> -> vector<2x96xf32>
    %159 = vector.broadcast %15 : vector<1x96xf32> to vector<2x96xf32>
    %160 = arith.addf %158, %159 : vector<2x96xf32>
    %161 = vector.extract_strided_slice %157 {offsets = [0, 0], sizes = [2, 32], strides = [1, 1]} : vector<2x96xf32> to vector<2x32xf32>
    %162 = vector.extract_strided_slice %160 {offsets = [0, 0], sizes = [2, 32], strides = [1, 1]} : vector<2x96xf32> to vector<2x32xf32>
    %163 = arith.addf %161, %162 : vector<2x32xf32>
    %164 = arith.negf %163 : vector<2x32xf32>
    %165 = math.exp %164 : vector<2x32xf32>
    %cst_47 = arith.constant 1.000000e+00 : f32
    %166 = vector.broadcast %cst_47 : f32 to vector<2x32xf32>
    %167 = arith.addf %166, %165 : vector<2x32xf32>
    %168 = arith.divf %166, %167 : vector<2x32xf32>
    %169 = vector.extract_strided_slice %157 {offsets = [0, 32], sizes = [2, 32], strides = [1, 1]} : vector<2x96xf32> to vector<2x32xf32>
    %170 = vector.extract_strided_slice %160 {offsets = [0, 32], sizes = [2, 32], strides = [1, 1]} : vector<2x96xf32> to vector<2x32xf32>
    %171 = arith.addf %169, %170 : vector<2x32xf32>
    %172 = arith.negf %171 : vector<2x32xf32>
    %173 = math.exp %172 : vector<2x32xf32>
    %cst_48 = arith.constant 1.000000e+00 : f32
    %174 = vector.broadcast %cst_48 : f32 to vector<2x32xf32>
    %175 = arith.addf %174, %173 : vector<2x32xf32>
    %176 = arith.divf %174, %175 : vector<2x32xf32>
    %177 = vector.extract_strided_slice %157 {offsets = [0, 64], sizes = [2, 32], strides = [1, 1]} : vector<2x96xf32> to vector<2x32xf32>
    %178 = vector.extract_strided_slice %160 {offsets = [0, 64], sizes = [2, 32], strides = [1, 1]} : vector<2x96xf32> to vector<2x32xf32>
    %179 = arith.mulf %168, %178 : vector<2x32xf32>
    %180 = arith.addf %177, %179 : vector<2x32xf32>
    %181 = math.tanh %180 : vector<2x32xf32>
    %cst_49 = arith.constant 1.000000e+00 : f32
    %182 = vector.broadcast %cst_49 : f32 to vector<2x32xf32>
    %183 = arith.subf %182, %176 : vector<2x32xf32>
    %184 = arith.mulf %183, %181 : vector<2x32xf32>
    %185 = arith.mulf %176, %118 : vector<2x32xf32>
    %186 = arith.addf %184, %185 : vector<2x32xf32>
    %187 = vector.extract_strided_slice %13 {offsets = [13, 0, 0], sizes = [1, 2, 96], strides = [1, 1, 1]} : vector<16x2x96xf32> to vector<1x2x96xf32>
    %188 = vector.shape_cast %187 : vector<1x2x96xf32> to vector<2x96xf32>
    %cst_50 = arith.constant dense<0.000000e+00> : vector<2x96xf32>
    %189 = tpu.matmul %149, %16, %cst_50 {dimension_numbers = #tpu.dot_dimension_numbers<[1], [0], [0], [1], [0, 0, 1, 1], [], []>} : vector<2x32xf32>, vector<32x96xf32>, vector<2x96xf32> -> vector<2x96xf32>
    %190 = vector.broadcast %17 : vector<1x96xf32> to vector<2x96xf32>
    %191 = arith.addf %189, %190 : vector<2x96xf32>
    %192 = vector.extract_strided_slice %188 {offsets = [0, 0], sizes = [2, 32], strides = [1, 1]} : vector<2x96xf32> to vector<2x32xf32>
    %193 = vector.extract_strided_slice %191 {offsets = [0, 0], sizes = [2, 32], strides = [1, 1]} : vector<2x96xf32> to vector<2x32xf32>
    %194 = arith.addf %192, %193 : vector<2x32xf32>
    %195 = arith.negf %194 : vector<2x32xf32>
    %196 = math.exp %195 : vector<2x32xf32>
    %cst_51 = arith.constant 1.000000e+00 : f32
    %197 = vector.broadcast %cst_51 : f32 to vector<2x32xf32>
    %198 = arith.addf %197, %196 : vector<2x32xf32>
    %199 = arith.divf %197, %198 : vector<2x32xf32>
    %200 = vector.extract_strided_slice %188 {offsets = [0, 32], sizes = [2, 32], strides = [1, 1]} : vector<2x96xf32> to vector<2x32xf32>
    %201 = vector.extract_strided_slice %191 {offsets = [0, 32], sizes = [2, 32], strides = [1, 1]} : vector<2x96xf32> to vector<2x32xf32>
    %202 = arith.addf %200, %201 : vector<2x32xf32>
    %203 = arith.negf %202 : vector<2x32xf32>
    %204 = math.exp %203 : vector<2x32xf32>
    %cst_52 = arith.constant 1.000000e+00 : f32
    %205 = vector.broadcast %cst_52 : f32 to vector<2x32xf32>
    %206 = arith.addf %205, %204 : vector<2x32xf32>
    %207 = arith.divf %205, %206 : vector<2x32xf32>
    %208 = vector.extract_strided_slice %188 {offsets = [0, 64], sizes = [2, 32], strides = [1, 1]} : vector<2x96xf32> to vector<2x32xf32>
    %209 = vector.extract_strided_slice %191 {offsets = [0, 64], sizes = [2, 32], strides = [1, 1]} : vector<2x96xf32> to vector<2x32xf32>
    %210 = arith.mulf %199, %209 : vector<2x32xf32>
    %211 = arith.addf %208, %210 : vector<2x32xf32>
    %212 = math.tanh %211 : vector<2x32xf32>
    %cst_53 = arith.constant 1.000000e+00 : f32
    %213 = vector.broadcast %cst_53 : f32 to vector<2x32xf32>
    %214 = arith.subf %213, %207 : vector<2x32xf32>
    %215 = arith.mulf %214, %212 : vector<2x32xf32>
    %216 = arith.mulf %207, %149 : vector<2x32xf32>
    %217 = arith.addf %215, %216 : vector<2x32xf32>
    %c2 = arith.constant 2 : index
    %c0_54 = arith.constant 0 : index
    %c0_55 = arith.constant 0 : index
    %218 = vector.load %arg16[%c2, %c0_54, %c0_55] : memref<16x2x32xf32, #tpu.memory_space<vmem>>, vector<1x2x32xf32>
    %219 = vector.shape_cast %218 : vector<1x2x32xf32> to vector<2x32xf32>
    %220 = vector.shape_cast %186 : vector<2x32xf32> to vector<1x2x32xf32>
    tpu.vector_store %arg16[%c2, %c0_54, %c0_55], %220 {strides = array<i32>} : memref<16x2x32xf32, #tpu.memory_space<vmem>>, vector<1x2x32xf32>,
    %c13 = arith.constant 13 : index
    %c0_56 = arith.constant 0 : index
    %c0_57 = arith.constant 0 : index
    %221 = vector.load %arg17[%c13, %c0_56, %c0_57] : memref<16x2x32xf32, #tpu.memory_space<vmem>>, vector<1x2x32xf32>
    %222 = vector.shape_cast %221 : vector<1x2x32xf32> to vector<2x32xf32>
    %223 = vector.shape_cast %217 : vector<2x32xf32> to vector<1x2x32xf32>
    tpu.vector_store %arg17[%c13, %c0_56, %c0_57], %223 {strides = array<i32>} : memref<16x2x32xf32, #tpu.memory_space<vmem>>, vector<1x2x32xf32>,
    %224 = vector.extract_strided_slice %7 {offsets = [3, 0, 0], sizes = [1, 2, 96], strides = [1, 1, 1]} : vector<16x2x96xf32> to vector<1x2x96xf32>
    %225 = vector.shape_cast %224 : vector<1x2x96xf32> to vector<2x96xf32>
    %cst_58 = arith.constant dense<0.000000e+00> : vector<2x96xf32>
    %226 = tpu.matmul %186, %14, %cst_58 {dimension_numbers = #tpu.dot_dimension_numbers<[1], [0], [0], [1], [0, 0, 1, 1], [], []>} : vector<2x32xf32>, vector<32x96xf32>, vector<2x96xf32> -> vector<2x96xf32>
    %227 = vector.broadcast %15 : vector<1x96xf32> to vector<2x96xf32>
    %228 = arith.addf %226, %227 : vector<2x96xf32>
    %229 = vector.extract_strided_slice %225 {offsets = [0, 0], sizes = [2, 32], strides = [1, 1]} : vector<2x96xf32> to vector<2x32xf32>
    %230 = vector.extract_strided_slice %228 {offsets = [0, 0], sizes = [2, 32], strides = [1, 1]} : vector<2x96xf32> to vector<2x32xf32>
    %231 = arith.addf %229, %230 : vector<2x32xf32>
    %232 = arith.negf %231 : vector<2x32xf32>
    %233 = math.exp %232 : vector<2x32xf32>
    %cst_59 = arith.constant 1.000000e+00 : f32
    %234 = vector.broadcast %cst_59 : f32 to vector<2x32xf32>
    %235 = arith.addf %234, %233 : vector<2x32xf32>
    %236 = arith.divf %234, %235 : vector<2x32xf32>
    %237 = vector.extract_strided_slice %225 {offsets = [0, 32], sizes = [2, 32], strides = [1, 1]} : vector<2x96xf32> to vector<2x32xf32>
    %238 = vector.extract_strided_slice %228 {offsets = [0, 32], sizes = [2, 32], strides = [1, 1]} : vector<2x96xf32> to vector<2x32xf32>
    %239 = arith.addf %237, %238 : vector<2x32xf32>
    %240 = arith.negf %239 : vector<2x32xf32>
    %241 = math.exp %240 : vector<2x32xf32>
    %cst_60 = arith.constant 1.000000e+00 : f32
    %242 = vector.broadcast %cst_60 : f32 to vector<2x32xf32>
    %243 = arith.addf %242, %241 : vector<2x32xf32>
    %244 = arith.divf %242, %243 : vector<2x32xf32>
    %245 = vector.extract_strided_slice %225 {offsets = [0, 64], sizes = [2, 32], strides = [1, 1]} : vector<2x96xf32> to vector<2x32xf32>
    %246 = vector.extract_strided_slice %228 {offsets = [0, 64], sizes = [2, 32], strides = [1, 1]} : vector<2x96xf32> to vector<2x32xf32>
    %247 = arith.mulf %236, %246 : vector<2x32xf32>
    %248 = arith.addf %245, %247 : vector<2x32xf32>
    %249 = math.tanh %248 : vector<2x32xf32>
    %cst_61 = arith.constant 1.000000e+00 : f32
    %250 = vector.broadcast %cst_61 : f32 to vector<2x32xf32>
    %251 = arith.subf %250, %244 : vector<2x32xf32>
    %252 = arith.mulf %251, %249 : vector<2x32xf32>
    %253 = arith.mulf %244, %186 : vector<2x32xf32>
    %254 = arith.addf %252, %253 : vector<2x32xf32>
    %255 = vector.extract_strided_slice %13 {offsets = [12, 0, 0], sizes = [1, 2, 96], strides = [1, 1, 1]} : vector<16x2x96xf32> to vector<1x2x96xf32>
    %256 = vector.shape_cast %255 : vector<1x2x96xf32> to vector<2x96xf32>
    %cst_62 = arith.constant dense<0.000000e+00> : vector<2x96xf32>
    %257 = tpu.matmul %217, %16, %cst_62 {dimension_numbers = #tpu.dot_dimension_numbers<[1], [0], [0], [1], [0, 0, 1, 1], [], []>} : vector<2x32xf32>, vector<32x96xf32>, vector<2x96xf32> -> vector<2x96xf32>
    %258 = vector.broadcast %17 : vector<1x96xf32> to vector<2x96xf32>
    %259 = arith.addf %257, %258 : vector<2x96xf32>
    %260 = vector.extract_strided_slice %256 {offsets = [0, 0], sizes = [2, 32], strides = [1, 1]} : vector<2x96xf32> to vector<2x32xf32>
    %261 = vector.extract_strided_slice %259 {offsets = [0, 0], sizes = [2, 32], strides = [1, 1]} : vector<2x96xf32> to vector<2x32xf32>
    %262 = arith.addf %260, %261 : vector<2x32xf32>
    %263 = arith.negf %262 : vector<2x32xf32>
    %264 = math.exp %263 : vector<2x32xf32>
    %cst_63 = arith.constant 1.000000e+00 : f32
    %265 = vector.broadcast %cst_63 : f32 to vector<2x32xf32>
    %266 = arith.addf %265, %264 : vector<2x32xf32>
    %267 = arith.divf %265, %266 : vector<2x32xf32>
    %268 = vector.extract_strided_slice %256 {offsets = [0, 32], sizes = [2, 32], strides = [1, 1]} : vector<2x96xf32> to vector<2x32xf32>
    %269 = vector.extract_strided_slice %259 {offsets = [0, 32], sizes = [2, 32], strides = [1, 1]} : vector<2x96xf32> to vector<2x32xf32>
    %270 = arith.addf %268, %269 : vector<2x32xf32>
    %271 = arith.negf %270 : vector<2x32xf32>
    %272 = math.exp %271 : vector<2x32xf32>
    %cst_64 = arith.constant 1.000000e+00 : f32
    %273 = vector.broadcast %cst_64 : f32 to vector<2x32xf32>
    %274 = arith.addf %273, %272 : vector<2x32xf32>
    %275 = arith.divf %273, %274 : vector<2x32xf32>
    %276 = vector.extract_strided_slice %256 {offsets = [0, 64], sizes = [2, 32], strides = [1, 1]} : vector<2x96xf32> to vector<2x32xf32>
    %277 = vector.extract_strided_slice %259 {offsets = [0, 64], sizes = [2, 32], strides = [1, 1]} : vector<2x96xf32> to vector<2x32xf32>
    %278 = arith.mulf %267, %277 : vector<2x32xf32>
    %279 = arith.addf %276, %278 : vector<2x32xf32>
    %280 = math.tanh %279 : vector<2x32xf32>
    %cst_65 = arith.constant 1.000000e+00 : f32
    %281 = vector.broadcast %cst_65 : f32 to vector<2x32xf32>
    %282 = arith.subf %281, %275 : vector<2x32xf32>
    %283 = arith.mulf %282, %280 : vector<2x32xf32>
    %284 = arith.mulf %275, %217 : vector<2x32xf32>
    %285 = arith.addf %283, %284 : vector<2x32xf32>
    %c3 = arith.constant 3 : index
    %c0_66 = arith.constant 0 : index
    %c0_67 = arith.constant 0 : index
    %286 = vector.load %arg16[%c3, %c0_66, %c0_67] : memref<16x2x32xf32, #tpu.memory_space<vmem>>, vector<1x2x32xf32>
    %287 = vector.shape_cast %286 : vector<1x2x32xf32> to vector<2x32xf32>
    %288 = vector.shape_cast %254 : vector<2x32xf32> to vector<1x2x32xf32>
    tpu.vector_store %arg16[%c3, %c0_66, %c0_67], %288 {strides = array<i32>} : memref<16x2x32xf32, #tpu.memory_space<vmem>>, vector<1x2x32xf32>,
    %c12 = arith.constant 12 : index
    %c0_68 = arith.constant 0 : index
    %c0_69 = arith.constant 0 : index
    %289 = vector.load %arg17[%c12, %c0_68, %c0_69] : memref<16x2x32xf32, #tpu.memory_space<vmem>>, vector<1x2x32xf32>
    %290 = vector.shape_cast %289 : vector<1x2x32xf32> to vector<2x32xf32>
    %291 = vector.shape_cast %285 : vector<2x32xf32> to vector<1x2x32xf32>
    tpu.vector_store %arg17[%c12, %c0_68, %c0_69], %291 {strides = array<i32>} : memref<16x2x32xf32, #tpu.memory_space<vmem>>, vector<1x2x32xf32>,
    %292 = vector.extract_strided_slice %7 {offsets = [4, 0, 0], sizes = [1, 2, 96], strides = [1, 1, 1]} : vector<16x2x96xf32> to vector<1x2x96xf32>
    %293 = vector.shape_cast %292 : vector<1x2x96xf32> to vector<2x96xf32>
    %cst_70 = arith.constant dense<0.000000e+00> : vector<2x96xf32>
    %294 = tpu.matmul %254, %14, %cst_70 {dimension_numbers = #tpu.dot_dimension_numbers<[1], [0], [0], [1], [0, 0, 1, 1], [], []>} : vector<2x32xf32>, vector<32x96xf32>, vector<2x96xf32> -> vector<2x96xf32>
    %295 = vector.broadcast %15 : vector<1x96xf32> to vector<2x96xf32>
    %296 = arith.addf %294, %295 : vector<2x96xf32>
    %297 = vector.extract_strided_slice %293 {offsets = [0, 0], sizes = [2, 32], strides = [1, 1]} : vector<2x96xf32> to vector<2x32xf32>
    %298 = vector.extract_strided_slice %296 {offsets = [0, 0], sizes = [2, 32], strides = [1, 1]} : vector<2x96xf32> to vector<2x32xf32>
    %299 = arith.addf %297, %298 : vector<2x32xf32>
    %300 = arith.negf %299 : vector<2x32xf32>
    %301 = math.exp %300 : vector<2x32xf32>
    %cst_71 = arith.constant 1.000000e+00 : f32
    %302 = vector.broadcast %cst_71 : f32 to vector<2x32xf32>
    %303 = arith.addf %302, %301 : vector<2x32xf32>
    %304 = arith.divf %302, %303 : vector<2x32xf32>
    %305 = vector.extract_strided_slice %293 {offsets = [0, 32], sizes = [2, 32], strides = [1, 1]} : vector<2x96xf32> to vector<2x32xf32>
    %306 = vector.extract_strided_slice %296 {offsets = [0, 32], sizes = [2, 32], strides = [1, 1]} : vector<2x96xf32> to vector<2x32xf32>
    %307 = arith.addf %305, %306 : vector<2x32xf32>
    %308 = arith.negf %307 : vector<2x32xf32>
    %309 = math.exp %308 : vector<2x32xf32>
    %cst_72 = arith.constant 1.000000e+00 : f32
    %310 = vector.broadcast %cst_72 : f32 to vector<2x32xf32>
    %311 = arith.addf %310, %309 : vector<2x32xf32>
    %312 = arith.divf %310, %311 : vector<2x32xf32>
    %313 = vector.extract_strided_slice %293 {offsets = [0, 64], sizes = [2, 32], strides = [1, 1]} : vector<2x96xf32> to vector<2x32xf32>
    %314 = vector.extract_strided_slice %296 {offsets = [0, 64], sizes = [2, 32], strides = [1, 1]} : vector<2x96xf32> to vector<2x32xf32>
    %315 = arith.mulf %304, %314 : vector<2x32xf32>
    %316 = arith.addf %313, %315 : vector<2x32xf32>
    %317 = math.tanh %316 : vector<2x32xf32>
    %cst_73 = arith.constant 1.000000e+00 : f32
    %318 = vector.broadcast %cst_73 : f32 to vector<2x32xf32>
    %319 = arith.subf %318, %312 : vector<2x32xf32>
    %320 = arith.mulf %319, %317 : vector<2x32xf32>
    %321 = arith.mulf %312, %254 : vector<2x32xf32>
    %322 = arith.addf %320, %321 : vector<2x32xf32>
    %323 = vector.extract_strided_slice %13 {offsets = [11, 0, 0], sizes = [1, 2, 96], strides = [1, 1, 1]} : vector<16x2x96xf32> to vector<1x2x96xf32>
    %324 = vector.shape_cast %323 : vector<1x2x96xf32> to vector<2x96xf32>
    %cst_74 = arith.constant dense<0.000000e+00> : vector<2x96xf32>
    %325 = tpu.matmul %285, %16, %cst_74 {dimension_numbers = #tpu.dot_dimension_numbers<[1], [0], [0], [1], [0, 0, 1, 1], [], []>} : vector<2x32xf32>, vector<32x96xf32>, vector<2x96xf32> -> vector<2x96xf32>
    %326 = vector.broadcast %17 : vector<1x96xf32> to vector<2x96xf32>
    %327 = arith.addf %325, %326 : vector<2x96xf32>
    %328 = vector.extract_strided_slice %324 {offsets = [0, 0], sizes = [2, 32], strides = [1, 1]} : vector<2x96xf32> to vector<2x32xf32>
    %329 = vector.extract_strided_slice %327 {offsets = [0, 0], sizes = [2, 32], strides = [1, 1]} : vector<2x96xf32> to vector<2x32xf32>
    %330 = arith.addf %328, %329 : vector<2x32xf32>
    %331 = arith.negf %330 : vector<2x32xf32>
    %332 = math.exp %331 : vector<2x32xf32>
    %cst_75 = arith.constant 1.000000e+00 : f32
    %333 = vector.broadcast %cst_75 : f32 to vector<2x32xf32>
    %334 = arith.addf %333, %332 : vector<2x32xf32>
    %335 = arith.divf %333, %334 : vector<2x32xf32>
    %336 = vector.extract_strided_slice %324 {offsets = [0, 32], sizes = [2, 32], strides = [1, 1]} : vector<2x96xf32> to vector<2x32xf32>
    %337 = vector.extract_strided_slice %327 {offsets = [0, 32], sizes = [2, 32], strides = [1, 1]} : vector<2x96xf32> to vector<2x32xf32>
    %338 = arith.addf %336, %337 : vector<2x32xf32>
    %339 = arith.negf %338 : vector<2x32xf32>
    %340 = math.exp %339 : vector<2x32xf32>
    %cst_76 = arith.constant 1.000000e+00 : f32
    %341 = vector.broadcast %cst_76 : f32 to vector<2x32xf32>
    %342 = arith.addf %341, %340 : vector<2x32xf32>
    %343 = arith.divf %341, %342 : vector<2x32xf32>
    %344 = vector.extract_strided_slice %324 {offsets = [0, 64], sizes = [2, 32], strides = [1, 1]} : vector<2x96xf32> to vector<2x32xf32>
    %345 = vector.extract_strided_slice %327 {offsets = [0, 64], sizes = [2, 32], strides = [1, 1]} : vector<2x96xf32> to vector<2x32xf32>
    %346 = arith.mulf %335, %345 : vector<2x32xf32>
    %347 = arith.addf %344, %346 : vector<2x32xf32>
    %348 = math.tanh %347 : vector<2x32xf32>
    %cst_77 = arith.constant 1.000000e+00 : f32
    %349 = vector.broadcast %cst_77 : f32 to vector<2x32xf32>
    %350 = arith.subf %349, %343 : vector<2x32xf32>
    %351 = arith.mulf %350, %348 : vector<2x32xf32>
    %352 = arith.mulf %343, %285 : vector<2x32xf32>
    %353 = arith.addf %351, %352 : vector<2x32xf32>
    %c4 = arith.constant 4 : index
    %c0_78 = arith.constant 0 : index
    %c0_79 = arith.constant 0 : index
    %354 = vector.load %arg16[%c4, %c0_78, %c0_79] : memref<16x2x32xf32, #tpu.memory_space<vmem>>, vector<1x2x32xf32>
    %355 = vector.shape_cast %354 : vector<1x2x32xf32> to vector<2x32xf32>
    %356 = vector.shape_cast %322 : vector<2x32xf32> to vector<1x2x32xf32>
    tpu.vector_store %arg16[%c4, %c0_78, %c0_79], %356 {strides = array<i32>} : memref<16x2x32xf32, #tpu.memory_space<vmem>>, vector<1x2x32xf32>,
    %c11 = arith.constant 11 : index
    %c0_80 = arith.constant 0 : index
    %c0_81 = arith.constant 0 : index
    %357 = vector.load %arg17[%c11, %c0_80, %c0_81] : memref<16x2x32xf32, #tpu.memory_space<vmem>>, vector<1x2x32xf32>
    %358 = vector.shape_cast %357 : vector<1x2x32xf32> to vector<2x32xf32>
    %359 = vector.shape_cast %353 : vector<2x32xf32> to vector<1x2x32xf32>
    tpu.vector_store %arg17[%c11, %c0_80, %c0_81], %359 {strides = array<i32>} : memref<16x2x32xf32, #tpu.memory_space<vmem>>, vector<1x2x32xf32>,
    %360 = vector.extract_strided_slice %7 {offsets = [5, 0, 0], sizes = [1, 2, 96], strides = [1, 1, 1]} : vector<16x2x96xf32> to vector<1x2x96xf32>
    %361 = vector.shape_cast %360 : vector<1x2x96xf32> to vector<2x96xf32>
    %cst_82 = arith.constant dense<0.000000e+00> : vector<2x96xf32>
    %362 = tpu.matmul %322, %14, %cst_82 {dimension_numbers = #tpu.dot_dimension_numbers<[1], [0], [0], [1], [0, 0, 1, 1], [], []>} : vector<2x32xf32>, vector<32x96xf32>, vector<2x96xf32> -> vector<2x96xf32>
    %363 = vector.broadcast %15 : vector<1x96xf32> to vector<2x96xf32>
    %364 = arith.addf %362, %363 : vector<2x96xf32>
    %365 = vector.extract_strided_slice %361 {offsets = [0, 0], sizes = [2, 32], strides = [1, 1]} : vector<2x96xf32> to vector<2x32xf32>
    %366 = vector.extract_strided_slice %364 {offsets = [0, 0], sizes = [2, 32], strides = [1, 1]} : vector<2x96xf32> to vector<2x32xf32>
    %367 = arith.addf %365, %366 : vector<2x32xf32>
    %368 = arith.negf %367 : vector<2x32xf32>
    %369 = math.exp %368 : vector<2x32xf32>
    %cst_83 = arith.constant 1.000000e+00 : f32
    %370 = vector.broadcast %cst_83 : f32 to vector<2x32xf32>
    %371 = arith.addf %370, %369 : vector<2x32xf32>
    %372 = arith.divf %370, %371 : vector<2x32xf32>
    %373 = vector.extract_strided_slice %361 {offsets = [0, 32], sizes = [2, 32], strides = [1, 1]} : vector<2x96xf32> to vector<2x32xf32>
    %374 = vector.extract_strided_slice %364 {offsets = [0, 32], sizes = [2, 32], strides = [1, 1]} : vector<2x96xf32> to vector<2x32xf32>
    %375 = arith.addf %373, %374 : vector<2x32xf32>
    %376 = arith.negf %375 : vector<2x32xf32>
    %377 = math.exp %376 : vector<2x32xf32>
    %cst_84 = arith.constant 1.000000e+00 : f32
    %378 = vector.broadcast %cst_84 : f32 to vector<2x32xf32>
    %379 = arith.addf %378, %377 : vector<2x32xf32>
    %380 = arith.divf %378, %379 : vector<2x32xf32>
    %381 = vector.extract_strided_slice %361 {offsets = [0, 64], sizes = [2, 32], strides = [1, 1]} : vector<2x96xf32> to vector<2x32xf32>
    %382 = vector.extract_strided_slice %364 {offsets = [0, 64], sizes = [2, 32], strides = [1, 1]} : vector<2x96xf32> to vector<2x32xf32>
    %383 = arith.mulf %372, %382 : vector<2x32xf32>
    %384 = arith.addf %381, %383 : vector<2x32xf32>
    %385 = math.tanh %384 : vector<2x32xf32>
    %cst_85 = arith.constant 1.000000e+00 : f32
    %386 = vector.broadcast %cst_85 : f32 to vector<2x32xf32>
    %387 = arith.subf %386, %380 : vector<2x32xf32>
    %388 = arith.mulf %387, %385 : vector<2x32xf32>
    %389 = arith.mulf %380, %322 : vector<2x32xf32>
    %390 = arith.addf %388, %389 : vector<2x32xf32>
    %391 = vector.extract_strided_slice %13 {offsets = [10, 0, 0], sizes = [1, 2, 96], strides = [1, 1, 1]} : vector<16x2x96xf32> to vector<1x2x96xf32>
    %392 = vector.shape_cast %391 : vector<1x2x96xf32> to vector<2x96xf32>
    %cst_86 = arith.constant dense<0.000000e+00> : vector<2x96xf32>
    %393 = tpu.matmul %353, %16, %cst_86 {dimension_numbers = #tpu.dot_dimension_numbers<[1], [0], [0], [1], [0, 0, 1, 1], [], []>} : vector<2x32xf32>, vector<32x96xf32>, vector<2x96xf32> -> vector<2x96xf32>
    %394 = vector.broadcast %17 : vector<1x96xf32> to vector<2x96xf32>
    %395 = arith.addf %393, %394 : vector<2x96xf32>
    %396 = vector.extract_strided_slice %392 {offsets = [0, 0], sizes = [2, 32], strides = [1, 1]} : vector<2x96xf32> to vector<2x32xf32>
    %397 = vector.extract_strided_slice %395 {offsets = [0, 0], sizes = [2, 32], strides = [1, 1]} : vector<2x96xf32> to vector<2x32xf32>
    %398 = arith.addf %396, %397 : vector<2x32xf32>
    %399 = arith.negf %398 : vector<2x32xf32>
    %400 = math.exp %399 : vector<2x32xf32>
    %cst_87 = arith.constant 1.000000e+00 : f32
    %401 = vector.broadcast %cst_87 : f32 to vector<2x32xf32>
    %402 = arith.addf %401, %400 : vector<2x32xf32>
    %403 = arith.divf %401, %402 : vector<2x32xf32>
    %404 = vector.extract_strided_slice %392 {offsets = [0, 32], sizes = [2, 32], strides = [1, 1]} : vector<2x96xf32> to vector<2x32xf32>
    %405 = vector.extract_strided_slice %395 {offsets = [0, 32], sizes = [2, 32], strides = [1, 1]} : vector<2x96xf32> to vector<2x32xf32>
    %406 = arith.addf %404, %405 : vector<2x32xf32>
    %407 = arith.negf %406 : vector<2x32xf32>
    %408 = math.exp %407 : vector<2x32xf32>
    %cst_88 = arith.constant 1.000000e+00 : f32
    %409 = vector.broadcast %cst_88 : f32 to vector<2x32xf32>
    %410 = arith.addf %409, %408 : vector<2x32xf32>
    %411 = arith.divf %409, %410 : vector<2x32xf32>
    %412 = vector.extract_strided_slice %392 {offsets = [0, 64], sizes = [2, 32], strides = [1, 1]} : vector<2x96xf32> to vector<2x32xf32>
    %413 = vector.extract_strided_slice %395 {offsets = [0, 64], sizes = [2, 32], strides = [1, 1]} : vector<2x96xf32> to vector<2x32xf32>
    %414 = arith.mulf %403, %413 : vector<2x32xf32>
    %415 = arith.addf %412, %414 : vector<2x32xf32>
    %416 = math.tanh %415 : vector<2x32xf32>
    %cst_89 = arith.constant 1.000000e+00 : f32
    %417 = vector.broadcast %cst_89 : f32 to vector<2x32xf32>
    %418 = arith.subf %417, %411 : vector<2x32xf32>
    %419 = arith.mulf %418, %416 : vector<2x32xf32>
    %420 = arith.mulf %411, %353 : vector<2x32xf32>
    %421 = arith.addf %419, %420 : vector<2x32xf32>
    %c5 = arith.constant 5 : index
    %c0_90 = arith.constant 0 : index
    %c0_91 = arith.constant 0 : index
    %422 = vector.load %arg16[%c5, %c0_90, %c0_91] : memref<16x2x32xf32, #tpu.memory_space<vmem>>, vector<1x2x32xf32>
    %423 = vector.shape_cast %422 : vector<1x2x32xf32> to vector<2x32xf32>
    %424 = vector.shape_cast %390 : vector<2x32xf32> to vector<1x2x32xf32>
    tpu.vector_store %arg16[%c5, %c0_90, %c0_91], %424 {strides = array<i32>} : memref<16x2x32xf32, #tpu.memory_space<vmem>>, vector<1x2x32xf32>,
    %c10 = arith.constant 10 : index
    %c0_92 = arith.constant 0 : index
    %c0_93 = arith.constant 0 : index
    %425 = vector.load %arg17[%c10, %c0_92, %c0_93] : memref<16x2x32xf32, #tpu.memory_space<vmem>>, vector<1x2x32xf32>
    %426 = vector.shape_cast %425 : vector<1x2x32xf32> to vector<2x32xf32>
    %427 = vector.shape_cast %421 : vector<2x32xf32> to vector<1x2x32xf32>
    tpu.vector_store %arg17[%c10, %c0_92, %c0_93], %427 {strides = array<i32>} : memref<16x2x32xf32, #tpu.memory_space<vmem>>, vector<1x2x32xf32>,
    %428 = vector.extract_strided_slice %7 {offsets = [6, 0, 0], sizes = [1, 2, 96], strides = [1, 1, 1]} : vector<16x2x96xf32> to vector<1x2x96xf32>
    %429 = vector.shape_cast %428 : vector<1x2x96xf32> to vector<2x96xf32>
    %cst_94 = arith.constant dense<0.000000e+00> : vector<2x96xf32>
    %430 = tpu.matmul %390, %14, %cst_94 {dimension_numbers = #tpu.dot_dimension_numbers<[1], [0], [0], [1], [0, 0, 1, 1], [], []>} : vector<2x32xf32>, vector<32x96xf32>, vector<2x96xf32> -> vector<2x96xf32>
    %431 = vector.broadcast %15 : vector<1x96xf32> to vector<2x96xf32>
    %432 = arith.addf %430, %431 : vector<2x96xf32>
    %433 = vector.extract_strided_slice %429 {offsets = [0, 0], sizes = [2, 32], strides = [1, 1]} : vector<2x96xf32> to vector<2x32xf32>
    %434 = vector.extract_strided_slice %432 {offsets = [0, 0], sizes = [2, 32], strides = [1, 1]} : vector<2x96xf32> to vector<2x32xf32>
    %435 = arith.addf %433, %434 : vector<2x32xf32>
    %436 = arith.negf %435 : vector<2x32xf32>
    %437 = math.exp %436 : vector<2x32xf32>
    %cst_95 = arith.constant 1.000000e+00 : f32
    %438 = vector.broadcast %cst_95 : f32 to vector<2x32xf32>
    %439 = arith.addf %438, %437 : vector<2x32xf32>
    %440 = arith.divf %438, %439 : vector<2x32xf32>
    %441 = vector.extract_strided_slice %429 {offsets = [0, 32], sizes = [2, 32], strides = [1, 1]} : vector<2x96xf32> to vector<2x32xf32>
    %442 = vector.extract_strided_slice %432 {offsets = [0, 32], sizes = [2, 32], strides = [1, 1]} : vector<2x96xf32> to vector<2x32xf32>
    %443 = arith.addf %441, %442 : vector<2x32xf32>
    %444 = arith.negf %443 : vector<2x32xf32>
    %445 = math.exp %444 : vector<2x32xf32>
    %cst_96 = arith.constant 1.000000e+00 : f32
    %446 = vector.broadcast %cst_96 : f32 to vector<2x32xf32>
    %447 = arith.addf %446, %445 : vector<2x32xf32>
    %448 = arith.divf %446, %447 : vector<2x32xf32>
    %449 = vector.extract_strided_slice %429 {offsets = [0, 64], sizes = [2, 32], strides = [1, 1]} : vector<2x96xf32> to vector<2x32xf32>
    %450 = vector.extract_strided_slice %432 {offsets = [0, 64], sizes = [2, 32], strides = [1, 1]} : vector<2x96xf32> to vector<2x32xf32>
    %451 = arith.mulf %440, %450 : vector<2x32xf32>
    %452 = arith.addf %449, %451 : vector<2x32xf32>
    %453 = math.tanh %452 : vector<2x32xf32>
    %cst_97 = arith.constant 1.000000e+00 : f32
    %454 = vector.broadcast %cst_97 : f32 to vector<2x32xf32>
    %455 = arith.subf %454, %448 : vector<2x32xf32>
    %456 = arith.mulf %455, %453 : vector<2x32xf32>
    %457 = arith.mulf %448, %390 : vector<2x32xf32>
    %458 = arith.addf %456, %457 : vector<2x32xf32>
    %459 = vector.extract_strided_slice %13 {offsets = [9, 0, 0], sizes = [1, 2, 96], strides = [1, 1, 1]} : vector<16x2x96xf32> to vector<1x2x96xf32>
    %460 = vector.shape_cast %459 : vector<1x2x96xf32> to vector<2x96xf32>
    %cst_98 = arith.constant dense<0.000000e+00> : vector<2x96xf32>
    %461 = tpu.matmul %421, %16, %cst_98 {dimension_numbers = #tpu.dot_dimension_numbers<[1], [0], [0], [1], [0, 0, 1, 1], [], []>} : vector<2x32xf32>, vector<32x96xf32>, vector<2x96xf32> -> vector<2x96xf32>
    %462 = vector.broadcast %17 : vector<1x96xf32> to vector<2x96xf32>
    %463 = arith.addf %461, %462 : vector<2x96xf32>
    %464 = vector.extract_strided_slice %460 {offsets = [0, 0], sizes = [2, 32], strides = [1, 1]} : vector<2x96xf32> to vector<2x32xf32>
    %465 = vector.extract_strided_slice %463 {offsets = [0, 0], sizes = [2, 32], strides = [1, 1]} : vector<2x96xf32> to vector<2x32xf32>
    %466 = arith.addf %464, %465 : vector<2x32xf32>
    %467 = arith.negf %466 : vector<2x32xf32>
    %468 = math.exp %467 : vector<2x32xf32>
    %cst_99 = arith.constant 1.000000e+00 : f32
    %469 = vector.broadcast %cst_99 : f32 to vector<2x32xf32>
    %470 = arith.addf %469, %468 : vector<2x32xf32>
    %471 = arith.divf %469, %470 : vector<2x32xf32>
    %472 = vector.extract_strided_slice %460 {offsets = [0, 32], sizes = [2, 32], strides = [1, 1]} : vector<2x96xf32> to vector<2x32xf32>
    %473 = vector.extract_strided_slice %463 {offsets = [0, 32], sizes = [2, 32], strides = [1, 1]} : vector<2x96xf32> to vector<2x32xf32>
    %474 = arith.addf %472, %473 : vector<2x32xf32>
    %475 = arith.negf %474 : vector<2x32xf32>
    %476 = math.exp %475 : vector<2x32xf32>
    %cst_100 = arith.constant 1.000000e+00 : f32
    %477 = vector.broadcast %cst_100 : f32 to vector<2x32xf32>
    %478 = arith.addf %477, %476 : vector<2x32xf32>
    %479 = arith.divf %477, %478 : vector<2x32xf32>
    %480 = vector.extract_strided_slice %460 {offsets = [0, 64], sizes = [2, 32], strides = [1, 1]} : vector<2x96xf32> to vector<2x32xf32>
    %481 = vector.extract_strided_slice %463 {offsets = [0, 64], sizes = [2, 32], strides = [1, 1]} : vector<2x96xf32> to vector<2x32xf32>
    %482 = arith.mulf %471, %481 : vector<2x32xf32>
    %483 = arith.addf %480, %482 : vector<2x32xf32>
    %484 = math.tanh %483 : vector<2x32xf32>
    %cst_101 = arith.constant 1.000000e+00 : f32
    %485 = vector.broadcast %cst_101 : f32 to vector<2x32xf32>
    %486 = arith.subf %485, %479 : vector<2x32xf32>
    %487 = arith.mulf %486, %484 : vector<2x32xf32>
    %488 = arith.mulf %479, %421 : vector<2x32xf32>
    %489 = arith.addf %487, %488 : vector<2x32xf32>
    %c6 = arith.constant 6 : index
    %c0_102 = arith.constant 0 : index
    %c0_103 = arith.constant 0 : index
    %490 = vector.load %arg16[%c6, %c0_102, %c0_103] : memref<16x2x32xf32, #tpu.memory_space<vmem>>, vector<1x2x32xf32>
    %491 = vector.shape_cast %490 : vector<1x2x32xf32> to vector<2x32xf32>
    %492 = vector.shape_cast %458 : vector<2x32xf32> to vector<1x2x32xf32>
    tpu.vector_store %arg16[%c6, %c0_102, %c0_103], %492 {strides = array<i32>} : memref<16x2x32xf32, #tpu.memory_space<vmem>>, vector<1x2x32xf32>,
    %c9 = arith.constant 9 : index
    %c0_104 = arith.constant 0 : index
    %c0_105 = arith.constant 0 : index
    %493 = vector.load %arg17[%c9, %c0_104, %c0_105] : memref<16x2x32xf32, #tpu.memory_space<vmem>>, vector<1x2x32xf32>
    %494 = vector.shape_cast %493 : vector<1x2x32xf32> to vector<2x32xf32>
    %495 = vector.shape_cast %489 : vector<2x32xf32> to vector<1x2x32xf32>
    tpu.vector_store %arg17[%c9, %c0_104, %c0_105], %495 {strides = array<i32>} : memref<16x2x32xf32, #tpu.memory_space<vmem>>, vector<1x2x32xf32>,
    %496 = vector.extract_strided_slice %7 {offsets = [7, 0, 0], sizes = [1, 2, 96], strides = [1, 1, 1]} : vector<16x2x96xf32> to vector<1x2x96xf32>
    %497 = vector.shape_cast %496 : vector<1x2x96xf32> to vector<2x96xf32>
    %cst_106 = arith.constant dense<0.000000e+00> : vector<2x96xf32>
    %498 = tpu.matmul %458, %14, %cst_106 {dimension_numbers = #tpu.dot_dimension_numbers<[1], [0], [0], [1], [0, 0, 1, 1], [], []>} : vector<2x32xf32>, vector<32x96xf32>, vector<2x96xf32> -> vector<2x96xf32>
    %499 = vector.broadcast %15 : vector<1x96xf32> to vector<2x96xf32>
    %500 = arith.addf %498, %499 : vector<2x96xf32>
    %501 = vector.extract_strided_slice %497 {offsets = [0, 0], sizes = [2, 32], strides = [1, 1]} : vector<2x96xf32> to vector<2x32xf32>
    %502 = vector.extract_strided_slice %500 {offsets = [0, 0], sizes = [2, 32], strides = [1, 1]} : vector<2x96xf32> to vector<2x32xf32>
    %503 = arith.addf %501, %502 : vector<2x32xf32>
    %504 = arith.negf %503 : vector<2x32xf32>
    %505 = math.exp %504 : vector<2x32xf32>
    %cst_107 = arith.constant 1.000000e+00 : f32
    %506 = vector.broadcast %cst_107 : f32 to vector<2x32xf32>
    %507 = arith.addf %506, %505 : vector<2x32xf32>
    %508 = arith.divf %506, %507 : vector<2x32xf32>
    %509 = vector.extract_strided_slice %497 {offsets = [0, 32], sizes = [2, 32], strides = [1, 1]} : vector<2x96xf32> to vector<2x32xf32>
    %510 = vector.extract_strided_slice %500 {offsets = [0, 32], sizes = [2, 32], strides = [1, 1]} : vector<2x96xf32> to vector<2x32xf32>
    %511 = arith.addf %509, %510 : vector<2x32xf32>
    %512 = arith.negf %511 : vector<2x32xf32>
    %513 = math.exp %512 : vector<2x32xf32>
    %cst_108 = arith.constant 1.000000e+00 : f32
    %514 = vector.broadcast %cst_108 : f32 to vector<2x32xf32>
    %515 = arith.addf %514, %513 : vector<2x32xf32>
    %516 = arith.divf %514, %515 : vector<2x32xf32>
    %517 = vector.extract_strided_slice %497 {offsets = [0, 64], sizes = [2, 32], strides = [1, 1]} : vector<2x96xf32> to vector<2x32xf32>
    %518 = vector.extract_strided_slice %500 {offsets = [0, 64], sizes = [2, 32], strides = [1, 1]} : vector<2x96xf32> to vector<2x32xf32>
    %519 = arith.mulf %508, %518 : vector<2x32xf32>
    %520 = arith.addf %517, %519 : vector<2x32xf32>
    %521 = math.tanh %520 : vector<2x32xf32>
    %cst_109 = arith.constant 1.000000e+00 : f32
    %522 = vector.broadcast %cst_109 : f32 to vector<2x32xf32>
    %523 = arith.subf %522, %516 : vector<2x32xf32>
    %524 = arith.mulf %523, %521 : vector<2x32xf32>
    %525 = arith.mulf %516, %458 : vector<2x32xf32>
    %526 = arith.addf %524, %525 : vector<2x32xf32>
    %527 = vector.extract_strided_slice %13 {offsets = [8, 0, 0], sizes = [1, 2, 96], strides = [1, 1, 1]} : vector<16x2x96xf32> to vector<1x2x96xf32>
    %528 = vector.shape_cast %527 : vector<1x2x96xf32> to vector<2x96xf32>
    %cst_110 = arith.constant dense<0.000000e+00> : vector<2x96xf32>
    %529 = tpu.matmul %489, %16, %cst_110 {dimension_numbers = #tpu.dot_dimension_numbers<[1], [0], [0], [1], [0, 0, 1, 1], [], []>} : vector<2x32xf32>, vector<32x96xf32>, vector<2x96xf32> -> vector<2x96xf32>
    %530 = vector.broadcast %17 : vector<1x96xf32> to vector<2x96xf32>
    %531 = arith.addf %529, %530 : vector<2x96xf32>
    %532 = vector.extract_strided_slice %528 {offsets = [0, 0], sizes = [2, 32], strides = [1, 1]} : vector<2x96xf32> to vector<2x32xf32>
    %533 = vector.extract_strided_slice %531 {offsets = [0, 0], sizes = [2, 32], strides = [1, 1]} : vector<2x96xf32> to vector<2x32xf32>
    %534 = arith.addf %532, %533 : vector<2x32xf32>
    %535 = arith.negf %534 : vector<2x32xf32>
    %536 = math.exp %535 : vector<2x32xf32>
    %cst_111 = arith.constant 1.000000e+00 : f32
    %537 = vector.broadcast %cst_111 : f32 to vector<2x32xf32>
    %538 = arith.addf %537, %536 : vector<2x32xf32>
    %539 = arith.divf %537, %538 : vector<2x32xf32>
    %540 = vector.extract_strided_slice %528 {offsets = [0, 32], sizes = [2, 32], strides = [1, 1]} : vector<2x96xf32> to vector<2x32xf32>
    %541 = vector.extract_strided_slice %531 {offsets = [0, 32], sizes = [2, 32], strides = [1, 1]} : vector<2x96xf32> to vector<2x32xf32>
    %542 = arith.addf %540, %541 : vector<2x32xf32>
    %543 = arith.negf %542 : vector<2x32xf32>
    %544 = math.exp %543 : vector<2x32xf32>
    %cst_112 = arith.constant 1.000000e+00 : f32
    %545 = vector.broadcast %cst_112 : f32 to vector<2x32xf32>
    %546 = arith.addf %545, %544 : vector<2x32xf32>
    %547 = arith.divf %545, %546 : vector<2x32xf32>
    %548 = vector.extract_strided_slice %528 {offsets = [0, 64], sizes = [2, 32], strides = [1, 1]} : vector<2x96xf32> to vector<2x32xf32>
    %549 = vector.extract_strided_slice %531 {offsets = [0, 64], sizes = [2, 32], strides = [1, 1]} : vector<2x96xf32> to vector<2x32xf32>
    %550 = arith.mulf %539, %549 : vector<2x32xf32>
    %551 = arith.addf %548, %550 : vector<2x32xf32>
    %552 = math.tanh %551 : vector<2x32xf32>
    %cst_113 = arith.constant 1.000000e+00 : f32
    %553 = vector.broadcast %cst_113 : f32 to vector<2x32xf32>
    %554 = arith.subf %553, %547 : vector<2x32xf32>
    %555 = arith.mulf %554, %552 : vector<2x32xf32>
    %556 = arith.mulf %547, %489 : vector<2x32xf32>
    %557 = arith.addf %555, %556 : vector<2x32xf32>
    %c7 = arith.constant 7 : index
    %c0_114 = arith.constant 0 : index
    %c0_115 = arith.constant 0 : index
    %558 = vector.load %arg16[%c7, %c0_114, %c0_115] : memref<16x2x32xf32, #tpu.memory_space<vmem>>, vector<1x2x32xf32>
    %559 = vector.shape_cast %558 : vector<1x2x32xf32> to vector<2x32xf32>
    %560 = vector.shape_cast %526 : vector<2x32xf32> to vector<1x2x32xf32>
    tpu.vector_store %arg16[%c7, %c0_114, %c0_115], %560 {strides = array<i32>} : memref<16x2x32xf32, #tpu.memory_space<vmem>>, vector<1x2x32xf32>,
    %c8 = arith.constant 8 : index
    %c0_116 = arith.constant 0 : index
    %c0_117 = arith.constant 0 : index
    %561 = vector.load %arg17[%c8, %c0_116, %c0_117] : memref<16x2x32xf32, #tpu.memory_space<vmem>>, vector<1x2x32xf32>
    %562 = vector.shape_cast %561 : vector<1x2x32xf32> to vector<2x32xf32>
    %563 = vector.shape_cast %557 : vector<2x32xf32> to vector<1x2x32xf32>
    tpu.vector_store %arg17[%c8, %c0_116, %c0_117], %563 {strides = array<i32>} : memref<16x2x32xf32, #tpu.memory_space<vmem>>, vector<1x2x32xf32>,
    %564 = vector.extract_strided_slice %7 {offsets = [8, 0, 0], sizes = [1, 2, 96], strides = [1, 1, 1]} : vector<16x2x96xf32> to vector<1x2x96xf32>
    %565 = vector.shape_cast %564 : vector<1x2x96xf32> to vector<2x96xf32>
    %cst_118 = arith.constant dense<0.000000e+00> : vector<2x96xf32>
    %566 = tpu.matmul %526, %14, %cst_118 {dimension_numbers = #tpu.dot_dimension_numbers<[1], [0], [0], [1], [0, 0, 1, 1], [], []>} : vector<2x32xf32>, vector<32x96xf32>, vector<2x96xf32> -> vector<2x96xf32>
    %567 = vector.broadcast %15 : vector<1x96xf32> to vector<2x96xf32>
    %568 = arith.addf %566, %567 : vector<2x96xf32>
    %569 = vector.extract_strided_slice %565 {offsets = [0, 0], sizes = [2, 32], strides = [1, 1]} : vector<2x96xf32> to vector<2x32xf32>
    %570 = vector.extract_strided_slice %568 {offsets = [0, 0], sizes = [2, 32], strides = [1, 1]} : vector<2x96xf32> to vector<2x32xf32>
    %571 = arith.addf %569, %570 : vector<2x32xf32>
    %572 = arith.negf %571 : vector<2x32xf32>
    %573 = math.exp %572 : vector<2x32xf32>
    %cst_119 = arith.constant 1.000000e+00 : f32
    %574 = vector.broadcast %cst_119 : f32 to vector<2x32xf32>
    %575 = arith.addf %574, %573 : vector<2x32xf32>
    %576 = arith.divf %574, %575 : vector<2x32xf32>
    %577 = vector.extract_strided_slice %565 {offsets = [0, 32], sizes = [2, 32], strides = [1, 1]} : vector<2x96xf32> to vector<2x32xf32>
    %578 = vector.extract_strided_slice %568 {offsets = [0, 32], sizes = [2, 32], strides = [1, 1]} : vector<2x96xf32> to vector<2x32xf32>
    %579 = arith.addf %577, %578 : vector<2x32xf32>
    %580 = arith.negf %579 : vector<2x32xf32>
    %581 = math.exp %580 : vector<2x32xf32>
    %cst_120 = arith.constant 1.000000e+00 : f32
    %582 = vector.broadcast %cst_120 : f32 to vector<2x32xf32>
    %583 = arith.addf %582, %581 : vector<2x32xf32>
    %584 = arith.divf %582, %583 : vector<2x32xf32>
    %585 = vector.extract_strided_slice %565 {offsets = [0, 64], sizes = [2, 32], strides = [1, 1]} : vector<2x96xf32> to vector<2x32xf32>
    %586 = vector.extract_strided_slice %568 {offsets = [0, 64], sizes = [2, 32], strides = [1, 1]} : vector<2x96xf32> to vector<2x32xf32>
    %587 = arith.mulf %576, %586 : vector<2x32xf32>
    %588 = arith.addf %585, %587 : vector<2x32xf32>
    %589 = math.tanh %588 : vector<2x32xf32>
    %cst_121 = arith.constant 1.000000e+00 : f32
    %590 = vector.broadcast %cst_121 : f32 to vector<2x32xf32>
    %591 = arith.subf %590, %584 : vector<2x32xf32>
    %592 = arith.mulf %591, %589 : vector<2x32xf32>
    %593 = arith.mulf %584, %526 : vector<2x32xf32>
    %594 = arith.addf %592, %593 : vector<2x32xf32>
    %595 = vector.extract_strided_slice %13 {offsets = [7, 0, 0], sizes = [1, 2, 96], strides = [1, 1, 1]} : vector<16x2x96xf32> to vector<1x2x96xf32>
    %596 = vector.shape_cast %595 : vector<1x2x96xf32> to vector<2x96xf32>
    %cst_122 = arith.constant dense<0.000000e+00> : vector<2x96xf32>
    %597 = tpu.matmul %557, %16, %cst_122 {dimension_numbers = #tpu.dot_dimension_numbers<[1], [0], [0], [1], [0, 0, 1, 1], [], []>} : vector<2x32xf32>, vector<32x96xf32>, vector<2x96xf32> -> vector<2x96xf32>
    %598 = vector.broadcast %17 : vector<1x96xf32> to vector<2x96xf32>
    %599 = arith.addf %597, %598 : vector<2x96xf32>
    %600 = vector.extract_strided_slice %596 {offsets = [0, 0], sizes = [2, 32], strides = [1, 1]} : vector<2x96xf32> to vector<2x32xf32>
    %601 = vector.extract_strided_slice %599 {offsets = [0, 0], sizes = [2, 32], strides = [1, 1]} : vector<2x96xf32> to vector<2x32xf32>
    %602 = arith.addf %600, %601 : vector<2x32xf32>
    %603 = arith.negf %602 : vector<2x32xf32>
    %604 = math.exp %603 : vector<2x32xf32>
    %cst_123 = arith.constant 1.000000e+00 : f32
    %605 = vector.broadcast %cst_123 : f32 to vector<2x32xf32>
    %606 = arith.addf %605, %604 : vector<2x32xf32>
    %607 = arith.divf %605, %606 : vector<2x32xf32>
    %608 = vector.extract_strided_slice %596 {offsets = [0, 32], sizes = [2, 32], strides = [1, 1]} : vector<2x96xf32> to vector<2x32xf32>
    %609 = vector.extract_strided_slice %599 {offsets = [0, 32], sizes = [2, 32], strides = [1, 1]} : vector<2x96xf32> to vector<2x32xf32>
    %610 = arith.addf %608, %609 : vector<2x32xf32>
    %611 = arith.negf %610 : vector<2x32xf32>
    %612 = math.exp %611 : vector<2x32xf32>
    %cst_124 = arith.constant 1.000000e+00 : f32
    %613 = vector.broadcast %cst_124 : f32 to vector<2x32xf32>
    %614 = arith.addf %613, %612 : vector<2x32xf32>
    %615 = arith.divf %613, %614 : vector<2x32xf32>
    %616 = vector.extract_strided_slice %596 {offsets = [0, 64], sizes = [2, 32], strides = [1, 1]} : vector<2x96xf32> to vector<2x32xf32>
    %617 = vector.extract_strided_slice %599 {offsets = [0, 64], sizes = [2, 32], strides = [1, 1]} : vector<2x96xf32> to vector<2x32xf32>
    %618 = arith.mulf %607, %617 : vector<2x32xf32>
    %619 = arith.addf %616, %618 : vector<2x32xf32>
    %620 = math.tanh %619 : vector<2x32xf32>
    %cst_125 = arith.constant 1.000000e+00 : f32
    %621 = vector.broadcast %cst_125 : f32 to vector<2x32xf32>
    %622 = arith.subf %621, %615 : vector<2x32xf32>
    %623 = arith.mulf %622, %620 : vector<2x32xf32>
    %624 = arith.mulf %615, %557 : vector<2x32xf32>
    %625 = arith.addf %623, %624 : vector<2x32xf32>
    %c8_126 = arith.constant 8 : index
    %c0_127 = arith.constant 0 : index
    %c0_128 = arith.constant 0 : index
    %626 = vector.load %arg16[%c8_126, %c0_127, %c0_128] : memref<16x2x32xf32, #tpu.memory_space<vmem>>, vector<1x2x32xf32>
    %627 = vector.shape_cast %626 : vector<1x2x32xf32> to vector<2x32xf32>
    %628 = vector.shape_cast %594 : vector<2x32xf32> to vector<1x2x32xf32>
    tpu.vector_store %arg16[%c8_126, %c0_127, %c0_128], %628 {strides = array<i32>} : memref<16x2x32xf32, #tpu.memory_space<vmem>>, vector<1x2x32xf32>,
    %c7_129 = arith.constant 7 : index
    %c0_130 = arith.constant 0 : index
    %c0_131 = arith.constant 0 : index
    %629 = vector.load %arg17[%c7_129, %c0_130, %c0_131] : memref<16x2x32xf32, #tpu.memory_space<vmem>>, vector<1x2x32xf32>
    %630 = vector.shape_cast %629 : vector<1x2x32xf32> to vector<2x32xf32>
    %631 = vector.shape_cast %625 : vector<2x32xf32> to vector<1x2x32xf32>
    tpu.vector_store %arg17[%c7_129, %c0_130, %c0_131], %631 {strides = array<i32>} : memref<16x2x32xf32, #tpu.memory_space<vmem>>, vector<1x2x32xf32>,
    %632 = vector.extract_strided_slice %7 {offsets = [9, 0, 0], sizes = [1, 2, 96], strides = [1, 1, 1]} : vector<16x2x96xf32> to vector<1x2x96xf32>
    %633 = vector.shape_cast %632 : vector<1x2x96xf32> to vector<2x96xf32>
    %cst_132 = arith.constant dense<0.000000e+00> : vector<2x96xf32>
    %634 = tpu.matmul %594, %14, %cst_132 {dimension_numbers = #tpu.dot_dimension_numbers<[1], [0], [0], [1], [0, 0, 1, 1], [], []>} : vector<2x32xf32>, vector<32x96xf32>, vector<2x96xf32> -> vector<2x96xf32>
    %635 = vector.broadcast %15 : vector<1x96xf32> to vector<2x96xf32>
    %636 = arith.addf %634, %635 : vector<2x96xf32>
    %637 = vector.extract_strided_slice %633 {offsets = [0, 0], sizes = [2, 32], strides = [1, 1]} : vector<2x96xf32> to vector<2x32xf32>
    %638 = vector.extract_strided_slice %636 {offsets = [0, 0], sizes = [2, 32], strides = [1, 1]} : vector<2x96xf32> to vector<2x32xf32>
    %639 = arith.addf %637, %638 : vector<2x32xf32>
    %640 = arith.negf %639 : vector<2x32xf32>
    %641 = math.exp %640 : vector<2x32xf32>
    %cst_133 = arith.constant 1.000000e+00 : f32
    %642 = vector.broadcast %cst_133 : f32 to vector<2x32xf32>
    %643 = arith.addf %642, %641 : vector<2x32xf32>
    %644 = arith.divf %642, %643 : vector<2x32xf32>
    %645 = vector.extract_strided_slice %633 {offsets = [0, 32], sizes = [2, 32], strides = [1, 1]} : vector<2x96xf32> to vector<2x32xf32>
    %646 = vector.extract_strided_slice %636 {offsets = [0, 32], sizes = [2, 32], strides = [1, 1]} : vector<2x96xf32> to vector<2x32xf32>
    %647 = arith.addf %645, %646 : vector<2x32xf32>
    %648 = arith.negf %647 : vector<2x32xf32>
    %649 = math.exp %648 : vector<2x32xf32>
    %cst_134 = arith.constant 1.000000e+00 : f32
    %650 = vector.broadcast %cst_134 : f32 to vector<2x32xf32>
    %651 = arith.addf %650, %649 : vector<2x32xf32>
    %652 = arith.divf %650, %651 : vector<2x32xf32>
    %653 = vector.extract_strided_slice %633 {offsets = [0, 64], sizes = [2, 32], strides = [1, 1]} : vector<2x96xf32> to vector<2x32xf32>
    %654 = vector.extract_strided_slice %636 {offsets = [0, 64], sizes = [2, 32], strides = [1, 1]} : vector<2x96xf32> to vector<2x32xf32>
    %655 = arith.mulf %644, %654 : vector<2x32xf32>
    %656 = arith.addf %653, %655 : vector<2x32xf32>
    %657 = math.tanh %656 : vector<2x32xf32>
    %cst_135 = arith.constant 1.000000e+00 : f32
    %658 = vector.broadcast %cst_135 : f32 to vector<2x32xf32>
    %659 = arith.subf %658, %652 : vector<2x32xf32>
    %660 = arith.mulf %659, %657 : vector<2x32xf32>
    %661 = arith.mulf %652, %594 : vector<2x32xf32>
    %662 = arith.addf %660, %661 : vector<2x32xf32>
    %663 = vector.extract_strided_slice %13 {offsets = [6, 0, 0], sizes = [1, 2, 96], strides = [1, 1, 1]} : vector<16x2x96xf32> to vector<1x2x96xf32>
    %664 = vector.shape_cast %663 : vector<1x2x96xf32> to vector<2x96xf32>
    %cst_136 = arith.constant dense<0.000000e+00> : vector<2x96xf32>
    %665 = tpu.matmul %625, %16, %cst_136 {dimension_numbers = #tpu.dot_dimension_numbers<[1], [0], [0], [1], [0, 0, 1, 1], [], []>} : vector<2x32xf32>, vector<32x96xf32>, vector<2x96xf32> -> vector<2x96xf32>
    %666 = vector.broadcast %17 : vector<1x96xf32> to vector<2x96xf32>
    %667 = arith.addf %665, %666 : vector<2x96xf32>
    %668 = vector.extract_strided_slice %664 {offsets = [0, 0], sizes = [2, 32], strides = [1, 1]} : vector<2x96xf32> to vector<2x32xf32>
    %669 = vector.extract_strided_slice %667 {offsets = [0, 0], sizes = [2, 32], strides = [1, 1]} : vector<2x96xf32> to vector<2x32xf32>
    %670 = arith.addf %668, %669 : vector<2x32xf32>
    %671 = arith.negf %670 : vector<2x32xf32>
    %672 = math.exp %671 : vector<2x32xf32>
    %cst_137 = arith.constant 1.000000e+00 : f32
    %673 = vector.broadcast %cst_137 : f32 to vector<2x32xf32>
    %674 = arith.addf %673, %672 : vector<2x32xf32>
    %675 = arith.divf %673, %674 : vector<2x32xf32>
    %676 = vector.extract_strided_slice %664 {offsets = [0, 32], sizes = [2, 32], strides = [1, 1]} : vector<2x96xf32> to vector<2x32xf32>
    %677 = vector.extract_strided_slice %667 {offsets = [0, 32], sizes = [2, 32], strides = [1, 1]} : vector<2x96xf32> to vector<2x32xf32>
    %678 = arith.addf %676, %677 : vector<2x32xf32>
    %679 = arith.negf %678 : vector<2x32xf32>
    %680 = math.exp %679 : vector<2x32xf32>
    %cst_138 = arith.constant 1.000000e+00 : f32
    %681 = vector.broadcast %cst_138 : f32 to vector<2x32xf32>
    %682 = arith.addf %681, %680 : vector<2x32xf32>
    %683 = arith.divf %681, %682 : vector<2x32xf32>
    %684 = vector.extract_strided_slice %664 {offsets = [0, 64], sizes = [2, 32], strides = [1, 1]} : vector<2x96xf32> to vector<2x32xf32>
    %685 = vector.extract_strided_slice %667 {offsets = [0, 64], sizes = [2, 32], strides = [1, 1]} : vector<2x96xf32> to vector<2x32xf32>
    %686 = arith.mulf %675, %685 : vector<2x32xf32>
    %687 = arith.addf %684, %686 : vector<2x32xf32>
    %688 = math.tanh %687 : vector<2x32xf32>
    %cst_139 = arith.constant 1.000000e+00 : f32
    %689 = vector.broadcast %cst_139 : f32 to vector<2x32xf32>
    %690 = arith.subf %689, %683 : vector<2x32xf32>
    %691 = arith.mulf %690, %688 : vector<2x32xf32>
    %692 = arith.mulf %683, %625 : vector<2x32xf32>
    %693 = arith.addf %691, %692 : vector<2x32xf32>
    %c9_140 = arith.constant 9 : index
    %c0_141 = arith.constant 0 : index
    %c0_142 = arith.constant 0 : index
    %694 = vector.load %arg16[%c9_140, %c0_141, %c0_142] : memref<16x2x32xf32, #tpu.memory_space<vmem>>, vector<1x2x32xf32>
    %695 = vector.shape_cast %694 : vector<1x2x32xf32> to vector<2x32xf32>
    %696 = vector.shape_cast %662 : vector<2x32xf32> to vector<1x2x32xf32>
    tpu.vector_store %arg16[%c9_140, %c0_141, %c0_142], %696 {strides = array<i32>} : memref<16x2x32xf32, #tpu.memory_space<vmem>>, vector<1x2x32xf32>,
    %c6_143 = arith.constant 6 : index
    %c0_144 = arith.constant 0 : index
    %c0_145 = arith.constant 0 : index
    %697 = vector.load %arg17[%c6_143, %c0_144, %c0_145] : memref<16x2x32xf32, #tpu.memory_space<vmem>>, vector<1x2x32xf32>
    %698 = vector.shape_cast %697 : vector<1x2x32xf32> to vector<2x32xf32>
    %699 = vector.shape_cast %693 : vector<2x32xf32> to vector<1x2x32xf32>
    tpu.vector_store %arg17[%c6_143, %c0_144, %c0_145], %699 {strides = array<i32>} : memref<16x2x32xf32, #tpu.memory_space<vmem>>, vector<1x2x32xf32>,
    %700 = vector.extract_strided_slice %7 {offsets = [10, 0, 0], sizes = [1, 2, 96], strides = [1, 1, 1]} : vector<16x2x96xf32> to vector<1x2x96xf32>
    %701 = vector.shape_cast %700 : vector<1x2x96xf32> to vector<2x96xf32>
    %cst_146 = arith.constant dense<0.000000e+00> : vector<2x96xf32>
    %702 = tpu.matmul %662, %14, %cst_146 {dimension_numbers = #tpu.dot_dimension_numbers<[1], [0], [0], [1], [0, 0, 1, 1], [], []>} : vector<2x32xf32>, vector<32x96xf32>, vector<2x96xf32> -> vector<2x96xf32>
    %703 = vector.broadcast %15 : vector<1x96xf32> to vector<2x96xf32>
    %704 = arith.addf %702, %703 : vector<2x96xf32>
    %705 = vector.extract_strided_slice %701 {offsets = [0, 0], sizes = [2, 32], strides = [1, 1]} : vector<2x96xf32> to vector<2x32xf32>
    %706 = vector.extract_strided_slice %704 {offsets = [0, 0], sizes = [2, 32], strides = [1, 1]} : vector<2x96xf32> to vector<2x32xf32>
    %707 = arith.addf %705, %706 : vector<2x32xf32>
    %708 = arith.negf %707 : vector<2x32xf32>
    %709 = math.exp %708 : vector<2x32xf32>
    %cst_147 = arith.constant 1.000000e+00 : f32
    %710 = vector.broadcast %cst_147 : f32 to vector<2x32xf32>
    %711 = arith.addf %710, %709 : vector<2x32xf32>
    %712 = arith.divf %710, %711 : vector<2x32xf32>
    %713 = vector.extract_strided_slice %701 {offsets = [0, 32], sizes = [2, 32], strides = [1, 1]} : vector<2x96xf32> to vector<2x32xf32>
    %714 = vector.extract_strided_slice %704 {offsets = [0, 32], sizes = [2, 32], strides = [1, 1]} : vector<2x96xf32> to vector<2x32xf32>
    %715 = arith.addf %713, %714 : vector<2x32xf32>
    %716 = arith.negf %715 : vector<2x32xf32>
    %717 = math.exp %716 : vector<2x32xf32>
    %cst_148 = arith.constant 1.000000e+00 : f32
    %718 = vector.broadcast %cst_148 : f32 to vector<2x32xf32>
    %719 = arith.addf %718, %717 : vector<2x32xf32>
    %720 = arith.divf %718, %719 : vector<2x32xf32>
    %721 = vector.extract_strided_slice %701 {offsets = [0, 64], sizes = [2, 32], strides = [1, 1]} : vector<2x96xf32> to vector<2x32xf32>
    %722 = vector.extract_strided_slice %704 {offsets = [0, 64], sizes = [2, 32], strides = [1, 1]} : vector<2x96xf32> to vector<2x32xf32>
    %723 = arith.mulf %712, %722 : vector<2x32xf32>
    %724 = arith.addf %721, %723 : vector<2x32xf32>
    %725 = math.tanh %724 : vector<2x32xf32>
    %cst_149 = arith.constant 1.000000e+00 : f32
    %726 = vector.broadcast %cst_149 : f32 to vector<2x32xf32>
    %727 = arith.subf %726, %720 : vector<2x32xf32>
    %728 = arith.mulf %727, %725 : vector<2x32xf32>
    %729 = arith.mulf %720, %662 : vector<2x32xf32>
    %730 = arith.addf %728, %729 : vector<2x32xf32>
    %731 = vector.extract_strided_slice %13 {offsets = [5, 0, 0], sizes = [1, 2, 96], strides = [1, 1, 1]} : vector<16x2x96xf32> to vector<1x2x96xf32>
    %732 = vector.shape_cast %731 : vector<1x2x96xf32> to vector<2x96xf32>
    %cst_150 = arith.constant dense<0.000000e+00> : vector<2x96xf32>
    %733 = tpu.matmul %693, %16, %cst_150 {dimension_numbers = #tpu.dot_dimension_numbers<[1], [0], [0], [1], [0, 0, 1, 1], [], []>} : vector<2x32xf32>, vector<32x96xf32>, vector<2x96xf32> -> vector<2x96xf32>
    %734 = vector.broadcast %17 : vector<1x96xf32> to vector<2x96xf32>
    %735 = arith.addf %733, %734 : vector<2x96xf32>
    %736 = vector.extract_strided_slice %732 {offsets = [0, 0], sizes = [2, 32], strides = [1, 1]} : vector<2x96xf32> to vector<2x32xf32>
    %737 = vector.extract_strided_slice %735 {offsets = [0, 0], sizes = [2, 32], strides = [1, 1]} : vector<2x96xf32> to vector<2x32xf32>
    %738 = arith.addf %736, %737 : vector<2x32xf32>
    %739 = arith.negf %738 : vector<2x32xf32>
    %740 = math.exp %739 : vector<2x32xf32>
    %cst_151 = arith.constant 1.000000e+00 : f32
    %741 = vector.broadcast %cst_151 : f32 to vector<2x32xf32>
    %742 = arith.addf %741, %740 : vector<2x32xf32>
    %743 = arith.divf %741, %742 : vector<2x32xf32>
    %744 = vector.extract_strided_slice %732 {offsets = [0, 32], sizes = [2, 32], strides = [1, 1]} : vector<2x96xf32> to vector<2x32xf32>
    %745 = vector.extract_strided_slice %735 {offsets = [0, 32], sizes = [2, 32], strides = [1, 1]} : vector<2x96xf32> to vector<2x32xf32>
    %746 = arith.addf %744, %745 : vector<2x32xf32>
    %747 = arith.negf %746 : vector<2x32xf32>
    %748 = math.exp %747 : vector<2x32xf32>
    %cst_152 = arith.constant 1.000000e+00 : f32
    %749 = vector.broadcast %cst_152 : f32 to vector<2x32xf32>
    %750 = arith.addf %749, %748 : vector<2x32xf32>
    %751 = arith.divf %749, %750 : vector<2x32xf32>
    %752 = vector.extract_strided_slice %732 {offsets = [0, 64], sizes = [2, 32], strides = [1, 1]} : vector<2x96xf32> to vector<2x32xf32>
    %753 = vector.extract_strided_slice %735 {offsets = [0, 64], sizes = [2, 32], strides = [1, 1]} : vector<2x96xf32> to vector<2x32xf32>
    %754 = arith.mulf %743, %753 : vector<2x32xf32>
    %755 = arith.addf %752, %754 : vector<2x32xf32>
    %756 = math.tanh %755 : vector<2x32xf32>
    %cst_153 = arith.constant 1.000000e+00 : f32
    %757 = vector.broadcast %cst_153 : f32 to vector<2x32xf32>
    %758 = arith.subf %757, %751 : vector<2x32xf32>
    %759 = arith.mulf %758, %756 : vector<2x32xf32>
    %760 = arith.mulf %751, %693 : vector<2x32xf32>
    %761 = arith.addf %759, %760 : vector<2x32xf32>
    %c10_154 = arith.constant 10 : index
    %c0_155 = arith.constant 0 : index
    %c0_156 = arith.constant 0 : index
    %762 = vector.load %arg16[%c10_154, %c0_155, %c0_156] : memref<16x2x32xf32, #tpu.memory_space<vmem>>, vector<1x2x32xf32>
    %763 = vector.shape_cast %762 : vector<1x2x32xf32> to vector<2x32xf32>
    %764 = vector.shape_cast %730 : vector<2x32xf32> to vector<1x2x32xf32>
    tpu.vector_store %arg16[%c10_154, %c0_155, %c0_156], %764 {strides = array<i32>} : memref<16x2x32xf32, #tpu.memory_space<vmem>>, vector<1x2x32xf32>,
    %c5_157 = arith.constant 5 : index
    %c0_158 = arith.constant 0 : index
    %c0_159 = arith.constant 0 : index
    %765 = vector.load %arg17[%c5_157, %c0_158, %c0_159] : memref<16x2x32xf32, #tpu.memory_space<vmem>>, vector<1x2x32xf32>
    %766 = vector.shape_cast %765 : vector<1x2x32xf32> to vector<2x32xf32>
    %767 = vector.shape_cast %761 : vector<2x32xf32> to vector<1x2x32xf32>
    tpu.vector_store %arg17[%c5_157, %c0_158, %c0_159], %767 {strides = array<i32>} : memref<16x2x32xf32, #tpu.memory_space<vmem>>, vector<1x2x32xf32>,
    %768 = vector.extract_strided_slice %7 {offsets = [11, 0, 0], sizes = [1, 2, 96], strides = [1, 1, 1]} : vector<16x2x96xf32> to vector<1x2x96xf32>
    %769 = vector.shape_cast %768 : vector<1x2x96xf32> to vector<2x96xf32>
    %cst_160 = arith.constant dense<0.000000e+00> : vector<2x96xf32>
    %770 = tpu.matmul %730, %14, %cst_160 {dimension_numbers = #tpu.dot_dimension_numbers<[1], [0], [0], [1], [0, 0, 1, 1], [], []>} : vector<2x32xf32>, vector<32x96xf32>, vector<2x96xf32> -> vector<2x96xf32>
    %771 = vector.broadcast %15 : vector<1x96xf32> to vector<2x96xf32>
    %772 = arith.addf %770, %771 : vector<2x96xf32>
    %773 = vector.extract_strided_slice %769 {offsets = [0, 0], sizes = [2, 32], strides = [1, 1]} : vector<2x96xf32> to vector<2x32xf32>
    %774 = vector.extract_strided_slice %772 {offsets = [0, 0], sizes = [2, 32], strides = [1, 1]} : vector<2x96xf32> to vector<2x32xf32>
    %775 = arith.addf %773, %774 : vector<2x32xf32>
    %776 = arith.negf %775 : vector<2x32xf32>
    %777 = math.exp %776 : vector<2x32xf32>
    %cst_161 = arith.constant 1.000000e+00 : f32
    %778 = vector.broadcast %cst_161 : f32 to vector<2x32xf32>
    %779 = arith.addf %778, %777 : vector<2x32xf32>
    %780 = arith.divf %778, %779 : vector<2x32xf32>
    %781 = vector.extract_strided_slice %769 {offsets = [0, 32], sizes = [2, 32], strides = [1, 1]} : vector<2x96xf32> to vector<2x32xf32>
    %782 = vector.extract_strided_slice %772 {offsets = [0, 32], sizes = [2, 32], strides = [1, 1]} : vector<2x96xf32> to vector<2x32xf32>
    %783 = arith.addf %781, %782 : vector<2x32xf32>
    %784 = arith.negf %783 : vector<2x32xf32>
    %785 = math.exp %784 : vector<2x32xf32>
    %cst_162 = arith.constant 1.000000e+00 : f32
    %786 = vector.broadcast %cst_162 : f32 to vector<2x32xf32>
    %787 = arith.addf %786, %785 : vector<2x32xf32>
    %788 = arith.divf %786, %787 : vector<2x32xf32>
    %789 = vector.extract_strided_slice %769 {offsets = [0, 64], sizes = [2, 32], strides = [1, 1]} : vector<2x96xf32> to vector<2x32xf32>
    %790 = vector.extract_strided_slice %772 {offsets = [0, 64], sizes = [2, 32], strides = [1, 1]} : vector<2x96xf32> to vector<2x32xf32>
    %791 = arith.mulf %780, %790 : vector<2x32xf32>
    %792 = arith.addf %789, %791 : vector<2x32xf32>
    %793 = math.tanh %792 : vector<2x32xf32>
    %cst_163 = arith.constant 1.000000e+00 : f32
    %794 = vector.broadcast %cst_163 : f32 to vector<2x32xf32>
    %795 = arith.subf %794, %788 : vector<2x32xf32>
    %796 = arith.mulf %795, %793 : vector<2x32xf32>
    %797 = arith.mulf %788, %730 : vector<2x32xf32>
    %798 = arith.addf %796, %797 : vector<2x32xf32>
    %799 = vector.extract_strided_slice %13 {offsets = [4, 0, 0], sizes = [1, 2, 96], strides = [1, 1, 1]} : vector<16x2x96xf32> to vector<1x2x96xf32>
    %800 = vector.shape_cast %799 : vector<1x2x96xf32> to vector<2x96xf32>
    %cst_164 = arith.constant dense<0.000000e+00> : vector<2x96xf32>
    %801 = tpu.matmul %761, %16, %cst_164 {dimension_numbers = #tpu.dot_dimension_numbers<[1], [0], [0], [1], [0, 0, 1, 1], [], []>} : vector<2x32xf32>, vector<32x96xf32>, vector<2x96xf32> -> vector<2x96xf32>
    %802 = vector.broadcast %17 : vector<1x96xf32> to vector<2x96xf32>
    %803 = arith.addf %801, %802 : vector<2x96xf32>
    %804 = vector.extract_strided_slice %800 {offsets = [0, 0], sizes = [2, 32], strides = [1, 1]} : vector<2x96xf32> to vector<2x32xf32>
    %805 = vector.extract_strided_slice %803 {offsets = [0, 0], sizes = [2, 32], strides = [1, 1]} : vector<2x96xf32> to vector<2x32xf32>
    %806 = arith.addf %804, %805 : vector<2x32xf32>
    %807 = arith.negf %806 : vector<2x32xf32>
    %808 = math.exp %807 : vector<2x32xf32>
    %cst_165 = arith.constant 1.000000e+00 : f32
    %809 = vector.broadcast %cst_165 : f32 to vector<2x32xf32>
    %810 = arith.addf %809, %808 : vector<2x32xf32>
    %811 = arith.divf %809, %810 : vector<2x32xf32>
    %812 = vector.extract_strided_slice %800 {offsets = [0, 32], sizes = [2, 32], strides = [1, 1]} : vector<2x96xf32> to vector<2x32xf32>
    %813 = vector.extract_strided_slice %803 {offsets = [0, 32], sizes = [2, 32], strides = [1, 1]} : vector<2x96xf32> to vector<2x32xf32>
    %814 = arith.addf %812, %813 : vector<2x32xf32>
    %815 = arith.negf %814 : vector<2x32xf32>
    %816 = math.exp %815 : vector<2x32xf32>
    %cst_166 = arith.constant 1.000000e+00 : f32
    %817 = vector.broadcast %cst_166 : f32 to vector<2x32xf32>
    %818 = arith.addf %817, %816 : vector<2x32xf32>
    %819 = arith.divf %817, %818 : vector<2x32xf32>
    %820 = vector.extract_strided_slice %800 {offsets = [0, 64], sizes = [2, 32], strides = [1, 1]} : vector<2x96xf32> to vector<2x32xf32>
    %821 = vector.extract_strided_slice %803 {offsets = [0, 64], sizes = [2, 32], strides = [1, 1]} : vector<2x96xf32> to vector<2x32xf32>
    %822 = arith.mulf %811, %821 : vector<2x32xf32>
    %823 = arith.addf %820, %822 : vector<2x32xf32>
    %824 = math.tanh %823 : vector<2x32xf32>
    %cst_167 = arith.constant 1.000000e+00 : f32
    %825 = vector.broadcast %cst_167 : f32 to vector<2x32xf32>
    %826 = arith.subf %825, %819 : vector<2x32xf32>
    %827 = arith.mulf %826, %824 : vector<2x32xf32>
    %828 = arith.mulf %819, %761 : vector<2x32xf32>
    %829 = arith.addf %827, %828 : vector<2x32xf32>
    %c11_168 = arith.constant 11 : index
    %c0_169 = arith.constant 0 : index
    %c0_170 = arith.constant 0 : index
    %830 = vector.load %arg16[%c11_168, %c0_169, %c0_170] : memref<16x2x32xf32, #tpu.memory_space<vmem>>, vector<1x2x32xf32>
    %831 = vector.shape_cast %830 : vector<1x2x32xf32> to vector<2x32xf32>
    %832 = vector.shape_cast %798 : vector<2x32xf32> to vector<1x2x32xf32>
    tpu.vector_store %arg16[%c11_168, %c0_169, %c0_170], %832 {strides = array<i32>} : memref<16x2x32xf32, #tpu.memory_space<vmem>>, vector<1x2x32xf32>,
    %c4_171 = arith.constant 4 : index
    %c0_172 = arith.constant 0 : index
    %c0_173 = arith.constant 0 : index
    %833 = vector.load %arg17[%c4_171, %c0_172, %c0_173] : memref<16x2x32xf32, #tpu.memory_space<vmem>>, vector<1x2x32xf32>
    %834 = vector.shape_cast %833 : vector<1x2x32xf32> to vector<2x32xf32>
    %835 = vector.shape_cast %829 : vector<2x32xf32> to vector<1x2x32xf32>
    tpu.vector_store %arg17[%c4_171, %c0_172, %c0_173], %835 {strides = array<i32>} : memref<16x2x32xf32, #tpu.memory_space<vmem>>, vector<1x2x32xf32>,
    %836 = vector.extract_strided_slice %7 {offsets = [12, 0, 0], sizes = [1, 2, 96], strides = [1, 1, 1]} : vector<16x2x96xf32> to vector<1x2x96xf32>
    %837 = vector.shape_cast %836 : vector<1x2x96xf32> to vector<2x96xf32>
    %cst_174 = arith.constant dense<0.000000e+00> : vector<2x96xf32>
    %838 = tpu.matmul %798, %14, %cst_174 {dimension_numbers = #tpu.dot_dimension_numbers<[1], [0], [0], [1], [0, 0, 1, 1], [], []>} : vector<2x32xf32>, vector<32x96xf32>, vector<2x96xf32> -> vector<2x96xf32>
    %839 = vector.broadcast %15 : vector<1x96xf32> to vector<2x96xf32>
    %840 = arith.addf %838, %839 : vector<2x96xf32>
    %841 = vector.extract_strided_slice %837 {offsets = [0, 0], sizes = [2, 32], strides = [1, 1]} : vector<2x96xf32> to vector<2x32xf32>
    %842 = vector.extract_strided_slice %840 {offsets = [0, 0], sizes = [2, 32], strides = [1, 1]} : vector<2x96xf32> to vector<2x32xf32>
    %843 = arith.addf %841, %842 : vector<2x32xf32>
    %844 = arith.negf %843 : vector<2x32xf32>
    %845 = math.exp %844 : vector<2x32xf32>
    %cst_175 = arith.constant 1.000000e+00 : f32
    %846 = vector.broadcast %cst_175 : f32 to vector<2x32xf32>
    %847 = arith.addf %846, %845 : vector<2x32xf32>
    %848 = arith.divf %846, %847 : vector<2x32xf32>
    %849 = vector.extract_strided_slice %837 {offsets = [0, 32], sizes = [2, 32], strides = [1, 1]} : vector<2x96xf32> to vector<2x32xf32>
    %850 = vector.extract_strided_slice %840 {offsets = [0, 32], sizes = [2, 32], strides = [1, 1]} : vector<2x96xf32> to vector<2x32xf32>
    %851 = arith.addf %849, %850 : vector<2x32xf32>
    %852 = arith.negf %851 : vector<2x32xf32>
    %853 = math.exp %852 : vector<2x32xf32>
    %cst_176 = arith.constant 1.000000e+00 : f32
    %854 = vector.broadcast %cst_176 : f32 to vector<2x32xf32>
    %855 = arith.addf %854, %853 : vector<2x32xf32>
    %856 = arith.divf %854, %855 : vector<2x32xf32>
    %857 = vector.extract_strided_slice %837 {offsets = [0, 64], sizes = [2, 32], strides = [1, 1]} : vector<2x96xf32> to vector<2x32xf32>
    %858 = vector.extract_strided_slice %840 {offsets = [0, 64], sizes = [2, 32], strides = [1, 1]} : vector<2x96xf32> to vector<2x32xf32>
    %859 = arith.mulf %848, %858 : vector<2x32xf32>
    %860 = arith.addf %857, %859 : vector<2x32xf32>
    %861 = math.tanh %860 : vector<2x32xf32>
    %cst_177 = arith.constant 1.000000e+00 : f32
    %862 = vector.broadcast %cst_177 : f32 to vector<2x32xf32>
    %863 = arith.subf %862, %856 : vector<2x32xf32>
    %864 = arith.mulf %863, %861 : vector<2x32xf32>
    %865 = arith.mulf %856, %798 : vector<2x32xf32>
    %866 = arith.addf %864, %865 : vector<2x32xf32>
    %867 = vector.extract_strided_slice %13 {offsets = [3, 0, 0], sizes = [1, 2, 96], strides = [1, 1, 1]} : vector<16x2x96xf32> to vector<1x2x96xf32>
    %868 = vector.shape_cast %867 : vector<1x2x96xf32> to vector<2x96xf32>
    %cst_178 = arith.constant dense<0.000000e+00> : vector<2x96xf32>
    %869 = tpu.matmul %829, %16, %cst_178 {dimension_numbers = #tpu.dot_dimension_numbers<[1], [0], [0], [1], [0, 0, 1, 1], [], []>} : vector<2x32xf32>, vector<32x96xf32>, vector<2x96xf32> -> vector<2x96xf32>
    %870 = vector.broadcast %17 : vector<1x96xf32> to vector<2x96xf32>
    %871 = arith.addf %869, %870 : vector<2x96xf32>
    %872 = vector.extract_strided_slice %868 {offsets = [0, 0], sizes = [2, 32], strides = [1, 1]} : vector<2x96xf32> to vector<2x32xf32>
    %873 = vector.extract_strided_slice %871 {offsets = [0, 0], sizes = [2, 32], strides = [1, 1]} : vector<2x96xf32> to vector<2x32xf32>
    %874 = arith.addf %872, %873 : vector<2x32xf32>
    %875 = arith.negf %874 : vector<2x32xf32>
    %876 = math.exp %875 : vector<2x32xf32>
    %cst_179 = arith.constant 1.000000e+00 : f32
    %877 = vector.broadcast %cst_179 : f32 to vector<2x32xf32>
    %878 = arith.addf %877, %876 : vector<2x32xf32>
    %879 = arith.divf %877, %878 : vector<2x32xf32>
    %880 = vector.extract_strided_slice %868 {offsets = [0, 32], sizes = [2, 32], strides = [1, 1]} : vector<2x96xf32> to vector<2x32xf32>
    %881 = vector.extract_strided_slice %871 {offsets = [0, 32], sizes = [2, 32], strides = [1, 1]} : vector<2x96xf32> to vector<2x32xf32>
    %882 = arith.addf %880, %881 : vector<2x32xf32>
    %883 = arith.negf %882 : vector<2x32xf32>
    %884 = math.exp %883 : vector<2x32xf32>
    %cst_180 = arith.constant 1.000000e+00 : f32
    %885 = vector.broadcast %cst_180 : f32 to vector<2x32xf32>
    %886 = arith.addf %885, %884 : vector<2x32xf32>
    %887 = arith.divf %885, %886 : vector<2x32xf32>
    %888 = vector.extract_strided_slice %868 {offsets = [0, 64], sizes = [2, 32], strides = [1, 1]} : vector<2x96xf32> to vector<2x32xf32>
    %889 = vector.extract_strided_slice %871 {offsets = [0, 64], sizes = [2, 32], strides = [1, 1]} : vector<2x96xf32> to vector<2x32xf32>
    %890 = arith.mulf %879, %889 : vector<2x32xf32>
    %891 = arith.addf %888, %890 : vector<2x32xf32>
    %892 = math.tanh %891 : vector<2x32xf32>
    %cst_181 = arith.constant 1.000000e+00 : f32
    %893 = vector.broadcast %cst_181 : f32 to vector<2x32xf32>
    %894 = arith.subf %893, %887 : vector<2x32xf32>
    %895 = arith.mulf %894, %892 : vector<2x32xf32>
    %896 = arith.mulf %887, %829 : vector<2x32xf32>
    %897 = arith.addf %895, %896 : vector<2x32xf32>
    %c12_182 = arith.constant 12 : index
    %c0_183 = arith.constant 0 : index
    %c0_184 = arith.constant 0 : index
    %898 = vector.load %arg16[%c12_182, %c0_183, %c0_184] : memref<16x2x32xf32, #tpu.memory_space<vmem>>, vector<1x2x32xf32>
    %899 = vector.shape_cast %898 : vector<1x2x32xf32> to vector<2x32xf32>
    %900 = vector.shape_cast %866 : vector<2x32xf32> to vector<1x2x32xf32>
    tpu.vector_store %arg16[%c12_182, %c0_183, %c0_184], %900 {strides = array<i32>} : memref<16x2x32xf32, #tpu.memory_space<vmem>>, vector<1x2x32xf32>,
    %c3_185 = arith.constant 3 : index
    %c0_186 = arith.constant 0 : index
    %c0_187 = arith.constant 0 : index
    %901 = vector.load %arg17[%c3_185, %c0_186, %c0_187] : memref<16x2x32xf32, #tpu.memory_space<vmem>>, vector<1x2x32xf32>
    %902 = vector.shape_cast %901 : vector<1x2x32xf32> to vector<2x32xf32>
    %903 = vector.shape_cast %897 : vector<2x32xf32> to vector<1x2x32xf32>
    tpu.vector_store %arg17[%c3_185, %c0_186, %c0_187], %903 {strides = array<i32>} : memref<16x2x32xf32, #tpu.memory_space<vmem>>, vector<1x2x32xf32>,
    %904 = vector.extract_strided_slice %7 {offsets = [13, 0, 0], sizes = [1, 2, 96], strides = [1, 1, 1]} : vector<16x2x96xf32> to vector<1x2x96xf32>
    %905 = vector.shape_cast %904 : vector<1x2x96xf32> to vector<2x96xf32>
    %cst_188 = arith.constant dense<0.000000e+00> : vector<2x96xf32>
    %906 = tpu.matmul %866, %14, %cst_188 {dimension_numbers = #tpu.dot_dimension_numbers<[1], [0], [0], [1], [0, 0, 1, 1], [], []>} : vector<2x32xf32>, vector<32x96xf32>, vector<2x96xf32> -> vector<2x96xf32>
    %907 = vector.broadcast %15 : vector<1x96xf32> to vector<2x96xf32>
    %908 = arith.addf %906, %907 : vector<2x96xf32>
    %909 = vector.extract_strided_slice %905 {offsets = [0, 0], sizes = [2, 32], strides = [1, 1]} : vector<2x96xf32> to vector<2x32xf32>
    %910 = vector.extract_strided_slice %908 {offsets = [0, 0], sizes = [2, 32], strides = [1, 1]} : vector<2x96xf32> to vector<2x32xf32>
    %911 = arith.addf %909, %910 : vector<2x32xf32>
    %912 = arith.negf %911 : vector<2x32xf32>
    %913 = math.exp %912 : vector<2x32xf32>
    %cst_189 = arith.constant 1.000000e+00 : f32
    %914 = vector.broadcast %cst_189 : f32 to vector<2x32xf32>
    %915 = arith.addf %914, %913 : vector<2x32xf32>
    %916 = arith.divf %914, %915 : vector<2x32xf32>
    %917 = vector.extract_strided_slice %905 {offsets = [0, 32], sizes = [2, 32], strides = [1, 1]} : vector<2x96xf32> to vector<2x32xf32>
    %918 = vector.extract_strided_slice %908 {offsets = [0, 32], sizes = [2, 32], strides = [1, 1]} : vector<2x96xf32> to vector<2x32xf32>
    %919 = arith.addf %917, %918 : vector<2x32xf32>
    %920 = arith.negf %919 : vector<2x32xf32>
    %921 = math.exp %920 : vector<2x32xf32>
    %cst_190 = arith.constant 1.000000e+00 : f32
    %922 = vector.broadcast %cst_190 : f32 to vector<2x32xf32>
    %923 = arith.addf %922, %921 : vector<2x32xf32>
    %924 = arith.divf %922, %923 : vector<2x32xf32>
    %925 = vector.extract_strided_slice %905 {offsets = [0, 64], sizes = [2, 32], strides = [1, 1]} : vector<2x96xf32> to vector<2x32xf32>
    %926 = vector.extract_strided_slice %908 {offsets = [0, 64], sizes = [2, 32], strides = [1, 1]} : vector<2x96xf32> to vector<2x32xf32>
    %927 = arith.mulf %916, %926 : vector<2x32xf32>
    %928 = arith.addf %925, %927 : vector<2x32xf32>
    %929 = math.tanh %928 : vector<2x32xf32>
    %cst_191 = arith.constant 1.000000e+00 : f32
    %930 = vector.broadcast %cst_191 : f32 to vector<2x32xf32>
    %931 = arith.subf %930, %924 : vector<2x32xf32>
    %932 = arith.mulf %931, %929 : vector<2x32xf32>
    %933 = arith.mulf %924, %866 : vector<2x32xf32>
    %934 = arith.addf %932, %933 : vector<2x32xf32>
    %935 = vector.extract_strided_slice %13 {offsets = [2, 0, 0], sizes = [1, 2, 96], strides = [1, 1, 1]} : vector<16x2x96xf32> to vector<1x2x96xf32>
    %936 = vector.shape_cast %935 : vector<1x2x96xf32> to vector<2x96xf32>
    %cst_192 = arith.constant dense<0.000000e+00> : vector<2x96xf32>
    %937 = tpu.matmul %897, %16, %cst_192 {dimension_numbers = #tpu.dot_dimension_numbers<[1], [0], [0], [1], [0, 0, 1, 1], [], []>} : vector<2x32xf32>, vector<32x96xf32>, vector<2x96xf32> -> vector<2x96xf32>
    %938 = vector.broadcast %17 : vector<1x96xf32> to vector<2x96xf32>
    %939 = arith.addf %937, %938 : vector<2x96xf32>
    %940 = vector.extract_strided_slice %936 {offsets = [0, 0], sizes = [2, 32], strides = [1, 1]} : vector<2x96xf32> to vector<2x32xf32>
    %941 = vector.extract_strided_slice %939 {offsets = [0, 0], sizes = [2, 32], strides = [1, 1]} : vector<2x96xf32> to vector<2x32xf32>
    %942 = arith.addf %940, %941 : vector<2x32xf32>
    %943 = arith.negf %942 : vector<2x32xf32>
    %944 = math.exp %943 : vector<2x32xf32>
    %cst_193 = arith.constant 1.000000e+00 : f32
    %945 = vector.broadcast %cst_193 : f32 to vector<2x32xf32>
    %946 = arith.addf %945, %944 : vector<2x32xf32>
    %947 = arith.divf %945, %946 : vector<2x32xf32>
    %948 = vector.extract_strided_slice %936 {offsets = [0, 32], sizes = [2, 32], strides = [1, 1]} : vector<2x96xf32> to vector<2x32xf32>
    %949 = vector.extract_strided_slice %939 {offsets = [0, 32], sizes = [2, 32], strides = [1, 1]} : vector<2x96xf32> to vector<2x32xf32>
    %950 = arith.addf %948, %949 : vector<2x32xf32>
    %951 = arith.negf %950 : vector<2x32xf32>
    %952 = math.exp %951 : vector<2x32xf32>
    %cst_194 = arith.constant 1.000000e+00 : f32
    %953 = vector.broadcast %cst_194 : f32 to vector<2x32xf32>
    %954 = arith.addf %953, %952 : vector<2x32xf32>
    %955 = arith.divf %953, %954 : vector<2x32xf32>
    %956 = vector.extract_strided_slice %936 {offsets = [0, 64], sizes = [2, 32], strides = [1, 1]} : vector<2x96xf32> to vector<2x32xf32>
    %957 = vector.extract_strided_slice %939 {offsets = [0, 64], sizes = [2, 32], strides = [1, 1]} : vector<2x96xf32> to vector<2x32xf32>
    %958 = arith.mulf %947, %957 : vector<2x32xf32>
    %959 = arith.addf %956, %958 : vector<2x32xf32>
    %960 = math.tanh %959 : vector<2x32xf32>
    %cst_195 = arith.constant 1.000000e+00 : f32
    %961 = vector.broadcast %cst_195 : f32 to vector<2x32xf32>
    %962 = arith.subf %961, %955 : vector<2x32xf32>
    %963 = arith.mulf %962, %960 : vector<2x32xf32>
    %964 = arith.mulf %955, %897 : vector<2x32xf32>
    %965 = arith.addf %963, %964 : vector<2x32xf32>
    %c13_196 = arith.constant 13 : index
    %c0_197 = arith.constant 0 : index
    %c0_198 = arith.constant 0 : index
    %966 = vector.load %arg16[%c13_196, %c0_197, %c0_198] : memref<16x2x32xf32, #tpu.memory_space<vmem>>, vector<1x2x32xf32>
    %967 = vector.shape_cast %966 : vector<1x2x32xf32> to vector<2x32xf32>
    %968 = vector.shape_cast %934 : vector<2x32xf32> to vector<1x2x32xf32>
    tpu.vector_store %arg16[%c13_196, %c0_197, %c0_198], %968 {strides = array<i32>} : memref<16x2x32xf32, #tpu.memory_space<vmem>>, vector<1x2x32xf32>,
    %c2_199 = arith.constant 2 : index
    %c0_200 = arith.constant 0 : index
    %c0_201 = arith.constant 0 : index
    %969 = vector.load %arg17[%c2_199, %c0_200, %c0_201] : memref<16x2x32xf32, #tpu.memory_space<vmem>>, vector<1x2x32xf32>
    %970 = vector.shape_cast %969 : vector<1x2x32xf32> to vector<2x32xf32>
    %971 = vector.shape_cast %965 : vector<2x32xf32> to vector<1x2x32xf32>
    tpu.vector_store %arg17[%c2_199, %c0_200, %c0_201], %971 {strides = array<i32>} : memref<16x2x32xf32, #tpu.memory_space<vmem>>, vector<1x2x32xf32>,
    %972 = vector.extract_strided_slice %7 {offsets = [14, 0, 0], sizes = [1, 2, 96], strides = [1, 1, 1]} : vector<16x2x96xf32> to vector<1x2x96xf32>
    %973 = vector.shape_cast %972 : vector<1x2x96xf32> to vector<2x96xf32>
    %cst_202 = arith.constant dense<0.000000e+00> : vector<2x96xf32>
    %974 = tpu.matmul %934, %14, %cst_202 {dimension_numbers = #tpu.dot_dimension_numbers<[1], [0], [0], [1], [0, 0, 1, 1], [], []>} : vector<2x32xf32>, vector<32x96xf32>, vector<2x96xf32> -> vector<2x96xf32>
    %975 = vector.broadcast %15 : vector<1x96xf32> to vector<2x96xf32>
    %976 = arith.addf %974, %975 : vector<2x96xf32>
    %977 = vector.extract_strided_slice %973 {offsets = [0, 0], sizes = [2, 32], strides = [1, 1]} : vector<2x96xf32> to vector<2x32xf32>
    %978 = vector.extract_strided_slice %976 {offsets = [0, 0], sizes = [2, 32], strides = [1, 1]} : vector<2x96xf32> to vector<2x32xf32>
    %979 = arith.addf %977, %978 : vector<2x32xf32>
    %980 = arith.negf %979 : vector<2x32xf32>
    %981 = math.exp %980 : vector<2x32xf32>
    %cst_203 = arith.constant 1.000000e+00 : f32
    %982 = vector.broadcast %cst_203 : f32 to vector<2x32xf32>
    %983 = arith.addf %982, %981 : vector<2x32xf32>
    %984 = arith.divf %982, %983 : vector<2x32xf32>
    %985 = vector.extract_strided_slice %973 {offsets = [0, 32], sizes = [2, 32], strides = [1, 1]} : vector<2x96xf32> to vector<2x32xf32>
    %986 = vector.extract_strided_slice %976 {offsets = [0, 32], sizes = [2, 32], strides = [1, 1]} : vector<2x96xf32> to vector<2x32xf32>
    %987 = arith.addf %985, %986 : vector<2x32xf32>
    %988 = arith.negf %987 : vector<2x32xf32>
    %989 = math.exp %988 : vector<2x32xf32>
    %cst_204 = arith.constant 1.000000e+00 : f32
    %990 = vector.broadcast %cst_204 : f32 to vector<2x32xf32>
    %991 = arith.addf %990, %989 : vector<2x32xf32>
    %992 = arith.divf %990, %991 : vector<2x32xf32>
    %993 = vector.extract_strided_slice %973 {offsets = [0, 64], sizes = [2, 32], strides = [1, 1]} : vector<2x96xf32> to vector<2x32xf32>
    %994 = vector.extract_strided_slice %976 {offsets = [0, 64], sizes = [2, 32], strides = [1, 1]} : vector<2x96xf32> to vector<2x32xf32>
    %995 = arith.mulf %984, %994 : vector<2x32xf32>
    %996 = arith.addf %993, %995 : vector<2x32xf32>
    %997 = math.tanh %996 : vector<2x32xf32>
    %cst_205 = arith.constant 1.000000e+00 : f32
    %998 = vector.broadcast %cst_205 : f32 to vector<2x32xf32>
    %999 = arith.subf %998, %992 : vector<2x32xf32>
    %1000 = arith.mulf %999, %997 : vector<2x32xf32>
    %1001 = arith.mulf %992, %934 : vector<2x32xf32>
    %1002 = arith.addf %1000, %1001 : vector<2x32xf32>
    %1003 = vector.extract_strided_slice %13 {offsets = [1, 0, 0], sizes = [1, 2, 96], strides = [1, 1, 1]} : vector<16x2x96xf32> to vector<1x2x96xf32>
    %1004 = vector.shape_cast %1003 : vector<1x2x96xf32> to vector<2x96xf32>
    %cst_206 = arith.constant dense<0.000000e+00> : vector<2x96xf32>
    %1005 = tpu.matmul %965, %16, %cst_206 {dimension_numbers = #tpu.dot_dimension_numbers<[1], [0], [0], [1], [0, 0, 1, 1], [], []>} : vector<2x32xf32>, vector<32x96xf32>, vector<2x96xf32> -> vector<2x96xf32>
    %1006 = vector.broadcast %17 : vector<1x96xf32> to vector<2x96xf32>
    %1007 = arith.addf %1005, %1006 : vector<2x96xf32>
    %1008 = vector.extract_strided_slice %1004 {offsets = [0, 0], sizes = [2, 32], strides = [1, 1]} : vector<2x96xf32> to vector<2x32xf32>
    %1009 = vector.extract_strided_slice %1007 {offsets = [0, 0], sizes = [2, 32], strides = [1, 1]} : vector<2x96xf32> to vector<2x32xf32>
    %1010 = arith.addf %1008, %1009 : vector<2x32xf32>
    %1011 = arith.negf %1010 : vector<2x32xf32>
    %1012 = math.exp %1011 : vector<2x32xf32>
    %cst_207 = arith.constant 1.000000e+00 : f32
    %1013 = vector.broadcast %cst_207 : f32 to vector<2x32xf32>
    %1014 = arith.addf %1013, %1012 : vector<2x32xf32>
    %1015 = arith.divf %1013, %1014 : vector<2x32xf32>
    %1016 = vector.extract_strided_slice %1004 {offsets = [0, 32], sizes = [2, 32], strides = [1, 1]} : vector<2x96xf32> to vector<2x32xf32>
    %1017 = vector.extract_strided_slice %1007 {offsets = [0, 32], sizes = [2, 32], strides = [1, 1]} : vector<2x96xf32> to vector<2x32xf32>
    %1018 = arith.addf %1016, %1017 : vector<2x32xf32>
    %1019 = arith.negf %1018 : vector<2x32xf32>
    %1020 = math.exp %1019 : vector<2x32xf32>
    %cst_208 = arith.constant 1.000000e+00 : f32
    %1021 = vector.broadcast %cst_208 : f32 to vector<2x32xf32>
    %1022 = arith.addf %1021, %1020 : vector<2x32xf32>
    %1023 = arith.divf %1021, %1022 : vector<2x32xf32>
    %1024 = vector.extract_strided_slice %1004 {offsets = [0, 64], sizes = [2, 32], strides = [1, 1]} : vector<2x96xf32> to vector<2x32xf32>
    %1025 = vector.extract_strided_slice %1007 {offsets = [0, 64], sizes = [2, 32], strides = [1, 1]} : vector<2x96xf32> to vector<2x32xf32>
    %1026 = arith.mulf %1015, %1025 : vector<2x32xf32>
    %1027 = arith.addf %1024, %1026 : vector<2x32xf32>
    %1028 = math.tanh %1027 : vector<2x32xf32>
    %cst_209 = arith.constant 1.000000e+00 : f32
    %1029 = vector.broadcast %cst_209 : f32 to vector<2x32xf32>
    %1030 = arith.subf %1029, %1023 : vector<2x32xf32>
    %1031 = arith.mulf %1030, %1028 : vector<2x32xf32>
    %1032 = arith.mulf %1023, %965 : vector<2x32xf32>
    %1033 = arith.addf %1031, %1032 : vector<2x32xf32>
    %c14_210 = arith.constant 14 : index
    %c0_211 = arith.constant 0 : index
    %c0_212 = arith.constant 0 : index
    %1034 = vector.load %arg16[%c14_210, %c0_211, %c0_212] : memref<16x2x32xf32, #tpu.memory_space<vmem>>, vector<1x2x32xf32>
    %1035 = vector.shape_cast %1034 : vector<1x2x32xf32> to vector<2x32xf32>
    %1036 = vector.shape_cast %1002 : vector<2x32xf32> to vector<1x2x32xf32>
    tpu.vector_store %arg16[%c14_210, %c0_211, %c0_212], %1036 {strides = array<i32>} : memref<16x2x32xf32, #tpu.memory_space<vmem>>, vector<1x2x32xf32>,
    %c1_213 = arith.constant 1 : index
    %c0_214 = arith.constant 0 : index
    %c0_215 = arith.constant 0 : index
    %1037 = vector.load %arg17[%c1_213, %c0_214, %c0_215] : memref<16x2x32xf32, #tpu.memory_space<vmem>>, vector<1x2x32xf32>
    %1038 = vector.shape_cast %1037 : vector<1x2x32xf32> to vector<2x32xf32>
    %1039 = vector.shape_cast %1033 : vector<2x32xf32> to vector<1x2x32xf32>
    tpu.vector_store %arg17[%c1_213, %c0_214, %c0_215], %1039 {strides = array<i32>} : memref<16x2x32xf32, #tpu.memory_space<vmem>>, vector<1x2x32xf32>,
    %1040 = vector.extract_strided_slice %7 {offsets = [15, 0, 0], sizes = [1, 2, 96], strides = [1, 1, 1]} : vector<16x2x96xf32> to vector<1x2x96xf32>
    %1041 = vector.shape_cast %1040 : vector<1x2x96xf32> to vector<2x96xf32>
    %cst_216 = arith.constant dense<0.000000e+00> : vector<2x96xf32>
    %1042 = tpu.matmul %1002, %14, %cst_216 {dimension_numbers = #tpu.dot_dimension_numbers<[1], [0], [0], [1], [0, 0, 1, 1], [], []>} : vector<2x32xf32>, vector<32x96xf32>, vector<2x96xf32> -> vector<2x96xf32>
    %1043 = vector.broadcast %15 : vector<1x96xf32> to vector<2x96xf32>
    %1044 = arith.addf %1042, %1043 : vector<2x96xf32>
    %1045 = vector.extract_strided_slice %1041 {offsets = [0, 0], sizes = [2, 32], strides = [1, 1]} : vector<2x96xf32> to vector<2x32xf32>
    %1046 = vector.extract_strided_slice %1044 {offsets = [0, 0], sizes = [2, 32], strides = [1, 1]} : vector<2x96xf32> to vector<2x32xf32>
    %1047 = arith.addf %1045, %1046 : vector<2x32xf32>
    %1048 = arith.negf %1047 : vector<2x32xf32>
    %1049 = math.exp %1048 : vector<2x32xf32>
    %cst_217 = arith.constant 1.000000e+00 : f32
    %1050 = vector.broadcast %cst_217 : f32 to vector<2x32xf32>
    %1051 = arith.addf %1050, %1049 : vector<2x32xf32>
    %1052 = arith.divf %1050, %1051 : vector<2x32xf32>
    %1053 = vector.extract_strided_slice %1041 {offsets = [0, 32], sizes = [2, 32], strides = [1, 1]} : vector<2x96xf32> to vector<2x32xf32>
    %1054 = vector.extract_strided_slice %1044 {offsets = [0, 32], sizes = [2, 32], strides = [1, 1]} : vector<2x96xf32> to vector<2x32xf32>
    %1055 = arith.addf %1053, %1054 : vector<2x32xf32>
    %1056 = arith.negf %1055 : vector<2x32xf32>
    %1057 = math.exp %1056 : vector<2x32xf32>
    %cst_218 = arith.constant 1.000000e+00 : f32
    %1058 = vector.broadcast %cst_218 : f32 to vector<2x32xf32>
    %1059 = arith.addf %1058, %1057 : vector<2x32xf32>
    %1060 = arith.divf %1058, %1059 : vector<2x32xf32>
    %1061 = vector.extract_strided_slice %1041 {offsets = [0, 64], sizes = [2, 32], strides = [1, 1]} : vector<2x96xf32> to vector<2x32xf32>
    %1062 = vector.extract_strided_slice %1044 {offsets = [0, 64], sizes = [2, 32], strides = [1, 1]} : vector<2x96xf32> to vector<2x32xf32>
    %1063 = arith.mulf %1052, %1062 : vector<2x32xf32>
    %1064 = arith.addf %1061, %1063 : vector<2x32xf32>
    %1065 = math.tanh %1064 : vector<2x32xf32>
    %cst_219 = arith.constant 1.000000e+00 : f32
    %1066 = vector.broadcast %cst_219 : f32 to vector<2x32xf32>
    %1067 = arith.subf %1066, %1060 : vector<2x32xf32>
    %1068 = arith.mulf %1067, %1065 : vector<2x32xf32>
    %1069 = arith.mulf %1060, %1002 : vector<2x32xf32>
    %1070 = arith.addf %1068, %1069 : vector<2x32xf32>
    %1071 = vector.extract_strided_slice %13 {offsets = [0, 0, 0], sizes = [1, 2, 96], strides = [1, 1, 1]} : vector<16x2x96xf32> to vector<1x2x96xf32>
    %1072 = vector.shape_cast %1071 : vector<1x2x96xf32> to vector<2x96xf32>
    %cst_220 = arith.constant dense<0.000000e+00> : vector<2x96xf32>
    %1073 = tpu.matmul %1033, %16, %cst_220 {dimension_numbers = #tpu.dot_dimension_numbers<[1], [0], [0], [1], [0, 0, 1, 1], [], []>} : vector<2x32xf32>, vector<32x96xf32>, vector<2x96xf32> -> vector<2x96xf32>
    %1074 = vector.broadcast %17 : vector<1x96xf32> to vector<2x96xf32>
    %1075 = arith.addf %1073, %1074 : vector<2x96xf32>
    %1076 = vector.extract_strided_slice %1072 {offsets = [0, 0], sizes = [2, 32], strides = [1, 1]} : vector<2x96xf32> to vector<2x32xf32>
    %1077 = vector.extract_strided_slice %1075 {offsets = [0, 0], sizes = [2, 32], strides = [1, 1]} : vector<2x96xf32> to vector<2x32xf32>
    %1078 = arith.addf %1076, %1077 : vector<2x32xf32>
    %1079 = arith.negf %1078 : vector<2x32xf32>
    %1080 = math.exp %1079 : vector<2x32xf32>
    %cst_221 = arith.constant 1.000000e+00 : f32
    %1081 = vector.broadcast %cst_221 : f32 to vector<2x32xf32>
    %1082 = arith.addf %1081, %1080 : vector<2x32xf32>
    %1083 = arith.divf %1081, %1082 : vector<2x32xf32>
    %1084 = vector.extract_strided_slice %1072 {offsets = [0, 32], sizes = [2, 32], strides = [1, 1]} : vector<2x96xf32> to vector<2x32xf32>
    %1085 = vector.extract_strided_slice %1075 {offsets = [0, 32], sizes = [2, 32], strides = [1, 1]} : vector<2x96xf32> to vector<2x32xf32>
    %1086 = arith.addf %1084, %1085 : vector<2x32xf32>
    %1087 = arith.negf %1086 : vector<2x32xf32>
    %1088 = math.exp %1087 : vector<2x32xf32>
    %cst_222 = arith.constant 1.000000e+00 : f32
    %1089 = vector.broadcast %cst_222 : f32 to vector<2x32xf32>
    %1090 = arith.addf %1089, %1088 : vector<2x32xf32>
    %1091 = arith.divf %1089, %1090 : vector<2x32xf32>
    %1092 = vector.extract_strided_slice %1072 {offsets = [0, 64], sizes = [2, 32], strides = [1, 1]} : vector<2x96xf32> to vector<2x32xf32>
    %1093 = vector.extract_strided_slice %1075 {offsets = [0, 64], sizes = [2, 32], strides = [1, 1]} : vector<2x96xf32> to vector<2x32xf32>
    %1094 = arith.mulf %1083, %1093 : vector<2x32xf32>
    %1095 = arith.addf %1092, %1094 : vector<2x32xf32>
    %1096 = math.tanh %1095 : vector<2x32xf32>
    %cst_223 = arith.constant 1.000000e+00 : f32
    %1097 = vector.broadcast %cst_223 : f32 to vector<2x32xf32>
    %1098 = arith.subf %1097, %1091 : vector<2x32xf32>
    %1099 = arith.mulf %1098, %1096 : vector<2x32xf32>
    %1100 = arith.mulf %1091, %1033 : vector<2x32xf32>
    %1101 = arith.addf %1099, %1100 : vector<2x32xf32>
    %c15_224 = arith.constant 15 : index
    %c0_225 = arith.constant 0 : index
    %c0_226 = arith.constant 0 : index
    %1102 = vector.load %arg16[%c15_224, %c0_225, %c0_226] : memref<16x2x32xf32, #tpu.memory_space<vmem>>, vector<1x2x32xf32>
    %1103 = vector.shape_cast %1102 : vector<1x2x32xf32> to vector<2x32xf32>
    %1104 = vector.shape_cast %1070 : vector<2x32xf32> to vector<1x2x32xf32>
    tpu.vector_store %arg16[%c15_224, %c0_225, %c0_226], %1104 {strides = array<i32>} : memref<16x2x32xf32, #tpu.memory_space<vmem>>, vector<1x2x32xf32>,
    %c0_227 = arith.constant 0 : index
    %c0_228 = arith.constant 0 : index
    %c0_229 = arith.constant 0 : index
    %1105 = vector.load %arg17[%c0_227, %c0_228, %c0_229] : memref<16x2x32xf32, #tpu.memory_space<vmem>>, vector<1x2x32xf32>
    %1106 = vector.shape_cast %1105 : vector<1x2x32xf32> to vector<2x32xf32>
    %1107 = vector.shape_cast %1101 : vector<2x32xf32> to vector<1x2x32xf32>
    tpu.vector_store %arg17[%c0_227, %c0_228, %c0_229], %1107 {strides = array<i32>} : memref<16x2x32xf32, #tpu.memory_space<vmem>>, vector<1x2x32xf32>,
    %c0_230 = arith.constant 0 : index
    %c0_231 = arith.constant 0 : index
    %c0_232 = arith.constant 0 : index
    %1108 = vector.load %arg16[%c0_230, %c0_231, %c0_232] : memref<16x2x32xf32, #tpu.memory_space<vmem>>, vector<16x2x32xf32>
    %c0_233 = arith.constant 0 : index
    %c0_234 = arith.constant 0 : index
    %c0_235 = arith.constant 0 : index
    %1109 = vector.load %arg17[%c0_233, %c0_234, %c0_235] : memref<16x2x32xf32, #tpu.memory_space<vmem>>, vector<16x2x32xf32>
    %1110 = tpu.concatenate %1108, %1109 in 2 : vector<16x2x32xf32>, vector<16x2x32xf32> -> vector<16x2x64xf32>
    %c0_236 = arith.constant 0 : index
    %c0_237 = arith.constant 0 : index
    %c0_238 = arith.constant 0 : index
    %1111 = vector.load %arg13[%c0_236, %c0_237, %c0_238] : memref<16x2x64xf32, #tpu.memory_space<vmem>>, vector<16x2x64xf32>
    tpu.vector_store %arg13[%c0_236, %c0_237, %c0_238], %1110 {strides = array<i32>} : memref<16x2x64xf32, #tpu.memory_space<vmem>>, vector<16x2x64xf32>,
    %1112 = vector.shape_cast %1110 : vector<16x2x64xf32> to vector<32x64xf32>
    %c0_239 = arith.constant 0 : index
    %c0_240 = arith.constant 0 : index
    %1113 = vector.load %arg11[%c0_239, %c0_240] : memref<64x32xf32, #tpu.memory_space<vmem>>, vector<64x32xf32>
    %cst_241 = arith.constant dense<0.000000e+00> : vector<32x32xf32>
    %1114 = tpu.matmul %1112, %1113, %cst_241 {dimension_numbers = #tpu.dot_dimension_numbers<[1], [0], [0], [1], [0, 0, 1, 1], [], []>} : vector<32x64xf32>, vector<64x32xf32>, vector<32x32xf32> -> vector<32x32xf32>
    %c0_242 = arith.constant 0 : index
    %c0_243 = arith.constant 0 : index
    %1115 = vector.load %arg12[%c0_242, %c0_243] : memref<1x32xf32, #tpu.memory_space<vmem>>, vector<1x32xf32>
    %1116 = vector.broadcast %1115 : vector<1x32xf32> to vector<32x32xf32>
    %1117 = arith.addf %1114, %1116 : vector<32x32xf32>
    %1118 = vector.shape_cast %1117 : vector<32x32xf32> to vector<16x2x32xf32>
    %c0_244 = arith.constant 0 : index
    %c0_245 = arith.constant 0 : index
    %c0_246 = arith.constant 0 : index
    %1119 = vector.load %arg14[%c0_244, %c0_245, %c0_246] : memref<16x2x32xf32, #tpu.memory_space<vmem>>, vector<16x2x32xf32>
    tpu.vector_store %arg14[%c0_244, %c0_245, %c0_246], %1118 {strides = array<i32>} : memref<16x2x32xf32, #tpu.memory_space<vmem>>, vector<16x2x32xf32>,
    %1120 = tpu.concatenate %1070, %1101 in 1 : vector<2x32xf32>, vector<2x32xf32> -> vector<2x64xf32>
    %c0_247 = arith.constant 0 : index
    %c0_248 = arith.constant 0 : index
    %1121 = vector.load %arg9[%c0_247, %c0_248] : memref<64x32xf32, #tpu.memory_space<vmem>>, vector<64x32xf32>
    %cst_249 = arith.constant dense<0.000000e+00> : vector<2x32xf32>
    %1122 = tpu.matmul %1120, %1121, %cst_249 {dimension_numbers = #tpu.dot_dimension_numbers<[1], [0], [0], [1], [0, 0, 1, 1], [], []>} : vector<2x64xf32>, vector<64x32xf32>, vector<2x32xf32> -> vector<2x32xf32>
    %c0_250 = arith.constant 0 : index
    %c0_251 = arith.constant 0 : index
    %1123 = vector.load %arg10[%c0_250, %c0_251] : memref<1x32xf32, #tpu.memory_space<vmem>>, vector<1x32xf32>
    %1124 = vector.broadcast %1123 : vector<1x32xf32> to vector<2x32xf32>
    %1125 = arith.addf %1122, %1124 : vector<2x32xf32>
    %1126 = math.tanh %1125 : vector<2x32xf32>
    %c0_252 = arith.constant 0 : index
    %c0_253 = arith.constant 0 : index
    %1127 = vector.load %arg15[%c0_252, %c0_253] : memref<2x32xf32, #tpu.memory_space<vmem>>, vector<2x32xf32>
    tpu.vector_store %arg15[%c0_252, %c0_253], %1126 {strides = array<i32>} : memref<2x32xf32, #tpu.memory_space<vmem>>, vector<2x32xf32>,
    return
  }
}

</mosaic_0001>

<llo_original>
// kernel: tpu_custom_call.1
$region0: #{tpu_custom_call.1}
  #allocation0 [shape = 'u32[]', space=smem, size = 0x4, offset = 0x4, fixed_abs, tag = 'smem constant byte address 0x4 - core index']
  #allocation1 [shape = 'u32[144,128]{1,0:T(1,128)}', space=vmem, size = 0x12000, scoped, tag = 'internal scratch']
  #allocation2 [shape = 'f32[16,2,32]{2,1,0:T(2,128)}', space=vmem, size = 0x4000, scoped, tag = 'scratch operand']
  #allocation3 [shape = 'f32[16,2,32]{2,1,0:T(2,128)}', space=vmem, size = 0x4000, scoped, tag = 'scratch operand']
  %s0 = inlined_call_operand.vmem [shape: f32[16,2,8], index: 0, kind: input, shape index: {}]
  %s1 = inlined_call_operand.vmem [shape: f32[8,96], index: 1, kind: input, shape index: {}]
  %s2 = inlined_call_operand.vmem [shape: f32[32,96], index: 2, kind: input, shape index: {}]
  %s3 = inlined_call_operand.vmem [shape: f32[1,96], index: 3, kind: input, shape index: {}]
  %s4 = inlined_call_operand.vmem [shape: f32[1,96], index: 4, kind: input, shape index: {}]
  %s5 = inlined_call_operand.vmem [shape: f32[8,96], index: 5, kind: input, shape index: {}]
  %s6 = inlined_call_operand.vmem [shape: f32[32,96], index: 6, kind: input, shape index: {}]
  %s7 = inlined_call_operand.vmem [shape: f32[1,96], index: 7, kind: input, shape index: {}]
  %s8 = inlined_call_operand.vmem [shape: f32[1,96], index: 8, kind: input, shape index: {}]
  %s9 = inlined_call_operand.vmem [shape: f32[64,32], index: 9, kind: input, shape index: {}]
  %s10 = inlined_call_operand.vmem [shape: f32[1,32], index: 10, kind: input, shape index: {}]
  %s11 = inlined_call_operand.vmem [shape: f32[64,32], index: 11, kind: input, shape index: {}]
  %s12 = inlined_call_operand.vmem [shape: f32[1,32], index: 12, kind: input, shape index: {}]
  %s13 = inlined_call_operand.hbm [shape: f32[16,2,64], index: 13, kind: output, shape index: {0}]
  %s14 = inlined_call_operand.hbm [shape: f32[16,2,32], index: 14, kind: output, shape index: {1}]
  %s15 = inlined_call_operand.hbm [shape: f32[2,32], index: 15, kind: output, shape index: {2}]
  %16 = xla_tuple %s13, %s14, %s15
  %s17 = sld [smem:[#allocation0]]
  $region78: #{tpu_custom_call.1} parent=0
    _
  %s19 = ssub.s32 1, %s17
  %s20 = scalar_select 0, %s19, %s17
  $region1: #{tpu_custom_call.1} parent=0
    #allocation4 [shape = 'u8[16384]{0}', space=vmem, size = 0x4000, scoped, tag = 'output window, operand 0, single buffered']
    #allocation5 [shape = 's32[1]{0}', space=sflag, size = 0x4, scoped, tag = 'scoped memory for tpu_custom_call.1']
    #allocation6 [shape = 'u8[16384]{0}', space=vmem, size = 0x4000, scoped, tag = 'output window, operand 1, single buffered']
    #allocation7 [shape = 's32[1]{0}', space=sflag, size = 0x4, scoped, tag = 'scoped memory for tpu_custom_call.1']
    #allocation8 [shape = 'u8[1024]{0}', space=vmem, size = 0x400, scoped, tag = 'output window, operand 2, single buffered']
    %21 = vsyncpa [#allocation5], 0
    %22 = vsyncpa [#allocation7], 0
    // Predicated region
    $region2: #{tpu_custom_call.1} parent=1 // pred_check
      _
    $region3: #{tpu_custom_call.1} parent=1 // pred_check_branch
      %24 = sbr.rel (0) target = $region5
    $region4: #{tpu_custom_call.1} parent=1 // pred_region
      _
    $region5: #{tpu_custom_call.1} parent=1 // pred_fallthru
      _
    // Predicated region
    $region6: #{tpu_custom_call.1} parent=1 // pred_check
      _
    $region7: #{tpu_custom_call.1} parent=1 // pred_check_branch
      %26 = sbr.rel (0) target = $region9
    $region8: #{tpu_custom_call.1} parent=1 // pred_region
      _
    $region9: #{tpu_custom_call.1} parent=1 // pred_fallthru
      _
    // Predicated region
    $region10: #{tpu_custom_call.1} parent=1 // pred_check
      _
    $region11: #{tpu_custom_call.1} parent=1 // pred_check_branch
      %28 = sbr.rel (0) target = $region13
    $region12: #{tpu_custom_call.1} parent=1 // pred_region
      _
    $region13: #{tpu_custom_call.1} parent=1 // pred_fallthru
      _
    // Predicated region
    $region14: #{tpu_custom_call.1} parent=1 // pred_check
      _
    $region15: #{tpu_custom_call.1} parent=1 // pred_check_branch
      %30 = sbr.rel (0) target = $region17
    $region16: #{tpu_custom_call.1} parent=1 // pred_region
      _
    $region17: #{tpu_custom_call.1} parent=1 // pred_fallthru
      _
    // Predicated region
    $region18: #{tpu_custom_call.1} parent=1 // pred_check
      _
    $region19: #{tpu_custom_call.1} parent=1 // pred_check_branch
      %32 = sbr.rel (0) target = $region21
    $region20: #{tpu_custom_call.1} parent=1 // pred_region
      _
    $region21: #{tpu_custom_call.1} parent=1 // pred_fallthru
      _
    // Predicated region
    $region22: #{tpu_custom_call.1} parent=1 // pred_check
      _
    $region23: #{tpu_custom_call.1} parent=1 // pred_check_branch
      %34 = sbr.rel (0) target = $region25
    $region24: #{tpu_custom_call.1} parent=1 // pred_region
      _
    $region25: #{tpu_custom_call.1} parent=1 // pred_fallthru
      _
    // Predicated region
    $region26: #{tpu_custom_call.1} parent=1 // pred_check
      _
    $region27: #{tpu_custom_call.1} parent=1 // pred_check_branch
      %36 = sbr.rel (0) target = $region29
    $region28: #{tpu_custom_call.1} parent=1 // pred_region
      _
    $region29: #{tpu_custom_call.1} parent=1 // pred_fallthru
      _
    // Predicated region
    $region30: #{tpu_custom_call.1} parent=1 // pred_check
      _
    $region31: #{tpu_custom_call.1} parent=1 // pred_check_branch
      %38 = sbr.rel (0) target = $region33
    $region32: #{tpu_custom_call.1} parent=1 // pred_region
      _
    $region33: #{tpu_custom_call.1} parent=1 // pred_fallthru
      _
    // Predicated region
    $region34: #{tpu_custom_call.1} parent=1 // pred_check
      _
    $region35: #{tpu_custom_call.1} parent=1 // pred_check_branch
      %40 = sbr.rel (0) target = $region37
    $region36: #{tpu_custom_call.1} parent=1 // pred_region
      _
    $region37: #{tpu_custom_call.1} parent=1 // pred_fallthru
      _
    // Predicated region
    $region38: #{tpu_custom_call.1} parent=1 // pred_check
      _
    $region39: #{tpu_custom_call.1} parent=1 // pred_check_branch
      %42 = sbr.rel (0) target = $region41
    $region40: #{tpu_custom_call.1} parent=1 // pred_region
      _
    $region41: #{tpu_custom_call.1} parent=1 // pred_fallthru
      _
    // Predicated region
    $region42: #{tpu_custom_call.1} parent=1 // pred_check
      _
    $region43: #{tpu_custom_call.1} parent=1 // pred_check_branch
      %44 = sbr.rel (0) target = $region45
    $region44: #{tpu_custom_call.1} parent=1 // pred_region
      _
    $region45: #{tpu_custom_call.1} parent=1 // pred_fallthru
      _
    // Predicated region
    $region46: #{tpu_custom_call.1} parent=1 // pred_check
      _
    $region47: #{tpu_custom_call.1} parent=1 // pred_check_branch
      %46 = sbr.rel (0) target = $region49
    $region48: #{tpu_custom_call.1} parent=1 // pred_region
      _
    $region49: #{tpu_custom_call.1} parent=1 // pred_fallthru
      _
    // Predicated region
    $region50: #{tpu_custom_call.1} parent=1 // pred_check
      _
    $region51: #{tpu_custom_call.1} parent=1 // pred_check_branch
      %48 = sbr.rel (0) target = $region53
    $region52: #{tpu_custom_call.1} parent=1 // pred_region
      _
    $region53: #{tpu_custom_call.1} parent=1 // pred_fallthru
      _
    %v49 = vld [vmem:[%s0] sm:$0x3]
    %v50 = vld [vmem:[%s0 + $0x2] sm:$0x3]
    %v51 = vld [vmem:[%s0 + $0x4] sm:$0x3]
    %v52 = vld [vmem:[%s0 + $0x6] sm:$0x3]
    %v53 = vld [vmem:[%s0 + $0x8] sm:$0x3]
    %v54 = vld [vmem:[%s0 + $0xa] sm:$0x3]
    %v55 = vld [vmem:[%s0 + $0xc] sm:$0x3]
    %v56 = vld [vmem:[%s0 + $0xe] sm:$0x3]
    %v57 = vld [vmem:[%s0 + $0x10] sm:$0x3]
    %v58 = vld [vmem:[%s0 + $0x12] sm:$0x3]
    %v59 = vld [vmem:[%s0 + $0x14] sm:$0x3]
    %v60 = vld [vmem:[%s0 + $0x16] sm:$0x3]
    %v61 = vld [vmem:[%s0 + $0x18] sm:$0x3]
    %v62 = vld [vmem:[%s0 + $0x1a] sm:$0x3]
    %v63 = vld [vmem:[%s0 + $0x1c] sm:$0x3]
    %v64 = vld [vmem:[%s0 + $0x1e] sm:$0x3]
    %v65 = vld [vmem:[%s1] sm:$0xff]
    %v66 = vld [vmem:[%s3] sm:$0x1]
    %v68 = vlaneseq
    %v69 = vshrl.u32 %v68, 7
    %v70 = vsub.s32 0, %v69
    %v71 = vrot.slane %v66, %v70
    %v89 = vcombine.low %v49, %v50
    %v90 = vcombine.low %v51, %v52
    %v92 = vunpack.c.l.s4 1983009808
    %v93 = vunpack.c.0.s8 %v92
    %v94 = vlaneseq
    %v95 = vshrl.u32 %v94, 7
    %v96 = vsub.s32 %v93, %v95
    %v97 = vrot.slane %v89, %v96
    %v99 = vunpack.c.l.s4 1983009808
    %v100 = vunpack.c.0.s8 %v99
    %v101 = vlaneseq
    %v102 = vshrl.u32 %v101, 7
    %v103 = vsub.s32 %v100, %v102
    %v104 = vrot.slane %v90, %v103
    %v105 = vcombine.low %v97, %v104
    %v106 = vcombine.low %v53, %v54
    %v107 = vcombine.low %v55, %v56
    %v109 = vunpack.c.l.s4 1983009808
    %v110 = vunpack.c.0.s8 %v109
    %v111 = vlaneseq
    %v112 = vshrl.u32 %v111, 7
    %v113 = vsub.s32 %v110, %v112
    %v114 = vrot.slane %v106, %v113
    %v116 = vunpack.c.l.s4 1983009808
    %v117 = vunpack.c.0.s8 %v116
    %v118 = vlaneseq
    %v119 = vshrl.u32 %v118, 7
    %v120 = vsub.s32 %v117, %v119
    %v121 = vrot.slane %v107, %v120
    %v122 = vcombine.low %v114, %v121
    %v123 = vcombine.low %v57, %v58
    %v124 = vcombine.low %v59, %v60
    %v126 = vunpack.c.l.s4 1983009808
    %v127 = vunpack.c.0.s8 %v126
    %v128 = vlaneseq
    %v129 = vshrl.u32 %v128, 7
    %v130 = vsub.s32 %v127, %v129
    %v131 = vrot.slane %v123, %v130
    %v133 = vunpack.c.l.s4 1983009808
    %v134 = vunpack.c.0.s8 %v133
    %v135 = vlaneseq
    %v136 = vshrl.u32 %v135, 7
    %v137 = vsub.s32 %v134, %v136
    %v138 = vrot.slane %v124, %v137
    %v139 = vcombine.low %v131, %v138
    %v140 = vcombine.low %v61, %v62
    %v141 = vcombine.low %v63, %v64
    %v143 = vunpack.c.l.s4 1983009808
    %v144 = vunpack.c.0.s8 %v143
    %v145 = vlaneseq
    %v146 = vshrl.u32 %v145, 7
    %v147 = vsub.s32 %v144, %v146
    %v148 = vrot.slane %v140, %v147
    %v150 = vunpack.c.l.s4 1983009808
    %v151 = vunpack.c.0.s8 %v150
    %v152 = vlaneseq
    %v153 = vshrl.u32 %v152, 7
    %v154 = vsub.s32 %v151, %v153
    %v155 = vrot.slane %v141, %v154
    %v156 = vcombine.low %v148, %v155
    %vm157 = vcmask 64512
    %v158 = vsel %vm157, %v105, 0
    %v160 = vsel %vm157, %v122, 0
    %v162 = vsel %vm157, %v139, 0
    %v164 = vsel %vm157, %v156, 0
    %166 = vmatprep.subr.mxu0 0.0
    %167 = vmatpush1.msra.mxu0 0.0
    %168 = vmatprep.subr.mxu0 0.0
    %169 = vmatpush1.msra.mxu0 0.0
    %170 = vmatprep.subr.mxu0 0.0
    %171 = vmatpush1.msra.mxu0 0.0
    %172 = vmatprep.subr.mxu0 0.0
    %173 = vmatpush1.msra.mxu0 0.0
    %174 = vmatprep.subr.mxu0 0.0
    %175 = vmatpush1.msra.mxu0 0.0
    %176 = vmatprep.subr.mxu0 0.0
    %177 = vmatpush1.msra.mxu0 0.0
    %178 = vmatprep.subr.mxu0 0.0
    %179 = vmatpush1.msra.mxu0 0.0
    %180 = vmatprep.subr.mxu0 0.0
    %181 = vmatpush1.msra.mxu0 0.0
    %182 = vmatprep.subr.mxu0 0.0
    %183 = vmatpush1.msra.mxu0 0.0
    %184 = vmatprep.subr.mxu0 0.0
    %185 = vmatpush1.msra.mxu0 0.0
    %186 = vmatprep.subr.mxu0 0.0
    %187 = vmatpush1.msra.mxu0 0.0
    %188 = vmatprep.subr.mxu0 0.0
    %189 = vmatpush1.msra.mxu0 0.0
    %190 = vmatprep.subr.mxu0 0.0
    %191 = vmatpush1.msra.mxu0 0.0
    %192 = vmatprep.subr.mxu0 0.0
    %193 = vmatpush1.msra.mxu0 0.0
    %194 = vmatprep.subr.mxu0 0.0
    %195 = vmatpush1.msra.mxu0 0.0
    %196 = vmatprep.subr.mxu0 0.0
    %197 = vmatpush1.msra.mxu0 %v65
    %198 = vmatprep.subr.mxu0 0.0
    %199 = vmatpush2.msra.mxu0 0.0
    %200 = vmatprep.subr.mxu0 0.0
    %201 = vmatpush2.msra.mxu0 0.0
    %202 = vmatprep.subr.mxu0 0.0
    %203 = vmatpush2.msra.mxu0 0.0
    %204 = vmatprep.subr.mxu0 0.0
    %205 = vmatpush2.msra.mxu0 0.0
    %206 = vmatprep.subr.mxu0 0.0
    %207 = vmatpush2.msra.mxu0 0.0
    %208 = vmatprep.subr.mxu0 0.0
    %209 = vmatpush2.msra.mxu0 0.0
    %210 = vmatprep.subr.mxu0 0.0
    %211 = vmatpush2.msra.mxu0 0.0
    %212 = vmatprep.subr.mxu0 0.0
    %213 = vmatpush2.msra.mxu0 0.0
    %214 = vmatprep.subr.mxu0 0.0
    %215 = vmatpush2.msra.mxu0 0.0
    %216 = vmatprep.subr.mxu0 0.0
    %217 = vmatpush2.msra.mxu0 0.0
    %218 = vmatprep.subr.mxu0 0.0
    %219 = vmatpush2.msra.mxu0 0.0
    %220 = vmatprep.subr.mxu0 0.0
    %221 = vmatpush2.msra.mxu0 0.0
    %222 = vmatprep.subr.mxu0 0.0
    %223 = vmatpush2.msra.mxu0 0.0
    %224 = vmatprep.subr.mxu0 0.0
    %225 = vmatpush2.msra.mxu0 0.0
    %226 = vmatprep.subr.mxu0 0.0
    %227 = vmatpush2.msra.mxu0 0.0
    %228 = vmatprep.subr.mxu0 0.0
    %229 = vmatpush2.msra.mxu0 0.0
    %230 = vmatprep.mubr.f32.mxu0 0.0
    %231 = vmatmul.mubr.f32.gmra.mxu0 %v158
    %v232 = vpop.f32.mrf.mxu0
    %v233 = vadd.f32 %v71, %v232
    %v234 = vpop.f32.mrf.mxu0
    %235 = vmatprep.mubr.f32.mxu0 0.0
    %236 = vmatmul.mubr.f32.gmra.mxu0 %v160
    %v237 = vpop.f32.mrf.mxu0
    %v238 = vadd.f32 %v71, %v237
    %v239 = vpop.f32.mrf.mxu0
    %240 = vmatprep.mubr.f32.mxu0 0.0
    %241 = vmatmul.mubr.f32.gmra.mxu0 %v162
    %v242 = vpop.f32.mrf.mxu0
    %v243 = vadd.f32 %v71, %v242
    %v244 = vpop.f32.mrf.mxu0
    %245 = vmatprep.mubr.f32.mxu0 0.0
    %246 = vmatmul.mubr.f32.gmra.mxu0 %v164
    %v247 = vpop.f32.mrf.mxu0
    %v248 = vadd.f32 %v71, %v247
    %v249 = vpop.f32.mrf.mxu0
    %250 = vdwg.mxu0
    %v255 = vcombine.high %v233, %v233
    %v257 = vunpack.c.l.s4 1983009808
    %v258 = vunpack.c.0.s8 %v257
    %v259 = vlaneseq
    %v260 = vshrl.u32 %v259, 7
    %v261 = vsub.s32 %v258, %v260
    %v262 = vrot.slane %v233, %v261
    %v264 = vunpack.c.l.s4 1983009808
    %v265 = vunpack.c.0.s8 %v264
    %v266 = vlaneseq
    %v267 = vshrl.u32 %v266, 7
    %v268 = vsub.s32 %v265, %v267
    %v269 = vrot.slane %v255, %v268
    %v270 = vcombine.high %v262, %v262
    %v271 = vcombine.high %v269, %v269
    %v272 = vcombine.high %v238, %v238
    %v274 = vunpack.c.l.s4 1983009808
    %v275 = vunpack.c.0.s8 %v274
    %v276 = vlaneseq
    %v277 = vshrl.u32 %v276, 7
    %v278 = vsub.s32 %v275, %v277
    %v279 = vrot.slane %v238, %v278
    %v281 = vunpack.c.l.s4 1983009808
    %v282 = vunpack.c.0.s8 %v281
    %v283 = vlaneseq
    %v284 = vshrl.u32 %v283, 7
    %v285 = vsub.s32 %v282, %v284
    %v286 = vrot.slane %v272, %v285
    %v287 = vcombine.high %v279, %v279
    %v288 = vcombine.high %v286, %v286
    %v289 = vcombine.high %v243, %v243
    %v291 = vunpack.c.l.s4 1983009808
    %v292 = vunpack.c.0.s8 %v291
    %v293 = vlaneseq
    %v294 = vshrl.u32 %v293, 7
    %v295 = vsub.s32 %v292, %v294
    %v296 = vrot.slane %v243, %v295
    %v298 = vunpack.c.l.s4 1983009808
    %v299 = vunpack.c.0.s8 %v298
    %v300 = vlaneseq
    %v301 = vshrl.u32 %v300, 7
    %v302 = vsub.s32 %v299, %v301
    %v303 = vrot.slane %v289, %v302
    %v304 = vcombine.high %v296, %v296
    %v305 = vcombine.high %v303, %v303
    %v306 = vcombine.high %v248, %v248
    %v308 = vunpack.c.l.s4 1983009808
    %v309 = vunpack.c.0.s8 %v308
    %v310 = vlaneseq
    %v311 = vshrl.u32 %v310, 7
    %v312 = vsub.s32 %v309, %v311
    %v313 = vrot.slane %v248, %v312
    %v315 = vunpack.c.l.s4 1983009808
    %v316 = vunpack.c.0.s8 %v315
    %v317 = vlaneseq
    %v318 = vshrl.u32 %v317, 7
    %v319 = vsub.s32 %v316, %v318
    %v320 = vrot.slane %v306, %v319
    %v321 = vcombine.high %v313, %v313
    %v322 = vcombine.high %v320, %v320
    %v339 = vld [vmem:[%s5] sm:$0xff]
    %v340 = vld [vmem:[%s7] sm:$0x1]
    %v342 = vlaneseq
    %v343 = vshrl.u32 %v342, 7
    %v344 = vsub.s32 0, %v343
    %v345 = vrot.slane %v340, %v344
    %347 = vmatprep.subr.mxu0 0.0
    %348 = vmatpush1.msra.mxu0 0.0
    %349 = vmatprep.subr.mxu0 0.0
    %350 = vmatpush1.msra.mxu0 0.0
    %351 = vmatprep.subr.mxu0 0.0
    %352 = vmatpush1.msra.mxu0 0.0
    %353 = vmatprep.subr.mxu0 0.0
    %354 = vmatpush1.msra.mxu0 0.0
    %355 = vmatprep.subr.mxu0 0.0
    %356 = vmatpush1.msra.mxu0 0.0
    %357 = vmatprep.subr.mxu0 0.0
    %358 = vmatpush1.msra.mxu0 0.0
    %359 = vmatprep.subr.mxu0 0.0
    %360 = vmatpush1.msra.mxu0 0.0
    %361 = vmatprep.subr.mxu0 0.0
    %362 = vmatpush1.msra.mxu0 0.0
    %363 = vmatprep.subr.mxu0 0.0
    %364 = vmatpush1.msra.mxu0 0.0
    %365 = vmatprep.subr.mxu0 0.0
    %366 = vmatpush1.msra.mxu0 0.0
    %367 = vmatprep.subr.mxu0 0.0
    %368 = vmatpush1.msra.mxu0 0.0
    %369 = vmatprep.subr.mxu0 0.0
    %370 = vmatpush1.msra.mxu0 0.0
    %371 = vmatprep.subr.mxu0 0.0
    %372 = vmatpush1.msra.mxu0 0.0
    %373 = vmatprep.subr.mxu0 0.0
    %374 = vmatpush1.msra.mxu0 0.0
    %375 = vmatprep.subr.mxu0 0.0
    %376 = vmatpush1.msra.mxu0 0.0
    %377 = vmatprep.subr.mxu0 0.0
    %378 = vmatpush1.msra.mxu0 %v339
    %379 = vmatprep.subr.mxu0 0.0
    %380 = vmatpush2.msra.mxu0 0.0
    %381 = vmatprep.subr.mxu0 0.0
    %382 = vmatpush2.msra.mxu0 0.0
    %383 = vmatprep.subr.mxu0 0.0
    %384 = vmatpush2.msra.mxu0 0.0
    %385 = vmatprep.subr.mxu0 0.0
    %386 = vmatpush2.msra.mxu0 0.0
    %387 = vmatprep.subr.mxu0 0.0
    %388 = vmatpush2.msra.mxu0 0.0
    %389 = vmatprep.subr.mxu0 0.0
    %390 = vmatpush2.msra.mxu0 0.0
    %391 = vmatprep.subr.mxu0 0.0
    %392 = vmatpush2.msra.mxu0 0.0
    %393 = vmatprep.subr.mxu0 0.0
    %394 = vmatpush2.msra.mxu0 0.0
    %395 = vmatprep.subr.mxu0 0.0
    %396 = vmatpush2.msra.mxu0 0.0
    %397 = vmatprep.subr.mxu0 0.0
    %398 = vmatpush2.msra.mxu0 0.0
    %399 = vmatprep.subr.mxu0 0.0
    %400 = vmatpush2.msra.mxu0 0.0
    %401 = vmatprep.subr.mxu0 0.0
    %402 = vmatpush2.msra.mxu0 0.0
    %403 = vmatprep.subr.mxu0 0.0
    %404 = vmatpush2.msra.mxu0 0.0
    %405 = vmatprep.subr.mxu0 0.0
    %406 = vmatpush2.msra.mxu0 0.0
    %407 = vmatprep.subr.mxu0 0.0
    %408 = vmatpush2.msra.mxu0 0.0
    %409 = vmatprep.subr.mxu0 0.0
    %410 = vmatpush2.msra.mxu0 0.0
    %411 = vmatprep.mubr.f32.mxu0 0.0
    %412 = vmatmul.mubr.f32.gmra.mxu0 %v158
    %v413 = vpop.f32.mrf.mxu0
    %v414 = vadd.f32 %v345, %v413
    %v415 = vpop.f32.mrf.mxu0
    %416 = vmatprep.mubr.f32.mxu0 0.0
    %417 = vmatmul.mubr.f32.gmra.mxu0 %v160
    %v418 = vpop.f32.mrf.mxu0
    %v419 = vadd.f32 %v345, %v418
    %v420 = vpop.f32.mrf.mxu0
    %421 = vmatprep.mubr.f32.mxu0 0.0
    %422 = vmatmul.mubr.f32.gmra.mxu0 %v162
    %v423 = vpop.f32.mrf.mxu0
    %v424 = vadd.f32 %v345, %v423
    %v425 = vpop.f32.mrf.mxu0
    %426 = vmatprep.mubr.f32.mxu0 0.0
    %427 = vmatmul.mubr.f32.gmra.mxu0 %v164
    %v428 = vpop.f32.mrf.mxu0
    %v429 = vadd.f32 %v345, %v428
    %v430 = vpop.f32.mrf.mxu0
    %431 = vdwg.mxu0
    %v436 = vcombine.high %v414, %v414
    %v438 = vunpack.c.l.s4 1983009808
    %v439 = vunpack.c.0.s8 %v438
    %v440 = vlaneseq
    %v441 = vshrl.u32 %v440, 7
    %v442 = vsub.s32 %v439, %v441
    %v443 = vrot.slane %v414, %v442
    %v445 = vunpack.c.l.s4 1983009808
    %v446 = vunpack.c.0.s8 %v445
    %v447 = vlaneseq
    %v448 = vshrl.u32 %v447, 7
    %v449 = vsub.s32 %v446, %v448
    %v450 = vrot.slane %v436, %v449
    %v451 = vcombine.high %v443, %v443
    %v452 = vcombine.high %v450, %v450
    %v453 = vcombine.high %v419, %v419
    %v455 = vunpack.c.l.s4 1983009808
    %v456 = vunpack.c.0.s8 %v455
    %v457 = vlaneseq
    %v458 = vshrl.u32 %v457, 7
    %v459 = vsub.s32 %v456, %v458
    %v460 = vrot.slane %v419, %v459
    %v462 = vunpack.c.l.s4 1983009808
    %v463 = vunpack.c.0.s8 %v462
    %v464 = vlaneseq
    %v465 = vshrl.u32 %v464, 7
    %v466 = vsub.s32 %v463, %v465
    %v467 = vrot.slane %v453, %v466
    %v468 = vcombine.high %v460, %v460
    %v469 = vcombine.high %v467, %v467
    %v470 = vcombine.high %v424, %v424
    %v472 = vunpack.c.l.s4 1983009808
    %v473 = vunpack.c.0.s8 %v472
    %v474 = vlaneseq
    %v475 = vshrl.u32 %v474, 7
    %v476 = vsub.s32 %v473, %v475
    %v477 = vrot.slane %v424, %v476
    %v479 = vunpack.c.l.s4 1983009808
    %v480 = vunpack.c.0.s8 %v479
    %v481 = vlaneseq
    %v482 = vshrl.u32 %v481, 7
    %v483 = vsub.s32 %v480, %v482
    %v484 = vrot.slane %v470, %v483
    %v485 = vcombine.high %v477, %v477
    %v486 = vcombine.high %v484, %v484
    %v487 = vcombine.high %v429, %v429
    %v489 = vunpack.c.l.s4 1983009808
    %v490 = vunpack.c.0.s8 %v489
    %v491 = vlaneseq
    %v492 = vshrl.u32 %v491, 7
    %v493 = vsub.s32 %v490, %v492
    %v494 = vrot.slane %v429, %v493
    %v496 = vunpack.c.l.s4 1983009808
    %v497 = vunpack.c.0.s8 %v496
    %v498 = vlaneseq
    %v499 = vshrl.u32 %v498, 7
    %v500 = vsub.s32 %v497, %v499
    %v501 = vrot.slane %v487, %v500
    %v502 = vcombine.high %v494, %v494
    %v503 = vcombine.high %v501, %v501
    %v520 = vld [vmem:[%s2] sm:$0xff]
    %v521 = vld [vmem:[%s2 + $0x8] sm:$0xff]
    %v522 = vld [vmem:[%s2 + $0x10] sm:$0xff]
    %v523 = vld [vmem:[%s2 + $0x18] sm:$0xff]
    %v524 = vld [vmem:[%s4] sm:$0x1]
    %v525 = vld [vmem:[%s6] sm:$0xff]
    %v526 = vld [vmem:[%s6 + $0x8] sm:$0xff]
    %v527 = vld [vmem:[%s6 + $0x10] sm:$0xff]
    %v528 = vld [vmem:[%s6 + $0x18] sm:$0xff]
    %v529 = vld [vmem:[%s8] sm:$0x1]
    %v531 = vlaneseq
    %v532 = vshrl.u32 %v531, 7
    %v533 = vsub.s32 0, %v532
    %v534 = vrot.slane %v524, %v533
    %vm536 = vcmask 261120
    %v538 = vsel %vm536, 0.0, 0
    %540 = vmatprep.subr.mxu0 0.0
    %541 = vmatpush1.msra.mxu0 0.0
    %542 = vmatprep.subr.mxu0 0.0
    %543 = vmatpush1.msra.mxu0 0.0
    %544 = vmatprep.subr.mxu0 0.0
    %545 = vmatpush1.msra.mxu0 0.0
    %546 = vmatprep.subr.mxu0 0.0
    %547 = vmatpush1.msra.mxu0 0.0
    %548 = vmatprep.subr.mxu0 0.0
    %549 = vmatpush1.msra.mxu0 0.0
    %550 = vmatprep.subr.mxu0 0.0
    %551 = vmatpush1.msra.mxu0 0.0
    %552 = vmatprep.subr.mxu0 0.0
    %553 = vmatpush1.msra.mxu0 0.0
    %554 = vmatprep.subr.mxu0 0.0
    %555 = vmatpush1.msra.mxu0 0.0
    %556 = vmatprep.subr.mxu0 0.0
    %557 = vmatpush1.msra.mxu0 0.0
    %558 = vmatprep.subr.mxu0 0.0
    %559 = vmatpush1.msra.mxu0 0.0
    %560 = vmatprep.subr.mxu0 0.0
    %561 = vmatpush1.msra.mxu0 0.0
    %562 = vmatprep.subr.mxu0 0.0
    %563 = vmatpush1.msra.mxu0 0.0
    %564 = vmatprep.subr.mxu0 0.0
    %565 = vmatpush1.msra.mxu0 %v523
    %566 = vmatprep.subr.mxu0 0.0
    %567 = vmatpush1.msra.mxu0 %v522
    %568 = vmatprep.subr.mxu0 0.0
    %569 = vmatpush1.msra.mxu0 %v521
    %570 = vmatprep.subr.mxu0 0.0
    %571 = vmatpush1.msra.mxu0 %v520
    %572 = vmatprep.subr.mxu0 0.0
    %573 = vmatpush2.msra.mxu0 0.0
    %574 = vmatprep.subr.mxu0 0.0
    %575 = vmatpush2.msra.mxu0 0.0
    %576 = vmatprep.subr.mxu0 0.0
    %577 = vmatpush2.msra.mxu0 0.0
    %578 = vmatprep.subr.mxu0 0.0
    %579 = vmatpush2.msra.mxu0 0.0
    %580 = vmatprep.subr.mxu0 0.0
    %581 = vmatpush2.msra.mxu0 0.0
    %582 = vmatprep.subr.mxu0 0.0
    %583 = vmatpush2.msra.mxu0 0.0
    %584 = vmatprep.subr.mxu0 0.0
    %585 = vmatpush2.msra.mxu0 0.0
    %586 = vmatprep.subr.mxu0 0.0
    %587 = vmatpush2.msra.mxu0 0.0
    %588 = vmatprep.subr.mxu0 0.0
    %589 = vmatpush2.msra.mxu0 0.0
    %590 = vmatprep.subr.mxu0 0.0
    %591 = vmatpush2.msra.mxu0 0.0
    %592 = vmatprep.subr.mxu0 0.0
    %593 = vmatpush2.msra.mxu0 0.0
    %594 = vmatprep.subr.mxu0 0.0
    %595 = vmatpush2.msra.mxu0 0.0
    %596 = vmatprep.subr.mxu0 0.0
    %597 = vmatpush2.msra.mxu0 0.0
    %598 = vmatprep.subr.mxu0 0.0
    %599 = vmatpush2.msra.mxu0 0.0
    %600 = vmatprep.subr.mxu0 0.0
    %601 = vmatpush2.msra.mxu0 0.0
    %602 = vmatprep.subr.mxu0 0.0
    %603 = vmatpush2.msra.mxu0 0.0
    %604 = vmatprep.mubr.f32.mxu0 0.0
    %605 = vmatmul.mubr.f32.gmra.mxu0 %v538
    %v606 = vpop.f32.mrf.mxu0
    %v607 = vadd.f32 %v534, %v606
    %v608 = vpop.f32.mrf.mxu0
    %609 = vdwg.mxu0
    %v610 = vadd.f32 %v262, %v607
    %v611 = vxor.u32 %v610, 2147483648
    %v612 = vmul.f32 %v611, 1.442695
    %v613 = vpow.pop %v612
    %v614 = vadd.f32 %v613, 1.0
    %v615 = vrcp.pop %v614
    %v616 = vmul.f32 1.0, %v615
    %v619 = vunpack.c.l.s4 1983009808
    %v620 = vunpack.c.0.s8 %v619
    %v621 = vlaneseq
    %v622 = vshrl.u32 %v621, 7
    %v623 = vsub.s32 %v620, %v622
    %v624 = vrot.slane %v607, %v623
    %625 = vrot.lane.b32.xlu0 %v624, 64
    %v626 = vpop.permute.xlu0 %625
    %v628 = vmul.f32 %v616, %v626
    %630 = vrot.lane.b32.xlu0 %v628, 64
    %v631 = vpop.permute.xlu0 %630
    %v633 = vadd.f32 %v262, %v631
    %v634 = vtanh.pop %v633
    %v635 = vsub.f32 1.0, %v616
    %637 = vrot.lane.b32.xlu0 %v634, 96
    %v638 = vpop.permute.xlu0 %637
    %v640 = vmul.f32 %v635, %v638
    %v641 = vmul.f32 %v616, 0.0
    %v642 = vadd.f32 %v640, %v641
    %v644 = vlaneseq
    %v645 = vshrl.u32 %v644, 7
    %v646 = vsub.s32 0, %v645
    %v647 = vrot.slane %v529, %v646
    %649 = vmatprep.subr.mxu0 0.0
    %650 = vmatpush1.msra.mxu0 0.0
    %651 = vmatprep.subr.mxu0 0.0
    %652 = vmatpush1.msra.mxu0 0.0
    %653 = vmatprep.subr.mxu0 0.0
    %654 = vmatpush1.msra.mxu0 0.0
    %655 = vmatprep.subr.mxu0 0.0
    %656 = vmatpush1.msra.mxu0 0.0
    %657 = vmatprep.subr.mxu0 0.0
    %658 = vmatpush1.msra.mxu0 0.0
    %659 = vmatprep.subr.mxu0 0.0
    %660 = vmatpush1.msra.mxu0 0.0
    %661 = vmatprep.subr.mxu0 0.0
    %662 = vmatpush1.msra.mxu0 0.0
    %663 = vmatprep.subr.mxu0 0.0
    %664 = vmatpush1.msra.mxu0 0.0
    %665 = vmatprep.subr.mxu0 0.0
    %666 = vmatpush1.msra.mxu0 0.0
    %667 = vmatprep.subr.mxu0 0.0
    %668 = vmatpush1.msra.mxu0 0.0
    %669 = vmatprep.subr.mxu0 0.0
    %670 = vmatpush1.msra.mxu0 0.0
    %671 = vmatprep.subr.mxu0 0.0
    %672 = vmatpush1.msra.mxu0 0.0
    %673 = vmatprep.subr.mxu0 0.0
    %674 = vmatpush1.msra.mxu0 %v528
    %675 = vmatprep.subr.mxu0 0.0
    %676 = vmatpush1.msra.mxu0 %v527
    %677 = vmatprep.subr.mxu0 0.0
    %678 = vmatpush1.msra.mxu0 %v526
    %679 = vmatprep.subr.mxu0 0.0
    %680 = vmatpush1.msra.mxu0 %v525
    %681 = vmatprep.subr.mxu0 0.0
    %682 = vmatpush2.msra.mxu0 0.0
    %683 = vmatprep.subr.mxu0 0.0
    %684 = vmatpush2.msra.mxu0 0.0
    %685 = vmatprep.subr.mxu0 0.0
    %686 = vmatpush2.msra.mxu0 0.0
    %687 = vmatprep.subr.mxu0 0.0
    %688 = vmatpush2.msra.mxu0 0.0
    %689 = vmatprep.subr.mxu0 0.0
    %690 = vmatpush2.msra.mxu0 0.0
    %691 = vmatprep.subr.mxu0 0.0
    %692 = vmatpush2.msra.mxu0 0.0
    %693 = vmatprep.subr.mxu0 0.0
    %694 = vmatpush2.msra.mxu0 0.0
    %695 = vmatprep.subr.mxu0 0.0
    %696 = vmatpush2.msra.mxu0 0.0
    %697 = vmatprep.subr.mxu0 0.0
    %698 = vmatpush2.msra.mxu0 0.0
    %699 = vmatprep.subr.mxu0 0.0
    %700 = vmatpush2.msra.mxu0 0.0
    %701 = vmatprep.subr.mxu0 0.0
    %702 = vmatpush2.msra.mxu0 0.0
    %703 = vmatprep.subr.mxu0 0.0
    %704 = vmatpush2.msra.mxu0 0.0
    %705 = vmatprep.subr.mxu0 0.0
    %706 = vmatpush2.msra.mxu0 0.0
    %707 = vmatprep.subr.mxu0 0.0
    %708 = vmatpush2.msra.mxu0 0.0
    %709 = vmatprep.subr.mxu0 0.0
    %710 = vmatpush2.msra.mxu0 0.0
    %711 = vmatprep.subr.mxu0 0.0
    %712 = vmatpush2.msra.mxu0 0.0
    %713 = vmatprep.mubr.f32.mxu0 0.0
    %714 = vmatmul.mubr.f32.gmra.mxu0 %v538
    %v715 = vpop.f32.mrf.mxu0
    %v716 = vadd.f32 %v647, %v715
    %v717 = vpop.f32.mrf.mxu0
    %718 = vdwg.mxu0
    %v719 = vadd.f32 %v503, %v716
    %v720 = vxor.u32 %v719, 2147483648
    %v721 = vmul.f32 %v720, 1.442695
    %v722 = vpow.pop %v721
    %v723 = vadd.f32 %v722, 1.0
    %v724 = vrcp.pop %v723
    %v725 = vmul.f32 1.0, %v724
    %v728 = vunpack.c.l.s4 1983009808
    %v729 = vunpack.c.0.s8 %v728
    %v730 = vlaneseq
    %v731 = vshrl.u32 %v730, 7
    %v732 = vsub.s32 %v729, %v731
    %v733 = vrot.slane %v716, %v732
    %734 = vrot.lane.b32.xlu0 %v733, 64
    %v735 = vpop.permute.xlu0 %734
    %v737 = vmul.f32 %v725, %v735
    %739 = vrot.lane.b32.xlu0 %v737, 64
    %v740 = vpop.permute.xlu0 %739
    %v742 = vadd.f32 %v503, %v740
    %v743 = vtanh.pop %v742
    %v744 = vsub.f32 1.0, %v725
    %746 = vrot.lane.b32.xlu0 %v743, 96
    %v747 = vpop.permute.xlu0 %746
    %v749 = vmul.f32 %v744, %v747
    %v750 = vmul.f32 %v725, 0.0
    %v751 = vadd.f32 %v749, %v750
    %v754 = vunpack.c.l.s4 1983009808
    %v755 = vunpack.c.0.s8 %v754
    %v756 = vlaneseq
    %v757 = vshrl.u32 %v756, 7
    %v758 = vsub.s32 %v755, %v757
    %v759 = vrot.slane %v642, %v758
    %760 = vrot.lane.b32.xlu0 %v759, 96
    %v761 = vpop.permute.xlu0 %760
    %vm763 = vcmask 254976
    %764 = vst.msk [vmem:[#allocation2] sm:$0x3] %vm763, %v761
    %v767 = vunpack.c.l.s4 1983009808
    %v768 = vunpack.c.0.s8 %v767
    %v769 = vlaneseq
    %v770 = vshrl.u32 %v769, 7
    %v771 = vsub.s32 %v768, %v770
    %v772 = vrot.slane %v751, %v771
    %773 = vrot.lane.b32.xlu0 %v772, 96
    %v774 = vpop.permute.xlu0 %773
    %s776 = scalar_lea.vmem [#allocation3], 30
    %777 = vst.msk [vmem:[%s776] sm:$0x3] %vm763, %v774
    %v778 = vsel %vm536, %v761, 0
    %780 = vmatprep.subr.mxu0 0.0
    %781 = vmatpush1.msra.mxu0 0.0
    %782 = vmatprep.subr.mxu0 0.0
    %783 = vmatpush1.msra.mxu0 0.0
    %784 = vmatprep.subr.mxu0 0.0
    %785 = vmatpush1.msra.mxu0 0.0
    %786 = vmatprep.subr.mxu0 0.0
    %787 = vmatpush1.msra.mxu0 0.0
    %788 = vmatprep.subr.mxu0 0.0
    %789 = vmatpush1.msra.mxu0 0.0
    %790 = vmatprep.subr.mxu0 0.0
    %791 = vmatpush1.msra.mxu0 0.0
    %792 = vmatprep.subr.mxu0 0.0
    %793 = vmatpush1.msra.mxu0 0.0
    %794 = vmatprep.subr.mxu0 0.0
    %795 = vmatpush1.msra.mxu0 0.0
    %796 = vmatprep.subr.mxu0 0.0
    %797 = vmatpush1.msra.mxu0 0.0
    %798 = vmatprep.subr.mxu0 0.0
    %799 = vmatpush1.msra.mxu0 0.0
    %800 = vmatprep.subr.mxu0 0.0
    %801 = vmatpush1.msra.mxu0 0.0
    %802 = vmatprep.subr.mxu0 0.0
    %803 = vmatpush1.msra.mxu0 0.0
    %804 = vmatprep.subr.mxu0 0.0
    %805 = vmatpush1.msra.mxu0 %v523
    %806 = vmatprep.subr.mxu0 0.0
    %807 = vmatpush1.msra.mxu0 %v522
    %808 = vmatprep.subr.mxu0 0.0
    %809 = vmatpush1.msra.mxu0 %v521
    %810 = vmatprep.subr.mxu0 0.0
    %811 = vmatpush1.msra.mxu0 %v520
    %812 = vmatprep.subr.mxu0 0.0
    %813 = vmatpush2.msra.mxu0 0.0
    %814 = vmatprep.subr.mxu0 0.0
    %815 = vmatpush2.msra.mxu0 0.0
    %816 = vmatprep.subr.mxu0 0.0
    %817 = vmatpush2.msra.mxu0 0.0
    %818 = vmatprep.subr.mxu0 0.0
    %819 = vmatpush2.msra.mxu0 0.0
    %820 = vmatprep.subr.mxu0 0.0
    %821 = vmatpush2.msra.mxu0 0.0
    %822 = vmatprep.subr.mxu0 0.0
    %823 = vmatpush2.msra.mxu0 0.0
    %824 = vmatprep.subr.mxu0 0.0
    %825 = vmatpush2.msra.mxu0 0.0
    %826 = vmatprep.subr.mxu0 0.0
    %827 = vmatpush2.msra.mxu0 0.0
    %828 = vmatprep.subr.mxu0 0.0
    %829 = vmatpush2.msra.mxu0 0.0
    %830 = vmatprep.subr.mxu0 0.0
    %831 = vmatpush2.msra.mxu0 0.0
    %832 = vmatprep.subr.mxu0 0.0
    %833 = vmatpush2.msra.mxu0 0.0
    %834 = vmatprep.subr.mxu0 0.0
    %835 = vmatpush2.msra.mxu0 0.0
    %836 = vmatprep.subr.mxu0 0.0
    %837 = vmatpush2.msra.mxu0 0.0
    %838 = vmatprep.subr.mxu0 0.0
    %839 = vmatpush2.msra.mxu0 0.0
    %840 = vmatprep.subr.mxu0 0.0
    %841 = vmatpush2.msra.mxu0 0.0
    %842 = vmatprep.subr.mxu0 0.0
    %843 = vmatpush2.msra.mxu0 0.0
    %844 = vmatprep.mubr.f32.mxu0 0.0
    %845 = vmatmul.mubr.f32.gmra.mxu0 %v778
    %v846 = vpop.f32.mrf.mxu0
    %v847 = vadd.f32 %v534, %v846
    %v848 = vpop.f32.mrf.mxu0
    %849 = vdwg.mxu0
    %v850 = vadd.f32 %v270, %v847
    %v851 = vxor.u32 %v850, 2147483648
    %v852 = vmul.f32 %v851, 1.442695
    %v853 = vpow.pop %v852
    %v854 = vadd.f32 %v853, 1.0
    %v855 = vrcp.pop %v854
    %v856 = vmul.f32 1.0, %v855
    %v859 = vunpack.c.l.s4 1983009808
    %v860 = vunpack.c.0.s8 %v859
    %v861 = vlaneseq
    %v862 = vshrl.u32 %v861, 7
    %v863 = vsub.s32 %v860, %v862
    %v864 = vrot.slane %v847, %v863
    %865 = vrot.lane.b32.xlu0 %v864, 64
    %v866 = vpop.permute.xlu0 %865
    %v868 = vmul.f32 %v856, %v866
    %870 = vrot.lane.b32.xlu0 %v868, 64
    %v871 = vpop.permute.xlu0 %870
    %v873 = vadd.f32 %v270, %v871
    %v874 = vtanh.pop %v873
    %v875 = vsub.f32 1.0, %v856
    %877 = vrot.lane.b32.xlu0 %v874, 96
    %v878 = vpop.permute.xlu0 %877
    %v880 = vmul.f32 %v875, %v878
    %v881 = vmul.f32 %v856, %v642
    %v882 = vadd.f32 %v880, %v881
    %v883 = vsel %vm536, %v774, 0
    %885 = vmatprep.subr.mxu0 0.0
    %886 = vmatpush1.msra.mxu0 0.0
    %887 = vmatprep.subr.mxu0 0.0
    %888 = vmatpush1.msra.mxu0 0.0
    %889 = vmatprep.subr.mxu0 0.0
    %890 = vmatpush1.msra.mxu0 0.0
    %891 = vmatprep.subr.mxu0 0.0
    %892 = vmatpush1.msra.mxu0 0.0
    %893 = vmatprep.subr.mxu0 0.0
    %894 = vmatpush1.msra.mxu0 0.0
    %895 = vmatprep.subr.mxu0 0.0
    %896 = vmatpush1.msra.mxu0 0.0
    %897 = vmatprep.subr.mxu0 0.0
    %898 = vmatpush1.msra.mxu0 0.0
    %899 = vmatprep.subr.mxu0 0.0
    %900 = vmatpush1.msra.mxu0 0.0
    %901 = vmatprep.subr.mxu0 0.0
    %902 = vmatpush1.msra.mxu0 0.0
    %903 = vmatprep.subr.mxu0 0.0
    %904 = vmatpush1.msra.mxu0 0.0
    %905 = vmatprep.subr.mxu0 0.0
    %906 = vmatpush1.msra.mxu0 0.0
    %907 = vmatprep.subr.mxu0 0.0
    %908 = vmatpush1.msra.mxu0 0.0
    %909 = vmatprep.subr.mxu0 0.0
    %910 = vmatpush1.msra.mxu0 %v528
    %911 = vmatprep.subr.mxu0 0.0
    %912 = vmatpush1.msra.mxu0 %v527
    %913 = vmatprep.subr.mxu0 0.0
    %914 = vmatpush1.msra.mxu0 %v526
    %915 = vmatprep.subr.mxu0 0.0
    %916 = vmatpush1.msra.mxu0 %v525
    %917 = vmatprep.subr.mxu0 0.0
    %918 = vmatpush2.msra.mxu0 0.0
    %919 = vmatprep.subr.mxu0 0.0
    %920 = vmatpush2.msra.mxu0 0.0
    %921 = vmatprep.subr.mxu0 0.0
    %922 = vmatpush2.msra.mxu0 0.0
    %923 = vmatprep.subr.mxu0 0.0
    %924 = vmatpush2.msra.mxu0 0.0
    %925 = vmatprep.subr.mxu0 0.0
    %926 = vmatpush2.msra.mxu0 0.0
    %927 = vmatprep.subr.mxu0 0.0
    %928 = vmatpush2.msra.mxu0 0.0
    %929 = vmatprep.subr.mxu0 0.0
    %930 = vmatpush2.msra.mxu0 0.0
    %931 = vmatprep.subr.mxu0 0.0
    %932 = vmatpush2.msra.mxu0 0.0
    %933 = vmatprep.subr.mxu0 0.0
    %934 = vmatpush2.msra.mxu0 0.0
    %935 = vmatprep.subr.mxu0 0.0
    %936 = vmatpush2.msra.mxu0 0.0
    %937 = vmatprep.subr.mxu0 0.0
    %938 = vmatpush2.msra.mxu0 0.0
    %939 = vmatprep.subr.mxu0 0.0
    %940 = vmatpush2.msra.mxu0 0.0
    %941 = vmatprep.subr.mxu0 0.0
    %942 = vmatpush2.msra.mxu0 0.0
    %943 = vmatprep.subr.mxu0 0.0
    %944 = vmatpush2.msra.mxu0 0.0
    %945 = vmatprep.subr.mxu0 0.0
    %946 = vmatpush2.msra.mxu0 0.0
    %947 = vmatprep.subr.mxu0 0.0
    %948 = vmatpush2.msra.mxu0 0.0
    %949 = vmatprep.mubr.f32.mxu0 0.0
    %950 = vmatmul.mubr.f32.gmra.mxu0 %v883
    %v951 = vpop.f32.mrf.mxu0
    %v952 = vadd.f32 %v647, %v951
    %v953 = vpop.f32.mrf.mxu0
    %954 = vdwg.mxu0
    %v955 = vadd.f32 %v501, %v952
    %v956 = vxor.u32 %v955, 2147483648
    %v957 = vmul.f32 %v956, 1.442695
    %v958 = vpow.pop %v957
    %v959 = vadd.f32 %v958, 1.0
    %v960 = vrcp.pop %v959
    %v961 = vmul.f32 1.0, %v960
    %v964 = vunpack.c.l.s4 1983009808
    %v965 = vunpack.c.0.s8 %v964
    %v966 = vlaneseq
    %v967 = vshrl.u32 %v966, 7
    %v968 = vsub.s32 %v965, %v967
    %v969 = vrot.slane %v952, %v968
    %970 = vrot.lane.b32.xlu0 %v969, 64
    %v971 = vpop.permute.xlu0 %970
    %v973 = vmul.f32 %v961, %v971
    %975 = vrot.lane.b32.xlu0 %v973, 64
    %v976 = vpop.permute.xlu0 %975
    %v978 = vadd.f32 %v501, %v976
    %v979 = vtanh.pop %v978
    %v980 = vsub.f32 1.0, %v961
    %982 = vrot.lane.b32.xlu0 %v979, 96
    %v983 = vpop.permute.xlu0 %982
    %v985 = vmul.f32 %v980, %v983
    %v986 = vmul.f32 %v961, %v751
    %v987 = vadd.f32 %v985, %v986
    %v990 = vunpack.c.l.s4 1983009808
    %v991 = vunpack.c.0.s8 %v990
    %v992 = vlaneseq
    %v993 = vshrl.u32 %v992, 7
    %v994 = vsub.s32 %v991, %v993
    %v995 = vrot.slane %v882, %v994
    %996 = vrot.lane.b32.xlu0 %v995, 96
    %v997 = vpop.permute.xlu0 %996
    %s999 = scalar_lea.vmem [#allocation2], 2
    %1000 = vst.msk [vmem:[%s999] sm:$0x3] %vm763, %v997
    %v1003 = vunpack.c.l.s4 1983009808
    %v1004 = vunpack.c.0.s8 %v1003
    %v1005 = vlaneseq
    %v1006 = vshrl.u32 %v1005, 7
    %v1007 = vsub.s32 %v1004, %v1006
    %v1008 = vrot.slane %v987, %v1007
    %1009 = vrot.lane.b32.xlu0 %v1008, 96
    %v1010 = vpop.permute.xlu0 %1009
    %s1012 = scalar_lea.vmem [#allocation3], 28
    %1013 = vst.msk [vmem:[%s1012] sm:$0x3] %vm763, %v1010
    %v1014 = vsel %vm536, %v997, 0
    %1016 = vmatprep.subr.mxu0 0.0
    %1017 = vmatpush1.msra.mxu0 0.0
    %1018 = vmatprep.subr.mxu0 0.0
    %1019 = vmatpush1.msra.mxu0 0.0
    %1020 = vmatprep.subr.mxu0 0.0
    %1021 = vmatpush1.msra.mxu0 0.0
    %1022 = vmatprep.subr.mxu0 0.0
    %1023 = vmatpush1.msra.mxu0 0.0
    %1024 = vmatprep.subr.mxu0 0.0
    %1025 = vmatpush1.msra.mxu0 0.0
    %1026 = vmatprep.subr.mxu0 0.0
    %1027 = vmatpush1.msra.mxu0 0.0
    %1028 = vmatprep.subr.mxu0 0.0
    %1029 = vmatpush1.msra.mxu0 0.0
    %1030 = vmatprep.subr.mxu0 0.0
    %1031 = vmatpush1.msra.mxu0 0.0
    %1032 = vmatprep.subr.mxu0 0.0
    %1033 = vmatpush1.msra.mxu0 0.0
    %1034 = vmatprep.subr.mxu0 0.0
    %1035 = vmatpush1.msra.mxu0 0.0
    %1036 = vmatprep.subr.mxu0 0.0
    %1037 = vmatpush1.msra.mxu0 0.0
    %1038 = vmatprep.subr.mxu0 0.0
    %1039 = vmatpush1.msra.mxu0 0.0
    %1040 = vmatprep.subr.mxu0 0.0
    %1041 = vmatpush1.msra.mxu0 %v523
    %1042 = vmatprep.subr.mxu0 0.0
    %1043 = vmatpush1.msra.mxu0 %v522
    %1044 = vmatprep.subr.mxu0 0.0
    %1045 = vmatpush1.msra.mxu0 %v521
    %1046 = vmatprep.subr.mxu0 0.0
    %1047 = vmatpush1.msra.mxu0 %v520
    %1048 = vmatprep.subr.mxu0 0.0
    %1049 = vmatpush2.msra.mxu0 0.0
    %1050 = vmatprep.subr.mxu0 0.0
    %1051 = vmatpush2.msra.mxu0 0.0
    %1052 = vmatprep.subr.mxu0 0.0
    %1053 = vmatpush2.msra.mxu0 0.0
    %1054 = vmatprep.subr.mxu0 0.0
    %1055 = vmatpush2.msra.mxu0 0.0
    %1056 = vmatprep.subr.mxu0 0.0
    %1057 = vmatpush2.msra.mxu0 0.0
    %1058 = vmatprep.subr.mxu0 0.0
    %1059 = vmatpush2.msra.mxu0 0.0
    %1060 = vmatprep.subr.mxu0 0.0
    %1061 = vmatpush2.msra.mxu0 0.0
    %1062 = vmatprep.subr.mxu0 0.0
    %1063 = vmatpush2.msra.mxu0 0.0
    %1064 = vmatprep.subr.mxu0 0.0
    %1065 = vmatpush2.msra.mxu0 0.0
    %1066 = vmatprep.subr.mxu0 0.0
    %1067 = vmatpush2.msra.mxu0 0.0
    %1068 = vmatprep.subr.mxu0 0.0
    %1069 = vmatpush2.msra.mxu0 0.0
    %1070 = vmatprep.subr.mxu0 0.0
    %1071 = vmatpush2.msra.mxu0 0.0
    %1072 = vmatprep.subr.mxu0 0.0
    %1073 = vmatpush2.msra.mxu0 0.0
    %1074 = vmatprep.subr.mxu0 0.0
    %1075 = vmatpush2.msra.mxu0 0.0
    %1076 = vmatprep.subr.mxu0 0.0
    %1077 = vmatpush2.msra.mxu0 0.0
    %1078 = vmatprep.subr.mxu0 0.0
    %1079 = vmatpush2.msra.mxu0 0.0
    %1080 = vmatprep.mubr.f32.mxu0 0.0
    %1081 = vmatmul.mubr.f32.gmra.mxu0 %v1014
    %v1082 = vpop.f32.mrf.mxu0
    %v1083 = vadd.f32 %v534, %v1082
    %v1084 = vpop.f32.mrf.mxu0
    %1085 = vdwg.mxu0
    %v1086 = vadd.f32 %v269, %v1083
    %v1087 = vxor.u32 %v1086, 2147483648
    %v1088 = vmul.f32 %v1087, 1.442695
    %v1089 = vpow.pop %v1088
    %v1090 = vadd.f32 %v1089, 1.0
    %v1091 = vrcp.pop %v1090
    %v1092 = vmul.f32 1.0, %v1091
    %v1095 = vunpack.c.l.s4 1983009808
    %v1096 = vunpack.c.0.s8 %v1095
    %v1097 = vlaneseq
    %v1098 = vshrl.u32 %v1097, 7
    %v1099 = vsub.s32 %v1096, %v1098
    %v1100 = vrot.slane %v1083, %v1099
    %1101 = vrot.lane.b32.xlu0 %v1100, 64
    %v1102 = vpop.permute.xlu0 %1101
    %v1104 = vmul.f32 %v1092, %v1102
    %1106 = vrot.lane.b32.xlu0 %v1104, 64
    %v1107 = vpop.permute.xlu0 %1106
    %v1109 = vadd.f32 %v269, %v1107
    %v1110 = vtanh.pop %v1109
    %v1111 = vsub.f32 1.0, %v1092
    %1113 = vrot.lane.b32.xlu0 %v1110, 96
    %v1114 = vpop.permute.xlu0 %1113
    %v1116 = vmul.f32 %v1111, %v1114
    %v1117 = vmul.f32 %v1092, %v882
    %v1118 = vadd.f32 %v1116, %v1117
    %v1119 = vsel %vm536, %v1010, 0
    %1121 = vmatprep.subr.mxu0 0.0
    %1122 = vmatpush1.msra.mxu0 0.0
    %1123 = vmatprep.subr.mxu0 0.0
    %1124 = vmatpush1.msra.mxu0 0.0
    %1125 = vmatprep.subr.mxu0 0.0
    %1126 = vmatpush1.msra.mxu0 0.0
    %1127 = vmatprep.subr.mxu0 0.0
    %1128 = vmatpush1.msra.mxu0 0.0
    %1129 = vmatprep.subr.mxu0 0.0
    %1130 = vmatpush1.msra.mxu0 0.0
    %1131 = vmatprep.subr.mxu0 0.0
    %1132 = vmatpush1.msra.mxu0 0.0
    %1133 = vmatprep.subr.mxu0 0.0
    %1134 = vmatpush1.msra.mxu0 0.0
    %1135 = vmatprep.subr.mxu0 0.0
    %1136 = vmatpush1.msra.mxu0 0.0
    %1137 = vmatprep.subr.mxu0 0.0
    %1138 = vmatpush1.msra.mxu0 0.0
    %1139 = vmatprep.subr.mxu0 0.0
    %1140 = vmatpush1.msra.mxu0 0.0
    %1141 = vmatprep.subr.mxu0 0.0
    %1142 = vmatpush1.msra.mxu0 0.0
    %1143 = vmatprep.subr.mxu0 0.0
    %1144 = vmatpush1.msra.mxu0 0.0
    %1145 = vmatprep.subr.mxu0 0.0
    %1146 = vmatpush1.msra.mxu0 %v528
    %1147 = vmatprep.subr.mxu0 0.0
    %1148 = vmatpush1.msra.mxu0 %v527
    %1149 = vmatprep.subr.mxu0 0.0
    %1150 = vmatpush1.msra.mxu0 %v526
    %1151 = vmatprep.subr.mxu0 0.0
    %1152 = vmatpush1.msra.mxu0 %v525
    %1153 = vmatprep.subr.mxu0 0.0
    %1154 = vmatpush2.msra.mxu0 0.0
    %1155 = vmatprep.subr.mxu0 0.0
    %1156 = vmatpush2.msra.mxu0 0.0
    %1157 = vmatprep.subr.mxu0 0.0
    %1158 = vmatpush2.msra.mxu0 0.0
    %1159 = vmatprep.subr.mxu0 0.0
    %1160 = vmatpush2.msra.mxu0 0.0
    %1161 = vmatprep.subr.mxu0 0.0
    %1162 = vmatpush2.msra.mxu0 0.0
    %1163 = vmatprep.subr.mxu0 0.0
    %1164 = vmatpush2.msra.mxu0 0.0
    %1165 = vmatprep.subr.mxu0 0.0
    %1166 = vmatpush2.msra.mxu0 0.0
    %1167 = vmatprep.subr.mxu0 0.0
    %1168 = vmatpush2.msra.mxu0 0.0
    %1169 = vmatprep.subr.mxu0 0.0
    %1170 = vmatpush2.msra.mxu0 0.0
    %1171 = vmatprep.subr.mxu0 0.0
    %1172 = vmatpush2.msra.mxu0 0.0
    %1173 = vmatprep.subr.mxu0 0.0
    %1174 = vmatpush2.msra.mxu0 0.0
    %1175 = vmatprep.subr.mxu0 0.0
    %1176 = vmatpush2.msra.mxu0 0.0
    %1177 = vmatprep.subr.mxu0 0.0
    %1178 = vmatpush2.msra.mxu0 0.0
    %1179 = vmatprep.subr.mxu0 0.0
    %1180 = vmatpush2.msra.mxu0 0.0
    %1181 = vmatprep.subr.mxu0 0.0
    %1182 = vmatpush2.msra.mxu0 0.0
    %1183 = vmatprep.subr.mxu0 0.0
    %1184 = vmatpush2.msra.mxu0 0.0
    %1185 = vmatprep.mubr.f32.mxu0 0.0
    %1186 = vmatmul.mubr.f32.gmra.mxu0 %v1119
    %v1187 = vpop.f32.mrf.mxu0
    %v1188 = vadd.f32 %v647, %v1187
    %v1189 = vpop.f32.mrf.mxu0
    %1190 = vdwg.mxu0
    %v1191 = vadd.f32 %v502, %v1188
    %v1192 = vxor.u32 %v1191, 2147483648
    %v1193 = vmul.f32 %v1192, 1.442695
    %v1194 = vpow.pop %v1193
    %v1195 = vadd.f32 %v1194, 1.0
    %v1196 = vrcp.pop %v1195
    %v1197 = vmul.f32 1.0, %v1196
    %v1200 = vunpack.c.l.s4 1983009808
    %v1201 = vunpack.c.0.s8 %v1200
    %v1202 = vlaneseq
    %v1203 = vshrl.u32 %v1202, 7
    %v1204 = vsub.s32 %v1201, %v1203
    %v1205 = vrot.slane %v1188, %v1204
    %1206 = vrot.lane.b32.xlu0 %v1205, 64
    %v1207 = vpop.permute.xlu0 %1206
    %v1209 = vmul.f32 %v1197, %v1207
    %1211 = vrot.lane.b32.xlu0 %v1209, 64
    %v1212 = vpop.permute.xlu0 %1211
    %v1214 = vadd.f32 %v502, %v1212
    %v1215 = vtanh.pop %v1214
    %v1216 = vsub.f32 1.0, %v1197
    %1218 = vrot.lane.b32.xlu0 %v1215, 96
    %v1219 = vpop.permute.xlu0 %1218
    %v1221 = vmul.f32 %v1216, %v1219
    %v1222 = vmul.f32 %v1197, %v987
    %v1223 = vadd.f32 %v1221, %v1222
    %v1226 = vunpack.c.l.s4 1983009808
    %v1227 = vunpack.c.0.s8 %v1226
    %v1228 = vlaneseq
    %v1229 = vshrl.u32 %v1228, 7
    %v1230 = vsub.s32 %v1227, %v1229
    %v1231 = vrot.slane %v1118, %v1230
    %1232 = vrot.lane.b32.xlu0 %v1231, 96
    %v1233 = vpop.permute.xlu0 %1232
    %s1235 = scalar_lea.vmem [#allocation2], 4
    %1236 = vst.msk [vmem:[%s1235] sm:$0x3] %vm763, %v1233
    %v1239 = vunpack.c.l.s4 1983009808
    %v1240 = vunpack.c.0.s8 %v1239
    %v1241 = vlaneseq
    %v1242 = vshrl.u32 %v1241, 7
    %v1243 = vsub.s32 %v1240, %v1242
    %v1244 = vrot.slane %v1223, %v1243
    %1245 = vrot.lane.b32.xlu0 %v1244, 96
    %v1246 = vpop.permute.xlu0 %1245
    %s1248 = scalar_lea.vmem [#allocation3], 26
    %1249 = vst.msk [vmem:[%s1248] sm:$0x3] %vm763, %v1246
    %v1250 = vsel %vm536, %v1233, 0
    %1252 = vmatprep.subr.mxu0 0.0
    %1253 = vmatpush1.msra.mxu0 0.0
    %1254 = vmatprep.subr.mxu0 0.0
    %1255 = vmatpush1.msra.mxu0 0.0
    %1256 = vmatprep.subr.mxu0 0.0
    %1257 = vmatpush1.msra.mxu0 0.0
    %1258 = vmatprep.subr.mxu0 0.0
    %1259 = vmatpush1.msra.mxu0 0.0
    %1260 = vmatprep.subr.mxu0 0.0
    %1261 = vmatpush1.msra.mxu0 0.0
    %1262 = vmatprep.subr.mxu0 0.0
    %1263 = vmatpush1.msra.mxu0 0.0
    %1264 = vmatprep.subr.mxu0 0.0
    %1265 = vmatpush1.msra.mxu0 0.0
    %1266 = vmatprep.subr.mxu0 0.0
    %1267 = vmatpush1.msra.mxu0 0.0
    %1268 = vmatprep.subr.mxu0 0.0
    %1269 = vmatpush1.msra.mxu0 0.0
    %1270 = vmatprep.subr.mxu0 0.0
    %1271 = vmatpush1.msra.mxu0 0.0
    %1272 = vmatprep.subr.mxu0 0.0
    %1273 = vmatpush1.msra.mxu0 0.0
    %1274 = vmatprep.subr.mxu0 0.0
    %1275 = vmatpush1.msra.mxu0 0.0
    %1276 = vmatprep.subr.mxu0 0.0
    %1277 = vmatpush1.msra.mxu0 %v523
    %1278 = vmatprep.subr.mxu0 0.0
    %1279 = vmatpush1.msra.mxu0 %v522
    %1280 = vmatprep.subr.mxu0 0.0
    %1281 = vmatpush1.msra.mxu0 %v521
    %1282 = vmatprep.subr.mxu0 0.0
    %1283 = vmatpush1.msra.mxu0 %v520
    %1284 = vmatprep.subr.mxu0 0.0
    %1285 = vmatpush2.msra.mxu0 0.0
    %1286 = vmatprep.subr.mxu0 0.0
    %1287 = vmatpush2.msra.mxu0 0.0
    %1288 = vmatprep.subr.mxu0 0.0
    %1289 = vmatpush2.msra.mxu0 0.0
    %1290 = vmatprep.subr.mxu0 0.0
    %1291 = vmatpush2.msra.mxu0 0.0
    %1292 = vmatprep.subr.mxu0 0.0
    %1293 = vmatpush2.msra.mxu0 0.0
    %1294 = vmatprep.subr.mxu0 0.0
    %1295 = vmatpush2.msra.mxu0 0.0
    %1296 = vmatprep.subr.mxu0 0.0
    %1297 = vmatpush2.msra.mxu0 0.0
    %1298 = vmatprep.subr.mxu0 0.0
    %1299 = vmatpush2.msra.mxu0 0.0
    %1300 = vmatprep.subr.mxu0 0.0
    %1301 = vmatpush2.msra.mxu0 0.0
    %1302 = vmatprep.subr.mxu0 0.0
    %1303 = vmatpush2.msra.mxu0 0.0
    %1304 = vmatprep.subr.mxu0 0.0
    %1305 = vmatpush2.msra.mxu0 0.0
    %1306 = vmatprep.subr.mxu0 0.0
    %1307 = vmatpush2.msra.mxu0 0.0
    %1308 = vmatprep.subr.mxu0 0.0
    %1309 = vmatpush2.msra.mxu0 0.0
    %1310 = vmatprep.subr.mxu0 0.0
    %1311 = vmatpush2.msra.mxu0 0.0
    %1312 = vmatprep.subr.mxu0 0.0
    %1313 = vmatpush2.msra.mxu0 0.0
    %1314 = vmatprep.subr.mxu0 0.0
    %1315 = vmatpush2.msra.mxu0 0.0
    %1316 = vmatprep.mubr.f32.mxu0 0.0
    %1317 = vmatmul.mubr.f32.gmra.mxu0 %v1250
    %v1318 = vpop.f32.mrf.mxu0
    %v1319 = vadd.f32 %v534, %v1318
    %v1320 = vpop.f32.mrf.mxu0
    %1321 = vdwg.mxu0
    %v1322 = vadd.f32 %v271, %v1319
    %v1323 = vxor.u32 %v1322, 2147483648
    %v1324 = vmul.f32 %v1323, 1.442695
    %v1325 = vpow.pop %v1324
    %v1326 = vadd.f32 %v1325, 1.0
    %v1327 = vrcp.pop %v1326
    %v1328 = vmul.f32 1.0, %v1327
    %v1331 = vunpack.c.l.s4 1983009808
    %v1332 = vunpack.c.0.s8 %v1331
    %v1333 = vlaneseq
    %v1334 = vshrl.u32 %v1333, 7
    %v1335 = vsub.s32 %v1332, %v1334
    %v1336 = vrot.slane %v1319, %v1335
    %1337 = vrot.lane.b32.xlu0 %v1336, 64
    %v1338 = vpop.permute.xlu0 %1337
    %v1340 = vmul.f32 %v1328, %v1338
    %1342 = vrot.lane.b32.xlu0 %v1340, 64
    %v1343 = vpop.permute.xlu0 %1342
    %v1345 = vadd.f32 %v271, %v1343
    %v1346 = vtanh.pop %v1345
    %v1347 = vsub.f32 1.0, %v1328
    %1349 = vrot.lane.b32.xlu0 %v1346, 96
    %v1350 = vpop.permute.xlu0 %1349
    %v1352 = vmul.f32 %v1347, %v1350
    %v1353 = vmul.f32 %v1328, %v1118
    %v1354 = vadd.f32 %v1352, %v1353
    %v1355 = vsel %vm536, %v1246, 0
    %1357 = vmatprep.subr.mxu0 0.0
    %1358 = vmatpush1.msra.mxu0 0.0
    %1359 = vmatprep.subr.mxu0 0.0
    %1360 = vmatpush1.msra.mxu0 0.0
    %1361 = vmatprep.subr.mxu0 0.0
    %1362 = vmatpush1.msra.mxu0 0.0
    %1363 = vmatprep.subr.mxu0 0.0
    %1364 = vmatpush1.msra.mxu0 0.0
    %1365 = vmatprep.subr.mxu0 0.0
    %1366 = vmatpush1.msra.mxu0 0.0
    %1367 = vmatprep.subr.mxu0 0.0
    %1368 = vmatpush1.msra.mxu0 0.0
    %1369 = vmatprep.subr.mxu0 0.0
    %1370 = vmatpush1.msra.mxu0 0.0
    %1371 = vmatprep.subr.mxu0 0.0
    %1372 = vmatpush1.msra.mxu0 0.0
    %1373 = vmatprep.subr.mxu0 0.0
    %1374 = vmatpush1.msra.mxu0 0.0
    %1375 = vmatprep.subr.mxu0 0.0
    %1376 = vmatpush1.msra.mxu0 0.0
    %1377 = vmatprep.subr.mxu0 0.0
    %1378 = vmatpush1.msra.mxu0 0.0
    %1379 = vmatprep.subr.mxu0 0.0
    %1380 = vmatpush1.msra.mxu0 0.0
    %1381 = vmatprep.subr.mxu0 0.0
    %1382 = vmatpush1.msra.mxu0 %v528
    %1383 = vmatprep.subr.mxu0 0.0
    %1384 = vmatpush1.msra.mxu0 %v527
    %1385 = vmatprep.subr.mxu0 0.0
    %1386 = vmatpush1.msra.mxu0 %v526
    %1387 = vmatprep.subr.mxu0 0.0
    %1388 = vmatpush1.msra.mxu0 %v525
    %1389 = vmatprep.subr.mxu0 0.0
    %1390 = vmatpush2.msra.mxu0 0.0
    %1391 = vmatprep.subr.mxu0 0.0
    %1392 = vmatpush2.msra.mxu0 0.0
    %1393 = vmatprep.subr.mxu0 0.0
    %1394 = vmatpush2.msra.mxu0 0.0
    %1395 = vmatprep.subr.mxu0 0.0
    %1396 = vmatpush2.msra.mxu0 0.0
    %1397 = vmatprep.subr.mxu0 0.0
    %1398 = vmatpush2.msra.mxu0 0.0
    %1399 = vmatprep.subr.mxu0 0.0
    %1400 = vmatpush2.msra.mxu0 0.0
    %1401 = vmatprep.subr.mxu0 0.0
    %1402 = vmatpush2.msra.mxu0 0.0
    %1403 = vmatprep.subr.mxu0 0.0
    %1404 = vmatpush2.msra.mxu0 0.0
    %1405 = vmatprep.subr.mxu0 0.0
    %1406 = vmatpush2.msra.mxu0 0.0
    %1407 = vmatprep.subr.mxu0 0.0
    %1408 = vmatpush2.msra.mxu0 0.0
    %1409 = vmatprep.subr.mxu0 0.0
    %1410 = vmatpush2.msra.mxu0 0.0
    %1411 = vmatprep.subr.mxu0 0.0
    %1412 = vmatpush2.msra.mxu0 0.0
    %1413 = vmatprep.subr.mxu0 0.0
    %1414 = vmatpush2.msra.mxu0 0.0
    %1415 = vmatprep.subr.mxu0 0.0
    %1416 = vmatpush2.msra.mxu0 0.0
    %1417 = vmatprep.subr.mxu0 0.0
    %1418 = vmatpush2.msra.mxu0 0.0
    %1419 = vmatprep.subr.mxu0 0.0
    %1420 = vmatpush2.msra.mxu0 0.0
    %1421 = vmatprep.mubr.f32.mxu0 0.0
    %1422 = vmatmul.mubr.f32.gmra.mxu0 %v1355
    %v1423 = vpop.f32.mrf.mxu0
    %v1424 = vadd.f32 %v647, %v1423
    %v1425 = vpop.f32.mrf.mxu0
    %1426 = vdwg.mxu0
    %v1427 = vadd.f32 %v494, %v1424
    %v1428 = vxor.u32 %v1427, 2147483648
    %v1429 = vmul.f32 %v1428, 1.442695
    %v1430 = vpow.pop %v1429
    %v1431 = vadd.f32 %v1430, 1.0
    %v1432 = vrcp.pop %v1431
    %v1433 = vmul.f32 1.0, %v1432
    %v1436 = vunpack.c.l.s4 1983009808
    %v1437 = vunpack.c.0.s8 %v1436
    %v1438 = vlaneseq
    %v1439 = vshrl.u32 %v1438, 7
    %v1440 = vsub.s32 %v1437, %v1439
    %v1441 = vrot.slane %v1424, %v1440
    %1442 = vrot.lane.b32.xlu0 %v1441, 64
    %v1443 = vpop.permute.xlu0 %1442
    %v1445 = vmul.f32 %v1433, %v1443
    %1447 = vrot.lane.b32.xlu0 %v1445, 64
    %v1448 = vpop.permute.xlu0 %1447
    %v1450 = vadd.f32 %v494, %v1448
    %v1451 = vtanh.pop %v1450
    %v1452 = vsub.f32 1.0, %v1433
    %1454 = vrot.lane.b32.xlu0 %v1451, 96
    %v1455 = vpop.permute.xlu0 %1454
    %v1457 = vmul.f32 %v1452, %v1455
    %v1458 = vmul.f32 %v1433, %v1223
    %v1459 = vadd.f32 %v1457, %v1458
    %v1462 = vunpack.c.l.s4 1983009808
    %v1463 = vunpack.c.0.s8 %v1462
    %v1464 = vlaneseq
    %v1465 = vshrl.u32 %v1464, 7
    %v1466 = vsub.s32 %v1463, %v1465
    %v1467 = vrot.slane %v1354, %v1466
    %1468 = vrot.lane.b32.xlu0 %v1467, 96
    %v1469 = vpop.permute.xlu0 %1468
    %s1471 = scalar_lea.vmem [#allocation2], 6
    %1472 = vst.msk [vmem:[%s1471] sm:$0x3] %vm763, %v1469
    %v1475 = vunpack.c.l.s4 1983009808
    %v1476 = vunpack.c.0.s8 %v1475
    %v1477 = vlaneseq
    %v1478 = vshrl.u32 %v1477, 7
    %v1479 = vsub.s32 %v1476, %v1478
    %v1480 = vrot.slane %v1459, %v1479
    %1481 = vrot.lane.b32.xlu0 %v1480, 96
    %v1482 = vpop.permute.xlu0 %1481
    %s1484 = scalar_lea.vmem [#allocation3], 24
    %1485 = vst.msk [vmem:[%s1484] sm:$0x3] %vm763, %v1482
    %v1486 = vsel %vm536, %v1469, 0
    %1488 = vmatprep.subr.mxu0 0.0
    %1489 = vmatpush1.msra.mxu0 0.0
    %1490 = vmatprep.subr.mxu0 0.0
    %1491 = vmatpush1.msra.mxu0 0.0
    %1492 = vmatprep.subr.mxu0 0.0
    %1493 = vmatpush1.msra.mxu0 0.0
    %1494 = vmatprep.subr.mxu0 0.0
    %1495 = vmatpush1.msra.mxu0 0.0
    %1496 = vmatprep.subr.mxu0 0.0
    %1497 = vmatpush1.msra.mxu0 0.0
    %1498 = vmatprep.subr.mxu0 0.0
    %1499 = vmatpush1.msra.mxu0 0.0
    %1500 = vmatprep.subr.mxu0 0.0
    %1501 = vmatpush1.msra.mxu0 0.0
    %1502 = vmatprep.subr.mxu0 0.0
    %1503 = vmatpush1.msra.mxu0 0.0
    %1504 = vmatprep.subr.mxu0 0.0
    %1505 = vmatpush1.msra.mxu0 0.0
    %1506 = vmatprep.subr.mxu0 0.0
    %1507 = vmatpush1.msra.mxu0 0.0
    %1508 = vmatprep.subr.mxu0 0.0
    %1509 = vmatpush1.msra.mxu0 0.0
    %1510 = vmatprep.subr.mxu0 0.0
    %1511 = vmatpush1.msra.mxu0 0.0
    %1512 = vmatprep.subr.mxu0 0.0
    %1513 = vmatpush1.msra.mxu0 %v523
    %1514 = vmatprep.subr.mxu0 0.0
    %1515 = vmatpush1.msra.mxu0 %v522
    %1516 = vmatprep.subr.mxu0 0.0
    %1517 = vmatpush1.msra.mxu0 %v521
    %1518 = vmatprep.subr.mxu0 0.0
    %1519 = vmatpush1.msra.mxu0 %v520
    %1520 = vmatprep.subr.mxu0 0.0
    %1521 = vmatpush2.msra.mxu0 0.0
    %1522 = vmatprep.subr.mxu0 0.0
    %1523 = vmatpush2.msra.mxu0 0.0
    %1524 = vmatprep.subr.mxu0 0.0
    %1525 = vmatpush2.msra.mxu0 0.0
    %1526 = vmatprep.subr.mxu0 0.0
    %1527 = vmatpush2.msra.mxu0 0.0
    %1528 = vmatprep.subr.mxu0 0.0
    %1529 = vmatpush2.msra.mxu0 0.0
    %1530 = vmatprep.subr.mxu0 0.0
    %1531 = vmatpush2.msra.mxu0 0.0
    %1532 = vmatprep.subr.mxu0 0.0
    %1533 = vmatpush2.msra.mxu0 0.0
    %1534 = vmatprep.subr.mxu0 0.0
    %1535 = vmatpush2.msra.mxu0 0.0
    %1536 = vmatprep.subr.mxu0 0.0
    %1537 = vmatpush2.msra.mxu0 0.0
    %1538 = vmatprep.subr.mxu0 0.0
    %1539 = vmatpush2.msra.mxu0 0.0
    %1540 = vmatprep.subr.mxu0 0.0
    %1541 = vmatpush2.msra.mxu0 0.0
    %1542 = vmatprep.subr.mxu0 0.0
    %1543 = vmatpush2.msra.mxu0 0.0
    %1544 = vmatprep.subr.mxu0 0.0
    %1545 = vmatpush2.msra.mxu0 0.0
    %1546 = vmatprep.subr.mxu0 0.0
    %1547 = vmatpush2.msra.mxu0 0.0
    %1548 = vmatprep.subr.mxu0 0.0
    %1549 = vmatpush2.msra.mxu0 0.0
    %1550 = vmatprep.subr.mxu0 0.0
    %1551 = vmatpush2.msra.mxu0 0.0
    %1552 = vmatprep.mubr.f32.mxu0 0.0
    %1553 = vmatmul.mubr.f32.gmra.mxu0 %v1486
    %v1554 = vpop.f32.mrf.mxu0
    %v1555 = vadd.f32 %v534, %v1554
    %v1556 = vpop.f32.mrf.mxu0
    %1557 = vdwg.mxu0
    %v1558 = vadd.f32 %v279, %v1555
    %v1559 = vxor.u32 %v1558, 2147483648
    %v1560 = vmul.f32 %v1559, 1.442695
    %v1561 = vpow.pop %v1560
    %v1562 = vadd.f32 %v1561, 1.0
    %v1563 = vrcp.pop %v1562
    %v1564 = vmul.f32 1.0, %v1563
    %v1567 = vunpack.c.l.s4 1983009808
    %v1568 = vunpack.c.0.s8 %v1567
    %v1569 = vlaneseq
    %v1570 = vshrl.u32 %v1569, 7
    %v1571 = vsub.s32 %v1568, %v1570
    %v1572 = vrot.slane %v1555, %v1571
    %1573 = vrot.lane.b32.xlu0 %v1572, 64
    %v1574 = vpop.permute.xlu0 %1573
    %v1576 = vmul.f32 %v1564, %v1574
    %1578 = vrot.lane.b32.xlu0 %v1576, 64
    %v1579 = vpop.permute.xlu0 %1578
    %v1581 = vadd.f32 %v279, %v1579
    %v1582 = vtanh.pop %v1581
    %v1583 = vsub.f32 1.0, %v1564
    %1585 = vrot.lane.b32.xlu0 %v1582, 96
    %v1586 = vpop.permute.xlu0 %1585
    %v1588 = vmul.f32 %v1583, %v1586
    %v1589 = vmul.f32 %v1564, %v1354
    %v1590 = vadd.f32 %v1588, %v1589
    %v1591 = vsel %vm536, %v1482, 0
    %1593 = vmatprep.subr.mxu0 0.0
    %1594 = vmatpush1.msra.mxu0 0.0
    %1595 = vmatprep.subr.mxu0 0.0
    %1596 = vmatpush1.msra.mxu0 0.0
    %1597 = vmatprep.subr.mxu0 0.0
    %1598 = vmatpush1.msra.mxu0 0.0
    %1599 = vmatprep.subr.mxu0 0.0
    %1600 = vmatpush1.msra.mxu0 0.0
    %1601 = vmatprep.subr.mxu0 0.0
    %1602 = vmatpush1.msra.mxu0 0.0
    %1603 = vmatprep.subr.mxu0 0.0
    %1604 = vmatpush1.msra.mxu0 0.0
    %1605 = vmatprep.subr.mxu0 0.0
    %1606 = vmatpush1.msra.mxu0 0.0
    %1607 = vmatprep.subr.mxu0 0.0
    %1608 = vmatpush1.msra.mxu0 0.0
    %1609 = vmatprep.subr.mxu0 0.0
    %1610 = vmatpush1.msra.mxu0 0.0
    %1611 = vmatprep.subr.mxu0 0.0
    %1612 = vmatpush1.msra.mxu0 0.0
    %1613 = vmatprep.subr.mxu0 0.0
    %1614 = vmatpush1.msra.mxu0 0.0
    %1615 = vmatprep.subr.mxu0 0.0
    %1616 = vmatpush1.msra.mxu0 0.0
    %1617 = vmatprep.subr.mxu0 0.0
    %1618 = vmatpush1.msra.mxu0 %v528
    %1619 = vmatprep.subr.mxu0 0.0
    %1620 = vmatpush1.msra.mxu0 %v527
    %1621 = vmatprep.subr.mxu0 0.0
    %1622 = vmatpush1.msra.mxu0 %v526
    %1623 = vmatprep.subr.mxu0 0.0
    %1624 = vmatpush1.msra.mxu0 %v525
    %1625 = vmatprep.subr.mxu0 0.0
    %1626 = vmatpush2.msra.mxu0 0.0
    %1627 = vmatprep.subr.mxu0 0.0
    %1628 = vmatpush2.msra.mxu0 0.0
    %1629 = vmatprep.subr.mxu0 0.0
    %1630 = vmatpush2.msra.mxu0 0.0
    %1631 = vmatprep.subr.mxu0 0.0
    %1632 = vmatpush2.msra.mxu0 0.0
    %1633 = vmatprep.subr.mxu0 0.0
    %1634 = vmatpush2.msra.mxu0 0.0
    %1635 = vmatprep.subr.mxu0 0.0
    %1636 = vmatpush2.msra.mxu0 0.0
    %1637 = vmatprep.subr.mxu0 0.0
    %1638 = vmatpush2.msra.mxu0 0.0
    %1639 = vmatprep.subr.mxu0 0.0
    %1640 = vmatpush2.msra.mxu0 0.0
    %1641 = vmatprep.subr.mxu0 0.0
    %1642 = vmatpush2.msra.mxu0 0.0
    %1643 = vmatprep.subr.mxu0 0.0
    %1644 = vmatpush2.msra.mxu0 0.0
    %1645 = vmatprep.subr.mxu0 0.0
    %1646 = vmatpush2.msra.mxu0 0.0
    %1647 = vmatprep.subr.mxu0 0.0
    %1648 = vmatpush2.msra.mxu0 0.0
    %1649 = vmatprep.subr.mxu0 0.0
    %1650 = vmatpush2.msra.mxu0 0.0
    %1651 = vmatprep.subr.mxu0 0.0
    %1652 = vmatpush2.msra.mxu0 0.0
    %1653 = vmatprep.subr.mxu0 0.0
    %1654 = vmatpush2.msra.mxu0 0.0
    %1655 = vmatprep.subr.mxu0 0.0
    %1656 = vmatpush2.msra.mxu0 0.0
    %1657 = vmatprep.mubr.f32.mxu0 0.0
    %1658 = vmatmul.mubr.f32.gmra.mxu0 %v1591
    %v1659 = vpop.f32.mrf.mxu0
    %v1660 = vadd.f32 %v647, %v1659
    %v1661 = vpop.f32.mrf.mxu0
    %1662 = vdwg.mxu0
    %v1663 = vadd.f32 %v486, %v1660
    %v1664 = vxor.u32 %v1663, 2147483648
    %v1665 = vmul.f32 %v1664, 1.442695
    %v1666 = vpow.pop %v1665
    %v1667 = vadd.f32 %v1666, 1.0
    %v1668 = vrcp.pop %v1667
    %v1669 = vmul.f32 1.0, %v1668
    %v1672 = vunpack.c.l.s4 1983009808
    %v1673 = vunpack.c.0.s8 %v1672
    %v1674 = vlaneseq
    %v1675 = vshrl.u32 %v1674, 7
    %v1676 = vsub.s32 %v1673, %v1675
    %v1677 = vrot.slane %v1660, %v1676
    %1678 = vrot.lane.b32.xlu0 %v1677, 64
    %v1679 = vpop.permute.xlu0 %1678
    %v1681 = vmul.f32 %v1669, %v1679
    %1683 = vrot.lane.b32.xlu0 %v1681, 64
    %v1684 = vpop.permute.xlu0 %1683
    %v1686 = vadd.f32 %v486, %v1684
    %v1687 = vtanh.pop %v1686
    %v1688 = vsub.f32 1.0, %v1669
    %1690 = vrot.lane.b32.xlu0 %v1687, 96
    %v1691 = vpop.permute.xlu0 %1690
    %v1693 = vmul.f32 %v1688, %v1691
    %v1694 = vmul.f32 %v1669, %v1459
    %v1695 = vadd.f32 %v1693, %v1694
    %v1698 = vunpack.c.l.s4 1983009808
    %v1699 = vunpack.c.0.s8 %v1698
    %v1700 = vlaneseq
    %v1701 = vshrl.u32 %v1700, 7
    %v1702 = vsub.s32 %v1699, %v1701
    %v1703 = vrot.slane %v1590, %v1702
    %1704 = vrot.lane.b32.xlu0 %v1703, 96
    %v1705 = vpop.permute.xlu0 %1704
    %s1707 = scalar_lea.vmem [#allocation2], 8
    %1708 = vst.msk [vmem:[%s1707] sm:$0x3] %vm763, %v1705
    %v1711 = vunpack.c.l.s4 1983009808
    %v1712 = vunpack.c.0.s8 %v1711
    %v1713 = vlaneseq
    %v1714 = vshrl.u32 %v1713, 7
    %v1715 = vsub.s32 %v1712, %v1714
    %v1716 = vrot.slane %v1695, %v1715
    %1717 = vrot.lane.b32.xlu0 %v1716, 96
    %v1718 = vpop.permute.xlu0 %1717
    %s1720 = scalar_lea.vmem [#allocation3], 22
    %1721 = vst.msk [vmem:[%s1720] sm:$0x3] %vm763, %v1718
    %v1722 = vsel %vm536, %v1705, 0
    %1724 = vmatprep.subr.mxu0 0.0
    %1725 = vmatpush1.msra.mxu0 0.0
    %1726 = vmatprep.subr.mxu0 0.0
    %1727 = vmatpush1.msra.mxu0 0.0
    %1728 = vmatprep.subr.mxu0 0.0
    %1729 = vmatpush1.msra.mxu0 0.0
    %1730 = vmatprep.subr.mxu0 0.0
    %1731 = vmatpush1.msra.mxu0 0.0
    %1732 = vmatprep.subr.mxu0 0.0
    %1733 = vmatpush1.msra.mxu0 0.0
    %1734 = vmatprep.subr.mxu0 0.0
    %1735 = vmatpush1.msra.mxu0 0.0
    %1736 = vmatprep.subr.mxu0 0.0
    %1737 = vmatpush1.msra.mxu0 0.0
    %1738 = vmatprep.subr.mxu0 0.0
    %1739 = vmatpush1.msra.mxu0 0.0
    %1740 = vmatprep.subr.mxu0 0.0
    %1741 = vmatpush1.msra.mxu0 0.0
    %1742 = vmatprep.subr.mxu0 0.0
    %1743 = vmatpush1.msra.mxu0 0.0
    %1744 = vmatprep.subr.mxu0 0.0
    %1745 = vmatpush1.msra.mxu0 0.0
    %1746 = vmatprep.subr.mxu0 0.0
    %1747 = vmatpush1.msra.mxu0 0.0
    %1748 = vmatprep.subr.mxu0 0.0
    %1749 = vmatpush1.msra.mxu0 %v523
    %1750 = vmatprep.subr.mxu0 0.0
    %1751 = vmatpush1.msra.mxu0 %v522
    %1752 = vmatprep.subr.mxu0 0.0
    %1753 = vmatpush1.msra.mxu0 %v521
    %1754 = vmatprep.subr.mxu0 0.0
    %1755 = vmatpush1.msra.mxu0 %v520
    %1756 = vmatprep.subr.mxu0 0.0
    %1757 = vmatpush2.msra.mxu0 0.0
    %1758 = vmatprep.subr.mxu0 0.0
    %1759 = vmatpush2.msra.mxu0 0.0
    %1760 = vmatprep.subr.mxu0 0.0
    %1761 = vmatpush2.msra.mxu0 0.0
    %1762 = vmatprep.subr.mxu0 0.0
    %1763 = vmatpush2.msra.mxu0 0.0
    %1764 = vmatprep.subr.mxu0 0.0
    %1765 = vmatpush2.msra.mxu0 0.0
    %1766 = vmatprep.subr.mxu0 0.0
    %1767 = vmatpush2.msra.mxu0 0.0
    %1768 = vmatprep.subr.mxu0 0.0
    %1769 = vmatpush2.msra.mxu0 0.0
    %1770 = vmatprep.subr.mxu0 0.0
    %1771 = vmatpush2.msra.mxu0 0.0
    %1772 = vmatprep.subr.mxu0 0.0
    %1773 = vmatpush2.msra.mxu0 0.0
    %1774 = vmatprep.subr.mxu0 0.0
    %1775 = vmatpush2.msra.mxu0 0.0
    %1776 = vmatprep.subr.mxu0 0.0
    %1777 = vmatpush2.msra.mxu0 0.0
    %1778 = vmatprep.subr.mxu0 0.0
    %1779 = vmatpush2.msra.mxu0 0.0
    %1780 = vmatprep.subr.mxu0 0.0
    %1781 = vmatpush2.msra.mxu0 0.0
    %1782 = vmatprep.subr.mxu0 0.0
    %1783 = vmatpush2.msra.mxu0 0.0
    %1784 = vmatprep.subr.mxu0 0.0
    %1785 = vmatpush2.msra.mxu0 0.0
    %1786 = vmatprep.subr.mxu0 0.0
    %1787 = vmatpush2.msra.mxu0 0.0
    %1788 = vmatprep.mubr.f32.mxu0 0.0
    %1789 = vmatmul.mubr.f32.gmra.mxu0 %v1722
    %v1790 = vpop.f32.mrf.mxu0
    %v1791 = vadd.f32 %v534, %v1790
    %v1792 = vpop.f32.mrf.mxu0
    %1793 = vdwg.mxu0
    %v1794 = vadd.f32 %v287, %v1791
    %v1795 = vxor.u32 %v1794, 2147483648
    %v1796 = vmul.f32 %v1795, 1.442695
    %v1797 = vpow.pop %v1796
    %v1798 = vadd.f32 %v1797, 1.0
    %v1799 = vrcp.pop %v1798
    %v1800 = vmul.f32 1.0, %v1799
    %v1803 = vunpack.c.l.s4 1983009808
    %v1804 = vunpack.c.0.s8 %v1803
    %v1805 = vlaneseq
    %v1806 = vshrl.u32 %v1805, 7
    %v1807 = vsub.s32 %v1804, %v1806
    %v1808 = vrot.slane %v1791, %v1807
    %1809 = vrot.lane.b32.xlu0 %v1808, 64
    %v1810 = vpop.permute.xlu0 %1809
    %v1812 = vmul.f32 %v1800, %v1810
    %1814 = vrot.lane.b32.xlu0 %v1812, 64
    %v1815 = vpop.permute.xlu0 %1814
    %v1817 = vadd.f32 %v287, %v1815
    %v1818 = vtanh.pop %v1817
    %v1819 = vsub.f32 1.0, %v1800
    %1821 = vrot.lane.b32.xlu0 %v1818, 96
    %v1822 = vpop.permute.xlu0 %1821
    %v1824 = vmul.f32 %v1819, %v1822
    %v1825 = vmul.f32 %v1800, %v1590
    %v1826 = vadd.f32 %v1824, %v1825
    %v1827 = vsel %vm536, %v1718, 0
    %1829 = vmatprep.subr.mxu0 0.0
    %1830 = vmatpush1.msra.mxu0 0.0
    %1831 = vmatprep.subr.mxu0 0.0
    %1832 = vmatpush1.msra.mxu0 0.0
    %1833 = vmatprep.subr.mxu0 0.0
    %1834 = vmatpush1.msra.mxu0 0.0
    %1835 = vmatprep.subr.mxu0 0.0
    %1836 = vmatpush1.msra.mxu0 0.0
    %1837 = vmatprep.subr.mxu0 0.0
    %1838 = vmatpush1.msra.mxu0 0.0
    %1839 = vmatprep.subr.mxu0 0.0
    %1840 = vmatpush1.msra.mxu0 0.0
    %1841 = vmatprep.subr.mxu0 0.0
    %1842 = vmatpush1.msra.mxu0 0.0
    %1843 = vmatprep.subr.mxu0 0.0
    %1844 = vmatpush1.msra.mxu0 0.0
    %1845 = vmatprep.subr.mxu0 0.0
    %1846 = vmatpush1.msra.mxu0 0.0
    %1847 = vmatprep.subr.mxu0 0.0
    %1848 = vmatpush1.msra.mxu0 0.0
    %1849 = vmatprep.subr.mxu0 0.0
    %1850 = vmatpush1.msra.mxu0 0.0
    %1851 = vmatprep.subr.mxu0 0.0
    %1852 = vmatpush1.msra.mxu0 0.0
    %1853 = vmatprep.subr.mxu0 0.0
    %1854 = vmatpush1.msra.mxu0 %v528
    %1855 = vmatprep.subr.mxu0 0.0
    %1856 = vmatpush1.msra.mxu0 %v527
    %1857 = vmatprep.subr.mxu0 0.0
    %1858 = vmatpush1.msra.mxu0 %v526
    %1859 = vmatprep.subr.mxu0 0.0
    %1860 = vmatpush1.msra.mxu0 %v525
    %1861 = vmatprep.subr.mxu0 0.0
    %1862 = vmatpush2.msra.mxu0 0.0
    %1863 = vmatprep.subr.mxu0 0.0
    %1864 = vmatpush2.msra.mxu0 0.0
    %1865 = vmatprep.subr.mxu0 0.0
    %1866 = vmatpush2.msra.mxu0 0.0
    %1867 = vmatprep.subr.mxu0 0.0
    %1868 = vmatpush2.msra.mxu0 0.0
    %1869 = vmatprep.subr.mxu0 0.0
    %1870 = vmatpush2.msra.mxu0 0.0
    %1871 = vmatprep.subr.mxu0 0.0
    %1872 = vmatpush2.msra.mxu0 0.0
    %1873 = vmatprep.subr.mxu0 0.0
    %1874 = vmatpush2.msra.mxu0 0.0
    %1875 = vmatprep.subr.mxu0 0.0
    %1876 = vmatpush2.msra.mxu0 0.0
    %1877 = vmatprep.subr.mxu0 0.0
    %1878 = vmatpush2.msra.mxu0 0.0
    %1879 = vmatprep.subr.mxu0 0.0
    %1880 = vmatpush2.msra.mxu0 0.0
    %1881 = vmatprep.subr.mxu0 0.0
    %1882 = vmatpush2.msra.mxu0 0.0
    %1883 = vmatprep.subr.mxu0 0.0
    %1884 = vmatpush2.msra.mxu0 0.0
    %1885 = vmatprep.subr.mxu0 0.0
    %1886 = vmatpush2.msra.mxu0 0.0
    %1887 = vmatprep.subr.mxu0 0.0
    %1888 = vmatpush2.msra.mxu0 0.0
    %1889 = vmatprep.subr.mxu0 0.0
    %1890 = vmatpush2.msra.mxu0 0.0
    %1891 = vmatprep.subr.mxu0 0.0
    %1892 = vmatpush2.msra.mxu0 0.0
    %1893 = vmatprep.mubr.f32.mxu0 0.0
    %1894 = vmatmul.mubr.f32.gmra.mxu0 %v1827
    %v1895 = vpop.f32.mrf.mxu0
    %v1896 = vadd.f32 %v647, %v1895
    %v1897 = vpop.f32.mrf.mxu0
    %1898 = vdwg.mxu0
    %v1899 = vadd.f32 %v484, %v1896
    %v1900 = vxor.u32 %v1899, 2147483648
    %v1901 = vmul.f32 %v1900, 1.442695
    %v1902 = vpow.pop %v1901
    %v1903 = vadd.f32 %v1902, 1.0
    %v1904 = vrcp.pop %v1903
    %v1905 = vmul.f32 1.0, %v1904
    %v1908 = vunpack.c.l.s4 1983009808
    %v1909 = vunpack.c.0.s8 %v1908
    %v1910 = vlaneseq
    %v1911 = vshrl.u32 %v1910, 7
    %v1912 = vsub.s32 %v1909, %v1911
    %v1913 = vrot.slane %v1896, %v1912
    %1914 = vrot.lane.b32.xlu0 %v1913, 64
    %v1915 = vpop.permute.xlu0 %1914
    %v1917 = vmul.f32 %v1905, %v1915
    %1919 = vrot.lane.b32.xlu0 %v1917, 64
    %v1920 = vpop.permute.xlu0 %1919
    %v1922 = vadd.f32 %v484, %v1920
    %v1923 = vtanh.pop %v1922
    %v1924 = vsub.f32 1.0, %v1905
    %1926 = vrot.lane.b32.xlu0 %v1923, 96
    %v1927 = vpop.permute.xlu0 %1926
    %v1929 = vmul.f32 %v1924, %v1927
    %v1930 = vmul.f32 %v1905, %v1695
    %v1931 = vadd.f32 %v1929, %v1930
    %v1934 = vunpack.c.l.s4 1983009808
    %v1935 = vunpack.c.0.s8 %v1934
    %v1936 = vlaneseq
    %v1937 = vshrl.u32 %v1936, 7
    %v1938 = vsub.s32 %v1935, %v1937
    %v1939 = vrot.slane %v1826, %v1938
    %1940 = vrot.lane.b32.xlu0 %v1939, 96
    %v1941 = vpop.permute.xlu0 %1940
    %s1943 = scalar_lea.vmem [#allocation2], 10
    %1944 = vst.msk [vmem:[%s1943] sm:$0x3] %vm763, %v1941
    %v1947 = vunpack.c.l.s4 1983009808
    %v1948 = vunpack.c.0.s8 %v1947
    %v1949 = vlaneseq
    %v1950 = vshrl.u32 %v1949, 7
    %v1951 = vsub.s32 %v1948, %v1950
    %v1952 = vrot.slane %v1931, %v1951
    %1953 = vrot.lane.b32.xlu0 %v1952, 96
    %v1954 = vpop.permute.xlu0 %1953
    %s1956 = scalar_lea.vmem [#allocation3], 20
    %1957 = vst.msk [vmem:[%s1956] sm:$0x3] %vm763, %v1954
    %v1958 = vsel %vm536, %v1941, 0
    %1960 = vmatprep.subr.mxu0 0.0
    %1961 = vmatpush1.msra.mxu0 0.0
    %1962 = vmatprep.subr.mxu0 0.0
    %1963 = vmatpush1.msra.mxu0 0.0
    %1964 = vmatprep.subr.mxu0 0.0
    %1965 = vmatpush1.msra.mxu0 0.0
    %1966 = vmatprep.subr.mxu0 0.0
    %1967 = vmatpush1.msra.mxu0 0.0
    %1968 = vmatprep.subr.mxu0 0.0
    %1969 = vmatpush1.msra.mxu0 0.0
    %1970 = vmatprep.subr.mxu0 0.0
    %1971 = vmatpush1.msra.mxu0 0.0
    %1972 = vmatprep.subr.mxu0 0.0
    %1973 = vmatpush1.msra.mxu0 0.0
    %1974 = vmatprep.subr.mxu0 0.0
    %1975 = vmatpush1.msra.mxu0 0.0
    %1976 = vmatprep.subr.mxu0 0.0
    %1977 = vmatpush1.msra.mxu0 0.0
    %1978 = vmatprep.subr.mxu0 0.0
    %1979 = vmatpush1.msra.mxu0 0.0
    %1980 = vmatprep.subr.mxu0 0.0
    %1981 = vmatpush1.msra.mxu0 0.0
    %1982 = vmatprep.subr.mxu0 0.0
    %1983 = vmatpush1.msra.mxu0 0.0
    %1984 = vmatprep.subr.mxu0 0.0
    %1985 = vmatpush1.msra.mxu0 %v523
    %1986 = vmatprep.subr.mxu0 0.0
    %1987 = vmatpush1.msra.mxu0 %v522
    %1988 = vmatprep.subr.mxu0 0.0
    %1989 = vmatpush1.msra.mxu0 %v521
    %1990 = vmatprep.subr.mxu0 0.0
    %1991 = vmatpush1.msra.mxu0 %v520
    %1992 = vmatprep.subr.mxu0 0.0
    %1993 = vmatpush2.msra.mxu0 0.0
    %1994 = vmatprep.subr.mxu0 0.0
    %1995 = vmatpush2.msra.mxu0 0.0
    %1996 = vmatprep.subr.mxu0 0.0
    %1997 = vmatpush2.msra.mxu0 0.0
    %1998 = vmatprep.subr.mxu0 0.0
    %1999 = vmatpush2.msra.mxu0 0.0
    %2000 = vmatprep.subr.mxu0 0.0
    %2001 = vmatpush2.msra.mxu0 0.0
    %2002 = vmatprep.subr.mxu0 0.0
    %2003 = vmatpush2.msra.mxu0 0.0
    %2004 = vmatprep.subr.mxu0 0.0
    %2005 = vmatpush2.msra.mxu0 0.0
    %2006 = vmatprep.subr.mxu0 0.0
    %2007 = vmatpush2.msra.mxu0 0.0
    %2008 = vmatprep.subr.mxu0 0.0
    %2009 = vmatpush2.msra.mxu0 0.0
    %2010 = vmatprep.subr.mxu0 0.0
    %2011 = vmatpush2.msra.mxu0 0.0
    %2012 = vmatprep.subr.mxu0 0.0
    %2013 = vmatpush2.msra.mxu0 0.0
    %2014 = vmatprep.subr.mxu0 0.0
    %2015 = vmatpush2.msra.mxu0 0.0
    %2016 = vmatprep.subr.mxu0 0.0
    %2017 = vmatpush2.msra.mxu0 0.0
    %2018 = vmatprep.subr.mxu0 0.0
    %2019 = vmatpush2.msra.mxu0 0.0
    %2020 = vmatprep.subr.mxu0 0.0
    %2021 = vmatpush2.msra.mxu0 0.0
    %2022 = vmatprep.subr.mxu0 0.0
    %2023 = vmatpush2.msra.mxu0 0.0
    %2024 = vmatprep.mubr.f32.mxu0 0.0
    %2025 = vmatmul.mubr.f32.gmra.mxu0 %v1958
    %v2026 = vpop.f32.mrf.mxu0
    %v2027 = vadd.f32 %v534, %v2026
    %v2028 = vpop.f32.mrf.mxu0
    %2029 = vdwg.mxu0
    %v2030 = vadd.f32 %v286, %v2027
    %v2031 = vxor.u32 %v2030, 2147483648
    %v2032 = vmul.f32 %v2031, 1.442695
    %v2033 = vpow.pop %v2032
    %v2034 = vadd.f32 %v2033, 1.0
    %v2035 = vrcp.pop %v2034
    %v2036 = vmul.f32 1.0, %v2035
    %v2039 = vunpack.c.l.s4 1983009808
    %v2040 = vunpack.c.0.s8 %v2039
    %v2041 = vlaneseq
    %v2042 = vshrl.u32 %v2041, 7
    %v2043 = vsub.s32 %v2040, %v2042
    %v2044 = vrot.slane %v2027, %v2043
    %2045 = vrot.lane.b32.xlu0 %v2044, 64
    %v2046 = vpop.permute.xlu0 %2045
    %v2048 = vmul.f32 %v2036, %v2046
    %2050 = vrot.lane.b32.xlu0 %v2048, 64
    %v2051 = vpop.permute.xlu0 %2050
    %v2053 = vadd.f32 %v286, %v2051
    %v2054 = vtanh.pop %v2053
    %v2055 = vsub.f32 1.0, %v2036
    %2057 = vrot.lane.b32.xlu0 %v2054, 96
    %v2058 = vpop.permute.xlu0 %2057
    %v2060 = vmul.f32 %v2055, %v2058
    %v2061 = vmul.f32 %v2036, %v1826
    %v2062 = vadd.f32 %v2060, %v2061
    %v2063 = vsel %vm536, %v1954, 0
    %2065 = vmatprep.subr.mxu0 0.0
    %2066 = vmatpush1.msra.mxu0 0.0
    %2067 = vmatprep.subr.mxu0 0.0
    %2068 = vmatpush1.msra.mxu0 0.0
    %2069 = vmatprep.subr.mxu0 0.0
    %2070 = vmatpush1.msra.mxu0 0.0
    %2071 = vmatprep.subr.mxu0 0.0
    %2072 = vmatpush1.msra.mxu0 0.0
    %2073 = vmatprep.subr.mxu0 0.0
    %2074 = vmatpush1.msra.mxu0 0.0
    %2075 = vmatprep.subr.mxu0 0.0
    %2076 = vmatpush1.msra.mxu0 0.0
    %2077 = vmatprep.subr.mxu0 0.0
    %2078 = vmatpush1.msra.mxu0 0.0
    %2079 = vmatprep.subr.mxu0 0.0
    %2080 = vmatpush1.msra.mxu0 0.0
    %2081 = vmatprep.subr.mxu0 0.0
    %2082 = vmatpush1.msra.mxu0 0.0
    %2083 = vmatprep.subr.mxu0 0.0
    %2084 = vmatpush1.msra.mxu0 0.0
    %2085 = vmatprep.subr.mxu0 0.0
    %2086 = vmatpush1.msra.mxu0 0.0
    %2087 = vmatprep.subr.mxu0 0.0
    %2088 = vmatpush1.msra.mxu0 0.0
    %2089 = vmatprep.subr.mxu0 0.0
    %2090 = vmatpush1.msra.mxu0 %v528
    %2091 = vmatprep.subr.mxu0 0.0
    %2092 = vmatpush1.msra.mxu0 %v527
    %2093 = vmatprep.subr.mxu0 0.0
    %2094 = vmatpush1.msra.mxu0 %v526
    %2095 = vmatprep.subr.mxu0 0.0
    %2096 = vmatpush1.msra.mxu0 %v525
    %2097 = vmatprep.subr.mxu0 0.0
    %2098 = vmatpush2.msra.mxu0 0.0
    %2099 = vmatprep.subr.mxu0 0.0
    %2100 = vmatpush2.msra.mxu0 0.0
    %2101 = vmatprep.subr.mxu0 0.0
    %2102 = vmatpush2.msra.mxu0 0.0
    %2103 = vmatprep.subr.mxu0 0.0
    %2104 = vmatpush2.msra.mxu0 0.0
    %2105 = vmatprep.subr.mxu0 0.0
    %2106 = vmatpush2.msra.mxu0 0.0
    %2107 = vmatprep.subr.mxu0 0.0
    %2108 = vmatpush2.msra.mxu0 0.0
    %2109 = vmatprep.subr.mxu0 0.0
    %2110 = vmatpush2.msra.mxu0 0.0
    %2111 = vmatprep.subr.mxu0 0.0
    %2112 = vmatpush2.msra.mxu0 0.0
    %2113 = vmatprep.subr.mxu0 0.0
    %2114 = vmatpush2.msra.mxu0 0.0
    %2115 = vmatprep.subr.mxu0 0.0
    %2116 = vmatpush2.msra.mxu0 0.0
    %2117 = vmatprep.subr.mxu0 0.0
    %2118 = vmatpush2.msra.mxu0 0.0
    %2119 = vmatprep.subr.mxu0 0.0
    %2120 = vmatpush2.msra.mxu0 0.0
    %2121 = vmatprep.subr.mxu0 0.0
    %2122 = vmatpush2.msra.mxu0 0.0
    %2123 = vmatprep.subr.mxu0 0.0
    %2124 = vmatpush2.msra.mxu0 0.0
    %2125 = vmatprep.subr.mxu0 0.0
    %2126 = vmatpush2.msra.mxu0 0.0
    %2127 = vmatprep.subr.mxu0 0.0
    %2128 = vmatpush2.msra.mxu0 0.0
    %2129 = vmatprep.mubr.f32.mxu0 0.0
    %2130 = vmatmul.mubr.f32.gmra.mxu0 %v2063
    %v2131 = vpop.f32.mrf.mxu0
    %v2132 = vadd.f32 %v647, %v2131
    %v2133 = vpop.f32.mrf.mxu0
    %2134 = vdwg.mxu0
    %v2135 = vadd.f32 %v485, %v2132
    %v2136 = vxor.u32 %v2135, 2147483648
    %v2137 = vmul.f32 %v2136, 1.442695
    %v2138 = vpow.pop %v2137
    %v2139 = vadd.f32 %v2138, 1.0
    %v2140 = vrcp.pop %v2139
    %v2141 = vmul.f32 1.0, %v2140
    %v2144 = vunpack.c.l.s4 1983009808
    %v2145 = vunpack.c.0.s8 %v2144
    %v2146 = vlaneseq
    %v2147 = vshrl.u32 %v2146, 7
    %v2148 = vsub.s32 %v2145, %v2147
    %v2149 = vrot.slane %v2132, %v2148
    %2150 = vrot.lane.b32.xlu0 %v2149, 64
    %v2151 = vpop.permute.xlu0 %2150
    %v2153 = vmul.f32 %v2141, %v2151
    %2155 = vrot.lane.b32.xlu0 %v2153, 64
    %v2156 = vpop.permute.xlu0 %2155
    %v2158 = vadd.f32 %v485, %v2156
    %v2159 = vtanh.pop %v2158
    %v2160 = vsub.f32 1.0, %v2141
    %2162 = vrot.lane.b32.xlu0 %v2159, 96
    %v2163 = vpop.permute.xlu0 %2162
    %v2165 = vmul.f32 %v2160, %v2163
    %v2166 = vmul.f32 %v2141, %v1931
    %v2167 = vadd.f32 %v2165, %v2166
    %v2170 = vunpack.c.l.s4 1983009808
    %v2171 = vunpack.c.0.s8 %v2170
    %v2172 = vlaneseq
    %v2173 = vshrl.u32 %v2172, 7
    %v2174 = vsub.s32 %v2171, %v2173
    %v2175 = vrot.slane %v2062, %v2174
    %2176 = vrot.lane.b32.xlu0 %v2175, 96
    %v2177 = vpop.permute.xlu0 %2176
    %s2179 = scalar_lea.vmem [#allocation2], 12
    %2180 = vst.msk [vmem:[%s2179] sm:$0x3] %vm763, %v2177
    %v2183 = vunpack.c.l.s4 1983009808
    %v2184 = vunpack.c.0.s8 %v2183
    %v2185 = vlaneseq
    %v2186 = vshrl.u32 %v2185, 7
    %v2187 = vsub.s32 %v2184, %v2186
    %v2188 = vrot.slane %v2167, %v2187
    %2189 = vrot.lane.b32.xlu0 %v2188, 96
    %v2190 = vpop.permute.xlu0 %2189
    %s2192 = scalar_lea.vmem [#allocation3], 18
    %2193 = vst.msk [vmem:[%s2192] sm:$0x3] %vm763, %v2190
    %v2194 = vsel %vm536, %v2177, 0
    %2196 = vmatprep.subr.mxu0 0.0
    %2197 = vmatpush1.msra.mxu0 0.0
    %2198 = vmatprep.subr.mxu0 0.0
    %2199 = vmatpush1.msra.mxu0 0.0
    %2200 = vmatprep.subr.mxu0 0.0
    %2201 = vmatpush1.msra.mxu0 0.0
    %2202 = vmatprep.subr.mxu0 0.0
    %2203 = vmatpush1.msra.mxu0 0.0
    %2204 = vmatprep.subr.mxu0 0.0
    %2205 = vmatpush1.msra.mxu0 0.0
    %2206 = vmatprep.subr.mxu0 0.0
    %2207 = vmatpush1.msra.mxu0 0.0
    %2208 = vmatprep.subr.mxu0 0.0
    %2209 = vmatpush1.msra.mxu0 0.0
    %2210 = vmatprep.subr.mxu0 0.0
    %2211 = vmatpush1.msra.mxu0 0.0
    %2212 = vmatprep.subr.mxu0 0.0
    %2213 = vmatpush1.msra.mxu0 0.0
    %2214 = vmatprep.subr.mxu0 0.0
    %2215 = vmatpush1.msra.mxu0 0.0
    %2216 = vmatprep.subr.mxu0 0.0
    %2217 = vmatpush1.msra.mxu0 0.0
    %2218 = vmatprep.subr.mxu0 0.0
    %2219 = vmatpush1.msra.mxu0 0.0
    %2220 = vmatprep.subr.mxu0 0.0
    %2221 = vmatpush1.msra.mxu0 %v523
    %2222 = vmatprep.subr.mxu0 0.0
    %2223 = vmatpush1.msra.mxu0 %v522
    %2224 = vmatprep.subr.mxu0 0.0
    %2225 = vmatpush1.msra.mxu0 %v521
    %2226 = vmatprep.subr.mxu0 0.0
    %2227 = vmatpush1.msra.mxu0 %v520
    %2228 = vmatprep.subr.mxu0 0.0
    %2229 = vmatpush2.msra.mxu0 0.0
    %2230 = vmatprep.subr.mxu0 0.0
    %2231 = vmatpush2.msra.mxu0 0.0
    %2232 = vmatprep.subr.mxu0 0.0
    %2233 = vmatpush2.msra.mxu0 0.0
    %2234 = vmatprep.subr.mxu0 0.0
    %2235 = vmatpush2.msra.mxu0 0.0
    %2236 = vmatprep.subr.mxu0 0.0
    %2237 = vmatpush2.msra.mxu0 0.0
    %2238 = vmatprep.subr.mxu0 0.0
    %2239 = vmatpush2.msra.mxu0 0.0
    %2240 = vmatprep.subr.mxu0 0.0
    %2241 = vmatpush2.msra.mxu0 0.0
    %2242 = vmatprep.subr.mxu0 0.0
    %2243 = vmatpush2.msra.mxu0 0.0
    %2244 = vmatprep.subr.mxu0 0.0
    %2245 = vmatpush2.msra.mxu0 0.0
    %2246 = vmatprep.subr.mxu0 0.0
    %2247 = vmatpush2.msra.mxu0 0.0
    %2248 = vmatprep.subr.mxu0 0.0
    %2249 = vmatpush2.msra.mxu0 0.0
    %2250 = vmatprep.subr.mxu0 0.0
    %2251 = vmatpush2.msra.mxu0 0.0
    %2252 = vmatprep.subr.mxu0 0.0
    %2253 = vmatpush2.msra.mxu0 0.0
    %2254 = vmatprep.subr.mxu0 0.0
    %2255 = vmatpush2.msra.mxu0 0.0
    %2256 = vmatprep.subr.mxu0 0.0
    %2257 = vmatpush2.msra.mxu0 0.0
    %2258 = vmatprep.subr.mxu0 0.0
    %2259 = vmatpush2.msra.mxu0 0.0
    %2260 = vmatprep.mubr.f32.mxu0 0.0
    %2261 = vmatmul.mubr.f32.gmra.mxu0 %v2194
    %v2262 = vpop.f32.mrf.mxu0
    %v2263 = vadd.f32 %v534, %v2262
    %v2264 = vpop.f32.mrf.mxu0
    %2265 = vdwg.mxu0
    %v2266 = vadd.f32 %v288, %v2263
    %v2267 = vxor.u32 %v2266, 2147483648
    %v2268 = vmul.f32 %v2267, 1.442695
    %v2269 = vpow.pop %v2268
    %v2270 = vadd.f32 %v2269, 1.0
    %v2271 = vrcp.pop %v2270
    %v2272 = vmul.f32 1.0, %v2271
    %v2275 = vunpack.c.l.s4 1983009808
    %v2276 = vunpack.c.0.s8 %v2275
    %v2277 = vlaneseq
    %v2278 = vshrl.u32 %v2277, 7
    %v2279 = vsub.s32 %v2276, %v2278
    %v2280 = vrot.slane %v2263, %v2279
    %2281 = vrot.lane.b32.xlu0 %v2280, 64
    %v2282 = vpop.permute.xlu0 %2281
    %v2284 = vmul.f32 %v2272, %v2282
    %2286 = vrot.lane.b32.xlu0 %v2284, 64
    %v2287 = vpop.permute.xlu0 %2286
    %v2289 = vadd.f32 %v288, %v2287
    %v2290 = vtanh.pop %v2289
    %v2291 = vsub.f32 1.0, %v2272
    %2293 = vrot.lane.b32.xlu0 %v2290, 96
    %v2294 = vpop.permute.xlu0 %2293
    %v2296 = vmul.f32 %v2291, %v2294
    %v2297 = vmul.f32 %v2272, %v2062
    %v2298 = vadd.f32 %v2296, %v2297
    %v2299 = vsel %vm536, %v2190, 0
    %2301 = vmatprep.subr.mxu0 0.0
    %2302 = vmatpush1.msra.mxu0 0.0
    %2303 = vmatprep.subr.mxu0 0.0
    %2304 = vmatpush1.msra.mxu0 0.0
    %2305 = vmatprep.subr.mxu0 0.0
    %2306 = vmatpush1.msra.mxu0 0.0
    %2307 = vmatprep.subr.mxu0 0.0
    %2308 = vmatpush1.msra.mxu0 0.0
    %2309 = vmatprep.subr.mxu0 0.0
    %2310 = vmatpush1.msra.mxu0 0.0
    %2311 = vmatprep.subr.mxu0 0.0
    %2312 = vmatpush1.msra.mxu0 0.0
    %2313 = vmatprep.subr.mxu0 0.0
    %2314 = vmatpush1.msra.mxu0 0.0
    %2315 = vmatprep.subr.mxu0 0.0
    %2316 = vmatpush1.msra.mxu0 0.0
    %2317 = vmatprep.subr.mxu0 0.0
    %2318 = vmatpush1.msra.mxu0 0.0
    %2319 = vmatprep.subr.mxu0 0.0
    %2320 = vmatpush1.msra.mxu0 0.0
    %2321 = vmatprep.subr.mxu0 0.0
    %2322 = vmatpush1.msra.mxu0 0.0
    %2323 = vmatprep.subr.mxu0 0.0
    %2324 = vmatpush1.msra.mxu0 0.0
    %2325 = vmatprep.subr.mxu0 0.0
    %2326 = vmatpush1.msra.mxu0 %v528
    %2327 = vmatprep.subr.mxu0 0.0
    %2328 = vmatpush1.msra.mxu0 %v527
    %2329 = vmatprep.subr.mxu0 0.0
    %2330 = vmatpush1.msra.mxu0 %v526
    %2331 = vmatprep.subr.mxu0 0.0
    %2332 = vmatpush1.msra.mxu0 %v525
    %2333 = vmatprep.subr.mxu0 0.0
    %2334 = vmatpush2.msra.mxu0 0.0
    %2335 = vmatprep.subr.mxu0 0.0
    %2336 = vmatpush2.msra.mxu0 0.0
    %2337 = vmatprep.subr.mxu0 0.0
    %2338 = vmatpush2.msra.mxu0 0.0
    %2339 = vmatprep.subr.mxu0 0.0
    %2340 = vmatpush2.msra.mxu0 0.0
    %2341 = vmatprep.subr.mxu0 0.0
    %2342 = vmatpush2.msra.mxu0 0.0
    %2343 = vmatprep.subr.mxu0 0.0
    %2344 = vmatpush2.msra.mxu0 0.0
    %2345 = vmatprep.subr.mxu0 0.0
    %2346 = vmatpush2.msra.mxu0 0.0
    %2347 = vmatprep.subr.mxu0 0.0
    %2348 = vmatpush2.msra.mxu0 0.0
    %2349 = vmatprep.subr.mxu0 0.0
    %2350 = vmatpush2.msra.mxu0 0.0
    %2351 = vmatprep.subr.mxu0 0.0
    %2352 = vmatpush2.msra.mxu0 0.0
    %2353 = vmatprep.subr.mxu0 0.0
    %2354 = vmatpush2.msra.mxu0 0.0
    %2355 = vmatprep.subr.mxu0 0.0
    %2356 = vmatpush2.msra.mxu0 0.0
    %2357 = vmatprep.subr.mxu0 0.0
    %2358 = vmatpush2.msra.mxu0 0.0
    %2359 = vmatprep.subr.mxu0 0.0
    %2360 = vmatpush2.msra.mxu0 0.0
    %2361 = vmatprep.subr.mxu0 0.0
    %2362 = vmatpush2.msra.mxu0 0.0
    %2363 = vmatprep.subr.mxu0 0.0
    %2364 = vmatpush2.msra.mxu0 0.0
    %2365 = vmatprep.mubr.f32.mxu0 0.0
    %2366 = vmatmul.mubr.f32.gmra.mxu0 %v2299
    %v2367 = vpop.f32.mrf.mxu0
    %v2368 = vadd.f32 %v647, %v2367
    %v2369 = vpop.f32.mrf.mxu0
    %2370 = vdwg.mxu0
    %v2371 = vadd.f32 %v477, %v2368
    %v2372 = vxor.u32 %v2371, 2147483648
    %v2373 = vmul.f32 %v2372, 1.442695
    %v2374 = vpow.pop %v2373
    %v2375 = vadd.f32 %v2374, 1.0
    %v2376 = vrcp.pop %v2375
    %v2377 = vmul.f32 1.0, %v2376
    %v2380 = vunpack.c.l.s4 1983009808
    %v2381 = vunpack.c.0.s8 %v2380
    %v2382 = vlaneseq
    %v2383 = vshrl.u32 %v2382, 7
    %v2384 = vsub.s32 %v2381, %v2383
    %v2385 = vrot.slane %v2368, %v2384
    %2386 = vrot.lane.b32.xlu0 %v2385, 64
    %v2387 = vpop.permute.xlu0 %2386
    %v2389 = vmul.f32 %v2377, %v2387
    %2391 = vrot.lane.b32.xlu0 %v2389, 64
    %v2392 = vpop.permute.xlu0 %2391
    %v2394 = vadd.f32 %v477, %v2392
    %v2395 = vtanh.pop %v2394
    %v2396 = vsub.f32 1.0, %v2377
    %2398 = vrot.lane.b32.xlu0 %v2395, 96
    %v2399 = vpop.permute.xlu0 %2398
    %v2401 = vmul.f32 %v2396, %v2399
    %v2402 = vmul.f32 %v2377, %v2167
    %v2403 = vadd.f32 %v2401, %v2402
    %v2406 = vunpack.c.l.s4 1983009808
    %v2407 = vunpack.c.0.s8 %v2406
    %v2408 = vlaneseq
    %v2409 = vshrl.u32 %v2408, 7
    %v2410 = vsub.s32 %v2407, %v2409
    %v2411 = vrot.slane %v2298, %v2410
    %2412 = vrot.lane.b32.xlu0 %v2411, 96
    %v2413 = vpop.permute.xlu0 %2412
    %s2415 = scalar_lea.vmem [#allocation2], 14
    %2416 = vst.msk [vmem:[%s2415] sm:$0x3] %vm763, %v2413
    %v2419 = vunpack.c.l.s4 1983009808
    %v2420 = vunpack.c.0.s8 %v2419
    %v2421 = vlaneseq
    %v2422 = vshrl.u32 %v2421, 7
    %v2423 = vsub.s32 %v2420, %v2422
    %v2424 = vrot.slane %v2403, %v2423
    %2425 = vrot.lane.b32.xlu0 %v2424, 96
    %v2426 = vpop.permute.xlu0 %2425
    %s2428 = scalar_lea.vmem [#allocation3], 16
    %2429 = vst.msk [vmem:[%s2428] sm:$0x3] %vm763, %v2426
    %v2430 = vsel %vm536, %v2413, 0
    %2432 = vmatprep.subr.mxu0 0.0
    %2433 = vmatpush1.msra.mxu0 0.0
    %2434 = vmatprep.subr.mxu0 0.0
    %2435 = vmatpush1.msra.mxu0 0.0
    %2436 = vmatprep.subr.mxu0 0.0
    %2437 = vmatpush1.msra.mxu0 0.0
    %2438 = vmatprep.subr.mxu0 0.0
    %2439 = vmatpush1.msra.mxu0 0.0
    %2440 = vmatprep.subr.mxu0 0.0
    %2441 = vmatpush1.msra.mxu0 0.0
    %2442 = vmatprep.subr.mxu0 0.0
    %2443 = vmatpush1.msra.mxu0 0.0
    %2444 = vmatprep.subr.mxu0 0.0
    %2445 = vmatpush1.msra.mxu0 0.0
    %2446 = vmatprep.subr.mxu0 0.0
    %2447 = vmatpush1.msra.mxu0 0.0
    %2448 = vmatprep.subr.mxu0 0.0
    %2449 = vmatpush1.msra.mxu0 0.0
    %2450 = vmatprep.subr.mxu0 0.0
    %2451 = vmatpush1.msra.mxu0 0.0
    %2452 = vmatprep.subr.mxu0 0.0
    %2453 = vmatpush1.msra.mxu0 0.0
    %2454 = vmatprep.subr.mxu0 0.0
    %2455 = vmatpush1.msra.mxu0 0.0
    %2456 = vmatprep.subr.mxu0 0.0
    %2457 = vmatpush1.msra.mxu0 %v523
    %2458 = vmatprep.subr.mxu0 0.0
    %2459 = vmatpush1.msra.mxu0 %v522
    %2460 = vmatprep.subr.mxu0 0.0
    %2461 = vmatpush1.msra.mxu0 %v521
    %2462 = vmatprep.subr.mxu0 0.0
    %2463 = vmatpush1.msra.mxu0 %v520
    %2464 = vmatprep.subr.mxu0 0.0
    %2465 = vmatpush2.msra.mxu0 0.0
    %2466 = vmatprep.subr.mxu0 0.0
    %2467 = vmatpush2.msra.mxu0 0.0
    %2468 = vmatprep.subr.mxu0 0.0
    %2469 = vmatpush2.msra.mxu0 0.0
    %2470 = vmatprep.subr.mxu0 0.0
    %2471 = vmatpush2.msra.mxu0 0.0
    %2472 = vmatprep.subr.mxu0 0.0
    %2473 = vmatpush2.msra.mxu0 0.0
    %2474 = vmatprep.subr.mxu0 0.0
    %2475 = vmatpush2.msra.mxu0 0.0
    %2476 = vmatprep.subr.mxu0 0.0
    %2477 = vmatpush2.msra.mxu0 0.0
    %2478 = vmatprep.subr.mxu0 0.0
    %2479 = vmatpush2.msra.mxu0 0.0
    %2480 = vmatprep.subr.mxu0 0.0
    %2481 = vmatpush2.msra.mxu0 0.0
    %2482 = vmatprep.subr.mxu0 0.0
    %2483 = vmatpush2.msra.mxu0 0.0
    %2484 = vmatprep.subr.mxu0 0.0
    %2485 = vmatpush2.msra.mxu0 0.0
    %2486 = vmatprep.subr.mxu0 0.0
    %2487 = vmatpush2.msra.mxu0 0.0
    %2488 = vmatprep.subr.mxu0 0.0
    %2489 = vmatpush2.msra.mxu0 0.0
    %2490 = vmatprep.subr.mxu0 0.0
    %2491 = vmatpush2.msra.mxu0 0.0
    %2492 = vmatprep.subr.mxu0 0.0
    %2493 = vmatpush2.msra.mxu0 0.0
    %2494 = vmatprep.subr.mxu0 0.0
    %2495 = vmatpush2.msra.mxu0 0.0
    %2496 = vmatprep.mubr.f32.mxu0 0.0
    %2497 = vmatmul.mubr.f32.gmra.mxu0 %v2430
    %v2498 = vpop.f32.mrf.mxu0
    %v2499 = vadd.f32 %v534, %v2498
    %v2500 = vpop.f32.mrf.mxu0
    %2501 = vdwg.mxu0
    %v2502 = vadd.f32 %v296, %v2499
    %v2503 = vxor.u32 %v2502, 2147483648
    %v2504 = vmul.f32 %v2503, 1.442695
    %v2505 = vpow.pop %v2504
    %v2506 = vadd.f32 %v2505, 1.0
    %v2507 = vrcp.pop %v2506
    %v2508 = vmul.f32 1.0, %v2507
    %v2511 = vunpack.c.l.s4 1983009808
    %v2512 = vunpack.c.0.s8 %v2511
    %v2513 = vlaneseq
    %v2514 = vshrl.u32 %v2513, 7
    %v2515 = vsub.s32 %v2512, %v2514
    %v2516 = vrot.slane %v2499, %v2515
    %2517 = vrot.lane.b32.xlu0 %v2516, 64
    %v2518 = vpop.permute.xlu0 %2517
    %v2520 = vmul.f32 %v2508, %v2518
    %2522 = vrot.lane.b32.xlu0 %v2520, 64
    %v2523 = vpop.permute.xlu0 %2522
    %v2525 = vadd.f32 %v296, %v2523
    %v2526 = vtanh.pop %v2525
    %v2527 = vsub.f32 1.0, %v2508
    %2529 = vrot.lane.b32.xlu0 %v2526, 96
    %v2530 = vpop.permute.xlu0 %2529
    %v2532 = vmul.f32 %v2527, %v2530
    %v2533 = vmul.f32 %v2508, %v2298
    %v2534 = vadd.f32 %v2532, %v2533
    %v2535 = vsel %vm536, %v2426, 0
    %2537 = vmatprep.subr.mxu0 0.0
    %2538 = vmatpush1.msra.mxu0 0.0
    %2539 = vmatprep.subr.mxu0 0.0
    %2540 = vmatpush1.msra.mxu0 0.0
    %2541 = vmatprep.subr.mxu0 0.0
    %2542 = vmatpush1.msra.mxu0 0.0
    %2543 = vmatprep.subr.mxu0 0.0
    %2544 = vmatpush1.msra.mxu0 0.0
    %2545 = vmatprep.subr.mxu0 0.0
    %2546 = vmatpush1.msra.mxu0 0.0
    %2547 = vmatprep.subr.mxu0 0.0
    %2548 = vmatpush1.msra.mxu0 0.0
    %2549 = vmatprep.subr.mxu0 0.0
    %2550 = vmatpush1.msra.mxu0 0.0
    %2551 = vmatprep.subr.mxu0 0.0
    %2552 = vmatpush1.msra.mxu0 0.0
    %2553 = vmatprep.subr.mxu0 0.0
    %2554 = vmatpush1.msra.mxu0 0.0
    %2555 = vmatprep.subr.mxu0 0.0
    %2556 = vmatpush1.msra.mxu0 0.0
    %2557 = vmatprep.subr.mxu0 0.0
    %2558 = vmatpush1.msra.mxu0 0.0
    %2559 = vmatprep.subr.mxu0 0.0
    %2560 = vmatpush1.msra.mxu0 0.0
    %2561 = vmatprep.subr.mxu0 0.0
    %2562 = vmatpush1.msra.mxu0 %v528
    %2563 = vmatprep.subr.mxu0 0.0
    %2564 = vmatpush1.msra.mxu0 %v527
    %2565 = vmatprep.subr.mxu0 0.0
    %2566 = vmatpush1.msra.mxu0 %v526
    %2567 = vmatprep.subr.mxu0 0.0
    %2568 = vmatpush1.msra.mxu0 %v525
    %2569 = vmatprep.subr.mxu0 0.0
    %2570 = vmatpush2.msra.mxu0 0.0
    %2571 = vmatprep.subr.mxu0 0.0
    %2572 = vmatpush2.msra.mxu0 0.0
    %2573 = vmatprep.subr.mxu0 0.0
    %2574 = vmatpush2.msra.mxu0 0.0
    %2575 = vmatprep.subr.mxu0 0.0
    %2576 = vmatpush2.msra.mxu0 0.0
    %2577 = vmatprep.subr.mxu0 0.0
    %2578 = vmatpush2.msra.mxu0 0.0
    %2579 = vmatprep.subr.mxu0 0.0
    %2580 = vmatpush2.msra.mxu0 0.0
    %2581 = vmatprep.subr.mxu0 0.0
    %2582 = vmatpush2.msra.mxu0 0.0
    %2583 = vmatprep.subr.mxu0 0.0
    %2584 = vmatpush2.msra.mxu0 0.0
    %2585 = vmatprep.subr.mxu0 0.0
    %2586 = vmatpush2.msra.mxu0 0.0
    %2587 = vmatprep.subr.mxu0 0.0
    %2588 = vmatpush2.msra.mxu0 0.0
    %2589 = vmatprep.subr.mxu0 0.0
    %2590 = vmatpush2.msra.mxu0 0.0
    %2591 = vmatprep.subr.mxu0 0.0
    %2592 = vmatpush2.msra.mxu0 0.0
    %2593 = vmatprep.subr.mxu0 0.0
    %2594 = vmatpush2.msra.mxu0 0.0
    %2595 = vmatprep.subr.mxu0 0.0
    %2596 = vmatpush2.msra.mxu0 0.0
    %2597 = vmatprep.subr.mxu0 0.0
    %2598 = vmatpush2.msra.mxu0 0.0
    %2599 = vmatprep.subr.mxu0 0.0
    %2600 = vmatpush2.msra.mxu0 0.0
    %2601 = vmatprep.mubr.f32.mxu0 0.0
    %2602 = vmatmul.mubr.f32.gmra.mxu0 %v2535
    %v2603 = vpop.f32.mrf.mxu0
    %v2604 = vadd.f32 %v647, %v2603
    %v2605 = vpop.f32.mrf.mxu0
    %2606 = vdwg.mxu0
    %v2607 = vadd.f32 %v469, %v2604
    %v2608 = vxor.u32 %v2607, 2147483648
    %v2609 = vmul.f32 %v2608, 1.442695
    %v2610 = vpow.pop %v2609
    %v2611 = vadd.f32 %v2610, 1.0
    %v2612 = vrcp.pop %v2611
    %v2613 = vmul.f32 1.0, %v2612
    %v2616 = vunpack.c.l.s4 1983009808
    %v2617 = vunpack.c.0.s8 %v2616
    %v2618 = vlaneseq
    %v2619 = vshrl.u32 %v2618, 7
    %v2620 = vsub.s32 %v2617, %v2619
    %v2621 = vrot.slane %v2604, %v2620
    %2622 = vrot.lane.b32.xlu0 %v2621, 64
    %v2623 = vpop.permute.xlu0 %2622
    %v2625 = vmul.f32 %v2613, %v2623
    %2627 = vrot.lane.b32.xlu0 %v2625, 64
    %v2628 = vpop.permute.xlu0 %2627
    %v2630 = vadd.f32 %v469, %v2628
    %v2631 = vtanh.pop %v2630
    %v2632 = vsub.f32 1.0, %v2613
    %2634 = vrot.lane.b32.xlu0 %v2631, 96
    %v2635 = vpop.permute.xlu0 %2634
    %v2637 = vmul.f32 %v2632, %v2635
    %v2638 = vmul.f32 %v2613, %v2403
    %v2639 = vadd.f32 %v2637, %v2638
    %v2642 = vunpack.c.l.s4 1983009808
    %v2643 = vunpack.c.0.s8 %v2642
    %v2644 = vlaneseq
    %v2645 = vshrl.u32 %v2644, 7
    %v2646 = vsub.s32 %v2643, %v2645
    %v2647 = vrot.slane %v2534, %v2646
    %2648 = vrot.lane.b32.xlu0 %v2647, 96
    %v2649 = vpop.permute.xlu0 %2648
    %s2651 = scalar_lea.vmem [#allocation2], 16
    %2652 = vst.msk [vmem:[%s2651] sm:$0x3] %vm763, %v2649
    %v2655 = vunpack.c.l.s4 1983009808
    %v2656 = vunpack.c.0.s8 %v2655
    %v2657 = vlaneseq
    %v2658 = vshrl.u32 %v2657, 7
    %v2659 = vsub.s32 %v2656, %v2658
    %v2660 = vrot.slane %v2639, %v2659
    %2661 = vrot.lane.b32.xlu0 %v2660, 96
    %v2662 = vpop.permute.xlu0 %2661
    %s2664 = scalar_lea.vmem [#allocation3], 14
    %2665 = vst.msk [vmem:[%s2664] sm:$0x3] %vm763, %v2662
    %v2666 = vsel %vm536, %v2649, 0
    %2668 = vmatprep.subr.mxu0 0.0
    %2669 = vmatpush1.msra.mxu0 0.0
    %2670 = vmatprep.subr.mxu0 0.0
    %2671 = vmatpush1.msra.mxu0 0.0
    %2672 = vmatprep.subr.mxu0 0.0
    %2673 = vmatpush1.msra.mxu0 0.0
    %2674 = vmatprep.subr.mxu0 0.0
    %2675 = vmatpush1.msra.mxu0 0.0
    %2676 = vmatprep.subr.mxu0 0.0
    %2677 = vmatpush1.msra.mxu0 0.0
    %2678 = vmatprep.subr.mxu0 0.0
    %2679 = vmatpush1.msra.mxu0 0.0
    %2680 = vmatprep.subr.mxu0 0.0
    %2681 = vmatpush1.msra.mxu0 0.0
    %2682 = vmatprep.subr.mxu0 0.0
    %2683 = vmatpush1.msra.mxu0 0.0
    %2684 = vmatprep.subr.mxu0 0.0
    %2685 = vmatpush1.msra.mxu0 0.0
    %2686 = vmatprep.subr.mxu0 0.0
    %2687 = vmatpush1.msra.mxu0 0.0
    %2688 = vmatprep.subr.mxu0 0.0
    %2689 = vmatpush1.msra.mxu0 0.0
    %2690 = vmatprep.subr.mxu0 0.0
    %2691 = vmatpush1.msra.mxu0 0.0
    %2692 = vmatprep.subr.mxu0 0.0
    %2693 = vmatpush1.msra.mxu0 %v523
    %2694 = vmatprep.subr.mxu0 0.0
    %2695 = vmatpush1.msra.mxu0 %v522
    %2696 = vmatprep.subr.mxu0 0.0
    %2697 = vmatpush1.msra.mxu0 %v521
    %2698 = vmatprep.subr.mxu0 0.0
    %2699 = vmatpush1.msra.mxu0 %v520
    %2700 = vmatprep.subr.mxu0 0.0
    %2701 = vmatpush2.msra.mxu0 0.0
    %2702 = vmatprep.subr.mxu0 0.0
    %2703 = vmatpush2.msra.mxu0 0.0
    %2704 = vmatprep.subr.mxu0 0.0
    %2705 = vmatpush2.msra.mxu0 0.0
    %2706 = vmatprep.subr.mxu0 0.0
    %2707 = vmatpush2.msra.mxu0 0.0
    %2708 = vmatprep.subr.mxu0 0.0
    %2709 = vmatpush2.msra.mxu0 0.0
    %2710 = vmatprep.subr.mxu0 0.0
    %2711 = vmatpush2.msra.mxu0 0.0
    %2712 = vmatprep.subr.mxu0 0.0
    %2713 = vmatpush2.msra.mxu0 0.0
    %2714 = vmatprep.subr.mxu0 0.0
    %2715 = vmatpush2.msra.mxu0 0.0
    %2716 = vmatprep.subr.mxu0 0.0
    %2717 = vmatpush2.msra.mxu0 0.0
    %2718 = vmatprep.subr.mxu0 0.0
    %2719 = vmatpush2.msra.mxu0 0.0
    %2720 = vmatprep.subr.mxu0 0.0
    %2721 = vmatpush2.msra.mxu0 0.0
    %2722 = vmatprep.subr.mxu0 0.0
    %2723 = vmatpush2.msra.mxu0 0.0
    %2724 = vmatprep.subr.mxu0 0.0
    %2725 = vmatpush2.msra.mxu0 0.0
    %2726 = vmatprep.subr.mxu0 0.0
    %2727 = vmatpush2.msra.mxu0 0.0
    %2728 = vmatprep.subr.mxu0 0.0
    %2729 = vmatpush2.msra.mxu0 0.0
    %2730 = vmatprep.subr.mxu0 0.0
    %2731 = vmatpush2.msra.mxu0 0.0
    %2732 = vmatprep.mubr.f32.mxu0 0.0
    %2733 = vmatmul.mubr.f32.gmra.mxu0 %v2666
    %v2734 = vpop.f32.mrf.mxu0
    %v2735 = vadd.f32 %v534, %v2734
    %v2736 = vpop.f32.mrf.mxu0
    %2737 = vdwg.mxu0
    %v2738 = vadd.f32 %v304, %v2735
    %v2739 = vxor.u32 %v2738, 2147483648
    %v2740 = vmul.f32 %v2739, 1.442695
    %v2741 = vpow.pop %v2740
    %v2742 = vadd.f32 %v2741, 1.0
    %v2743 = vrcp.pop %v2742
    %v2744 = vmul.f32 1.0, %v2743
    %v2747 = vunpack.c.l.s4 1983009808
    %v2748 = vunpack.c.0.s8 %v2747
    %v2749 = vlaneseq
    %v2750 = vshrl.u32 %v2749, 7
    %v2751 = vsub.s32 %v2748, %v2750
    %v2752 = vrot.slane %v2735, %v2751
    %2753 = vrot.lane.b32.xlu0 %v2752, 64
    %v2754 = vpop.permute.xlu0 %2753
    %v2756 = vmul.f32 %v2744, %v2754
    %2758 = vrot.lane.b32.xlu0 %v2756, 64
    %v2759 = vpop.permute.xlu0 %2758
    %v2761 = vadd.f32 %v304, %v2759
    %v2762 = vtanh.pop %v2761
    %v2763 = vsub.f32 1.0, %v2744
    %2765 = vrot.lane.b32.xlu0 %v2762, 96
    %v2766 = vpop.permute.xlu0 %2765
    %v2768 = vmul.f32 %v2763, %v2766
    %v2769 = vmul.f32 %v2744, %v2534
    %v2770 = vadd.f32 %v2768, %v2769
    %v2771 = vsel %vm536, %v2662, 0
    %2773 = vmatprep.subr.mxu0 0.0
    %2774 = vmatpush1.msra.mxu0 0.0
    %2775 = vmatprep.subr.mxu0 0.0
    %2776 = vmatpush1.msra.mxu0 0.0
    %2777 = vmatprep.subr.mxu0 0.0
    %2778 = vmatpush1.msra.mxu0 0.0
    %2779 = vmatprep.subr.mxu0 0.0
    %2780 = vmatpush1.msra.mxu0 0.0
    %2781 = vmatprep.subr.mxu0 0.0
    %2782 = vmatpush1.msra.mxu0 0.0
    %2783 = vmatprep.subr.mxu0 0.0
    %2784 = vmatpush1.msra.mxu0 0.0
    %2785 = vmatprep.subr.mxu0 0.0
    %2786 = vmatpush1.msra.mxu0 0.0
    %2787 = vmatprep.subr.mxu0 0.0
    %2788 = vmatpush1.msra.mxu0 0.0
    %2789 = vmatprep.subr.mxu0 0.0
    %2790 = vmatpush1.msra.mxu0 0.0
    %2791 = vmatprep.subr.mxu0 0.0
    %2792 = vmatpush1.msra.mxu0 0.0
    %2793 = vmatprep.subr.mxu0 0.0
    %2794 = vmatpush1.msra.mxu0 0.0
    %2795 = vmatprep.subr.mxu0 0.0
    %2796 = vmatpush1.msra.mxu0 0.0
    %2797 = vmatprep.subr.mxu0 0.0
    %2798 = vmatpush1.msra.mxu0 %v528
    %2799 = vmatprep.subr.mxu0 0.0
    %2800 = vmatpush1.msra.mxu0 %v527
    %2801 = vmatprep.subr.mxu0 0.0
    %2802 = vmatpush1.msra.mxu0 %v526
    %2803 = vmatprep.subr.mxu0 0.0
    %2804 = vmatpush1.msra.mxu0 %v525
    %2805 = vmatprep.subr.mxu0 0.0
    %2806 = vmatpush2.msra.mxu0 0.0
    %2807 = vmatprep.subr.mxu0 0.0
    %2808 = vmatpush2.msra.mxu0 0.0
    %2809 = vmatprep.subr.mxu0 0.0
    %2810 = vmatpush2.msra.mxu0 0.0
    %2811 = vmatprep.subr.mxu0 0.0
    %2812 = vmatpush2.msra.mxu0 0.0
    %2813 = vmatprep.subr.mxu0 0.0
    %2814 = vmatpush2.msra.mxu0 0.0
    %2815 = vmatprep.subr.mxu0 0.0
    %2816 = vmatpush2.msra.mxu0 0.0
    %2817 = vmatprep.subr.mxu0 0.0
    %2818 = vmatpush2.msra.mxu0 0.0
    %2819 = vmatprep.subr.mxu0 0.0
    %2820 = vmatpush2.msra.mxu0 0.0
    %2821 = vmatprep.subr.mxu0 0.0
    %2822 = vmatpush2.msra.mxu0 0.0
    %2823 = vmatprep.subr.mxu0 0.0
    %2824 = vmatpush2.msra.mxu0 0.0
    %2825 = vmatprep.subr.mxu0 0.0
    %2826 = vmatpush2.msra.mxu0 0.0
    %2827 = vmatprep.subr.mxu0 0.0
    %2828 = vmatpush2.msra.mxu0 0.0
    %2829 = vmatprep.subr.mxu0 0.0
    %2830 = vmatpush2.msra.mxu0 0.0
    %2831 = vmatprep.subr.mxu0 0.0
    %2832 = vmatpush2.msra.mxu0 0.0
    %2833 = vmatprep.subr.mxu0 0.0
    %2834 = vmatpush2.msra.mxu0 0.0
    %2835 = vmatprep.subr.mxu0 0.0
    %2836 = vmatpush2.msra.mxu0 0.0
    %2837 = vmatprep.mubr.f32.mxu0 0.0
    %2838 = vmatmul.mubr.f32.gmra.mxu0 %v2771
    %v2839 = vpop.f32.mrf.mxu0
    %v2840 = vadd.f32 %v647, %v2839
    %v2841 = vpop.f32.mrf.mxu0
    %2842 = vdwg.mxu0
    %v2843 = vadd.f32 %v467, %v2840
    %v2844 = vxor.u32 %v2843, 2147483648
    %v2845 = vmul.f32 %v2844, 1.442695
    %v2846 = vpow.pop %v2845
    %v2847 = vadd.f32 %v2846, 1.0
    %v2848 = vrcp.pop %v2847
    %v2849 = vmul.f32 1.0, %v2848
    %v2852 = vunpack.c.l.s4 1983009808
    %v2853 = vunpack.c.0.s8 %v2852
    %v2854 = vlaneseq
    %v2855 = vshrl.u32 %v2854, 7
    %v2856 = vsub.s32 %v2853, %v2855
    %v2857 = vrot.slane %v2840, %v2856
    %2858 = vrot.lane.b32.xlu0 %v2857, 64
    %v2859 = vpop.permute.xlu0 %2858
    %v2861 = vmul.f32 %v2849, %v2859
    %2863 = vrot.lane.b32.xlu0 %v2861, 64
    %v2864 = vpop.permute.xlu0 %2863
    %v2866 = vadd.f32 %v467, %v2864
    %v2867 = vtanh.pop %v2866
    %v2868 = vsub.f32 1.0, %v2849
    %2870 = vrot.lane.b32.xlu0 %v2867, 96
    %v2871 = vpop.permute.xlu0 %2870
    %v2873 = vmul.f32 %v2868, %v2871
    %v2874 = vmul.f32 %v2849, %v2639
    %v2875 = vadd.f32 %v2873, %v2874
    %v2878 = vunpack.c.l.s4 1983009808
    %v2879 = vunpack.c.0.s8 %v2878
    %v2880 = vlaneseq
    %v2881 = vshrl.u32 %v2880, 7
    %v2882 = vsub.s32 %v2879, %v2881
    %v2883 = vrot.slane %v2770, %v2882
    %2884 = vrot.lane.b32.xlu0 %v2883, 96
    %v2885 = vpop.permute.xlu0 %2884
    %s2887 = scalar_lea.vmem [#allocation2], 18
    %2888 = vst.msk [vmem:[%s2887] sm:$0x3] %vm763, %v2885
    %v2891 = vunpack.c.l.s4 1983009808
    %v2892 = vunpack.c.0.s8 %v2891
    %v2893 = vlaneseq
    %v2894 = vshrl.u32 %v2893, 7
    %v2895 = vsub.s32 %v2892, %v2894
    %v2896 = vrot.slane %v2875, %v2895
    %2897 = vrot.lane.b32.xlu0 %v2896, 96
    %v2898 = vpop.permute.xlu0 %2897
    %s2900 = scalar_lea.vmem [#allocation3], 12
    %2901 = vst.msk [vmem:[%s2900] sm:$0x3] %vm763, %v2898
    %v2902 = vsel %vm536, %v2885, 0
    %2904 = vmatprep.subr.mxu0 0.0
    %2905 = vmatpush1.msra.mxu0 0.0
    %2906 = vmatprep.subr.mxu0 0.0
    %2907 = vmatpush1.msra.mxu0 0.0
    %2908 = vmatprep.subr.mxu0 0.0
    %2909 = vmatpush1.msra.mxu0 0.0
    %2910 = vmatprep.subr.mxu0 0.0
    %2911 = vmatpush1.msra.mxu0 0.0
    %2912 = vmatprep.subr.mxu0 0.0
    %2913 = vmatpush1.msra.mxu0 0.0
    %2914 = vmatprep.subr.mxu0 0.0
    %2915 = vmatpush1.msra.mxu0 0.0
    %2916 = vmatprep.subr.mxu0 0.0
    %2917 = vmatpush1.msra.mxu0 0.0
    %2918 = vmatprep.subr.mxu0 0.0
    %2919 = vmatpush1.msra.mxu0 0.0
    %2920 = vmatprep.subr.mxu0 0.0
    %2921 = vmatpush1.msra.mxu0 0.0
    %2922 = vmatprep.subr.mxu0 0.0
    %2923 = vmatpush1.msra.mxu0 0.0
    %2924 = vmatprep.subr.mxu0 0.0
    %2925 = vmatpush1.msra.mxu0 0.0
    %2926 = vmatprep.subr.mxu0 0.0
    %2927 = vmatpush1.msra.mxu0 0.0
    %2928 = vmatprep.subr.mxu0 0.0
    %2929 = vmatpush1.msra.mxu0 %v523
    %2930 = vmatprep.subr.mxu0 0.0
    %2931 = vmatpush1.msra.mxu0 %v522
    %2932 = vmatprep.subr.mxu0 0.0
    %2933 = vmatpush1.msra.mxu0 %v521
    %2934 = vmatprep.subr.mxu0 0.0
    %2935 = vmatpush1.msra.mxu0 %v520
    %2936 = vmatprep.subr.mxu0 0.0
    %2937 = vmatpush2.msra.mxu0 0.0
    %2938 = vmatprep.subr.mxu0 0.0
    %2939 = vmatpush2.msra.mxu0 0.0
    %2940 = vmatprep.subr.mxu0 0.0
    %2941 = vmatpush2.msra.mxu0 0.0
    %2942 = vmatprep.subr.mxu0 0.0
    %2943 = vmatpush2.msra.mxu0 0.0
    %2944 = vmatprep.subr.mxu0 0.0
    %2945 = vmatpush2.msra.mxu0 0.0
    %2946 = vmatprep.subr.mxu0 0.0
    %2947 = vmatpush2.msra.mxu0 0.0
    %2948 = vmatprep.subr.mxu0 0.0
    %2949 = vmatpush2.msra.mxu0 0.0
    %2950 = vmatprep.subr.mxu0 0.0
    %2951 = vmatpush2.msra.mxu0 0.0
    %2952 = vmatprep.subr.mxu0 0.0
    %2953 = vmatpush2.msra.mxu0 0.0
    %2954 = vmatprep.subr.mxu0 0.0
    %2955 = vmatpush2.msra.mxu0 0.0
    %2956 = vmatprep.subr.mxu0 0.0
    %2957 = vmatpush2.msra.mxu0 0.0
    %2958 = vmatprep.subr.mxu0 0.0
    %2959 = vmatpush2.msra.mxu0 0.0
    %2960 = vmatprep.subr.mxu0 0.0
    %2961 = vmatpush2.msra.mxu0 0.0
    %2962 = vmatprep.subr.mxu0 0.0
    %2963 = vmatpush2.msra.mxu0 0.0
    %2964 = vmatprep.subr.mxu0 0.0
    %2965 = vmatpush2.msra.mxu0 0.0
    %2966 = vmatprep.subr.mxu0 0.0
    %2967 = vmatpush2.msra.mxu0 0.0
    %2968 = vmatprep.mubr.f32.mxu0 0.0
    %2969 = vmatmul.mubr.f32.gmra.mxu0 %v2902
    %v2970 = vpop.f32.mrf.mxu0
    %v2971 = vadd.f32 %v534, %v2970
    %v2972 = vpop.f32.mrf.mxu0
    %2973 = vdwg.mxu0
    %v2974 = vadd.f32 %v303, %v2971
    %v2975 = vxor.u32 %v2974, 2147483648
    %v2976 = vmul.f32 %v2975, 1.442695
    %v2977 = vpow.pop %v2976
    %v2978 = vadd.f32 %v2977, 1.0
    %v2979 = vrcp.pop %v2978
    %v2980 = vmul.f32 1.0, %v2979
    %v2983 = vunpack.c.l.s4 1983009808
    %v2984 = vunpack.c.0.s8 %v2983
    %v2985 = vlaneseq
    %v2986 = vshrl.u32 %v2985, 7
    %v2987 = vsub.s32 %v2984, %v2986
    %v2988 = vrot.slane %v2971, %v2987
    %2989 = vrot.lane.b32.xlu0 %v2988, 64
    %v2990 = vpop.permute.xlu0 %2989
    %v2992 = vmul.f32 %v2980, %v2990
    %2994 = vrot.lane.b32.xlu0 %v2992, 64
    %v2995 = vpop.permute.xlu0 %2994
    %v2997 = vadd.f32 %v303, %v2995
    %v2998 = vtanh.pop %v2997
    %v2999 = vsub.f32 1.0, %v2980
    %3001 = vrot.lane.b32.xlu0 %v2998, 96
    %v3002 = vpop.permute.xlu0 %3001
    %v3004 = vmul.f32 %v2999, %v3002
    %v3005 = vmul.f32 %v2980, %v2770
    %v3006 = vadd.f32 %v3004, %v3005
    %v3007 = vsel %vm536, %v2898, 0
    %3009 = vmatprep.subr.mxu0 0.0
    %3010 = vmatpush1.msra.mxu0 0.0
    %3011 = vmatprep.subr.mxu0 0.0
    %3012 = vmatpush1.msra.mxu0 0.0
    %3013 = vmatprep.subr.mxu0 0.0
    %3014 = vmatpush1.msra.mxu0 0.0
    %3015 = vmatprep.subr.mxu0 0.0
    %3016 = vmatpush1.msra.mxu0 0.0
    %3017 = vmatprep.subr.mxu0 0.0
    %3018 = vmatpush1.msra.mxu0 0.0
    %3019 = vmatprep.subr.mxu0 0.0
    %3020 = vmatpush1.msra.mxu0 0.0
    %3021 = vmatprep.subr.mxu0 0.0
    %3022 = vmatpush1.msra.mxu0 0.0
    %3023 = vmatprep.subr.mxu0 0.0
    %3024 = vmatpush1.msra.mxu0 0.0
    %3025 = vmatprep.subr.mxu0 0.0
    %3026 = vmatpush1.msra.mxu0 0.0
    %3027 = vmatprep.subr.mxu0 0.0
    %3028 = vmatpush1.msra.mxu0 0.0
    %3029 = vmatprep.subr.mxu0 0.0
    %3030 = vmatpush1.msra.mxu0 0.0
    %3031 = vmatprep.subr.mxu0 0.0
    %3032 = vmatpush1.msra.mxu0 0.0
    %3033 = vmatprep.subr.mxu0 0.0
    %3034 = vmatpush1.msra.mxu0 %v528
    %3035 = vmatprep.subr.mxu0 0.0
    %3036 = vmatpush1.msra.mxu0 %v527
    %3037 = vmatprep.subr.mxu0 0.0
    %3038 = vmatpush1.msra.mxu0 %v526
    %3039 = vmatprep.subr.mxu0 0.0
    %3040 = vmatpush1.msra.mxu0 %v525
    %3041 = vmatprep.subr.mxu0 0.0
    %3042 = vmatpush2.msra.mxu0 0.0
    %3043 = vmatprep.subr.mxu0 0.0
    %3044 = vmatpush2.msra.mxu0 0.0
    %3045 = vmatprep.subr.mxu0 0.0
    %3046 = vmatpush2.msra.mxu0 0.0
    %3047 = vmatprep.subr.mxu0 0.0
    %3048 = vmatpush2.msra.mxu0 0.0
    %3049 = vmatprep.subr.mxu0 0.0
    %3050 = vmatpush2.msra.mxu0 0.0
    %3051 = vmatprep.subr.mxu0 0.0
    %3052 = vmatpush2.msra.mxu0 0.0
    %3053 = vmatprep.subr.mxu0 0.0
    %3054 = vmatpush2.msra.mxu0 0.0
    %3055 = vmatprep.subr.mxu0 0.0
    %3056 = vmatpush2.msra.mxu0 0.0
    %3057 = vmatprep.subr.mxu0 0.0
    %3058 = vmatpush2.msra.mxu0 0.0
    %3059 = vmatprep.subr.mxu0 0.0
    %3060 = vmatpush2.msra.mxu0 0.0
    %3061 = vmatprep.subr.mxu0 0.0
    %3062 = vmatpush2.msra.mxu0 0.0
    %3063 = vmatprep.subr.mxu0 0.0
    %3064 = vmatpush2.msra.mxu0 0.0
    %3065 = vmatprep.subr.mxu0 0.0
    %3066 = vmatpush2.msra.mxu0 0.0
    %3067 = vmatprep.subr.mxu0 0.0
    %3068 = vmatpush2.msra.mxu0 0.0
    %3069 = vmatprep.subr.mxu0 0.0
    %3070 = vmatpush2.msra.mxu0 0.0
    %3071 = vmatprep.subr.mxu0 0.0
    %3072 = vmatpush2.msra.mxu0 0.0
    %3073 = vmatprep.mubr.f32.mxu0 0.0
    %3074 = vmatmul.mubr.f32.gmra.mxu0 %v3007
    %v3075 = vpop.f32.mrf.mxu0
    %v3076 = vadd.f32 %v647, %v3075
    %v3077 = vpop.f32.mrf.mxu0
    %3078 = vdwg.mxu0
    %v3079 = vadd.f32 %v468, %v3076
    %v3080 = vxor.u32 %v3079, 2147483648
    %v3081 = vmul.f32 %v3080, 1.442695
    %v3082 = vpow.pop %v3081
    %v3083 = vadd.f32 %v3082, 1.0
    %v3084 = vrcp.pop %v3083
    %v3085 = vmul.f32 1.0, %v3084
    %v3088 = vunpack.c.l.s4 1983009808
    %v3089 = vunpack.c.0.s8 %v3088
    %v3090 = vlaneseq
    %v3091 = vshrl.u32 %v3090, 7
    %v3092 = vsub.s32 %v3089, %v3091
    %v3093 = vrot.slane %v3076, %v3092
    %3094 = vrot.lane.b32.xlu0 %v3093, 64
    %v3095 = vpop.permute.xlu0 %3094
    %v3097 = vmul.f32 %v3085, %v3095
    %3099 = vrot.lane.b32.xlu0 %v3097, 64
    %v3100 = vpop.permute.xlu0 %3099
    %v3102 = vadd.f32 %v468, %v3100
    %v3103 = vtanh.pop %v3102
    %v3104 = vsub.f32 1.0, %v3085
    %3106 = vrot.lane.b32.xlu0 %v3103, 96
    %v3107 = vpop.permute.xlu0 %3106
    %v3109 = vmul.f32 %v3104, %v3107
    %v3110 = vmul.f32 %v3085, %v2875
    %v3111 = vadd.f32 %v3109, %v3110
    %v3114 = vunpack.c.l.s4 1983009808
    %v3115 = vunpack.c.0.s8 %v3114
    %v3116 = vlaneseq
    %v3117 = vshrl.u32 %v3116, 7
    %v3118 = vsub.s32 %v3115, %v3117
    %v3119 = vrot.slane %v3006, %v3118
    %3120 = vrot.lane.b32.xlu0 %v3119, 96
    %v3121 = vpop.permute.xlu0 %3120
    %s3123 = scalar_lea.vmem [#allocation2], 20
    %3124 = vst.msk [vmem:[%s3123] sm:$0x3] %vm763, %v3121
    %v3127 = vunpack.c.l.s4 1983009808
    %v3128 = vunpack.c.0.s8 %v3127
    %v3129 = vlaneseq
    %v3130 = vshrl.u32 %v3129, 7
    %v3131 = vsub.s32 %v3128, %v3130
    %v3132 = vrot.slane %v3111, %v3131
    %3133 = vrot.lane.b32.xlu0 %v3132, 96
    %v3134 = vpop.permute.xlu0 %3133
    %s3136 = scalar_lea.vmem [#allocation3], 10
    %3137 = vst.msk [vmem:[%s3136] sm:$0x3] %vm763, %v3134
    %v3138 = vsel %vm536, %v3121, 0
    %3140 = vmatprep.subr.mxu0 0.0
    %3141 = vmatpush1.msra.mxu0 0.0
    %3142 = vmatprep.subr.mxu0 0.0
    %3143 = vmatpush1.msra.mxu0 0.0
    %3144 = vmatprep.subr.mxu0 0.0
    %3145 = vmatpush1.msra.mxu0 0.0
    %3146 = vmatprep.subr.mxu0 0.0
    %3147 = vmatpush1.msra.mxu0 0.0
    %3148 = vmatprep.subr.mxu0 0.0
    %3149 = vmatpush1.msra.mxu0 0.0
    %3150 = vmatprep.subr.mxu0 0.0
    %3151 = vmatpush1.msra.mxu0 0.0
    %3152 = vmatprep.subr.mxu0 0.0
    %3153 = vmatpush1.msra.mxu0 0.0
    %3154 = vmatprep.subr.mxu0 0.0
    %3155 = vmatpush1.msra.mxu0 0.0
    %3156 = vmatprep.subr.mxu0 0.0
    %3157 = vmatpush1.msra.mxu0 0.0
    %3158 = vmatprep.subr.mxu0 0.0
    %3159 = vmatpush1.msra.mxu0 0.0
    %3160 = vmatprep.subr.mxu0 0.0
    %3161 = vmatpush1.msra.mxu0 0.0
    %3162 = vmatprep.subr.mxu0 0.0
    %3163 = vmatpush1.msra.mxu0 0.0
    %3164 = vmatprep.subr.mxu0 0.0
    %3165 = vmatpush1.msra.mxu0 %v523
    %3166 = vmatprep.subr.mxu0 0.0
    %3167 = vmatpush1.msra.mxu0 %v522
    %3168 = vmatprep.subr.mxu0 0.0
    %3169 = vmatpush1.msra.mxu0 %v521
    %3170 = vmatprep.subr.mxu0 0.0
    %3171 = vmatpush1.msra.mxu0 %v520
    %3172 = vmatprep.subr.mxu0 0.0
    %3173 = vmatpush2.msra.mxu0 0.0
    %3174 = vmatprep.subr.mxu0 0.0
    %3175 = vmatpush2.msra.mxu0 0.0
    %3176 = vmatprep.subr.mxu0 0.0
    %3177 = vmatpush2.msra.mxu0 0.0
    %3178 = vmatprep.subr.mxu0 0.0
    %3179 = vmatpush2.msra.mxu0 0.0
    %3180 = vmatprep.subr.mxu0 0.0
    %3181 = vmatpush2.msra.mxu0 0.0
    %3182 = vmatprep.subr.mxu0 0.0
    %3183 = vmatpush2.msra.mxu0 0.0
    %3184 = vmatprep.subr.mxu0 0.0
    %3185 = vmatpush2.msra.mxu0 0.0
    %3186 = vmatprep.subr.mxu0 0.0
    %3187 = vmatpush2.msra.mxu0 0.0
    %3188 = vmatprep.subr.mxu0 0.0
    %3189 = vmatpush2.msra.mxu0 0.0
    %3190 = vmatprep.subr.mxu0 0.0
    %3191 = vmatpush2.msra.mxu0 0.0
    %3192 = vmatprep.subr.mxu0 0.0
    %3193 = vmatpush2.msra.mxu0 0.0
    %3194 = vmatprep.subr.mxu0 0.0
    %3195 = vmatpush2.msra.mxu0 0.0
    %3196 = vmatprep.subr.mxu0 0.0
    %3197 = vmatpush2.msra.mxu0 0.0
    %3198 = vmatprep.subr.mxu0 0.0
    %3199 = vmatpush2.msra.mxu0 0.0
    %3200 = vmatprep.subr.mxu0 0.0
    %3201 = vmatpush2.msra.mxu0 0.0
    %3202 = vmatprep.subr.mxu0 0.0
    %3203 = vmatpush2.msra.mxu0 0.0
    %3204 = vmatprep.mubr.f32.mxu0 0.0
    %3205 = vmatmul.mubr.f32.gmra.mxu0 %v3138
    %v3206 = vpop.f32.mrf.mxu0
    %v3207 = vadd.f32 %v534, %v3206
    %v3208 = vpop.f32.mrf.mxu0
    %3209 = vdwg.mxu0
    %v3210 = vadd.f32 %v305, %v3207
    %v3211 = vxor.u32 %v3210, 2147483648
    %v3212 = vmul.f32 %v3211, 1.442695
    %v3213 = vpow.pop %v3212
    %v3214 = vadd.f32 %v3213, 1.0
    %v3215 = vrcp.pop %v3214
    %v3216 = vmul.f32 1.0, %v3215
    %v3219 = vunpack.c.l.s4 1983009808
    %v3220 = vunpack.c.0.s8 %v3219
    %v3221 = vlaneseq
    %v3222 = vshrl.u32 %v3221, 7
    %v3223 = vsub.s32 %v3220, %v3222
    %v3224 = vrot.slane %v3207, %v3223
    %3225 = vrot.lane.b32.xlu0 %v3224, 64
    %v3226 = vpop.permute.xlu0 %3225
    %v3228 = vmul.f32 %v3216, %v3226
    %3230 = vrot.lane.b32.xlu0 %v3228, 64
    %v3231 = vpop.permute.xlu0 %3230
    %v3233 = vadd.f32 %v305, %v3231
    %v3234 = vtanh.pop %v3233
    %v3235 = vsub.f32 1.0, %v3216
    %3237 = vrot.lane.b32.xlu0 %v3234, 96
    %v3238 = vpop.permute.xlu0 %3237
    %v3240 = vmul.f32 %v3235, %v3238
    %v3241 = vmul.f32 %v3216, %v3006
    %v3242 = vadd.f32 %v3240, %v3241
    %v3243 = vsel %vm536, %v3134, 0
    %3245 = vmatprep.subr.mxu0 0.0
    %3246 = vmatpush1.msra.mxu0 0.0
    %3247 = vmatprep.subr.mxu0 0.0
    %3248 = vmatpush1.msra.mxu0 0.0
    %3249 = vmatprep.subr.mxu0 0.0
    %3250 = vmatpush1.msra.mxu0 0.0
    %3251 = vmatprep.subr.mxu0 0.0
    %3252 = vmatpush1.msra.mxu0 0.0
    %3253 = vmatprep.subr.mxu0 0.0
    %3254 = vmatpush1.msra.mxu0 0.0
    %3255 = vmatprep.subr.mxu0 0.0
    %3256 = vmatpush1.msra.mxu0 0.0
    %3257 = vmatprep.subr.mxu0 0.0
    %3258 = vmatpush1.msra.mxu0 0.0
    %3259 = vmatprep.subr.mxu0 0.0
    %3260 = vmatpush1.msra.mxu0 0.0
    %3261 = vmatprep.subr.mxu0 0.0
    %3262 = vmatpush1.msra.mxu0 0.0
    %3263 = vmatprep.subr.mxu0 0.0
    %3264 = vmatpush1.msra.mxu0 0.0
    %3265 = vmatprep.subr.mxu0 0.0
    %3266 = vmatpush1.msra.mxu0 0.0
    %3267 = vmatprep.subr.mxu0 0.0
    %3268 = vmatpush1.msra.mxu0 0.0
    %3269 = vmatprep.subr.mxu0 0.0
    %3270 = vmatpush1.msra.mxu0 %v528
    %3271 = vmatprep.subr.mxu0 0.0
    %3272 = vmatpush1.msra.mxu0 %v527
    %3273 = vmatprep.subr.mxu0 0.0
    %3274 = vmatpush1.msra.mxu0 %v526
    %3275 = vmatprep.subr.mxu0 0.0
    %3276 = vmatpush1.msra.mxu0 %v525
    %3277 = vmatprep.subr.mxu0 0.0
    %3278 = vmatpush2.msra.mxu0 0.0
    %3279 = vmatprep.subr.mxu0 0.0
    %3280 = vmatpush2.msra.mxu0 0.0
    %3281 = vmatprep.subr.mxu0 0.0
    %3282 = vmatpush2.msra.mxu0 0.0
    %3283 = vmatprep.subr.mxu0 0.0
    %3284 = vmatpush2.msra.mxu0 0.0
    %3285 = vmatprep.subr.mxu0 0.0
    %3286 = vmatpush2.msra.mxu0 0.0
    %3287 = vmatprep.subr.mxu0 0.0
    %3288 = vmatpush2.msra.mxu0 0.0
    %3289 = vmatprep.subr.mxu0 0.0
    %3290 = vmatpush2.msra.mxu0 0.0
    %3291 = vmatprep.subr.mxu0 0.0
    %3292 = vmatpush2.msra.mxu0 0.0
    %3293 = vmatprep.subr.mxu0 0.0
    %3294 = vmatpush2.msra.mxu0 0.0
    %3295 = vmatprep.subr.mxu0 0.0
    %3296 = vmatpush2.msra.mxu0 0.0
    %3297 = vmatprep.subr.mxu0 0.0
    %3298 = vmatpush2.msra.mxu0 0.0
    %3299 = vmatprep.subr.mxu0 0.0
    %3300 = vmatpush2.msra.mxu0 0.0
    %3301 = vmatprep.subr.mxu0 0.0
    %3302 = vmatpush2.msra.mxu0 0.0
    %3303 = vmatprep.subr.mxu0 0.0
    %3304 = vmatpush2.msra.mxu0 0.0
    %3305 = vmatprep.subr.mxu0 0.0
    %3306 = vmatpush2.msra.mxu0 0.0
    %3307 = vmatprep.subr.mxu0 0.0
    %3308 = vmatpush2.msra.mxu0 0.0
    %3309 = vmatprep.mubr.f32.mxu0 0.0
    %3310 = vmatmul.mubr.f32.gmra.mxu0 %v3243
    %v3311 = vpop.f32.mrf.mxu0
    %v3312 = vadd.f32 %v647, %v3311
    %v3313 = vpop.f32.mrf.mxu0
    %3314 = vdwg.mxu0
    %v3315 = vadd.f32 %v460, %v3312
    %v3316 = vxor.u32 %v3315, 2147483648
    %v3317 = vmul.f32 %v3316, 1.442695
    %v3318 = vpow.pop %v3317
    %v3319 = vadd.f32 %v3318, 1.0
    %v3320 = vrcp.pop %v3319
    %v3321 = vmul.f32 1.0, %v3320
    %v3324 = vunpack.c.l.s4 1983009808
    %v3325 = vunpack.c.0.s8 %v3324
    %v3326 = vlaneseq
    %v3327 = vshrl.u32 %v3326, 7
    %v3328 = vsub.s32 %v3325, %v3327
    %v3329 = vrot.slane %v3312, %v3328
    %3330 = vrot.lane.b32.xlu0 %v3329, 64
    %v3331 = vpop.permute.xlu0 %3330
    %v3333 = vmul.f32 %v3321, %v3331
    %3335 = vrot.lane.b32.xlu0 %v3333, 64
    %v3336 = vpop.permute.xlu0 %3335
    %v3338 = vadd.f32 %v460, %v3336
    %v3339 = vtanh.pop %v3338
    %v3340 = vsub.f32 1.0, %v3321
    %3342 = vrot.lane.b32.xlu0 %v3339, 96
    %v3343 = vpop.permute.xlu0 %3342
    %v3345 = vmul.f32 %v3340, %v3343
    %v3346 = vmul.f32 %v3321, %v3111
    %v3347 = vadd.f32 %v3345, %v3346
    %v3350 = vunpack.c.l.s4 1983009808
    %v3351 = vunpack.c.0.s8 %v3350
    %v3352 = vlaneseq
    %v3353 = vshrl.u32 %v3352, 7
    %v3354 = vsub.s32 %v3351, %v3353
    %v3355 = vrot.slane %v3242, %v3354
    %3356 = vrot.lane.b32.xlu0 %v3355, 96
    %v3357 = vpop.permute.xlu0 %3356
    %s3359 = scalar_lea.vmem [#allocation2], 22
    %3360 = vst.msk [vmem:[%s3359] sm:$0x3] %vm763, %v3357
    %v3363 = vunpack.c.l.s4 1983009808
    %v3364 = vunpack.c.0.s8 %v3363
    %v3365 = vlaneseq
    %v3366 = vshrl.u32 %v3365, 7
    %v3367 = vsub.s32 %v3364, %v3366
    %v3368 = vrot.slane %v3347, %v3367
    %3369 = vrot.lane.b32.xlu0 %v3368, 96
    %v3370 = vpop.permute.xlu0 %3369
    %s3372 = scalar_lea.vmem [#allocation3], 8
    %3373 = vst.msk [vmem:[%s3372] sm:$0x3] %vm763, %v3370
    %v3374 = vsel %vm536, %v3357, 0
    %3376 = vmatprep.subr.mxu0 0.0
    %3377 = vmatpush1.msra.mxu0 0.0
    %3378 = vmatprep.subr.mxu0 0.0
    %3379 = vmatpush1.msra.mxu0 0.0
    %3380 = vmatprep.subr.mxu0 0.0
    %3381 = vmatpush1.msra.mxu0 0.0
    %3382 = vmatprep.subr.mxu0 0.0
    %3383 = vmatpush1.msra.mxu0 0.0
    %3384 = vmatprep.subr.mxu0 0.0
    %3385 = vmatpush1.msra.mxu0 0.0
    %3386 = vmatprep.subr.mxu0 0.0
    %3387 = vmatpush1.msra.mxu0 0.0
    %3388 = vmatprep.subr.mxu0 0.0
    %3389 = vmatpush1.msra.mxu0 0.0
    %3390 = vmatprep.subr.mxu0 0.0
    %3391 = vmatpush1.msra.mxu0 0.0
    %3392 = vmatprep.subr.mxu0 0.0
    %3393 = vmatpush1.msra.mxu0 0.0
    %3394 = vmatprep.subr.mxu0 0.0
    %3395 = vmatpush1.msra.mxu0 0.0
    %3396 = vmatprep.subr.mxu0 0.0
    %3397 = vmatpush1.msra.mxu0 0.0
    %3398 = vmatprep.subr.mxu0 0.0
    %3399 = vmatpush1.msra.mxu0 0.0
    %3400 = vmatprep.subr.mxu0 0.0
    %3401 = vmatpush1.msra.mxu0 %v523
    %3402 = vmatprep.subr.mxu0 0.0
    %3403 = vmatpush1.msra.mxu0 %v522
    %3404 = vmatprep.subr.mxu0 0.0
    %3405 = vmatpush1.msra.mxu0 %v521
    %3406 = vmatprep.subr.mxu0 0.0
    %3407 = vmatpush1.msra.mxu0 %v520
    %3408 = vmatprep.subr.mxu0 0.0
    %3409 = vmatpush2.msra.mxu0 0.0
    %3410 = vmatprep.subr.mxu0 0.0
    %3411 = vmatpush2.msra.mxu0 0.0
    %3412 = vmatprep.subr.mxu0 0.0
    %3413 = vmatpush2.msra.mxu0 0.0
    %3414 = vmatprep.subr.mxu0 0.0
    %3415 = vmatpush2.msra.mxu0 0.0
    %3416 = vmatprep.subr.mxu0 0.0
    %3417 = vmatpush2.msra.mxu0 0.0
    %3418 = vmatprep.subr.mxu0 0.0
    %3419 = vmatpush2.msra.mxu0 0.0
    %3420 = vmatprep.subr.mxu0 0.0
    %3421 = vmatpush2.msra.mxu0 0.0
    %3422 = vmatprep.subr.mxu0 0.0
    %3423 = vmatpush2.msra.mxu0 0.0
    %3424 = vmatprep.subr.mxu0 0.0
    %3425 = vmatpush2.msra.mxu0 0.0
    %3426 = vmatprep.subr.mxu0 0.0
    %3427 = vmatpush2.msra.mxu0 0.0
    %3428 = vmatprep.subr.mxu0 0.0
    %3429 = vmatpush2.msra.mxu0 0.0
    %3430 = vmatprep.subr.mxu0 0.0
    %3431 = vmatpush2.msra.mxu0 0.0
    %3432 = vmatprep.subr.mxu0 0.0
    %3433 = vmatpush2.msra.mxu0 0.0
    %3434 = vmatprep.subr.mxu0 0.0
    %3435 = vmatpush2.msra.mxu0 0.0
    %3436 = vmatprep.subr.mxu0 0.0
    %3437 = vmatpush2.msra.mxu0 0.0
    %3438 = vmatprep.subr.mxu0 0.0
    %3439 = vmatpush2.msra.mxu0 0.0
    %3440 = vmatprep.mubr.f32.mxu0 0.0
    %3441 = vmatmul.mubr.f32.gmra.mxu0 %v3374
    %v3442 = vpop.f32.mrf.mxu0
    %v3443 = vadd.f32 %v534, %v3442
    %v3444 = vpop.f32.mrf.mxu0
    %3445 = vdwg.mxu0
    %v3446 = vadd.f32 %v313, %v3443
    %v3447 = vxor.u32 %v3446, 2147483648
    %v3448 = vmul.f32 %v3447, 1.442695
    %v3449 = vpow.pop %v3448
    %v3450 = vadd.f32 %v3449, 1.0
    %v3451 = vrcp.pop %v3450
    %v3452 = vmul.f32 1.0, %v3451
    %v3455 = vunpack.c.l.s4 1983009808
    %v3456 = vunpack.c.0.s8 %v3455
    %v3457 = vlaneseq
    %v3458 = vshrl.u32 %v3457, 7
    %v3459 = vsub.s32 %v3456, %v3458
    %v3460 = vrot.slane %v3443, %v3459
    %3461 = vrot.lane.b32.xlu0 %v3460, 64
    %v3462 = vpop.permute.xlu0 %3461
    %v3464 = vmul.f32 %v3452, %v3462
    %3466 = vrot.lane.b32.xlu0 %v3464, 64
    %v3467 = vpop.permute.xlu0 %3466
    %v3469 = vadd.f32 %v313, %v3467
    %v3470 = vtanh.pop %v3469
    %v3471 = vsub.f32 1.0, %v3452
    %3473 = vrot.lane.b32.xlu0 %v3470, 96
    %v3474 = vpop.permute.xlu0 %3473
    %v3476 = vmul.f32 %v3471, %v3474
    %v3477 = vmul.f32 %v3452, %v3242
    %v3478 = vadd.f32 %v3476, %v3477
    %v3479 = vsel %vm536, %v3370, 0
    %3481 = vmatprep.subr.mxu0 0.0
    %3482 = vmatpush1.msra.mxu0 0.0
    %3483 = vmatprep.subr.mxu0 0.0
    %3484 = vmatpush1.msra.mxu0 0.0
    %3485 = vmatprep.subr.mxu0 0.0
    %3486 = vmatpush1.msra.mxu0 0.0
    %3487 = vmatprep.subr.mxu0 0.0
    %3488 = vmatpush1.msra.mxu0 0.0
    %3489 = vmatprep.subr.mxu0 0.0
    %3490 = vmatpush1.msra.mxu0 0.0
    %3491 = vmatprep.subr.mxu0 0.0
    %3492 = vmatpush1.msra.mxu0 0.0
    %3493 = vmatprep.subr.mxu0 0.0
    %3494 = vmatpush1.msra.mxu0 0.0
    %3495 = vmatprep.subr.mxu0 0.0
    %3496 = vmatpush1.msra.mxu0 0.0
    %3497 = vmatprep.subr.mxu0 0.0
    %3498 = vmatpush1.msra.mxu0 0.0
    %3499 = vmatprep.subr.mxu0 0.0
    %3500 = vmatpush1.msra.mxu0 0.0
    %3501 = vmatprep.subr.mxu0 0.0
    %3502 = vmatpush1.msra.mxu0 0.0
    %3503 = vmatprep.subr.mxu0 0.0
    %3504 = vmatpush1.msra.mxu0 0.0
    %3505 = vmatprep.subr.mxu0 0.0
    %3506 = vmatpush1.msra.mxu0 %v528
    %3507 = vmatprep.subr.mxu0 0.0
    %3508 = vmatpush1.msra.mxu0 %v527
    %3509 = vmatprep.subr.mxu0 0.0
    %3510 = vmatpush1.msra.mxu0 %v526
    %3511 = vmatprep.subr.mxu0 0.0
    %3512 = vmatpush1.msra.mxu0 %v525
    %3513 = vmatprep.subr.mxu0 0.0
    %3514 = vmatpush2.msra.mxu0 0.0
    %3515 = vmatprep.subr.mxu0 0.0
    %3516 = vmatpush2.msra.mxu0 0.0
    %3517 = vmatprep.subr.mxu0 0.0
    %3518 = vmatpush2.msra.mxu0 0.0
    %3519 = vmatprep.subr.mxu0 0.0
    %3520 = vmatpush2.msra.mxu0 0.0
    %3521 = vmatprep.subr.mxu0 0.0
    %3522 = vmatpush2.msra.mxu0 0.0
    %3523 = vmatprep.subr.mxu0 0.0
    %3524 = vmatpush2.msra.mxu0 0.0
    %3525 = vmatprep.subr.mxu0 0.0
    %3526 = vmatpush2.msra.mxu0 0.0
    %3527 = vmatprep.subr.mxu0 0.0
    %3528 = vmatpush2.msra.mxu0 0.0
    %3529 = vmatprep.subr.mxu0 0.0
    %3530 = vmatpush2.msra.mxu0 0.0
    %3531 = vmatprep.subr.mxu0 0.0
    %3532 = vmatpush2.msra.mxu0 0.0
    %3533 = vmatprep.subr.mxu0 0.0
    %3534 = vmatpush2.msra.mxu0 0.0
    %3535 = vmatprep.subr.mxu0 0.0
    %3536 = vmatpush2.msra.mxu0 0.0
    %3537 = vmatprep.subr.mxu0 0.0
    %3538 = vmatpush2.msra.mxu0 0.0
    %3539 = vmatprep.subr.mxu0 0.0
    %3540 = vmatpush2.msra.mxu0 0.0
    %3541 = vmatprep.subr.mxu0 0.0
    %3542 = vmatpush2.msra.mxu0 0.0
    %3543 = vmatprep.subr.mxu0 0.0
    %3544 = vmatpush2.msra.mxu0 0.0
    %3545 = vmatprep.mubr.f32.mxu0 0.0
    %3546 = vmatmul.mubr.f32.gmra.mxu0 %v3479
    %v3547 = vpop.f32.mrf.mxu0
    %v3548 = vadd.f32 %v647, %v3547
    %v3549 = vpop.f32.mrf.mxu0
    %3550 = vdwg.mxu0
    %v3551 = vadd.f32 %v452, %v3548
    %v3552 = vxor.u32 %v3551, 2147483648
    %v3553 = vmul.f32 %v3552, 1.442695
    %v3554 = vpow.pop %v3553
    %v3555 = vadd.f32 %v3554, 1.0
    %v3556 = vrcp.pop %v3555
    %v3557 = vmul.f32 1.0, %v3556
    %v3560 = vunpack.c.l.s4 1983009808
    %v3561 = vunpack.c.0.s8 %v3560
    %v3562 = vlaneseq
    %v3563 = vshrl.u32 %v3562, 7
    %v3564 = vsub.s32 %v3561, %v3563
    %v3565 = vrot.slane %v3548, %v3564
    %3566 = vrot.lane.b32.xlu0 %v3565, 64
    %v3567 = vpop.permute.xlu0 %3566
    %v3569 = vmul.f32 %v3557, %v3567
    %3571 = vrot.lane.b32.xlu0 %v3569, 64
    %v3572 = vpop.permute.xlu0 %3571
    %v3574 = vadd.f32 %v452, %v3572
    %v3575 = vtanh.pop %v3574
    %v3576 = vsub.f32 1.0, %v3557
    %3578 = vrot.lane.b32.xlu0 %v3575, 96
    %v3579 = vpop.permute.xlu0 %3578
    %v3581 = vmul.f32 %v3576, %v3579
    %v3582 = vmul.f32 %v3557, %v3347
    %v3583 = vadd.f32 %v3581, %v3582
    %v3586 = vunpack.c.l.s4 1983009808
    %v3587 = vunpack.c.0.s8 %v3586
    %v3588 = vlaneseq
    %v3589 = vshrl.u32 %v3588, 7
    %v3590 = vsub.s32 %v3587, %v3589
    %v3591 = vrot.slane %v3478, %v3590
    %3592 = vrot.lane.b32.xlu0 %v3591, 96
    %v3593 = vpop.permute.xlu0 %3592
    %s3595 = scalar_lea.vmem [#allocation2], 24
    %3596 = vst.msk [vmem:[%s3595] sm:$0x3] %vm763, %v3593
    %v3599 = vunpack.c.l.s4 1983009808
    %v3600 = vunpack.c.0.s8 %v3599
    %v3601 = vlaneseq
    %v3602 = vshrl.u32 %v3601, 7
    %v3603 = vsub.s32 %v3600, %v3602
    %v3604 = vrot.slane %v3583, %v3603
    %3605 = vrot.lane.b32.xlu0 %v3604, 96
    %v3606 = vpop.permute.xlu0 %3605
    %s3608 = scalar_lea.vmem [#allocation3], 6
    %3609 = vst.msk [vmem:[%s3608] sm:$0x3] %vm763, %v3606
    %v3610 = vsel %vm536, %v3593, 0
    %3612 = vmatprep.subr.mxu0 0.0
    %3613 = vmatpush1.msra.mxu0 0.0
    %3614 = vmatprep.subr.mxu0 0.0
    %3615 = vmatpush1.msra.mxu0 0.0
    %3616 = vmatprep.subr.mxu0 0.0
    %3617 = vmatpush1.msra.mxu0 0.0
    %3618 = vmatprep.subr.mxu0 0.0
    %3619 = vmatpush1.msra.mxu0 0.0
    %3620 = vmatprep.subr.mxu0 0.0
    %3621 = vmatpush1.msra.mxu0 0.0
    %3622 = vmatprep.subr.mxu0 0.0
    %3623 = vmatpush1.msra.mxu0 0.0
    %3624 = vmatprep.subr.mxu0 0.0
    %3625 = vmatpush1.msra.mxu0 0.0
    %3626 = vmatprep.subr.mxu0 0.0
    %3627 = vmatpush1.msra.mxu0 0.0
    %3628 = vmatprep.subr.mxu0 0.0
    %3629 = vmatpush1.msra.mxu0 0.0
    %3630 = vmatprep.subr.mxu0 0.0
    %3631 = vmatpush1.msra.mxu0 0.0
    %3632 = vmatprep.subr.mxu0 0.0
    %3633 = vmatpush1.msra.mxu0 0.0
    %3634 = vmatprep.subr.mxu0 0.0
    %3635 = vmatpush1.msra.mxu0 0.0
    %3636 = vmatprep.subr.mxu0 0.0
    %3637 = vmatpush1.msra.mxu0 %v523
    %3638 = vmatprep.subr.mxu0 0.0
    %3639 = vmatpush1.msra.mxu0 %v522
    %3640 = vmatprep.subr.mxu0 0.0
    %3641 = vmatpush1.msra.mxu0 %v521
    %3642 = vmatprep.subr.mxu0 0.0
    %3643 = vmatpush1.msra.mxu0 %v520
    %3644 = vmatprep.subr.mxu0 0.0
    %3645 = vmatpush2.msra.mxu0 0.0
    %3646 = vmatprep.subr.mxu0 0.0
    %3647 = vmatpush2.msra.mxu0 0.0
    %3648 = vmatprep.subr.mxu0 0.0
    %3649 = vmatpush2.msra.mxu0 0.0
    %3650 = vmatprep.subr.mxu0 0.0
    %3651 = vmatpush2.msra.mxu0 0.0
    %3652 = vmatprep.subr.mxu0 0.0
    %3653 = vmatpush2.msra.mxu0 0.0
    %3654 = vmatprep.subr.mxu0 0.0
    %3655 = vmatpush2.msra.mxu0 0.0
    %3656 = vmatprep.subr.mxu0 0.0
    %3657 = vmatpush2.msra.mxu0 0.0
    %3658 = vmatprep.subr.mxu0 0.0
    %3659 = vmatpush2.msra.mxu0 0.0
    %3660 = vmatprep.subr.mxu0 0.0
    %3661 = vmatpush2.msra.mxu0 0.0
    %3662 = vmatprep.subr.mxu0 0.0
    %3663 = vmatpush2.msra.mxu0 0.0
    %3664 = vmatprep.subr.mxu0 0.0
    %3665 = vmatpush2.msra.mxu0 0.0
    %3666 = vmatprep.subr.mxu0 0.0
    %3667 = vmatpush2.msra.mxu0 0.0
    %3668 = vmatprep.subr.mxu0 0.0
    %3669 = vmatpush2.msra.mxu0 0.0
    %3670 = vmatprep.subr.mxu0 0.0
    %3671 = vmatpush2.msra.mxu0 0.0
    %3672 = vmatprep.subr.mxu0 0.0
    %3673 = vmatpush2.msra.mxu0 0.0
    %3674 = vmatprep.subr.mxu0 0.0
    %3675 = vmatpush2.msra.mxu0 0.0
    %3676 = vmatprep.mubr.f32.mxu0 0.0
    %3677 = vmatmul.mubr.f32.gmra.mxu0 %v3610
    %v3678 = vpop.f32.mrf.mxu0
    %v3679 = vadd.f32 %v534, %v3678
    %v3680 = vpop.f32.mrf.mxu0
    %3681 = vdwg.mxu0
    %v3682 = vadd.f32 %v321, %v3679
    %v3683 = vxor.u32 %v3682, 2147483648
    %v3684 = vmul.f32 %v3683, 1.442695
    %v3685 = vpow.pop %v3684
    %v3686 = vadd.f32 %v3685, 1.0
    %v3687 = vrcp.pop %v3686
    %v3688 = vmul.f32 1.0, %v3687
    %v3691 = vunpack.c.l.s4 1983009808
    %v3692 = vunpack.c.0.s8 %v3691
    %v3693 = vlaneseq
    %v3694 = vshrl.u32 %v3693, 7
    %v3695 = vsub.s32 %v3692, %v3694
    %v3696 = vrot.slane %v3679, %v3695
    %3697 = vrot.lane.b32.xlu0 %v3696, 64
    %v3698 = vpop.permute.xlu0 %3697
    %v3700 = vmul.f32 %v3688, %v3698
    %3702 = vrot.lane.b32.xlu0 %v3700, 64
    %v3703 = vpop.permute.xlu0 %3702
    %v3705 = vadd.f32 %v321, %v3703
    %v3706 = vtanh.pop %v3705
    %v3707 = vsub.f32 1.0, %v3688
    %3709 = vrot.lane.b32.xlu0 %v3706, 96
    %v3710 = vpop.permute.xlu0 %3709
    %v3712 = vmul.f32 %v3707, %v3710
    %v3713 = vmul.f32 %v3688, %v3478
    %v3714 = vadd.f32 %v3712, %v3713
    %v3715 = vsel %vm536, %v3606, 0
    %3717 = vmatprep.subr.mxu0 0.0
    %3718 = vmatpush1.msra.mxu0 0.0
    %3719 = vmatprep.subr.mxu0 0.0
    %3720 = vmatpush1.msra.mxu0 0.0
    %3721 = vmatprep.subr.mxu0 0.0
    %3722 = vmatpush1.msra.mxu0 0.0
    %3723 = vmatprep.subr.mxu0 0.0
    %3724 = vmatpush1.msra.mxu0 0.0
    %3725 = vmatprep.subr.mxu0 0.0
    %3726 = vmatpush1.msra.mxu0 0.0
    %3727 = vmatprep.subr.mxu0 0.0
    %3728 = vmatpush1.msra.mxu0 0.0
    %3729 = vmatprep.subr.mxu0 0.0
    %3730 = vmatpush1.msra.mxu0 0.0
    %3731 = vmatprep.subr.mxu0 0.0
    %3732 = vmatpush1.msra.mxu0 0.0
    %3733 = vmatprep.subr.mxu0 0.0
    %3734 = vmatpush1.msra.mxu0 0.0
    %3735 = vmatprep.subr.mxu0 0.0
    %3736 = vmatpush1.msra.mxu0 0.0
    %3737 = vmatprep.subr.mxu0 0.0
    %3738 = vmatpush1.msra.mxu0 0.0
    %3739 = vmatprep.subr.mxu0 0.0
    %3740 = vmatpush1.msra.mxu0 0.0
    %3741 = vmatprep.subr.mxu0 0.0
    %3742 = vmatpush1.msra.mxu0 %v528
    %3743 = vmatprep.subr.mxu0 0.0
    %3744 = vmatpush1.msra.mxu0 %v527
    %3745 = vmatprep.subr.mxu0 0.0
    %3746 = vmatpush1.msra.mxu0 %v526
    %3747 = vmatprep.subr.mxu0 0.0
    %3748 = vmatpush1.msra.mxu0 %v525
    %3749 = vmatprep.subr.mxu0 0.0
    %3750 = vmatpush2.msra.mxu0 0.0
    %3751 = vmatprep.subr.mxu0 0.0
    %3752 = vmatpush2.msra.mxu0 0.0
    %3753 = vmatprep.subr.mxu0 0.0
    %3754 = vmatpush2.msra.mxu0 0.0
    %3755 = vmatprep.subr.mxu0 0.0
    %3756 = vmatpush2.msra.mxu0 0.0
    %3757 = vmatprep.subr.mxu0 0.0
    %3758 = vmatpush2.msra.mxu0 0.0
    %3759 = vmatprep.subr.mxu0 0.0
    %3760 = vmatpush2.msra.mxu0 0.0
    %3761 = vmatprep.subr.mxu0 0.0
    %3762 = vmatpush2.msra.mxu0 0.0
    %3763 = vmatprep.subr.mxu0 0.0
    %3764 = vmatpush2.msra.mxu0 0.0
    %3765 = vmatprep.subr.mxu0 0.0
    %3766 = vmatpush2.msra.mxu0 0.0
    %3767 = vmatprep.subr.mxu0 0.0
    %3768 = vmatpush2.msra.mxu0 0.0
    %3769 = vmatprep.subr.mxu0 0.0
    %3770 = vmatpush2.msra.mxu0 0.0
    %3771 = vmatprep.subr.mxu0 0.0
    %3772 = vmatpush2.msra.mxu0 0.0
    %3773 = vmatprep.subr.mxu0 0.0
    %3774 = vmatpush2.msra.mxu0 0.0
    %3775 = vmatprep.subr.mxu0 0.0
    %3776 = vmatpush2.msra.mxu0 0.0
    %3777 = vmatprep.subr.mxu0 0.0
    %3778 = vmatpush2.msra.mxu0 0.0
    %3779 = vmatprep.subr.mxu0 0.0
    %3780 = vmatpush2.msra.mxu0 0.0
    %3781 = vmatprep.mubr.f32.mxu0 0.0
    %3782 = vmatmul.mubr.f32.gmra.mxu0 %v3715
    %v3783 = vpop.f32.mrf.mxu0
    %v3784 = vadd.f32 %v647, %v3783
    %v3785 = vpop.f32.mrf.mxu0
    %3786 = vdwg.mxu0
    %v3787 = vadd.f32 %v450, %v3784
    %v3788 = vxor.u32 %v3787, 2147483648
    %v3789 = vmul.f32 %v3788, 1.442695
    %v3790 = vpow.pop %v3789
    %v3791 = vadd.f32 %v3790, 1.0
    %v3792 = vrcp.pop %v3791
    %v3793 = vmul.f32 1.0, %v3792
    %v3796 = vunpack.c.l.s4 1983009808
    %v3797 = vunpack.c.0.s8 %v3796
    %v3798 = vlaneseq
    %v3799 = vshrl.u32 %v3798, 7
    %v3800 = vsub.s32 %v3797, %v3799
    %v3801 = vrot.slane %v3784, %v3800
    %3802 = vrot.lane.b32.xlu0 %v3801, 64
    %v3803 = vpop.permute.xlu0 %3802
    %v3805 = vmul.f32 %v3793, %v3803
    %3807 = vrot.lane.b32.xlu0 %v3805, 64
    %v3808 = vpop.permute.xlu0 %3807
    %v3810 = vadd.f32 %v450, %v3808
    %v3811 = vtanh.pop %v3810
    %v3812 = vsub.f32 1.0, %v3793
    %3814 = vrot.lane.b32.xlu0 %v3811, 96
    %v3815 = vpop.permute.xlu0 %3814
    %v3817 = vmul.f32 %v3812, %v3815
    %v3818 = vmul.f32 %v3793, %v3583
    %v3819 = vadd.f32 %v3817, %v3818
    %v3822 = vunpack.c.l.s4 1983009808
    %v3823 = vunpack.c.0.s8 %v3822
    %v3824 = vlaneseq
    %v3825 = vshrl.u32 %v3824, 7
    %v3826 = vsub.s32 %v3823, %v3825
    %v3827 = vrot.slane %v3714, %v3826
    %3828 = vrot.lane.b32.xlu0 %v3827, 96
    %v3829 = vpop.permute.xlu0 %3828
    %s3831 = scalar_lea.vmem [#allocation2], 26
    %3832 = vst.msk [vmem:[%s3831] sm:$0x3] %vm763, %v3829
    %v3835 = vunpack.c.l.s4 1983009808
    %v3836 = vunpack.c.0.s8 %v3835
    %v3837 = vlaneseq
    %v3838 = vshrl.u32 %v3837, 7
    %v3839 = vsub.s32 %v3836, %v3838
    %v3840 = vrot.slane %v3819, %v3839
    %3841 = vrot.lane.b32.xlu0 %v3840, 96
    %v3842 = vpop.permute.xlu0 %3841
    %s3844 = scalar_lea.vmem [#allocation3], 4
    %3845 = vst.msk [vmem:[%s3844] sm:$0x3] %vm763, %v3842
    %v3846 = vsel %vm536, %v3829, 0
    %3848 = vmatprep.subr.mxu0 0.0
    %3849 = vmatpush1.msra.mxu0 0.0
    %3850 = vmatprep.subr.mxu0 0.0
    %3851 = vmatpush1.msra.mxu0 0.0
    %3852 = vmatprep.subr.mxu0 0.0
    %3853 = vmatpush1.msra.mxu0 0.0
    %3854 = vmatprep.subr.mxu0 0.0
    %3855 = vmatpush1.msra.mxu0 0.0
    %3856 = vmatprep.subr.mxu0 0.0
    %3857 = vmatpush1.msra.mxu0 0.0
    %3858 = vmatprep.subr.mxu0 0.0
    %3859 = vmatpush1.msra.mxu0 0.0
    %3860 = vmatprep.subr.mxu0 0.0
    %3861 = vmatpush1.msra.mxu0 0.0
    %3862 = vmatprep.subr.mxu0 0.0
    %3863 = vmatpush1.msra.mxu0 0.0
    %3864 = vmatprep.subr.mxu0 0.0
    %3865 = vmatpush1.msra.mxu0 0.0
    %3866 = vmatprep.subr.mxu0 0.0
    %3867 = vmatpush1.msra.mxu0 0.0
    %3868 = vmatprep.subr.mxu0 0.0
    %3869 = vmatpush1.msra.mxu0 0.0
    %3870 = vmatprep.subr.mxu0 0.0
    %3871 = vmatpush1.msra.mxu0 0.0
    %3872 = vmatprep.subr.mxu0 0.0
    %3873 = vmatpush1.msra.mxu0 %v523
    %3874 = vmatprep.subr.mxu0 0.0
    %3875 = vmatpush1.msra.mxu0 %v522
    %3876 = vmatprep.subr.mxu0 0.0
    %3877 = vmatpush1.msra.mxu0 %v521
    %3878 = vmatprep.subr.mxu0 0.0
    %3879 = vmatpush1.msra.mxu0 %v520
    %3880 = vmatprep.subr.mxu0 0.0
    %3881 = vmatpush2.msra.mxu0 0.0
    %3882 = vmatprep.subr.mxu0 0.0
    %3883 = vmatpush2.msra.mxu0 0.0
    %3884 = vmatprep.subr.mxu0 0.0
    %3885 = vmatpush2.msra.mxu0 0.0
    %3886 = vmatprep.subr.mxu0 0.0
    %3887 = vmatpush2.msra.mxu0 0.0
    %3888 = vmatprep.subr.mxu0 0.0
    %3889 = vmatpush2.msra.mxu0 0.0
    %3890 = vmatprep.subr.mxu0 0.0
    %3891 = vmatpush2.msra.mxu0 0.0
    %3892 = vmatprep.subr.mxu0 0.0
    %3893 = vmatpush2.msra.mxu0 0.0
    %3894 = vmatprep.subr.mxu0 0.0
    %3895 = vmatpush2.msra.mxu0 0.0
    %3896 = vmatprep.subr.mxu0 0.0
    %3897 = vmatpush2.msra.mxu0 0.0
    %3898 = vmatprep.subr.mxu0 0.0
    %3899 = vmatpush2.msra.mxu0 0.0
    %3900 = vmatprep.subr.mxu0 0.0
    %3901 = vmatpush2.msra.mxu0 0.0
    %3902 = vmatprep.subr.mxu0 0.0
    %3903 = vmatpush2.msra.mxu0 0.0
    %3904 = vmatprep.subr.mxu0 0.0
    %3905 = vmatpush2.msra.mxu0 0.0
    %3906 = vmatprep.subr.mxu0 0.0
    %3907 = vmatpush2.msra.mxu0 0.0
    %3908 = vmatprep.subr.mxu0 0.0
    %3909 = vmatpush2.msra.mxu0 0.0
    %3910 = vmatprep.subr.mxu0 0.0
    %3911 = vmatpush2.msra.mxu0 0.0
    %3912 = vmatprep.mubr.f32.mxu0 0.0
    %3913 = vmatmul.mubr.f32.gmra.mxu0 %v3846
    %v3914 = vpop.f32.mrf.mxu0
    %v3915 = vadd.f32 %v534, %v3914
    %v3916 = vpop.f32.mrf.mxu0
    %3917 = vdwg.mxu0
    %v3918 = vadd.f32 %v320, %v3915
    %v3919 = vxor.u32 %v3918, 2147483648
    %v3920 = vmul.f32 %v3919, 1.442695
    %v3921 = vpow.pop %v3920
    %v3922 = vadd.f32 %v3921, 1.0
    %v3923 = vrcp.pop %v3922
    %v3924 = vmul.f32 1.0, %v3923
    %v3927 = vunpack.c.l.s4 1983009808
    %v3928 = vunpack.c.0.s8 %v3927
    %v3929 = vlaneseq
    %v3930 = vshrl.u32 %v3929, 7
    %v3931 = vsub.s32 %v3928, %v3930
    %v3932 = vrot.slane %v3915, %v3931
    %3933 = vrot.lane.b32.xlu0 %v3932, 64
    %v3934 = vpop.permute.xlu0 %3933
    %v3936 = vmul.f32 %v3924, %v3934
    %3938 = vrot.lane.b32.xlu0 %v3936, 64
    %v3939 = vpop.permute.xlu0 %3938
    %v3941 = vadd.f32 %v320, %v3939
    %v3942 = vtanh.pop %v3941
    %v3943 = vsub.f32 1.0, %v3924
    %3945 = vrot.lane.b32.xlu0 %v3942, 96
    %v3946 = vpop.permute.xlu0 %3945
    %v3948 = vmul.f32 %v3943, %v3946
    %v3949 = vmul.f32 %v3924, %v3714
    %v3950 = vadd.f32 %v3948, %v3949
    %v3951 = vsel %vm536, %v3842, 0
    %3953 = vmatprep.subr.mxu0 0.0
    %3954 = vmatpush1.msra.mxu0 0.0
    %3955 = vmatprep.subr.mxu0 0.0
    %3956 = vmatpush1.msra.mxu0 0.0
    %3957 = vmatprep.subr.mxu0 0.0
    %3958 = vmatpush1.msra.mxu0 0.0
    %3959 = vmatprep.subr.mxu0 0.0
    %3960 = vmatpush1.msra.mxu0 0.0
    %3961 = vmatprep.subr.mxu0 0.0
    %3962 = vmatpush1.msra.mxu0 0.0
    %3963 = vmatprep.subr.mxu0 0.0
    %3964 = vmatpush1.msra.mxu0 0.0
    %3965 = vmatprep.subr.mxu0 0.0
    %3966 = vmatpush1.msra.mxu0 0.0
    %3967 = vmatprep.subr.mxu0 0.0
    %3968 = vmatpush1.msra.mxu0 0.0
    %3969 = vmatprep.subr.mxu0 0.0
    %3970 = vmatpush1.msra.mxu0 0.0
    %3971 = vmatprep.subr.mxu0 0.0
    %3972 = vmatpush1.msra.mxu0 0.0
    %3973 = vmatprep.subr.mxu0 0.0
    %3974 = vmatpush1.msra.mxu0 0.0
    %3975 = vmatprep.subr.mxu0 0.0
    %3976 = vmatpush1.msra.mxu0 0.0
    %3977 = vmatprep.subr.mxu0 0.0
    %3978 = vmatpush1.msra.mxu0 %v528
    %3979 = vmatprep.subr.mxu0 0.0
    %3980 = vmatpush1.msra.mxu0 %v527
    %3981 = vmatprep.subr.mxu0 0.0
    %3982 = vmatpush1.msra.mxu0 %v526
    %3983 = vmatprep.subr.mxu0 0.0
    %3984 = vmatpush1.msra.mxu0 %v525
    %3985 = vmatprep.subr.mxu0 0.0
    %3986 = vmatpush2.msra.mxu0 0.0
    %3987 = vmatprep.subr.mxu0 0.0
    %3988 = vmatpush2.msra.mxu0 0.0
    %3989 = vmatprep.subr.mxu0 0.0
    %3990 = vmatpush2.msra.mxu0 0.0
    %3991 = vmatprep.subr.mxu0 0.0
    %3992 = vmatpush2.msra.mxu0 0.0
    %3993 = vmatprep.subr.mxu0 0.0
    %3994 = vmatpush2.msra.mxu0 0.0
    %3995 = vmatprep.subr.mxu0 0.0
    %3996 = vmatpush2.msra.mxu0 0.0
    %3997 = vmatprep.subr.mxu0 0.0
    %3998 = vmatpush2.msra.mxu0 0.0
    %3999 = vmatprep.subr.mxu0 0.0
    %4000 = vmatpush2.msra.mxu0 0.0
    %4001 = vmatprep.subr.mxu0 0.0
    %4002 = vmatpush2.msra.mxu0 0.0
    %4003 = vmatprep.subr.mxu0 0.0
    %4004 = vmatpush2.msra.mxu0 0.0
    %4005 = vmatprep.subr.mxu0 0.0
    %4006 = vmatpush2.msra.mxu0 0.0
    %4007 = vmatprep.subr.mxu0 0.0
    %4008 = vmatpush2.msra.mxu0 0.0
    %4009 = vmatprep.subr.mxu0 0.0
    %4010 = vmatpush2.msra.mxu0 0.0
    %4011 = vmatprep.subr.mxu0 0.0
    %4012 = vmatpush2.msra.mxu0 0.0
    %4013 = vmatprep.subr.mxu0 0.0
    %4014 = vmatpush2.msra.mxu0 0.0
    %4015 = vmatprep.subr.mxu0 0.0
    %4016 = vmatpush2.msra.mxu0 0.0
    %4017 = vmatprep.mubr.f32.mxu0 0.0
    %4018 = vmatmul.mubr.f32.gmra.mxu0 %v3951
    %v4019 = vpop.f32.mrf.mxu0
    %v4020 = vadd.f32 %v647, %v4019
    %v4021 = vpop.f32.mrf.mxu0
    %4022 = vdwg.mxu0
    %v4023 = vadd.f32 %v451, %v4020
    %v4024 = vxor.u32 %v4023, 2147483648
    %v4025 = vmul.f32 %v4024, 1.442695
    %v4026 = vpow.pop %v4025
    %v4027 = vadd.f32 %v4026, 1.0
    %v4028 = vrcp.pop %v4027
    %v4029 = vmul.f32 1.0, %v4028
    %v4032 = vunpack.c.l.s4 1983009808
    %v4033 = vunpack.c.0.s8 %v4032
    %v4034 = vlaneseq
    %v4035 = vshrl.u32 %v4034, 7
    %v4036 = vsub.s32 %v4033, %v4035
    %v4037 = vrot.slane %v4020, %v4036
    %4038 = vrot.lane.b32.xlu0 %v4037, 64
    %v4039 = vpop.permute.xlu0 %4038
    %v4041 = vmul.f32 %v4029, %v4039
    %4043 = vrot.lane.b32.xlu0 %v4041, 64
    %v4044 = vpop.permute.xlu0 %4043
    %v4046 = vadd.f32 %v451, %v4044
    %v4047 = vtanh.pop %v4046
    %v4048 = vsub.f32 1.0, %v4029
    %4050 = vrot.lane.b32.xlu0 %v4047, 96
    %v4051 = vpop.permute.xlu0 %4050
    %v4053 = vmul.f32 %v4048, %v4051
    %v4054 = vmul.f32 %v4029, %v3819
    %v4055 = vadd.f32 %v4053, %v4054
    %v4058 = vunpack.c.l.s4 1983009808
    %v4059 = vunpack.c.0.s8 %v4058
    %v4060 = vlaneseq
    %v4061 = vshrl.u32 %v4060, 7
    %v4062 = vsub.s32 %v4059, %v4061
    %v4063 = vrot.slane %v3950, %v4062
    %4064 = vrot.lane.b32.xlu0 %v4063, 96
    %v4065 = vpop.permute.xlu0 %4064
    %s4067 = scalar_lea.vmem [#allocation2], 28
    %4068 = vst.msk [vmem:[%s4067] sm:$0x3] %vm763, %v4065
    %v4071 = vunpack.c.l.s4 1983009808
    %v4072 = vunpack.c.0.s8 %v4071
    %v4073 = vlaneseq
    %v4074 = vshrl.u32 %v4073, 7
    %v4075 = vsub.s32 %v4072, %v4074
    %v4076 = vrot.slane %v4055, %v4075
    %4077 = vrot.lane.b32.xlu0 %v4076, 96
    %v4078 = vpop.permute.xlu0 %4077
    %s4080 = scalar_lea.vmem [#allocation3], 2
    %4081 = vst.msk [vmem:[%s4080] sm:$0x3] %vm763, %v4078
    %v4082 = vsel %vm536, %v4065, 0
    %4084 = vmatprep.subr.mxu0 0.0
    %4085 = vmatpush1.msra.mxu0 0.0
    %4086 = vmatprep.subr.mxu0 0.0
    %4087 = vmatpush1.msra.mxu0 0.0
    %4088 = vmatprep.subr.mxu0 0.0
    %4089 = vmatpush1.msra.mxu0 0.0
    %4090 = vmatprep.subr.mxu0 0.0
    %4091 = vmatpush1.msra.mxu0 0.0
    %4092 = vmatprep.subr.mxu0 0.0
    %4093 = vmatpush1.msra.mxu0 0.0
    %4094 = vmatprep.subr.mxu0 0.0
    %4095 = vmatpush1.msra.mxu0 0.0
    %4096 = vmatprep.subr.mxu0 0.0
    %4097 = vmatpush1.msra.mxu0 0.0
    %4098 = vmatprep.subr.mxu0 0.0
    %4099 = vmatpush1.msra.mxu0 0.0
    %4100 = vmatprep.subr.mxu0 0.0
    %4101 = vmatpush1.msra.mxu0 0.0
    %4102 = vmatprep.subr.mxu0 0.0
    %4103 = vmatpush1.msra.mxu0 0.0
    %4104 = vmatprep.subr.mxu0 0.0
    %4105 = vmatpush1.msra.mxu0 0.0
    %4106 = vmatprep.subr.mxu0 0.0
    %4107 = vmatpush1.msra.mxu0 0.0
    %4108 = vmatprep.subr.mxu0 0.0
    %4109 = vmatpush1.msra.mxu0 %v523
    %4110 = vmatprep.subr.mxu0 0.0
    %4111 = vmatpush1.msra.mxu0 %v522
    %4112 = vmatprep.subr.mxu0 0.0
    %4113 = vmatpush1.msra.mxu0 %v521
    %4114 = vmatprep.subr.mxu0 0.0
    %4115 = vmatpush1.msra.mxu0 %v520
    %4116 = vmatprep.subr.mxu0 0.0
    %4117 = vmatpush2.msra.mxu0 0.0
    %4118 = vmatprep.subr.mxu0 0.0
    %4119 = vmatpush2.msra.mxu0 0.0
    %4120 = vmatprep.subr.mxu0 0.0
    %4121 = vmatpush2.msra.mxu0 0.0
    %4122 = vmatprep.subr.mxu0 0.0
    %4123 = vmatpush2.msra.mxu0 0.0
    %4124 = vmatprep.subr.mxu0 0.0
    %4125 = vmatpush2.msra.mxu0 0.0
    %4126 = vmatprep.subr.mxu0 0.0
    %4127 = vmatpush2.msra.mxu0 0.0
    %4128 = vmatprep.subr.mxu0 0.0
    %4129 = vmatpush2.msra.mxu0 0.0
    %4130 = vmatprep.subr.mxu0 0.0
    %4131 = vmatpush2.msra.mxu0 0.0
    %4132 = vmatprep.subr.mxu0 0.0
    %4133 = vmatpush2.msra.mxu0 0.0
    %4134 = vmatprep.subr.mxu0 0.0
    %4135 = vmatpush2.msra.mxu0 0.0
    %4136 = vmatprep.subr.mxu0 0.0
    %4137 = vmatpush2.msra.mxu0 0.0
    %4138 = vmatprep.subr.mxu0 0.0
    %4139 = vmatpush2.msra.mxu0 0.0
    %4140 = vmatprep.subr.mxu0 0.0
    %4141 = vmatpush2.msra.mxu0 0.0
    %4142 = vmatprep.subr.mxu0 0.0
    %4143 = vmatpush2.msra.mxu0 0.0
    %4144 = vmatprep.subr.mxu0 0.0
    %4145 = vmatpush2.msra.mxu0 0.0
    %4146 = vmatprep.subr.mxu0 0.0
    %4147 = vmatpush2.msra.mxu0 0.0
    %4148 = vmatprep.mubr.f32.mxu0 0.0
    %4149 = vmatmul.mubr.f32.gmra.mxu0 %v4082
    %v4150 = vpop.f32.mrf.mxu0
    %v4151 = vadd.f32 %v534, %v4150
    %v4152 = vpop.f32.mrf.mxu0
    %4153 = vdwg.mxu0
    %v4154 = vadd.f32 %v322, %v4151
    %v4155 = vxor.u32 %v4154, 2147483648
    %v4156 = vmul.f32 %v4155, 1.442695
    %v4157 = vpow.pop %v4156
    %v4158 = vadd.f32 %v4157, 1.0
    %v4159 = vrcp.pop %v4158
    %v4160 = vmul.f32 1.0, %v4159
    %v4163 = vunpack.c.l.s4 1983009808
    %v4164 = vunpack.c.0.s8 %v4163
    %v4165 = vlaneseq
    %v4166 = vshrl.u32 %v4165, 7
    %v4167 = vsub.s32 %v4164, %v4166
    %v4168 = vrot.slane %v4151, %v4167
    %4169 = vrot.lane.b32.xlu0 %v4168, 64
    %v4170 = vpop.permute.xlu0 %4169
    %v4172 = vmul.f32 %v4160, %v4170
    %4174 = vrot.lane.b32.xlu0 %v4172, 64
    %v4175 = vpop.permute.xlu0 %4174
    %v4177 = vadd.f32 %v322, %v4175
    %v4178 = vtanh.pop %v4177
    %v4179 = vsub.f32 1.0, %v4160
    %4181 = vrot.lane.b32.xlu0 %v4178, 96
    %v4182 = vpop.permute.xlu0 %4181
    %v4184 = vmul.f32 %v4179, %v4182
    %v4185 = vmul.f32 %v4160, %v3950
    %v4186 = vadd.f32 %v4184, %v4185
    %v4187 = vsel %vm536, %v4078, 0
    %4189 = vmatprep.subr.mxu0 0.0
    %4190 = vmatpush1.msra.mxu0 0.0
    %4191 = vmatprep.subr.mxu0 0.0
    %4192 = vmatpush1.msra.mxu0 0.0
    %4193 = vmatprep.subr.mxu0 0.0
    %4194 = vmatpush1.msra.mxu0 0.0
    %4195 = vmatprep.subr.mxu0 0.0
    %4196 = vmatpush1.msra.mxu0 0.0
    %4197 = vmatprep.subr.mxu0 0.0
    %4198 = vmatpush1.msra.mxu0 0.0
    %4199 = vmatprep.subr.mxu0 0.0
    %4200 = vmatpush1.msra.mxu0 0.0
    %4201 = vmatprep.subr.mxu0 0.0
    %4202 = vmatpush1.msra.mxu0 0.0
    %4203 = vmatprep.subr.mxu0 0.0
    %4204 = vmatpush1.msra.mxu0 0.0
    %4205 = vmatprep.subr.mxu0 0.0
    %4206 = vmatpush1.msra.mxu0 0.0
    %4207 = vmatprep.subr.mxu0 0.0
    %4208 = vmatpush1.msra.mxu0 0.0
    %4209 = vmatprep.subr.mxu0 0.0
    %4210 = vmatpush1.msra.mxu0 0.0
    %4211 = vmatprep.subr.mxu0 0.0
    %4212 = vmatpush1.msra.mxu0 0.0
    %4213 = vmatprep.subr.mxu0 0.0
    %4214 = vmatpush1.msra.mxu0 %v528
    %4215 = vmatprep.subr.mxu0 0.0
    %4216 = vmatpush1.msra.mxu0 %v527
    %4217 = vmatprep.subr.mxu0 0.0
    %4218 = vmatpush1.msra.mxu0 %v526
    %4219 = vmatprep.subr.mxu0 0.0
    %4220 = vmatpush1.msra.mxu0 %v525
    %4221 = vmatprep.subr.mxu0 0.0
    %4222 = vmatpush2.msra.mxu0 0.0
    %4223 = vmatprep.subr.mxu0 0.0
    %4224 = vmatpush2.msra.mxu0 0.0
    %4225 = vmatprep.subr.mxu0 0.0
    %4226 = vmatpush2.msra.mxu0 0.0
    %4227 = vmatprep.subr.mxu0 0.0
    %4228 = vmatpush2.msra.mxu0 0.0
    %4229 = vmatprep.subr.mxu0 0.0
    %4230 = vmatpush2.msra.mxu0 0.0
    %4231 = vmatprep.subr.mxu0 0.0
    %4232 = vmatpush2.msra.mxu0 0.0
    %4233 = vmatprep.subr.mxu0 0.0
    %4234 = vmatpush2.msra.mxu0 0.0
    %4235 = vmatprep.subr.mxu0 0.0
    %4236 = vmatpush2.msra.mxu0 0.0
    %4237 = vmatprep.subr.mxu0 0.0
    %4238 = vmatpush2.msra.mxu0 0.0
    %4239 = vmatprep.subr.mxu0 0.0
    %4240 = vmatpush2.msra.mxu0 0.0
    %4241 = vmatprep.subr.mxu0 0.0
    %4242 = vmatpush2.msra.mxu0 0.0
    %4243 = vmatprep.subr.mxu0 0.0
    %4244 = vmatpush2.msra.mxu0 0.0
    %4245 = vmatprep.subr.mxu0 0.0
    %4246 = vmatpush2.msra.mxu0 0.0
    %4247 = vmatprep.subr.mxu0 0.0
    %4248 = vmatpush2.msra.mxu0 0.0
    %4249 = vmatprep.subr.mxu0 0.0
    %4250 = vmatpush2.msra.mxu0 0.0
    %4251 = vmatprep.subr.mxu0 0.0
    %4252 = vmatpush2.msra.mxu0 0.0
    %4253 = vmatprep.mubr.f32.mxu0 0.0
    %4254 = vmatmul.mubr.f32.gmra.mxu0 %v4187
    %v4255 = vpop.f32.mrf.mxu0
    %v4256 = vadd.f32 %v647, %v4255
    %v4257 = vpop.f32.mrf.mxu0
    %4258 = vdwg.mxu0
    %v4259 = vadd.f32 %v443, %v4256
    %v4260 = vxor.u32 %v4259, 2147483648
    %v4261 = vmul.f32 %v4260, 1.442695
    %v4262 = vpow.pop %v4261
    %v4263 = vadd.f32 %v4262, 1.0
    %v4264 = vrcp.pop %v4263
    %v4265 = vmul.f32 1.0, %v4264
    %v4268 = vunpack.c.l.s4 1983009808
    %v4269 = vunpack.c.0.s8 %v4268
    %v4270 = vlaneseq
    %v4271 = vshrl.u32 %v4270, 7
    %v4272 = vsub.s32 %v4269, %v4271
    %v4273 = vrot.slane %v4256, %v4272
    %4274 = vrot.lane.b32.xlu0 %v4273, 64
    %v4275 = vpop.permute.xlu0 %4274
    %v4277 = vmul.f32 %v4265, %v4275
    %4279 = vrot.lane.b32.xlu0 %v4277, 64
    %v4280 = vpop.permute.xlu0 %4279
    %v4282 = vadd.f32 %v443, %v4280
    %v4283 = vtanh.pop %v4282
    %v4284 = vsub.f32 1.0, %v4265
    %4286 = vrot.lane.b32.xlu0 %v4283, 96
    %v4287 = vpop.permute.xlu0 %4286
    %v4289 = vmul.f32 %v4284, %v4287
    %v4290 = vmul.f32 %v4265, %v4055
    %v4291 = vadd.f32 %v4289, %v4290
    %v4294 = vunpack.c.l.s4 1983009808
    %v4295 = vunpack.c.0.s8 %v4294
    %v4296 = vlaneseq
    %v4297 = vshrl.u32 %v4296, 7
    %v4298 = vsub.s32 %v4295, %v4297
    %v4299 = vrot.slane %v4186, %v4298
    %4300 = vrot.lane.b32.xlu0 %v4299, 96
    %v4301 = vpop.permute.xlu0 %4300
    %s4303 = scalar_lea.vmem [#allocation2], 30
    %4304 = vst.msk [vmem:[%s4303] sm:$0x3] %vm763, %v4301
    %v4307 = vunpack.c.l.s4 1983009808
    %v4308 = vunpack.c.0.s8 %v4307
    %v4309 = vlaneseq
    %v4310 = vshrl.u32 %v4309, 7
    %v4311 = vsub.s32 %v4308, %v4310
    %v4312 = vrot.slane %v4291, %v4311
    %4313 = vrot.lane.b32.xlu0 %v4312, 96
    %v4314 = vpop.permute.xlu0 %4313
    %4316 = vst.msk [vmem:[#allocation3] sm:$0x3] %vm763, %v4314
    %v4317 = vld [vmem:[#allocation2] sm:$0x3]
    %v4318 = vld [vmem:[#allocation2 + $0x2] sm:$0x3]
    %v4319 = vld [vmem:[#allocation2 + $0x4] sm:$0x3]
    %v4320 = vld [vmem:[#allocation2 + $0x6] sm:$0x3]
    %v4321 = vld [vmem:[#allocation2 + $0x8] sm:$0x3]
    %v4322 = vld [vmem:[#allocation2 + $0xa] sm:$0x3]
    %v4323 = vld [vmem:[#allocation2 + $0xc] sm:$0x3]
    %v4324 = vld [vmem:[#allocation2 + $0xe] sm:$0x3]
    %v4325 = vld [vmem:[#allocation2 + $0x10] sm:$0x3]
    %v4326 = vld [vmem:[#allocation2 + $0x12] sm:$0x3]
    %v4327 = vld [vmem:[#allocation2 + $0x14] sm:$0x3]
    %v4328 = vld [vmem:[#allocation2 + $0x16] sm:$0x3]
    %v4329 = vld [vmem:[#allocation2 + $0x18] sm:$0x3]
    %v4330 = vld [vmem:[#allocation2 + $0x1a] sm:$0x3]
    %v4331 = vld [vmem:[#allocation2 + $0x1c] sm:$0x3]
    %v4332 = vld [vmem:[#allocation2 + $0x1e] sm:$0x3]
    %v4333 = vld [vmem:[#allocation3] sm:$0x3]
    %v4334 = vld [vmem:[#allocation3 + $0x2] sm:$0x3]
    %v4335 = vld [vmem:[#allocation3 + $0x4] sm:$0x3]
    %v4336 = vld [vmem:[#allocation3 + $0x6] sm:$0x3]
    %v4337 = vld [vmem:[#allocation3 + $0x8] sm:$0x3]
    %v4338 = vld [vmem:[#allocation3 + $0xa] sm:$0x3]
    %v4339 = vld [vmem:[#allocation3 + $0xc] sm:$0x3]
    %v4340 = vld [vmem:[#allocation3 + $0xe] sm:$0x3]
    %v4341 = vld [vmem:[#allocation3 + $0x10] sm:$0x3]
    %v4342 = vld [vmem:[#allocation3 + $0x12] sm:$0x3]
    %v4343 = vld [vmem:[#allocation3 + $0x14] sm:$0x3]
    %v4344 = vld [vmem:[#allocation3 + $0x16] sm:$0x3]
    %v4345 = vld [vmem:[#allocation3 + $0x18] sm:$0x3]
    %v4346 = vld [vmem:[#allocation3 + $0x1a] sm:$0x3]
    %v4347 = vld [vmem:[#allocation3 + $0x1c] sm:$0x3]
    %v4348 = vld [vmem:[#allocation3 + $0x1e] sm:$0x3]
    %4365 = vrot.lane.b32.xlu0 %v4333, 32
    %v4366 = vpop.permute.xlu0 %4365
    %4367 = vrot.lane.b32.xlu0 %v4334, 32
    %v4368 = vpop.permute.xlu0 %4367
    %4369 = vrot.lane.b32.xlu0 %v4335, 32
    %v4370 = vpop.permute.xlu0 %4369
    %4371 = vrot.lane.b32.xlu0 %v4336, 32
    %v4372 = vpop.permute.xlu0 %4371
    %4373 = vrot.lane.b32.xlu0 %v4337, 32
    %v4374 = vpop.permute.xlu0 %4373
    %4375 = vrot.lane.b32.xlu0 %v4338, 32
    %v4376 = vpop.permute.xlu0 %4375
    %4377 = vrot.lane.b32.xlu0 %v4339, 32
    %v4378 = vpop.permute.xlu0 %4377
    %4379 = vrot.lane.b32.xlu0 %v4340, 32
    %v4380 = vpop.permute.xlu0 %4379
    %4381 = vrot.lane.b32.xlu0 %v4341, 32
    %v4382 = vpop.permute.xlu0 %4381
    %4383 = vrot.lane.b32.xlu0 %v4342, 32
    %v4384 = vpop.permute.xlu0 %4383
    %4385 = vrot.lane.b32.xlu0 %v4343, 32
    %v4386 = vpop.permute.xlu0 %4385
    %4387 = vrot.lane.b32.xlu0 %v4344, 32
    %v4388 = vpop.permute.xlu0 %4387
    %4389 = vrot.lane.b32.xlu0 %v4345, 32
    %v4390 = vpop.permute.xlu0 %4389
    %4391 = vrot.lane.b32.xlu0 %v4346, 32
    %v4392 = vpop.permute.xlu0 %4391
    %4393 = vrot.lane.b32.xlu0 %v4347, 32
    %v4394 = vpop.permute.xlu0 %4393
    %4395 = vrot.lane.b32.xlu0 %v4348, 32
    %v4396 = vpop.permute.xlu0 %4395
    %v4413 = vsel %vm536, %v4317, %v4366
    %v4414 = vsel %vm536, %v4318, %v4368
    %v4415 = vsel %vm536, %v4319, %v4370
    %v4416 = vsel %vm536, %v4320, %v4372
    %v4417 = vsel %vm536, %v4321, %v4374
    %v4418 = vsel %vm536, %v4322, %v4376
    %v4419 = vsel %vm536, %v4323, %v4378
    %v4420 = vsel %vm536, %v4324, %v4380
    %v4421 = vsel %vm536, %v4325, %v4382
    %v4422 = vsel %vm536, %v4326, %v4384
    %v4423 = vsel %vm536, %v4327, %v4386
    %v4424 = vsel %vm536, %v4328, %v4388
    %v4425 = vsel %vm536, %v4329, %v4390
    %v4426 = vsel %vm536, %v4330, %v4392
    %v4427 = vsel %vm536, %v4331, %v4394
    %v4428 = vsel %vm536, %v4332, %v4396
    %vm4429 = vcmask 517120
    %4430 = vst.msk [vmem:[#allocation4] sm:$0x3] %vm4429, %v4413
    %4431 = vst.msk [vmem:[#allocation4 + $0x2] sm:$0x3] %vm4429, %v4414
    %4432 = vst.msk [vmem:[#allocation4 + $0x4] sm:$0x3] %vm4429, %v4415
    %4433 = vst.msk [vmem:[#allocation4 + $0x6] sm:$0x3] %vm4429, %v4416
    %4434 = vst.msk [vmem:[#allocation4 + $0x8] sm:$0x3] %vm4429, %v4417
    %4435 = vst.msk [vmem:[#allocation4 + $0xa] sm:$0x3] %vm4429, %v4418
    %4436 = vst.msk [vmem:[#allocation4 + $0xc] sm:$0x3] %vm4429, %v4419
    %4437 = vst.msk [vmem:[#allocation4 + $0xe] sm:$0x3] %vm4429, %v4420
    %4438 = vst.msk [vmem:[#allocation4 + $0x10] sm:$0x3] %vm4429, %v4421
    %4439 = vst.msk [vmem:[#allocation4 + $0x12] sm:$0x3] %vm4429, %v4422
    %4440 = vst.msk [vmem:[#allocation4 + $0x14] sm:$0x3] %vm4429, %v4423
    %4441 = vst.msk [vmem:[#allocation4 + $0x16] sm:$0x3] %vm4429, %v4424
    %4442 = vst.msk [vmem:[#allocation4 + $0x18] sm:$0x3] %vm4429, %v4425
    %4443 = vst.msk [vmem:[#allocation4 + $0x1a] sm:$0x3] %vm4429, %v4426
    %4444 = vst.msk [vmem:[#allocation4 + $0x1c] sm:$0x3] %vm4429, %v4427
    %4445 = vst.msk [vmem:[#allocation4 + $0x1e] sm:$0x3] %vm4429, %v4428
    %v4446 = vld [vmem:[%s11] sm:$0xff]
    %v4447 = vld [vmem:[%s11 + $0x8] sm:$0xff]
    %v4448 = vld [vmem:[%s11 + $0x10] sm:$0xff]
    %v4449 = vld [vmem:[%s11 + $0x18] sm:$0xff]
    %v4450 = vld [vmem:[%s11 + $0x20] sm:$0xff]
    %v4451 = vld [vmem:[%s11 + $0x28] sm:$0xff]
    %v4452 = vld [vmem:[%s11 + $0x30] sm:$0xff]
    %v4453 = vld [vmem:[%s11 + $0x38] sm:$0xff]
    %v4454 = vld [vmem:[%s12] sm:$0x1]
    %v4456 = vlaneseq
    %v4457 = vshrl.u32 %v4456, 7
    %v4458 = vsub.s32 0, %v4457
    %v4459 = vrot.slane %v4454, %v4458
    %v4477 = vcombine.low %v4413, %v4414
    %v4478 = vcombine.low %v4415, %v4416
    %v4480 = vunpack.c.l.s4 1983009808
    %v4481 = vunpack.c.0.s8 %v4480
    %v4482 = vlaneseq
    %v4483 = vshrl.u32 %v4482, 7
    %v4484 = vsub.s32 %v4481, %v4483
    %v4485 = vrot.slane %v4477, %v4484
    %v4487 = vunpack.c.l.s4 1983009808
    %v4488 = vunpack.c.0.s8 %v4487
    %v4489 = vlaneseq
    %v4490 = vshrl.u32 %v4489, 7
    %v4491 = vsub.s32 %v4488, %v4490
    %v4492 = vrot.slane %v4478, %v4491
    %v4493 = vcombine.low %v4485, %v4492
    %v4494 = vcombine.low %v4417, %v4418
    %v4495 = vcombine.low %v4419, %v4420
    %v4497 = vunpack.c.l.s4 1983009808
    %v4498 = vunpack.c.0.s8 %v4497
    %v4499 = vlaneseq
    %v4500 = vshrl.u32 %v4499, 7
    %v4501 = vsub.s32 %v4498, %v4500
    %v4502 = vrot.slane %v4494, %v4501
    %v4504 = vunpack.c.l.s4 1983009808
    %v4505 = vunpack.c.0.s8 %v4504
    %v4506 = vlaneseq
    %v4507 = vshrl.u32 %v4506, 7
    %v4508 = vsub.s32 %v4505, %v4507
    %v4509 = vrot.slane %v4495, %v4508
    %v4510 = vcombine.low %v4502, %v4509
    %v4511 = vcombine.low %v4421, %v4422
    %v4512 = vcombine.low %v4423, %v4424
    %v4514 = vunpack.c.l.s4 1983009808
    %v4515 = vunpack.c.0.s8 %v4514
    %v4516 = vlaneseq
    %v4517 = vshrl.u32 %v4516, 7
    %v4518 = vsub.s32 %v4515, %v4517
    %v4519 = vrot.slane %v4511, %v4518
    %v4521 = vunpack.c.l.s4 1983009808
    %v4522 = vunpack.c.0.s8 %v4521
    %v4523 = vlaneseq
    %v4524 = vshrl.u32 %v4523, 7
    %v4525 = vsub.s32 %v4522, %v4524
    %v4526 = vrot.slane %v4512, %v4525
    %v4527 = vcombine.low %v4519, %v4526
    %v4528 = vcombine.low %v4425, %v4426
    %v4529 = vcombine.low %v4427, %v4428
    %v4531 = vunpack.c.l.s4 1983009808
    %v4532 = vunpack.c.0.s8 %v4531
    %v4533 = vlaneseq
    %v4534 = vshrl.u32 %v4533, 7
    %v4535 = vsub.s32 %v4532, %v4534
    %v4536 = vrot.slane %v4528, %v4535
    %v4538 = vunpack.c.l.s4 1983009808
    %v4539 = vunpack.c.0.s8 %v4538
    %v4540 = vlaneseq
    %v4541 = vshrl.u32 %v4540, 7
    %v4542 = vsub.s32 %v4539, %v4541
    %v4543 = vrot.slane %v4529, %v4542
    %v4544 = vcombine.low %v4536, %v4543
    %vm4545 = vcmask 523264
    %v4546 = vsel %vm4545, %v4493, 0
    %v4548 = vsel %vm4545, %v4510, 0
    %v4550 = vsel %vm4545, %v4527, 0
    %v4552 = vsel %vm4545, %v4544, 0
    %4554 = vmatprep.subr.mxu0 0.0
    %4555 = vmatpush1.msra.mxu0 0.0
    %4556 = vmatprep.subr.mxu0 0.0
    %4557 = vmatpush1.msra.mxu0 0.0
    %4558 = vmatprep.subr.mxu0 0.0
    %4559 = vmatpush1.msra.mxu0 0.0
    %4560 = vmatprep.subr.mxu0 0.0
    %4561 = vmatpush1.msra.mxu0 0.0
    %4562 = vmatprep.subr.mxu0 0.0
    %4563 = vmatpush1.msra.mxu0 0.0
    %4564 = vmatprep.subr.mxu0 0.0
    %4565 = vmatpush1.msra.mxu0 0.0
    %4566 = vmatprep.subr.mxu0 0.0
    %4567 = vmatpush1.msra.mxu0 0.0
    %4568 = vmatprep.subr.mxu0 0.0
    %4569 = vmatpush1.msra.mxu0 0.0
    %4570 = vmatprep.subr.mxu0 0.0
    %4571 = vmatpush1.msra.mxu0 %v4453
    %4572 = vmatprep.subr.mxu0 0.0
    %4573 = vmatpush1.msra.mxu0 %v4452
    %4574 = vmatprep.subr.mxu0 0.0
    %4575 = vmatpush1.msra.mxu0 %v4451
    %4576 = vmatprep.subr.mxu0 0.0
    %4577 = vmatpush1.msra.mxu0 %v4450
    %4578 = vmatprep.subr.mxu0 0.0
    %4579 = vmatpush1.msra.mxu0 %v4449
    %4580 = vmatprep.subr.mxu0 0.0
    %4581 = vmatpush1.msra.mxu0 %v4448
    %4582 = vmatprep.subr.mxu0 0.0
    %4583 = vmatpush1.msra.mxu0 %v4447
    %4584 = vmatprep.subr.mxu0 0.0
    %4585 = vmatpush1.msra.mxu0 %v4446
    %4586 = vmatprep.subr.mxu0 0.0
    %4587 = vmatpush2.msra.mxu0 0.0
    %4588 = vmatprep.subr.mxu0 0.0
    %4589 = vmatpush2.msra.mxu0 0.0
    %4590 = vmatprep.subr.mxu0 0.0
    %4591 = vmatpush2.msra.mxu0 0.0
    %4592 = vmatprep.subr.mxu0 0.0
    %4593 = vmatpush2.msra.mxu0 0.0
    %4594 = vmatprep.subr.mxu0 0.0
    %4595 = vmatpush2.msra.mxu0 0.0
    %4596 = vmatprep.subr.mxu0 0.0
    %4597 = vmatpush2.msra.mxu0 0.0
    %4598 = vmatprep.subr.mxu0 0.0
    %4599 = vmatpush2.msra.mxu0 0.0
    %4600 = vmatprep.subr.mxu0 0.0
    %4601 = vmatpush2.msra.mxu0 0.0
    %4602 = vmatprep.subr.mxu0 0.0
    %4603 = vmatpush2.msra.mxu0 0.0
    %4604 = vmatprep.subr.mxu0 0.0
    %4605 = vmatpush2.msra.mxu0 0.0
    %4606 = vmatprep.subr.mxu0 0.0
    %4607 = vmatpush2.msra.mxu0 0.0
    %4608 = vmatprep.subr.mxu0 0.0
    %4609 = vmatpush2.msra.mxu0 0.0
    %4610 = vmatprep.subr.mxu0 0.0
    %4611 = vmatpush2.msra.mxu0 0.0
    %4612 = vmatprep.subr.mxu0 0.0
    %4613 = vmatpush2.msra.mxu0 0.0
    %4614 = vmatprep.subr.mxu0 0.0
    %4615 = vmatpush2.msra.mxu0 0.0
    %4616 = vmatprep.subr.mxu0 0.0
    %4617 = vmatpush2.msra.mxu0 0.0
    %4618 = vmatprep.mubr.f32.mxu0 0.0
    %4619 = vmatmul.mubr.f32.gmra.mxu0 %v4546
    %v4620 = vpop.f32.mrf.mxu0
    %v4621 = vadd.f32 %v4459, %v4620
    %v4622 = vpop.f32.mrf.mxu0
    %4623 = vmatprep.mubr.f32.mxu0 0.0
    %4624 = vmatmul.mubr.f32.gmra.mxu0 %v4548
    %v4625 = vpop.f32.mrf.mxu0
    %v4626 = vadd.f32 %v4459, %v4625
    %v4627 = vpop.f32.mrf.mxu0
    %4628 = vmatprep.mubr.f32.mxu0 0.0
    %4629 = vmatmul.mubr.f32.gmra.mxu0 %v4550
    %v4630 = vpop.f32.mrf.mxu0
    %v4631 = vadd.f32 %v4459, %v4630
    %v4632 = vpop.f32.mrf.mxu0
    %4633 = vmatprep.mubr.f32.mxu0 0.0
    %4634 = vmatmul.mubr.f32.gmra.mxu0 %v4552
    %v4635 = vpop.f32.mrf.mxu0
    %v4636 = vadd.f32 %v4459, %v4635
    %v4637 = vpop.f32.mrf.mxu0
    %4638 = vdwg.mxu0
    %v4643 = vcombine.high %v4621, %v4621
    %v4645 = vunpack.c.l.s4 1983009808
    %v4646 = vunpack.c.0.s8 %v4645
    %v4647 = vlaneseq
    %v4648 = vshrl.u32 %v4647, 7
    %v4649 = vsub.s32 %v4646, %v4648
    %v4650 = vrot.slane %v4621, %v4649
    %v4652 = vunpack.c.l.s4 1983009808
    %v4653 = vunpack.c.0.s8 %v4652
    %v4654 = vlaneseq
    %v4655 = vshrl.u32 %v4654, 7
    %v4656 = vsub.s32 %v4653, %v4655
    %v4657 = vrot.slane %v4643, %v4656
    %v4658 = vcombine.high %v4650, %v4650
    %v4659 = vcombine.high %v4657, %v4657
    %v4660 = vcombine.high %v4626, %v4626
    %v4662 = vunpack.c.l.s4 1983009808
    %v4663 = vunpack.c.0.s8 %v4662
    %v4664 = vlaneseq
    %v4665 = vshrl.u32 %v4664, 7
    %v4666 = vsub.s32 %v4663, %v4665
    %v4667 = vrot.slane %v4626, %v4666
    %v4669 = vunpack.c.l.s4 1983009808
    %v4670 = vunpack.c.0.s8 %v4669
    %v4671 = vlaneseq
    %v4672 = vshrl.u32 %v4671, 7
    %v4673 = vsub.s32 %v4670, %v4672
    %v4674 = vrot.slane %v4660, %v4673
    %v4675 = vcombine.high %v4667, %v4667
    %v4676 = vcombine.high %v4674, %v4674
    %v4677 = vcombine.high %v4631, %v4631
    %v4679 = vunpack.c.l.s4 1983009808
    %v4680 = vunpack.c.0.s8 %v4679
    %v4681 = vlaneseq
    %v4682 = vshrl.u32 %v4681, 7
    %v4683 = vsub.s32 %v4680, %v4682
    %v4684 = vrot.slane %v4631, %v4683
    %v4686 = vunpack.c.l.s4 1983009808
    %v4687 = vunpack.c.0.s8 %v4686
    %v4688 = vlaneseq
    %v4689 = vshrl.u32 %v4688, 7
    %v4690 = vsub.s32 %v4687, %v4689
    %v4691 = vrot.slane %v4677, %v4690
    %v4692 = vcombine.high %v4684, %v4684
    %v4693 = vcombine.high %v4691, %v4691
    %v4694 = vcombine.high %v4636, %v4636
    %v4696 = vunpack.c.l.s4 1983009808
    %v4697 = vunpack.c.0.s8 %v4696
    %v4698 = vlaneseq
    %v4699 = vshrl.u32 %v4698, 7
    %v4700 = vsub.s32 %v4697, %v4699
    %v4701 = vrot.slane %v4636, %v4700
    %v4703 = vunpack.c.l.s4 1983009808
    %v4704 = vunpack.c.0.s8 %v4703
    %v4705 = vlaneseq
    %v4706 = vshrl.u32 %v4705, 7
    %v4707 = vsub.s32 %v4704, %v4706
    %v4708 = vrot.slane %v4694, %v4707
    %v4709 = vcombine.high %v4701, %v4701
    %v4710 = vcombine.high %v4708, %v4708
    %4727 = vst.msk [vmem:[#allocation6] sm:$0x3] %vm763, %v4650
    %4728 = vst.msk [vmem:[#allocation6 + $0x2] sm:$0x3] %vm763, %v4658
    %4729 = vst.msk [vmem:[#allocation6 + $0x4] sm:$0x3] %vm763, %v4657
    %4730 = vst.msk [vmem:[#allocation6 + $0x6] sm:$0x3] %vm763, %v4659
    %4731 = vst.msk [vmem:[#allocation6 + $0x8] sm:$0x3] %vm763, %v4667
    %4732 = vst.msk [vmem:[#allocation6 + $0xa] sm:$0x3] %vm763, %v4675
    %4733 = vst.msk [vmem:[#allocation6 + $0xc] sm:$0x3] %vm763, %v4674
    %4734 = vst.msk [vmem:[#allocation6 + $0xe] sm:$0x3] %vm763, %v4676
    %4735 = vst.msk [vmem:[#allocation6 + $0x10] sm:$0x3] %vm763, %v4684
    %4736 = vst.msk [vmem:[#allocation6 + $0x12] sm:$0x3] %vm763, %v4692
    %4737 = vst.msk [vmem:[#allocation6 + $0x14] sm:$0x3] %vm763, %v4691
    %4738 = vst.msk [vmem:[#allocation6 + $0x16] sm:$0x3] %vm763, %v4693
    %4739 = vst.msk [vmem:[#allocation6 + $0x18] sm:$0x3] %vm763, %v4701
    %4740 = vst.msk [vmem:[#allocation6 + $0x1a] sm:$0x3] %vm763, %v4709
    %4741 = vst.msk [vmem:[#allocation6 + $0x1c] sm:$0x3] %vm763, %v4708
    %4742 = vst.msk [vmem:[#allocation6 + $0x1e] sm:$0x3] %vm763, %v4710
    %v4743 = vsel %vm536, %v4301, %v4291
    %v4744 = vld [vmem:[%s9] sm:$0xff]
    %v4745 = vld [vmem:[%s9 + $0x8] sm:$0xff]
    %v4746 = vld [vmem:[%s9 + $0x10] sm:$0xff]
    %v4747 = vld [vmem:[%s9 + $0x18] sm:$0xff]
    %v4748 = vld [vmem:[%s9 + $0x20] sm:$0xff]
    %v4749 = vld [vmem:[%s9 + $0x28] sm:$0xff]
    %v4750 = vld [vmem:[%s9 + $0x30] sm:$0xff]
    %v4751 = vld [vmem:[%s9 + $0x38] sm:$0xff]
    %v4752 = vld [vmem:[%s10] sm:$0x1]
    %v4754 = vlaneseq
    %v4755 = vshrl.u32 %v4754, 7
    %v4756 = vsub.s32 0, %v4755
    %v4757 = vrot.slane %v4752, %v4756
    %v4760 = vsel %vm4545, %v4743, 0
    %4762 = vmatprep.subr.mxu0 0.0
    %4763 = vmatpush1.msra.mxu0 0.0
    %4764 = vmatprep.subr.mxu0 0.0
    %4765 = vmatpush1.msra.mxu0 0.0
    %4766 = vmatprep.subr.mxu0 0.0
    %4767 = vmatpush1.msra.mxu0 0.0
    %4768 = vmatprep.subr.mxu0 0.0
    %4769 = vmatpush1.msra.mxu0 0.0
    %4770 = vmatprep.subr.mxu0 0.0
    %4771 = vmatpush1.msra.mxu0 0.0
    %4772 = vmatprep.subr.mxu0 0.0
    %4773 = vmatpush1.msra.mxu0 0.0
    %4774 = vmatprep.subr.mxu0 0.0
    %4775 = vmatpush1.msra.mxu0 0.0
    %4776 = vmatprep.subr.mxu0 0.0
    %4777 = vmatpush1.msra.mxu0 0.0
    %4778 = vmatprep.subr.mxu0 0.0
    %4779 = vmatpush1.msra.mxu0 %v4751
    %4780 = vmatprep.subr.mxu0 0.0
    %4781 = vmatpush1.msra.mxu0 %v4750
    %4782 = vmatprep.subr.mxu0 0.0
    %4783 = vmatpush1.msra.mxu0 %v4749
    %4784 = vmatprep.subr.mxu0 0.0
    %4785 = vmatpush1.msra.mxu0 %v4748
    %4786 = vmatprep.subr.mxu0 0.0
    %4787 = vmatpush1.msra.mxu0 %v4747
    %4788 = vmatprep.subr.mxu0 0.0
    %4789 = vmatpush1.msra.mxu0 %v4746
    %4790 = vmatprep.subr.mxu0 0.0
    %4791 = vmatpush1.msra.mxu0 %v4745
    %4792 = vmatprep.subr.mxu0 0.0
    %4793 = vmatpush1.msra.mxu0 %v4744
    %4794 = vmatprep.subr.mxu0 0.0
    %4795 = vmatpush2.msra.mxu0 0.0
    %4796 = vmatprep.subr.mxu0 0.0
    %4797 = vmatpush2.msra.mxu0 0.0
    %4798 = vmatprep.subr.mxu0 0.0
    %4799 = vmatpush2.msra.mxu0 0.0
    %4800 = vmatprep.subr.mxu0 0.0
    %4801 = vmatpush2.msra.mxu0 0.0
    %4802 = vmatprep.subr.mxu0 0.0
    %4803 = vmatpush2.msra.mxu0 0.0
    %4804 = vmatprep.subr.mxu0 0.0
    %4805 = vmatpush2.msra.mxu0 0.0
    %4806 = vmatprep.subr.mxu0 0.0
    %4807 = vmatpush2.msra.mxu0 0.0
    %4808 = vmatprep.subr.mxu0 0.0
    %4809 = vmatpush2.msra.mxu0 0.0
    %4810 = vmatprep.subr.mxu0 0.0
    %4811 = vmatpush2.msra.mxu0 0.0
    %4812 = vmatprep.subr.mxu0 0.0
    %4813 = vmatpush2.msra.mxu0 0.0
    %4814 = vmatprep.subr.mxu0 0.0
    %4815 = vmatpush2.msra.mxu0 0.0
    %4816 = vmatprep.subr.mxu0 0.0
    %4817 = vmatpush2.msra.mxu0 0.0
    %4818 = vmatprep.subr.mxu0 0.0
    %4819 = vmatpush2.msra.mxu0 0.0
    %4820 = vmatprep.subr.mxu0 0.0
    %4821 = vmatpush2.msra.mxu0 0.0
    %4822 = vmatprep.subr.mxu0 0.0
    %4823 = vmatpush2.msra.mxu0 0.0
    %4824 = vmatprep.subr.mxu0 0.0
    %4825 = vmatpush2.msra.mxu0 0.0
    %4826 = vmatprep.mubr.f32.mxu0 0.0
    %4827 = vmatmul.mubr.f32.gmra.mxu0 %v4760
    %v4828 = vpop.f32.mrf.mxu0
    %v4829 = vadd.f32 %v4757, %v4828
    %v4830 = vpop.f32.mrf.mxu0
    %4831 = vdwg.mxu0
    %v4832 = vtanh.pop %v4829
    %4833 = vst.msk [vmem:[#allocation8] sm:$0x3] %vm763, %v4832
    // Predicated region
    $region54: #{tpu_custom_call.1} parent=1 // pred_check
      _
    $region55: #{tpu_custom_call.1} parent=1 // pred_check_branch
      %4835 = sbr.rel (0) target = $region57
    $region56: #{tpu_custom_call.1} parent=1 // pred_region
      %s4837 = ssub.s32 512, 512
      %4838 = vsyncadd [#allocation5], %s4837
      %s4839 = sshll.u32 [#allocation4], 4
      %s4840 = int_to_ptr.vmem [resolvable:$true] %s4839
      %4845 = dma.vmem_to_hbm [thread:$0]  %s4840, 512, %s13, [#allocation5], 32, 32, 2
    $region57: #{tpu_custom_call.1} parent=1 // pred_fallthru
      _
    // Predicated region
    $region58: #{tpu_custom_call.1} parent=1 // pred_check
      _
    $region59: #{tpu_custom_call.1} parent=1 // pred_check_branch
      %4847 = sbr.rel (0) target = $region61
    $region60: #{tpu_custom_call.1} parent=1 // pred_region
      %s4849 = ssub.s32 512, 512
      %4850 = vsyncadd [#allocation7], %s4849
      %s4851 = sshll.u32 [#allocation6], 4
      %s4852 = int_to_ptr.vmem [resolvable:$true] %s4851
      %4857 = dma.vmem_to_hbm [thread:$0]  %s4852, 512, %s14, [#allocation7], 32, 32, 2
    $region61: #{tpu_custom_call.1} parent=1 // pred_fallthru
      _
    // Predicated region
    $region62: #{tpu_custom_call.1} parent=1 // pred_check
      _
    $region63: #{tpu_custom_call.1} parent=1 // pred_check_branch
      %4859 = sbr.rel (0) target = $region65
    $region64: #{tpu_custom_call.1} parent=1 // pred_region
      %s4861 = ssub.s32 32, 32
      %4862 = vsyncadd [#allocation7], %s4861
      %s4864 = sshll.u32 [#allocation8], 4
      %s4865 = int_to_ptr.vmem [resolvable:$true] %s4864
      %4867 = dma.vmem_to_hbm [thread:$0]  %s4865, 32, %s15, [#allocation7]
    $region65: #{tpu_custom_call.1} parent=1 // pred_fallthru
      _
    // Predicated region
    $region66: #{tpu_custom_call.1} parent=1 // pred_check
      _
    $region67: #{tpu_custom_call.1} parent=1 // pred_check_branch
      %4869 = sbr.rel (0) target = $region69
    $region68: #{tpu_custom_call.1} parent=1 // pred_region
      %4870 = dma.done [#allocation5], 512
    $region69: #{tpu_custom_call.1} parent=1 // pred_fallthru
      _
    // Predicated region
    $region70: #{tpu_custom_call.1} parent=1 // pred_check
      _
    $region71: #{tpu_custom_call.1} parent=1 // pred_check_branch
      %4872 = sbr.rel (0) target = $region73
    $region72: #{tpu_custom_call.1} parent=1 // pred_region
      %4873 = dma.done [#allocation7], 512
    $region73: #{tpu_custom_call.1} parent=1 // pred_fallthru
      _
    // Predicated region
    $region74: #{tpu_custom_call.1} parent=1 // pred_check
      _
    $region75: #{tpu_custom_call.1} parent=1 // pred_check_branch
      %4875 = sbr.rel (0) target = $region77
    $region76: #{tpu_custom_call.1} parent=1 // pred_region
      %4876 = dma.done [#allocation7], 32
    $region77: #{tpu_custom_call.1} parent=1 // pred_fallthru
      _
    %4877 = vsyncpa [#allocation5], 1
    %4878 = vsyncpa [#allocation7], 1

</llo_original>
